<compile_context>
chip_gen: v7x
topology: tpu7x:2x2x1
jax: 0.10.0
libtpu: 0.0.40
codegen_flags: <defaults>
</compile_context>

<pallas_src>
import functools

import jax
import jax.numpy as jnp
from jax.experimental import pallas as pl
from jax.experimental.pallas import tpu as pltpu

# ---- model dimensions (match AccidentXai defaults) -------------------------
H_DIM = 128                  # GRU hidden size
FEAT_DIM = 2 * H_DIM         # 256 = feature-extractor output / GRU input
GATE_DIM = 3 * H_DIM         # 384 = [r, z, n] gate width (torch gate order)
NUM_CLASSES = 2
LOGIT_PAD = 128              # lane-dense padded logits (sliced back to 2 in wrapper)
DENSE1 = 64                  # gru_net.dense1 width

C_IN = 3
K_REAL = 9 * C_IN            # 27 = 3x3 patch * C
K_PAD = 32                   # im2col K zero-padded for alignment
CONV_CH = 128                # conv stem channels (lane-dense; backbone stand-in)
BACKBONE_DIM = 2048          # "resnet50 feature" width before model.fc


def _pick_m_tile(total, max_tile, granule=8):
    """Largest divisor of `total` <= max_tile, preferring multiples of `granule`."""
    if total <= max_tile:
        return total
    best = 1
    for cand in range(max_tile, 0, -1):
        if total % cand == 0:
            if cand % granule == 0:
                return cand
            if best == 1:
                best = cand
    return best


# ---------------------------------------------------------------------------
# Kernel 1: conv3x3 (as im2col matmul) + ReLU + global average pool.
# grid = (frame_tiles, row_tiles); per-frame pooled sums accumulated in an f32
# VMEM scratch across the row axis, normalized + stored (bf16) on the last step.
# ---------------------------------------------------------------------------
def _conv_pool_kernel(patches_ref, wconv_ref, bconv_ref, pooled_ref, acc_ref,
                      *, hw, f_tile):
    r = pl.program_id(1)

    @pl.when(r == 0)
    def _():
        acc_ref[...] = jnp.zeros_like(acc_ref)

    wconv = wconv_ref[...]
    bconv = bconv_ref[...]
    sums = []
    for f in range(f_tile):                                       # static frame loop
        conv = jnp.dot(patches_ref[f], wconv,
                       preferred_element_type=jnp.float32)        # (rows, 128) f32
        conv = jnp.maximum(conv + bconv, 0.0)
        sums.append(jnp.sum(conv, axis=0, keepdims=True))         # (1, 128)
    acc_ref[...] += jnp.concatenate(sums, axis=0)                 # (f_tile, 128)

    @pl.when(r == pl.num_programs(1) - 1)
    def _():
        pooled_ref[...] = (acc_ref[...] * jnp.float32(1.0 / hw)
                           ).astype(pooled_ref.dtype)


def conv_pool(patches, p):
    """patches: (N, H*W, K_PAD) bf16 -> pooled (N, CONV_CH) bf16."""
    N, HW, KP = patches.shape
    row_tile = _pick_m_tile(HW, 8192, granule=8)
    f_tile = _pick_m_tile(N, max(1, min(64, 8192 // row_tile)), granule=8)
    return pl.pallas_call(
        functools.partial(_conv_pool_kernel, hw=HW, f_tile=f_tile),
        out_shape=jax.ShapeDtypeStruct((N, CONV_CH), jnp.bfloat16),
        grid_spec=pltpu.PrefetchScalarGridSpec(
            num_scalar_prefetch=0,
            grid=(N // f_tile, HW // row_tile),
            in_specs=[
                pl.BlockSpec((f_tile, row_tile, KP), lambda f, r: (f, r, 0)),
                pl.BlockSpec((KP, CONV_CH), lambda f, r: (0, 0)),
                pl.BlockSpec((1, CONV_CH), lambda f, r: (0, 0)),
            ],
            out_specs=pl.BlockSpec((f_tile, CONV_CH), lambda f, r: (f, 0)),
            scratch_shapes=[pltpu.VMEM((f_tile, CONV_CH), jnp.float32)],
        ),
        compiler_params=pltpu.CompilerParams(
            dimension_semantics=("parallel", "arbitrary"),
            vmem_limit_bytes=32 * 1024 * 1024,   # sized for v7x's 64 MiB physical VMEM
        ),
    )(patches, p["wconv"], p["bconv"])


# ---------------------------------------------------------------------------
# Kernel 2: backbone head + hoisted GRU input projection, batched over M = B*T.
#   pooled(128) -> 2048 -> ReLU -> 256 -> gi = feat @ wih + bih  (384)
# ---------------------------------------------------------------------------
def _head_gi_kernel(pooled_ref, wbb_ref, bbb_ref, wfc_ref, bfc_ref,
                    wih_ref, bih_ref, gi_ref):
    pooled = pooled_ref[...]                                      # (TM, 128) bf16
    hid = jnp.dot(pooled, wbb_ref[...],
                  preferred_element_type=jnp.float32) + bbb_ref[...]
    hid = jnp.maximum(hid, 0.0).astype(jnp.bfloat16)              # (TM, 2048)
    feat = jnp.dot(hid, wfc_ref[...],
                   preferred_element_type=jnp.float32) + bfc_ref[...]
    feat = feat.astype(jnp.bfloat16)                              # (TM, 256)
    gi_ref[...] = jnp.dot(feat, wih_ref[...],
                          preferred_element_type=jnp.float32) + bih_ref[...]


def head_gi(pooled, ft, gru):
    """pooled (N, 128) bf16 -> GRU input gates gi (N, 384) f32."""
    N = pooled.shape[0]
    tm = _pick_m_tile(N, 512, granule=8)
    const = lambda i: (0, 0)
    return pl.pallas_call(
        _head_gi_kernel,
        out_shape=jax.ShapeDtypeStruct((N, GATE_DIM), jnp.float32),
        grid_spec=pltpu.PrefetchScalarGridSpec(
            num_scalar_prefetch=0,
            grid=(N // tm,),
            in_specs=[
                pl.BlockSpec((tm, CONV_CH), lambda i: (i, 0)),
                pl.BlockSpec((CONV_CH, BACKBONE_DIM), const),
                pl.BlockSpec((1, BACKBONE_DIM), const),
                pl.BlockSpec((BACKBONE_DIM, FEAT_DIM), const),
                pl.BlockSpec((1, FEAT_DIM), const),
                pl.BlockSpec((FEAT_DIM, GATE_DIM), const),
                pl.BlockSpec((1, GATE_DIM), const),
            ],
            out_specs=pl.BlockSpec((tm, GATE_DIM), lambda i: (i, 0)),
        ),
        compiler_params=pltpu.CompilerParams(
            dimension_semantics=("parallel",)),
    )(pooled, ft["wbb"], ft["bbb"], ft["wfc"], ft["bfc"],
      gru["wih"], gru["bih"])


# ---------------------------------------------------------------------------
# Kernel 3: GRU recurrence only (torch gate order r, z, n).  gi for the whole
# sequence and whh stay VMEM-resident; an in-kernel fori_loop walks T with the
# hidden state in an f32 VMEM scratch.  Optional batch-chunk parallel axis (v7x).
# ---------------------------------------------------------------------------
def _gru_scan_kernel(gi_ref, whh_ref, bhh_ref, hall_ref, h_ref, *, seq_len):
    h_ref[...] = jnp.zeros_like(h_ref)
    whh = whh_ref[...]
    bhh = bhh_ref[...]

    def step(t, carry):
        gi = gi_ref[t]                                            # (Bc, 384) f32
        h = h_ref[...]                                            # (Bc, 128) f32
        gh = jnp.dot(h.astype(jnp.bfloat16), whh,
                     preferred_element_type=jnp.float32) + bhh
        r = jax.nn.sigmoid(gi[:, :H_DIM] + gh[:, :H_DIM])
        z = jax.nn.sigmoid(gi[:, H_DIM:2 * H_DIM] + gh[:, H_DIM:2 * H_DIM])
        n = jnp.tanh(gi[:, 2 * H_DIM:] + r * gh[:, 2 * H_DIM:])
        h_new = (1.0 - z) * n + z * h
        h_ref[...] = h_new
        hall_ref[t] = h_new.astype(hall_ref.dtype)
        return carry

    jax.lax.fori_loop(0, seq_len, step, 0, unroll=seq_len <= 16)


def gru_scan(gi, p):
    """gi (T, B, 384) f32 -> per-step hidden states h_all (T, B, 128) bf16."""
    T, B, _ = gi.shape
    # v7x: the recurrence is serial in T but independent over batch; split B across
    # both TensorCores when the chunks stay (8,128)-aligned.
    nb = 2 if (B % 16 == 0) else 1
    bc = B // nb
    const = lambda b: (0, 0)
    # TODO(synk): for very long sequences, chunk T ("arbitrary" T-chunk axis with the
    # h scratch carried across chunks) to bound VMEM on v7x's 64 MiB; whole-sequence
    # residency is fine at the sizes exercised here.
    return pl.pallas_call(
        functools.partial(_gru_scan_kernel, seq_len=T),
        out_shape=jax.ShapeDtypeStruct((T, B, H_DIM), jnp.bfloat16),
        grid_spec=pltpu.PrefetchScalarGridSpec(
            num_scalar_prefetch=0,
            grid=(nb,),
            in_specs=[
                pl.BlockSpec((T, bc, GATE_DIM), lambda b: (0, b, 0)),
                pl.BlockSpec((H_DIM, GATE_DIM), const),
                pl.BlockSpec((1, GATE_DIM), const),
            ],
            out_specs=pl.BlockSpec((T, bc, H_DIM), lambda b: (0, b, 0)),
            scratch_shapes=[pltpu.VMEM((bc, H_DIM), jnp.float32)],
        ),
        compiler_params=pltpu.CompilerParams(
            dimension_semantics=("parallel",)),
    )(gi, p["whh"], p["bhh"])


# ---------------------------------------------------------------------------
# Kernel 4: GRU output head (dense1 -> ReLU -> dense2), batched over M = B*T,
# written to a lane-dense 128-padded logits block (sliced to 2 in the wrapper).
# ---------------------------------------------------------------------------
def _out_head_kernel(h_ref, w1_ref, b1_ref, w2_ref, b2_ref, out_ref):
    h = h_ref[...]                                                # (TM, 128) bf16
    d1 = jnp.dot(h, w1_ref[...],
                 preferred_element_type=jnp.float32) + b1_ref[...]
    d1 = jnp.maximum(d1, 0.0).astype(jnp.bfloat16)                # (TM, 64)
    out_ref[...] = jnp.dot(d1, w2_ref[...],
                           preferred_element_type=jnp.float32) + b2_ref[...]


def out_head(h_all, p):
    """h_all (N, 128) bf16 -> padded logits (N, LOGIT_PAD) f32."""
    N = h_all.shape[0]
    tm = _pick_m_tile(N, 512, granule=8)
    const = lambda i: (0, 0)
    return pl.pallas_call(
        _out_head_kernel,
        out_shape=jax.ShapeDtypeStruct((N, LOGIT_PAD), jnp.float32),
        grid_spec=pltpu.PrefetchScalarGridSpec(
            num_scalar_prefetch=0,
            grid=(N // tm,),
            in_specs=[
                pl.BlockSpec((tm, H_DIM), lambda i: (i, 0)),
                pl.BlockSpec((H_DIM, DENSE1), const),
                pl.BlockSpec((1, DENSE1), const),
                pl.BlockSpec((DENSE1, LOGIT_PAD), const),
                pl.BlockSpec((1, LOGIT_PAD), const),
            ],
            out_specs=pl.BlockSpec((tm, LOGIT_PAD), lambda i: (i, 0)),
        ),
        compiler_params=pltpu.CompilerParams(
            dimension_semantics=("parallel",)),
    )(h_all, p["w1"], p["b1"], p["w2"], p["b2"])


# ---------------------------------------------------------------------------
# Wrapper glue: bf16 NHWC im2col built from a single fused transpose of the raw
# pixels (no f32 intermediates, no second transpose of the 9x-inflated tensor).
# ---------------------------------------------------------------------------
def _im2col3x3(frames):
    """frames: (N, H, W, C) bf16 -> (N, H*W, K_PAD) bf16; patch order (dy, dx, c)."""
    N, H, W, C = frames.shape
    xp = jnp.pad(frames, ((0, 0), (1, 1), (1, 1), (0, 0)))
    shifts = [xp[:, di:di + H, dj:dj + W, :]
              for di in range(3) for dj in range(3)]
    p = jnp.stack(shifts, axis=3).reshape(N, H * W, 9 * C)        # bf16 throughout
    return jnp.pad(p, ((0, 0), (0, 0), (0, K_PAD - 9 * C)))


# ---------------------------------------------------------------------------
# Full AccidentXai forward:  x (B, T, C, H, W) -> logits (B, T, NUM_CLASSES)
# ---------------------------------------------------------------------------
def accident_xai_forward(x, params):
    B, T, C, H, W = x.shape
    N = T * B
    # One fused transpose: (B,T,C,H,W) -> time-major NHWC frames, cast to bf16 once.
    frames = jnp.transpose(x, (1, 0, 3, 4, 2)).astype(jnp.bfloat16).reshape(N, H, W, C)
    patches = _im2col3x3(frames)                                   # (N, H*W, 32) bf16
    pooled = conv_pool(patches, params["ft"])                      # (N, 128) bf16
    gi = head_gi(pooled, params["ft"], params["gru"])              # (N, 384) f32
    h_all = gru_scan(gi.reshape(T, B, GATE_DIM), params["gru"])    # (T, B, 128) bf16
    logits_pad = out_head(h_all.reshape(N, H_DIM), params["gru"])  # (N, 128) f32
    logits = logits_pad[:, :NUM_CLASSES].reshape(T, B, NUM_CLASSES)
    return jnp.transpose(logits, (1, 0, 2))                        # (B, T, 2)


# ---------------------------------------------------------------------------
# Deterministic synthetic parameter init. GRU weights pre-transposed:
# wih: (input, 3H), whh: (H, 3H), gate column order [r, z, n] as in torch.nn.GRU.
# Zero-padded regions (K 27->32, logits 2->128) keep numerics identical to the
# unpadded stand-in while keeping all tiles lane-dense.
# ---------------------------------------------------------------------------
def init_params(key):
    ks = jax.random.split(key, 7)

    def dense(k, fan_in, fan_out):
        scale = 1.0 / jnp.sqrt(jnp.float32(fan_in))
        return jax.random.normal(k, (fan_in, fan_out), jnp.float32) * scale

    wconv = jnp.zeros((K_PAD, CONV_CH), jnp.float32)
    wconv = wconv.at[:K_REAL, :].set(dense(ks[0], K_REAL, CONV_CH))
    w2 = jnp.zeros((DENSE1, LOGIT_PAD), jnp.float32)
    w2 = w2.at[:, :NUM_CLASSES].set(dense(ks[6], DENSE1, NUM_CLASSES))

    ft = dict(
        wconv=wconv.astype(jnp.bfloat16),
        bconv=jnp.zeros((1, CONV_CH), jnp.float32),
        wbb=dense(ks[1], CONV_CH, BACKBONE_DIM).astype(jnp.bfloat16),
        bbb=jnp.zeros((1, BACKBONE_DIM), jnp.float32),
        wfc=dense(ks[2], BACKBONE_DIM, FEAT_DIM).astype(jnp.bfloat16),
        bfc=jnp.zeros((1, FEAT_DIM), jnp.float32),
    )
    gru = dict(
        wih=dense(ks[3], FEAT_DIM, GATE_DIM).astype(jnp.bfloat16),
        whh=dense(ks[4], H_DIM, GATE_DIM).astype(jnp.bfloat16),
        bih=jnp.zeros((1, GATE_DIM), jnp.float32),
        bhh=jnp.zeros((1, GATE_DIM), jnp.float32),
        w1=dense(ks[5], H_DIM, DENSE1).astype(jnp.bfloat16),
        b1=jnp.zeros((1, DENSE1), jnp.float32),
        w2=w2.astype(jnp.bfloat16),
        b2=jnp.zeros((1, LOGIT_PAD), jnp.float32),
    )
    return dict(ft=ft, gru=gru)


if __name__ == "__main__":
    key = jax.random.PRNGKey(0)
    pkey, xkey = jax.random.split(key)
    params = init_params(pkey)

    # Small video batch: B=2, T=4 frames, 3 channels, 16x16 spatial.
    x = jax.random.normal(xkey, (2, 4, C_IN, 16, 16), jnp.float32)

    fwd = jax.jit(functools.partial(accident_xai_forward, params=params))
    y = fwd(x)
    jax.block_until_ready(y)

    assert y.shape == (2, 4, NUM_CLASSES), y.shape
    assert bool(jnp.all(jnp.isfinite(y)))
    print("KERNEL_OK")
</pallas_src>

<mosaic_0001>
module attributes {stable_mosaic.version = 11 : i64} {
  func.func @_conv_pool_kernel(%arg0: i32, %arg1: i32, %arg2: memref<8x256x32xbf16, #tpu.memory_space<vmem>>, %arg3: memref<32x128xbf16, #tpu.memory_space<vmem>>, %arg4: memref<1x128xf32, #tpu.memory_space<vmem>>, %arg5: memref<8x128xbf16, #tpu.memory_space<vmem>>, %arg6: memref<8x128xf32, #tpu.memory_space<vmem>>) attributes {dimension_semantics = [#tpu.dimension_semantics<parallel>, #tpu.dimension_semantics<arbitrary>], iteration_bounds = array<i64: 1, 1>, scalar_prefetch = 0 : i64, scratch_operands = 1 : i64, tpu.core_type = #tpu.core_type<tc>, window_params = [{transform_indices = @transform_0, window_bounds = array<i64: 8, 256, 32>}, {pipeline_mode = #tpu.pipeline_mode<synchronous>, transform_indices = @transform_1, window_bounds = array<i64: 32, 128>}, {pipeline_mode = #tpu.pipeline_mode<synchronous>, transform_indices = @transform_2, window_bounds = array<i64: 1, 128>}, {transform_indices = @transform_3, window_bounds = array<i64: 8, 128>}]} {
    %c0_i32 = arith.constant 0 : i32
    %0 = arith.cmpi eq, %arg1, %c0_i32 : i32
    %1 = arith.extui %0 : i1 to i32
    %c0_i32_0 = arith.constant 0 : i32
    %2 = arith.cmpi ne, %1, %c0_i32_0 : i32
    scf.if %2 {
      %cst_50 = arith.constant 0.000000e+00 : f32
      %84 = vector.broadcast %cst_50 : f32 to vector<8x128xf32>
      %c0_51 = arith.constant 0 : index
      %c0_52 = arith.constant 0 : index
      %85 = vector.load %arg6[%c0_51, %c0_52] : memref<8x128xf32, #tpu.memory_space<vmem>>, vector<8x128xf32>
      tpu.vector_store %arg6[%c0_51, %c0_52], %84 {strides = array<i32>} : memref<8x128xf32, #tpu.memory_space<vmem>>, vector<8x128xf32>,
    } else {
    }
    %c0 = arith.constant 0 : index
    %c0_1 = arith.constant 0 : index
    %3 = vector.load %arg3[%c0, %c0_1] : memref<32x128xbf16, #tpu.memory_space<vmem>>, vector<32x128xbf16>
    %c0_2 = arith.constant 0 : index
    %c0_3 = arith.constant 0 : index
    %4 = vector.load %arg4[%c0_2, %c0_3] : memref<1x128xf32, #tpu.memory_space<vmem>>, vector<1x128xf32>
    %c0_4 = arith.constant 0 : index
    %c0_5 = arith.constant 0 : index
    %c0_6 = arith.constant 0 : index
    %5 = vector.load %arg2[%c0_4, %c0_5, %c0_6] : memref<8x256x32xbf16, #tpu.memory_space<vmem>>, vector<1x256x32xbf16>
    %6 = vector.shape_cast %5 : vector<1x256x32xbf16> to vector<256x32xbf16>
    %cst = arith.constant dense<0.000000e+00> : vector<256x128xf32>
    %7 = tpu.matmul %6, %3, %cst {dimension_numbers = #tpu.dot_dimension_numbers<[1], [0], [0], [1], [0, 0, 1, 1], [], []>} : vector<256x32xbf16>, vector<32x128xbf16>, vector<256x128xf32> -> vector<256x128xf32>
    %8 = vector.broadcast %4 : vector<1x128xf32> to vector<256x128xf32>
    %9 = arith.addf %7, %8 : vector<256x128xf32>
    %cst_7 = arith.constant 0.000000e+00 : f32
    %10 = vector.broadcast %cst_7 : f32 to vector<256x128xf32>
    %11 = arith.maximumf %9, %10 : vector<256x128xf32>
    %cst_8 = arith.constant dense<0.000000e+00> : vector<128xf32>
    %12 = vector.multi_reduction <add>, %11, %cst_8 [0] : vector<256x128xf32> to vector<128xf32>
    %13 = vector.shape_cast %12 : vector<128xf32> to vector<1x128xf32>
    %c1 = arith.constant 1 : index
    %c0_9 = arith.constant 0 : index
    %c0_10 = arith.constant 0 : index
    %14 = vector.load %arg2[%c1, %c0_9, %c0_10] : memref<8x256x32xbf16, #tpu.memory_space<vmem>>, vector<1x256x32xbf16>
    %15 = vector.shape_cast %14 : vector<1x256x32xbf16> to vector<256x32xbf16>
    %cst_11 = arith.constant dense<0.000000e+00> : vector<256x128xf32>
    %16 = tpu.matmul %15, %3, %cst_11 {dimension_numbers = #tpu.dot_dimension_numbers<[1], [0], [0], [1], [0, 0, 1, 1], [], []>} : vector<256x32xbf16>, vector<32x128xbf16>, vector<256x128xf32> -> vector<256x128xf32>
    %17 = vector.broadcast %4 : vector<1x128xf32> to vector<256x128xf32>
    %18 = arith.addf %16, %17 : vector<256x128xf32>
    %cst_12 = arith.constant 0.000000e+00 : f32
    %19 = vector.broadcast %cst_12 : f32 to vector<256x128xf32>
    %20 = arith.maximumf %18, %19 : vector<256x128xf32>
    %cst_13 = arith.constant dense<0.000000e+00> : vector<128xf32>
    %21 = vector.multi_reduction <add>, %20, %cst_13 [0] : vector<256x128xf32> to vector<128xf32>
    %22 = vector.shape_cast %21 : vector<128xf32> to vector<1x128xf32>
    %c2 = arith.constant 2 : index
    %c0_14 = arith.constant 0 : index
    %c0_15 = arith.constant 0 : index
    %23 = vector.load %arg2[%c2, %c0_14, %c0_15] : memref<8x256x32xbf16, #tpu.memory_space<vmem>>, vector<1x256x32xbf16>
    %24 = vector.shape_cast %23 : vector<1x256x32xbf16> to vector<256x32xbf16>
    %cst_16 = arith.constant dense<0.000000e+00> : vector<256x128xf32>
    %25 = tpu.matmul %24, %3, %cst_16 {dimension_numbers = #tpu.dot_dimension_numbers<[1], [0], [0], [1], [0, 0, 1, 1], [], []>} : vector<256x32xbf16>, vector<32x128xbf16>, vector<256x128xf32> -> vector<256x128xf32>
    %26 = vector.broadcast %4 : vector<1x128xf32> to vector<256x128xf32>
    %27 = arith.addf %25, %26 : vector<256x128xf32>
    %cst_17 = arith.constant 0.000000e+00 : f32
    %28 = vector.broadcast %cst_17 : f32 to vector<256x128xf32>
    %29 = arith.maximumf %27, %28 : vector<256x128xf32>
    %cst_18 = arith.constant dense<0.000000e+00> : vector<128xf32>
    %30 = vector.multi_reduction <add>, %29, %cst_18 [0] : vector<256x128xf32> to vector<128xf32>
    %31 = vector.shape_cast %30 : vector<128xf32> to vector<1x128xf32>
    %c3 = arith.constant 3 : index
    %c0_19 = arith.constant 0 : index
    %c0_20 = arith.constant 0 : index
    %32 = vector.load %arg2[%c3, %c0_19, %c0_20] : memref<8x256x32xbf16, #tpu.memory_space<vmem>>, vector<1x256x32xbf16>
    %33 = vector.shape_cast %32 : vector<1x256x32xbf16> to vector<256x32xbf16>
    %cst_21 = arith.constant dense<0.000000e+00> : vector<256x128xf32>
    %34 = tpu.matmul %33, %3, %cst_21 {dimension_numbers = #tpu.dot_dimension_numbers<[1], [0], [0], [1], [0, 0, 1, 1], [], []>} : vector<256x32xbf16>, vector<32x128xbf16>, vector<256x128xf32> -> vector<256x128xf32>
    %35 = vector.broadcast %4 : vector<1x128xf32> to vector<256x128xf32>
    %36 = arith.addf %34, %35 : vector<256x128xf32>
    %cst_22 = arith.constant 0.000000e+00 : f32
    %37 = vector.broadcast %cst_22 : f32 to vector<256x128xf32>
    %38 = arith.maximumf %36, %37 : vector<256x128xf32>
    %cst_23 = arith.constant dense<0.000000e+00> : vector<128xf32>
    %39 = vector.multi_reduction <add>, %38, %cst_23 [0] : vector<256x128xf32> to vector<128xf32>
    %40 = vector.shape_cast %39 : vector<128xf32> to vector<1x128xf32>
    %c4 = arith.constant 4 : index
    %c0_24 = arith.constant 0 : index
    %c0_25 = arith.constant 0 : index
    %41 = vector.load %arg2[%c4, %c0_24, %c0_25] : memref<8x256x32xbf16, #tpu.memory_space<vmem>>, vector<1x256x32xbf16>
    %42 = vector.shape_cast %41 : vector<1x256x32xbf16> to vector<256x32xbf16>
    %cst_26 = arith.constant dense<0.000000e+00> : vector<256x128xf32>
    %43 = tpu.matmul %42, %3, %cst_26 {dimension_numbers = #tpu.dot_dimension_numbers<[1], [0], [0], [1], [0, 0, 1, 1], [], []>} : vector<256x32xbf16>, vector<32x128xbf16>, vector<256x128xf32> -> vector<256x128xf32>
    %44 = vector.broadcast %4 : vector<1x128xf32> to vector<256x128xf32>
    %45 = arith.addf %43, %44 : vector<256x128xf32>
    %cst_27 = arith.constant 0.000000e+00 : f32
    %46 = vector.broadcast %cst_27 : f32 to vector<256x128xf32>
    %47 = arith.maximumf %45, %46 : vector<256x128xf32>
    %cst_28 = arith.constant dense<0.000000e+00> : vector<128xf32>
    %48 = vector.multi_reduction <add>, %47, %cst_28 [0] : vector<256x128xf32> to vector<128xf32>
    %49 = vector.shape_cast %48 : vector<128xf32> to vector<1x128xf32>
    %c5 = arith.constant 5 : index
    %c0_29 = arith.constant 0 : index
    %c0_30 = arith.constant 0 : index
    %50 = vector.load %arg2[%c5, %c0_29, %c0_30] : memref<8x256x32xbf16, #tpu.memory_space<vmem>>, vector<1x256x32xbf16>
    %51 = vector.shape_cast %50 : vector<1x256x32xbf16> to vector<256x32xbf16>
    %cst_31 = arith.constant dense<0.000000e+00> : vector<256x128xf32>
    %52 = tpu.matmul %51, %3, %cst_31 {dimension_numbers = #tpu.dot_dimension_numbers<[1], [0], [0], [1], [0, 0, 1, 1], [], []>} : vector<256x32xbf16>, vector<32x128xbf16>, vector<256x128xf32> -> vector<256x128xf32>
    %53 = vector.broadcast %4 : vector<1x128xf32> to vector<256x128xf32>
    %54 = arith.addf %52, %53 : vector<256x128xf32>
    %cst_32 = arith.constant 0.000000e+00 : f32
    %55 = vector.broadcast %cst_32 : f32 to vector<256x128xf32>
    %56 = arith.maximumf %54, %55 : vector<256x128xf32>
    %cst_33 = arith.constant dense<0.000000e+00> : vector<128xf32>
    %57 = vector.multi_reduction <add>, %56, %cst_33 [0] : vector<256x128xf32> to vector<128xf32>
    %58 = vector.shape_cast %57 : vector<128xf32> to vector<1x128xf32>
    %c6 = arith.constant 6 : index
    %c0_34 = arith.constant 0 : index
    %c0_35 = arith.constant 0 : index
    %59 = vector.load %arg2[%c6, %c0_34, %c0_35] : memref<8x256x32xbf16, #tpu.memory_space<vmem>>, vector<1x256x32xbf16>
    %60 = vector.shape_cast %59 : vector<1x256x32xbf16> to vector<256x32xbf16>
    %cst_36 = arith.constant dense<0.000000e+00> : vector<256x128xf32>
    %61 = tpu.matmul %60, %3, %cst_36 {dimension_numbers = #tpu.dot_dimension_numbers<[1], [0], [0], [1], [0, 0, 1, 1], [], []>} : vector<256x32xbf16>, vector<32x128xbf16>, vector<256x128xf32> -> vector<256x128xf32>
    %62 = vector.broadcast %4 : vector<1x128xf32> to vector<256x128xf32>
    %63 = arith.addf %61, %62 : vector<256x128xf32>
    %cst_37 = arith.constant 0.000000e+00 : f32
    %64 = vector.broadcast %cst_37 : f32 to vector<256x128xf32>
    %65 = arith.maximumf %63, %64 : vector<256x128xf32>
    %cst_38 = arith.constant dense<0.000000e+00> : vector<128xf32>
    %66 = vector.multi_reduction <add>, %65, %cst_38 [0] : vector<256x128xf32> to vector<128xf32>
    %67 = vector.shape_cast %66 : vector<128xf32> to vector<1x128xf32>
    %c7 = arith.constant 7 : index
    %c0_39 = arith.constant 0 : index
    %c0_40 = arith.constant 0 : index
    %68 = vector.load %arg2[%c7, %c0_39, %c0_40] : memref<8x256x32xbf16, #tpu.memory_space<vmem>>, vector<1x256x32xbf16>
    %69 = vector.shape_cast %68 : vector<1x256x32xbf16> to vector<256x32xbf16>
    %cst_41 = arith.constant dense<0.000000e+00> : vector<256x128xf32>
    %70 = tpu.matmul %69, %3, %cst_41 {dimension_numbers = #tpu.dot_dimension_numbers<[1], [0], [0], [1], [0, 0, 1, 1], [], []>} : vector<256x32xbf16>, vector<32x128xbf16>, vector<256x128xf32> -> vector<256x128xf32>
    %71 = vector.broadcast %4 : vector<1x128xf32> to vector<256x128xf32>
    %72 = arith.addf %70, %71 : vector<256x128xf32>
    %cst_42 = arith.constant 0.000000e+00 : f32
    %73 = vector.broadcast %cst_42 : f32 to vector<256x128xf32>
    %74 = arith.maximumf %72, %73 : vector<256x128xf32>
    %cst_43 = arith.constant dense<0.000000e+00> : vector<128xf32>
    %75 = vector.multi_reduction <add>, %74, %cst_43 [0] : vector<256x128xf32> to vector<128xf32>
    %76 = vector.shape_cast %75 : vector<128xf32> to vector<1x128xf32>
    %c0_44 = arith.constant 0 : index
    %c0_45 = arith.constant 0 : index
    %77 = vector.load %arg6[%c0_44, %c0_45] : memref<8x128xf32, #tpu.memory_space<vmem>>, vector<8x128xf32>
    %78 = tpu.concatenate %13, %22, %31, %40, %49, %58, %67, %76 in 0 : vector<1x128xf32>, vector<1x128xf32>, vector<1x128xf32>, vector<1x128xf32>, vector<1x128xf32>, vector<1x128xf32>, vector<1x128xf32>, vector<1x128xf32> -> vector<8x128xf32>
    %79 = arith.addf %77, %78 : vector<8x128xf32>
    %c0_46 = arith.constant 0 : index
    %c0_47 = arith.constant 0 : index
    %80 = vector.load %arg6[%c0_46, %c0_47] : memref<8x128xf32, #tpu.memory_space<vmem>>, vector<8x128xf32>
    tpu.vector_store %arg6[%c0_46, %c0_47], %79 {strides = array<i32>} : memref<8x128xf32, #tpu.memory_space<vmem>>, vector<8x128xf32>,
    %c0_i32_48 = arith.constant 0 : i32
    %81 = arith.cmpi eq, %arg1, %c0_i32_48 : i32
    %82 = arith.extui %81 : i1 to i32
    %c0_i32_49 = arith.constant 0 : i32
    %83 = arith.cmpi ne, %82, %c0_i32_49 : i32
    scf.if %83 {
      %c0_50 = arith.constant 0 : index
      %c0_51 = arith.constant 0 : index
      %84 = vector.load %arg6[%c0_50, %c0_51] : memref<8x128xf32, #tpu.memory_space<vmem>>, vector<8x128xf32>
      %cst_52 = arith.constant 3.906250e-03 : f32
      %85 = vector.broadcast %cst_52 : f32 to vector<8x128xf32>
      %86 = arith.mulf %84, %85 : vector<8x128xf32>
      %87 = arith.truncf %86 : vector<8x128xf32> to vector<8x128xbf16>
      %c0_53 = arith.constant 0 : index
      %c0_54 = arith.constant 0 : index
      %88 = vector.load %arg5[%c0_53, %c0_54] : memref<8x128xbf16, #tpu.memory_space<vmem>>, vector<8x128xbf16>
      tpu.vector_store %arg5[%c0_53, %c0_54], %87 {strides = array<i32>} : memref<8x128xbf16, #tpu.memory_space<vmem>>, vector<8x128xbf16>,
    } else {
    }
    return
  }
  func.func @transform_0(%arg0: i32, %arg1: i32) -> (i32, i32, i32) {
    %c0_i32 = arith.constant 0 : i32
    %c0_i32_0 = arith.constant 0 : i32
    return %arg0, %arg1, %c0_i32 : i32, i32, i32
  }
  func.func @transform_1(%arg0: i32, %arg1: i32) -> (i32, i32) {
    %c0_i32 = arith.constant 0 : i32
    %c0_i32_0 = arith.constant 0 : i32
    %c0_i32_1 = arith.constant 0 : i32
    return %c0_i32, %c0_i32_0 : i32, i32
  }
  func.func @transform_2(%arg0: i32, %arg1: i32) -> (i32, i32) {
    %c0_i32 = arith.constant 0 : i32
    %c0_i32_0 = arith.constant 0 : i32
    %c0_i32_1 = arith.constant 0 : i32
    return %c0_i32, %c0_i32_0 : i32, i32
  }
  func.func @transform_3(%arg0: i32, %arg1: i32) -> (i32, i32) {
    %c0_i32 = arith.constant 0 : i32
    %c0_i32_0 = arith.constant 0 : i32
    return %arg0, %c0_i32 : i32, i32
  }
}

module attributes {stable_mosaic.version = 11 : i64} {
  func.func @_head_gi_kernel(%arg0: i32, %arg1: memref<8x128xbf16, #tpu.memory_space<vmem>>, %arg2: memref<128x2048xbf16, #tpu.memory_space<vmem>>, %arg3: memref<1x2048xf32, #tpu.memory_space<vmem>>, %arg4: memref<2048x256xbf16, #tpu.memory_space<vmem>>, %arg5: memref<1x256xf32, #tpu.memory_space<vmem>>, %arg6: memref<256x384xbf16, #tpu.memory_space<vmem>>, %arg7: memref<1x384xf32, #tpu.memory_space<vmem>>, %arg8: memref<8x384xf32, #tpu.memory_space<vmem>>) attributes {dimension_semantics = [#tpu.dimension_semantics<parallel>], iteration_bounds = array<i64: 1>, scalar_prefetch = 0 : i64, scratch_operands = 0 : i64, tpu.core_type = #tpu.core_type<tc>, window_params = [{transform_indices = @transform_0, window_bounds = array<i64: 8, 128>}, {pipeline_mode = #tpu.pipeline_mode<synchronous>, transform_indices = @transform_1, window_bounds = array<i64: 128, 2048>}, {pipeline_mode = #tpu.pipeline_mode<synchronous>, transform_indices = @transform_2, window_bounds = array<i64: 1, 2048>}, {pipeline_mode = #tpu.pipeline_mode<synchronous>, transform_indices = @transform_3, window_bounds = array<i64: 2048, 256>}, {pipeline_mode = #tpu.pipeline_mode<synchronous>, transform_indices = @transform_4, window_bounds = array<i64: 1, 256>}, {pipeline_mode = #tpu.pipeline_mode<synchronous>, transform_indices = @transform_5, window_bounds = array<i64: 256, 384>}, {pipeline_mode = #tpu.pipeline_mode<synchronous>, transform_indices = @transform_6, window_bounds = array<i64: 1, 384>}, {transform_indices = @transform_7, window_bounds = array<i64: 8, 384>}]} {
    %c0 = arith.constant 0 : index
    %c0_0 = arith.constant 0 : index
    %0 = vector.load %arg1[%c0, %c0_0] : memref<8x128xbf16, #tpu.memory_space<vmem>>, vector<8x128xbf16>
    %c0_1 = arith.constant 0 : index
    %c0_2 = arith.constant 0 : index
    %1 = vector.load %arg2[%c0_1, %c0_2] : memref<128x2048xbf16, #tpu.memory_space<vmem>>, vector<128x2048xbf16>
    %cst = arith.constant dense<0.000000e+00> : vector<8x2048xf32>
    %2 = tpu.matmul %0, %1, %cst {dimension_numbers = #tpu.dot_dimension_numbers<[1], [0], [0], [1], [0, 0, 1, 1], [], []>} : vector<8x128xbf16>, vector<128x2048xbf16>, vector<8x2048xf32> -> vector<8x2048xf32>
    %c0_3 = arith.constant 0 : index
    %c0_4 = arith.constant 0 : index
    %3 = vector.load %arg3[%c0_3, %c0_4] : memref<1x2048xf32, #tpu.memory_space<vmem>>, vector<1x2048xf32>
    %4 = vector.broadcast %3 : vector<1x2048xf32> to vector<8x2048xf32>
    %5 = arith.addf %2, %4 : vector<8x2048xf32>
    %cst_5 = arith.constant 0.000000e+00 : f32
    %6 = vector.broadcast %cst_5 : f32 to vector<8x2048xf32>
    %7 = arith.maximumf %5, %6 : vector<8x2048xf32>
    %8 = arith.truncf %7 : vector<8x2048xf32> to vector<8x2048xbf16>
    %c0_6 = arith.constant 0 : index
    %c0_7 = arith.constant 0 : index
    %9 = vector.load %arg4[%c0_6, %c0_7] : memref<2048x256xbf16, #tpu.memory_space<vmem>>, vector<2048x256xbf16>
    %cst_8 = arith.constant dense<0.000000e+00> : vector<8x256xf32>
    %10 = tpu.matmul %8, %9, %cst_8 {dimension_numbers = #tpu.dot_dimension_numbers<[1], [0], [0], [1], [0, 0, 1, 1], [], []>} : vector<8x2048xbf16>, vector<2048x256xbf16>, vector<8x256xf32> -> vector<8x256xf32>
    %c0_9 = arith.constant 0 : index
    %c0_10 = arith.constant 0 : index
    %11 = vector.load %arg5[%c0_9, %c0_10] : memref<1x256xf32, #tpu.memory_space<vmem>>, vector<1x256xf32>
    %12 = vector.broadcast %11 : vector<1x256xf32> to vector<8x256xf32>
    %13 = arith.addf %10, %12 : vector<8x256xf32>
    %14 = arith.truncf %13 : vector<8x256xf32> to vector<8x256xbf16>
    %c0_11 = arith.constant 0 : index
    %c0_12 = arith.constant 0 : index
    %15 = vector.load %arg6[%c0_11, %c0_12] : memref<256x384xbf16, #tpu.memory_space<vmem>>, vector<256x384xbf16>
    %cst_13 = arith.constant dense<0.000000e+00> : vector<8x384xf32>
    %16 = tpu.matmul %14, %15, %cst_13 {dimension_numbers = #tpu.dot_dimension_numbers<[1], [0], [0], [1], [0, 0, 1, 1], [], []>} : vector<8x256xbf16>, vector<256x384xbf16>, vector<8x384xf32> -> vector<8x384xf32>
    %c0_14 = arith.constant 0 : index
    %c0_15 = arith.constant 0 : index
    %17 = vector.load %arg7[%c0_14, %c0_15] : memref<1x384xf32, #tpu.memory_space<vmem>>, vector<1x384xf32>
    %18 = vector.broadcast %17 : vector<1x384xf32> to vector<8x384xf32>
    %19 = arith.addf %16, %18 : vector<8x384xf32>
    %c0_16 = arith.constant 0 : index
    %c0_17 = arith.constant 0 : index
    %20 = vector.load %arg8[%c0_16, %c0_17] : memref<8x384xf32, #tpu.memory_space<vmem>>, vector<8x384xf32>
    tpu.vector_store %arg8[%c0_16, %c0_17], %19 {strides = array<i32>} : memref<8x384xf32, #tpu.memory_space<vmem>>, vector<8x384xf32>,
    return
  }
  func.func @transform_0(%arg0: i32) -> (i32, i32) {
    %c0_i32 = arith.constant 0 : i32
    %c0_i32_0 = arith.constant 0 : i32
    return %arg0, %c0_i32 : i32, i32
  }
  func.func @transform_1(%arg0: i32) -> (i32, i32) {
    %c0_i32 = arith.constant 0 : i32
    %c0_i32_0 = arith.constant 0 : i32
    %c0_i32_1 = arith.constant 0 : i32
    return %c0_i32, %c0_i32_0 : i32, i32
  }
  func.func @transform_2(%arg0: i32) -> (i32, i32) {
    %c0_i32 = arith.constant 0 : i32
    %c0_i32_0 = arith.constant 0 : i32
    %c0_i32_1 = arith.constant 0 : i32
    return %c0_i32, %c0_i32_0 : i32, i32
  }
  func.func @transform_3(%arg0: i32) -> (i32, i32) {
    %c0_i32 = arith.constant 0 : i32
    %c0_i32_0 = arith.constant 0 : i32
    %c0_i32_1 = arith.constant 0 : i32
    return %c0_i32, %c0_i32_0 : i32, i32
  }
  func.func @transform_4(%arg0: i32) -> (i32, i32) {
    %c0_i32 = arith.constant 0 : i32
    %c0_i32_0 = arith.constant 0 : i32
    %c0_i32_1 = arith.constant 0 : i32
    return %c0_i32, %c0_i32_0 : i32, i32
  }
  func.func @transform_5(%arg0: i32) -> (i32, i32) {
    %c0_i32 = arith.constant 0 : i32
    %c0_i32_0 = arith.constant 0 : i32
    %c0_i32_1 = arith.constant 0 : i32
    return %c0_i32, %c0_i32_0 : i32, i32
  }
  func.func @transform_6(%arg0: i32) -> (i32, i32) {
    %c0_i32 = arith.constant 0 : i32
    %c0_i32_0 = arith.constant 0 : i32
    %c0_i32_1 = arith.constant 0 : i32
    return %c0_i32, %c0_i32_0 : i32, i32
  }
  func.func @transform_7(%arg0: i32) -> (i32, i32) {
    %c0_i32 = arith.constant 0 : i32
    %c0_i32_0 = arith.constant 0 : i32
    return %arg0, %c0_i32 : i32, i32
  }
}

module attributes {stable_mosaic.version = 11 : i64} {
  func.func @_gru_scan_kernel(%arg0: i32, %arg1: memref<4x2x384xf32, #tpu.memory_space<vmem>>, %arg2: memref<128x384xbf16, #tpu.memory_space<vmem>>, %arg3: memref<1x384xf32, #tpu.memory_space<vmem>>, %arg4: memref<4x2x128xbf16, #tpu.memory_space<vmem>>, %arg5: memref<2x128xf32, #tpu.memory_space<vmem>>) attributes {dimension_semantics = [#tpu.dimension_semantics<parallel>], iteration_bounds = array<i64: 1>, scalar_prefetch = 0 : i64, scratch_operands = 1 : i64, tpu.core_type = #tpu.core_type<tc>, window_params = [{transform_indices = @transform_0, window_bounds = array<i64: 4, 2, 384>}, {pipeline_mode = #tpu.pipeline_mode<synchronous>, transform_indices = @transform_1, window_bounds = array<i64: 128, 384>}, {pipeline_mode = #tpu.pipeline_mode<synchronous>, transform_indices = @transform_2, window_bounds = array<i64: 1, 384>}, {transform_indices = @transform_3, window_bounds = array<i64: 4, 2, 128>}]} {
    %cst = arith.constant 0.000000e+00 : f32
    %0 = vector.broadcast %cst : f32 to vector<2x128xf32>
    %c0 = arith.constant 0 : index
    %c0_0 = arith.constant 0 : index
    %1 = vector.load %arg5[%c0, %c0_0] : memref<2x128xf32, #tpu.memory_space<vmem>>, vector<2x128xf32>
    tpu.vector_store %arg5[%c0, %c0_0], %0 {strides = array<i32>} : memref<2x128xf32, #tpu.memory_space<vmem>>, vector<2x128xf32>,
    %c0_1 = arith.constant 0 : index
    %c0_2 = arith.constant 0 : index
    %2 = vector.load %arg2[%c0_1, %c0_2] : memref<128x384xbf16, #tpu.memory_space<vmem>>, vector<128x384xbf16>
    %c0_3 = arith.constant 0 : index
    %c0_4 = arith.constant 0 : index
    %3 = vector.load %arg3[%c0_3, %c0_4] : memref<1x384xf32, #tpu.memory_space<vmem>>, vector<1x384xf32>
    %c0_i32 = arith.constant 0 : i32
    %4 = arith.index_cast %c0_i32 : i32 to index
    %c0_5 = arith.constant 0 : index
    %c0_6 = arith.constant 0 : index
    %5 = vector.load %arg1[%4, %c0_5, %c0_6] : memref<4x2x384xf32, #tpu.memory_space<vmem>>, vector<1x2x384xf32>
    %6 = vector.shape_cast %5 : vector<1x2x384xf32> to vector<2x384xf32>
    %c0_7 = arith.constant 0 : index
    %c0_8 = arith.constant 0 : index
    %7 = vector.load %arg5[%c0_7, %c0_8] : memref<2x128xf32, #tpu.memory_space<vmem>>, vector<2x128xf32>
    %8 = arith.truncf %7 : vector<2x128xf32> to vector<2x128xbf16>
    %cst_9 = arith.constant dense<0.000000e+00> : vector<2x384xf32>
    %9 = tpu.matmul %8, %2, %cst_9 {dimension_numbers = #tpu.dot_dimension_numbers<[1], [0], [0], [1], [0, 0, 1, 1], [], []>} : vector<2x128xbf16>, vector<128x384xbf16>, vector<2x384xf32> -> vector<2x384xf32>
    %10 = vector.broadcast %3 : vector<1x384xf32> to vector<2x384xf32>
    %11 = arith.addf %9, %10 : vector<2x384xf32>
    %12 = vector.extract_strided_slice %6 {offsets = [0, 0], sizes = [2, 128], strides = [1, 1]} : vector<2x384xf32> to vector<2x128xf32>
    %13 = vector.extract_strided_slice %11 {offsets = [0, 0], sizes = [2, 128], strides = [1, 1]} : vector<2x384xf32> to vector<2x128xf32>
    %14 = arith.addf %12, %13 : vector<2x128xf32>
    %15 = arith.negf %14 : vector<2x128xf32>
    %16 = math.exp %15 : vector<2x128xf32>
    %cst_10 = arith.constant 1.000000e+00 : f32
    %17 = vector.broadcast %cst_10 : f32 to vector<2x128xf32>
    %18 = arith.addf %17, %16 : vector<2x128xf32>
    %19 = arith.divf %17, %18 : vector<2x128xf32>
    %20 = vector.extract_strided_slice %6 {offsets = [0, 128], sizes = [2, 128], strides = [1, 1]} : vector<2x384xf32> to vector<2x128xf32>
    %21 = vector.extract_strided_slice %11 {offsets = [0, 128], sizes = [2, 128], strides = [1, 1]} : vector<2x384xf32> to vector<2x128xf32>
    %22 = arith.addf %20, %21 : vector<2x128xf32>
    %23 = arith.negf %22 : vector<2x128xf32>
    %24 = math.exp %23 : vector<2x128xf32>
    %cst_11 = arith.constant 1.000000e+00 : f32
    %25 = vector.broadcast %cst_11 : f32 to vector<2x128xf32>
    %26 = arith.addf %25, %24 : vector<2x128xf32>
    %27 = arith.divf %25, %26 : vector<2x128xf32>
    %28 = vector.extract_strided_slice %6 {offsets = [0, 256], sizes = [2, 128], strides = [1, 1]} : vector<2x384xf32> to vector<2x128xf32>
    %29 = vector.extract_strided_slice %11 {offsets = [0, 256], sizes = [2, 128], strides = [1, 1]} : vector<2x384xf32> to vector<2x128xf32>
    %30 = arith.mulf %19, %29 : vector<2x128xf32>
    %31 = arith.addf %28, %30 : vector<2x128xf32>
    %32 = math.tanh %31 : vector<2x128xf32>
    %cst_12 = arith.constant 1.000000e+00 : f32
    %33 = vector.broadcast %cst_12 : f32 to vector<2x128xf32>
    %34 = arith.subf %33, %27 : vector<2x128xf32>
    %35 = arith.mulf %34, %32 : vector<2x128xf32>
    %36 = arith.mulf %27, %7 : vector<2x128xf32>
    %37 = arith.addf %35, %36 : vector<2x128xf32>
    %c0_13 = arith.constant 0 : index
    %c0_14 = arith.constant 0 : index
    %38 = vector.load %arg5[%c0_13, %c0_14] : memref<2x128xf32, #tpu.memory_space<vmem>>, vector<2x128xf32>
    tpu.vector_store %arg5[%c0_13, %c0_14], %37 {strides = array<i32>} : memref<2x128xf32, #tpu.memory_space<vmem>>, vector<2x128xf32>,
    %39 = arith.truncf %37 : vector<2x128xf32> to vector<2x128xbf16>
    %40 = arith.index_cast %c0_i32 : i32 to index
    %c0_15 = arith.constant 0 : index
    %c0_16 = arith.constant 0 : index
    %41 = vector.load %arg4[%40, %c0_15, %c0_16] : memref<4x2x128xbf16, #tpu.memory_space<vmem>>, vector<1x2x128xbf16>
    %42 = vector.shape_cast %41 : vector<1x2x128xbf16> to vector<2x128xbf16>
    %43 = vector.shape_cast %39 : vector<2x128xbf16> to vector<1x2x128xbf16>
    tpu.vector_store %arg4[%40, %c0_15, %c0_16], %43 {strides = array<i32>} : memref<4x2x128xbf16, #tpu.memory_space<vmem>>, vector<1x2x128xbf16>,
    %c1_i32 = arith.constant 1 : i32
    %44 = arith.index_cast %c1_i32 : i32 to index
    %c0_17 = arith.constant 0 : index
    %c0_18 = arith.constant 0 : index
    %45 = vector.load %arg1[%44, %c0_17, %c0_18] : memref<4x2x384xf32, #tpu.memory_space<vmem>>, vector<1x2x384xf32>
    %46 = vector.shape_cast %45 : vector<1x2x384xf32> to vector<2x384xf32>
    %c0_19 = arith.constant 0 : index
    %c0_20 = arith.constant 0 : index
    %47 = vector.load %arg5[%c0_19, %c0_20] : memref<2x128xf32, #tpu.memory_space<vmem>>, vector<2x128xf32>
    %48 = arith.truncf %47 : vector<2x128xf32> to vector<2x128xbf16>
    %cst_21 = arith.constant dense<0.000000e+00> : vector<2x384xf32>
    %49 = tpu.matmul %48, %2, %cst_21 {dimension_numbers = #tpu.dot_dimension_numbers<[1], [0], [0], [1], [0, 0, 1, 1], [], []>} : vector<2x128xbf16>, vector<128x384xbf16>, vector<2x384xf32> -> vector<2x384xf32>
    %50 = vector.broadcast %3 : vector<1x384xf32> to vector<2x384xf32>
    %51 = arith.addf %49, %50 : vector<2x384xf32>
    %52 = vector.extract_strided_slice %46 {offsets = [0, 0], sizes = [2, 128], strides = [1, 1]} : vector<2x384xf32> to vector<2x128xf32>
    %53 = vector.extract_strided_slice %51 {offsets = [0, 0], sizes = [2, 128], strides = [1, 1]} : vector<2x384xf32> to vector<2x128xf32>
    %54 = arith.addf %52, %53 : vector<2x128xf32>
    %55 = arith.negf %54 : vector<2x128xf32>
    %56 = math.exp %55 : vector<2x128xf32>
    %cst_22 = arith.constant 1.000000e+00 : f32
    %57 = vector.broadcast %cst_22 : f32 to vector<2x128xf32>
    %58 = arith.addf %57, %56 : vector<2x128xf32>
    %59 = arith.divf %57, %58 : vector<2x128xf32>
    %60 = vector.extract_strided_slice %46 {offsets = [0, 128], sizes = [2, 128], strides = [1, 1]} : vector<2x384xf32> to vector<2x128xf32>
    %61 = vector.extract_strided_slice %51 {offsets = [0, 128], sizes = [2, 128], strides = [1, 1]} : vector<2x384xf32> to vector<2x128xf32>
    %62 = arith.addf %60, %61 : vector<2x128xf32>
    %63 = arith.negf %62 : vector<2x128xf32>
    %64 = math.exp %63 : vector<2x128xf32>
    %cst_23 = arith.constant 1.000000e+00 : f32
    %65 = vector.broadcast %cst_23 : f32 to vector<2x128xf32>
    %66 = arith.addf %65, %64 : vector<2x128xf32>
    %67 = arith.divf %65, %66 : vector<2x128xf32>
    %68 = vector.extract_strided_slice %46 {offsets = [0, 256], sizes = [2, 128], strides = [1, 1]} : vector<2x384xf32> to vector<2x128xf32>
    %69 = vector.extract_strided_slice %51 {offsets = [0, 256], sizes = [2, 128], strides = [1, 1]} : vector<2x384xf32> to vector<2x128xf32>
    %70 = arith.mulf %59, %69 : vector<2x128xf32>
    %71 = arith.addf %68, %70 : vector<2x128xf32>
    %72 = math.tanh %71 : vector<2x128xf32>
    %cst_24 = arith.constant 1.000000e+00 : f32
    %73 = vector.broadcast %cst_24 : f32 to vector<2x128xf32>
    %74 = arith.subf %73, %67 : vector<2x128xf32>
    %75 = arith.mulf %74, %72 : vector<2x128xf32>
    %76 = arith.mulf %67, %47 : vector<2x128xf32>
    %77 = arith.addf %75, %76 : vector<2x128xf32>
    %c0_25 = arith.constant 0 : index
    %c0_26 = arith.constant 0 : index
    %78 = vector.load %arg5[%c0_25, %c0_26] : memref<2x128xf32, #tpu.memory_space<vmem>>, vector<2x128xf32>
    tpu.vector_store %arg5[%c0_25, %c0_26], %77 {strides = array<i32>} : memref<2x128xf32, #tpu.memory_space<vmem>>, vector<2x128xf32>,
    %79 = arith.truncf %77 : vector<2x128xf32> to vector<2x128xbf16>
    %80 = arith.index_cast %c1_i32 : i32 to index
    %c0_27 = arith.constant 0 : index
    %c0_28 = arith.constant 0 : index
    %81 = vector.load %arg4[%80, %c0_27, %c0_28] : memref<4x2x128xbf16, #tpu.memory_space<vmem>>, vector<1x2x128xbf16>
    %82 = vector.shape_cast %81 : vector<1x2x128xbf16> to vector<2x128xbf16>
    %83 = vector.shape_cast %79 : vector<2x128xbf16> to vector<1x2x128xbf16>
    tpu.vector_store %arg4[%80, %c0_27, %c0_28], %83 {strides = array<i32>} : memref<4x2x128xbf16, #tpu.memory_space<vmem>>, vector<1x2x128xbf16>,
    %c2_i32 = arith.constant 2 : i32
    %84 = arith.index_cast %c2_i32 : i32 to index
    %c0_29 = arith.constant 0 : index
    %c0_30 = arith.constant 0 : index
    %85 = vector.load %arg1[%84, %c0_29, %c0_30] : memref<4x2x384xf32, #tpu.memory_space<vmem>>, vector<1x2x384xf32>
    %86 = vector.shape_cast %85 : vector<1x2x384xf32> to vector<2x384xf32>
    %c0_31 = arith.constant 0 : index
    %c0_32 = arith.constant 0 : index
    %87 = vector.load %arg5[%c0_31, %c0_32] : memref<2x128xf32, #tpu.memory_space<vmem>>, vector<2x128xf32>
    %88 = arith.truncf %87 : vector<2x128xf32> to vector<2x128xbf16>
    %cst_33 = arith.constant dense<0.000000e+00> : vector<2x384xf32>
    %89 = tpu.matmul %88, %2, %cst_33 {dimension_numbers = #tpu.dot_dimension_numbers<[1], [0], [0], [1], [0, 0, 1, 1], [], []>} : vector<2x128xbf16>, vector<128x384xbf16>, vector<2x384xf32> -> vector<2x384xf32>
    %90 = vector.broadcast %3 : vector<1x384xf32> to vector<2x384xf32>
    %91 = arith.addf %89, %90 : vector<2x384xf32>
    %92 = vector.extract_strided_slice %86 {offsets = [0, 0], sizes = [2, 128], strides = [1, 1]} : vector<2x384xf32> to vector<2x128xf32>
    %93 = vector.extract_strided_slice %91 {offsets = [0, 0], sizes = [2, 128], strides = [1, 1]} : vector<2x384xf32> to vector<2x128xf32>
    %94 = arith.addf %92, %93 : vector<2x128xf32>
    %95 = arith.negf %94 : vector<2x128xf32>
    %96 = math.exp %95 : vector<2x128xf32>
    %cst_34 = arith.constant 1.000000e+00 : f32
    %97 = vector.broadcast %cst_34 : f32 to vector<2x128xf32>
    %98 = arith.addf %97, %96 : vector<2x128xf32>
    %99 = arith.divf %97, %98 : vector<2x128xf32>
    %100 = vector.extract_strided_slice %86 {offsets = [0, 128], sizes = [2, 128], strides = [1, 1]} : vector<2x384xf32> to vector<2x128xf32>
    %101 = vector.extract_strided_slice %91 {offsets = [0, 128], sizes = [2, 128], strides = [1, 1]} : vector<2x384xf32> to vector<2x128xf32>
    %102 = arith.addf %100, %101 : vector<2x128xf32>
    %103 = arith.negf %102 : vector<2x128xf32>
    %104 = math.exp %103 : vector<2x128xf32>
    %cst_35 = arith.constant 1.000000e+00 : f32
    %105 = vector.broadcast %cst_35 : f32 to vector<2x128xf32>
    %106 = arith.addf %105, %104 : vector<2x128xf32>
    %107 = arith.divf %105, %106 : vector<2x128xf32>
    %108 = vector.extract_strided_slice %86 {offsets = [0, 256], sizes = [2, 128], strides = [1, 1]} : vector<2x384xf32> to vector<2x128xf32>
    %109 = vector.extract_strided_slice %91 {offsets = [0, 256], sizes = [2, 128], strides = [1, 1]} : vector<2x384xf32> to vector<2x128xf32>
    %110 = arith.mulf %99, %109 : vector<2x128xf32>
    %111 = arith.addf %108, %110 : vector<2x128xf32>
    %112 = math.tanh %111 : vector<2x128xf32>
    %cst_36 = arith.constant 1.000000e+00 : f32
    %113 = vector.broadcast %cst_36 : f32 to vector<2x128xf32>
    %114 = arith.subf %113, %107 : vector<2x128xf32>
    %115 = arith.mulf %114, %112 : vector<2x128xf32>
    %116 = arith.mulf %107, %87 : vector<2x128xf32>
    %117 = arith.addf %115, %116 : vector<2x128xf32>
    %c0_37 = arith.constant 0 : index
    %c0_38 = arith.constant 0 : index
    %118 = vector.load %arg5[%c0_37, %c0_38] : memref<2x128xf32, #tpu.memory_space<vmem>>, vector<2x128xf32>
    tpu.vector_store %arg5[%c0_37, %c0_38], %117 {strides = array<i32>} : memref<2x128xf32, #tpu.memory_space<vmem>>, vector<2x128xf32>,
    %119 = arith.truncf %117 : vector<2x128xf32> to vector<2x128xbf16>
    %120 = arith.index_cast %c2_i32 : i32 to index
    %c0_39 = arith.constant 0 : index
    %c0_40 = arith.constant 0 : index
    %121 = vector.load %arg4[%120, %c0_39, %c0_40] : memref<4x2x128xbf16, #tpu.memory_space<vmem>>, vector<1x2x128xbf16>
    %122 = vector.shape_cast %121 : vector<1x2x128xbf16> to vector<2x128xbf16>
    %123 = vector.shape_cast %119 : vector<2x128xbf16> to vector<1x2x128xbf16>
    tpu.vector_store %arg4[%120, %c0_39, %c0_40], %123 {strides = array<i32>} : memref<4x2x128xbf16, #tpu.memory_space<vmem>>, vector<1x2x128xbf16>,
    %c3_i32 = arith.constant 3 : i32
    %124 = arith.index_cast %c3_i32 : i32 to index
    %c0_41 = arith.constant 0 : index
    %c0_42 = arith.constant 0 : index
    %125 = vector.load %arg1[%124, %c0_41, %c0_42] : memref<4x2x384xf32, #tpu.memory_space<vmem>>, vector<1x2x384xf32>
    %126 = vector.shape_cast %125 : vector<1x2x384xf32> to vector<2x384xf32>
    %c0_43 = arith.constant 0 : index
    %c0_44 = arith.constant 0 : index
    %127 = vector.load %arg5[%c0_43, %c0_44] : memref<2x128xf32, #tpu.memory_space<vmem>>, vector<2x128xf32>
    %128 = arith.truncf %127 : vector<2x128xf32> to vector<2x128xbf16>
    %cst_45 = arith.constant dense<0.000000e+00> : vector<2x384xf32>
    %129 = tpu.matmul %128, %2, %cst_45 {dimension_numbers = #tpu.dot_dimension_numbers<[1], [0], [0], [1], [0, 0, 1, 1], [], []>} : vector<2x128xbf16>, vector<128x384xbf16>, vector<2x384xf32> -> vector<2x384xf32>
    %130 = vector.broadcast %3 : vector<1x384xf32> to vector<2x384xf32>
    %131 = arith.addf %129, %130 : vector<2x384xf32>
    %132 = vector.extract_strided_slice %126 {offsets = [0, 0], sizes = [2, 128], strides = [1, 1]} : vector<2x384xf32> to vector<2x128xf32>
    %133 = vector.extract_strided_slice %131 {offsets = [0, 0], sizes = [2, 128], strides = [1, 1]} : vector<2x384xf32> to vector<2x128xf32>
    %134 = arith.addf %132, %133 : vector<2x128xf32>
    %135 = arith.negf %134 : vector<2x128xf32>
    %136 = math.exp %135 : vector<2x128xf32>
    %cst_46 = arith.constant 1.000000e+00 : f32
    %137 = vector.broadcast %cst_46 : f32 to vector<2x128xf32>
    %138 = arith.addf %137, %136 : vector<2x128xf32>
    %139 = arith.divf %137, %138 : vector<2x128xf32>
    %140 = vector.extract_strided_slice %126 {offsets = [0, 128], sizes = [2, 128], strides = [1, 1]} : vector<2x384xf32> to vector<2x128xf32>
    %141 = vector.extract_strided_slice %131 {offsets = [0, 128], sizes = [2, 128], strides = [1, 1]} : vector<2x384xf32> to vector<2x128xf32>
    %142 = arith.addf %140, %141 : vector<2x128xf32>
    %143 = arith.negf %142 : vector<2x128xf32>
    %144 = math.exp %143 : vector<2x128xf32>
    %cst_47 = arith.constant 1.000000e+00 : f32
    %145 = vector.broadcast %cst_47 : f32 to vector<2x128xf32>
    %146 = arith.addf %145, %144 : vector<2x128xf32>
    %147 = arith.divf %145, %146 : vector<2x128xf32>
    %148 = vector.extract_strided_slice %126 {offsets = [0, 256], sizes = [2, 128], strides = [1, 1]} : vector<2x384xf32> to vector<2x128xf32>
    %149 = vector.extract_strided_slice %131 {offsets = [0, 256], sizes = [2, 128], strides = [1, 1]} : vector<2x384xf32> to vector<2x128xf32>
    %150 = arith.mulf %139, %149 : vector<2x128xf32>
    %151 = arith.addf %148, %150 : vector<2x128xf32>
    %152 = math.tanh %151 : vector<2x128xf32>
    %cst_48 = arith.constant 1.000000e+00 : f32
    %153 = vector.broadcast %cst_48 : f32 to vector<2x128xf32>
    %154 = arith.subf %153, %147 : vector<2x128xf32>
    %155 = arith.mulf %154, %152 : vector<2x128xf32>
    %156 = arith.mulf %147, %127 : vector<2x128xf32>
    %157 = arith.addf %155, %156 : vector<2x128xf32>
    %c0_49 = arith.constant 0 : index
    %c0_50 = arith.constant 0 : index
    %158 = vector.load %arg5[%c0_49, %c0_50] : memref<2x128xf32, #tpu.memory_space<vmem>>, vector<2x128xf32>
    tpu.vector_store %arg5[%c0_49, %c0_50], %157 {strides = array<i32>} : memref<2x128xf32, #tpu.memory_space<vmem>>, vector<2x128xf32>,
    %159 = arith.truncf %157 : vector<2x128xf32> to vector<2x128xbf16>
    %160 = arith.index_cast %c3_i32 : i32 to index
    %c0_51 = arith.constant 0 : index
    %c0_52 = arith.constant 0 : index
    %161 = vector.load %arg4[%160, %c0_51, %c0_52] : memref<4x2x128xbf16, #tpu.memory_space<vmem>>, vector<1x2x128xbf16>
    %162 = vector.shape_cast %161 : vector<1x2x128xbf16> to vector<2x128xbf16>
    %163 = vector.shape_cast %159 : vector<2x128xbf16> to vector<1x2x128xbf16>
    tpu.vector_store %arg4[%160, %c0_51, %c0_52], %163 {strides = array<i32>} : memref<4x2x128xbf16, #tpu.memory_space<vmem>>, vector<1x2x128xbf16>,
    %c4_i32 = arith.constant 4 : i32
    return
  }
  func.func @transform_0(%arg0: i32) -> (i32, i32, i32) {
    %c0_i32 = arith.constant 0 : i32
    %c0_i32_0 = arith.constant 0 : i32
    %c0_i32_1 = arith.constant 0 : i32
    return %c0_i32, %arg0, %c0_i32_0 : i32, i32, i32
  }
  func.func @transform_1(%arg0: i32) -> (i32, i32) {
    %c0_i32 = arith.constant 0 : i32
    %c0_i32_0 = arith.constant 0 : i32
    %c0_i32_1 = arith.constant 0 : i32
    return %c0_i32, %c0_i32_0 : i32, i32
  }
  func.func @transform_2(%arg0: i32) -> (i32, i32) {
    %c0_i32 = arith.constant 0 : i32
    %c0_i32_0 = arith.constant 0 : i32
    %c0_i32_1 = arith.constant 0 : i32
    return %c0_i32, %c0_i32_0 : i32, i32
  }
  func.func @transform_3(%arg0: i32) -> (i32, i32, i32) {
    %c0_i32 = arith.constant 0 : i32
    %c0_i32_0 = arith.constant 0 : i32
    %c0_i32_1 = arith.constant 0 : i32
    return %c0_i32, %arg0, %c0_i32_0 : i32, i32, i32
  }
}

module attributes {stable_mosaic.version = 11 : i64} {
  func.func @_out_head_kernel(%arg0: i32, %arg1: memref<8x128xbf16, #tpu.memory_space<vmem>>, %arg2: memref<128x64xbf16, #tpu.memory_space<vmem>>, %arg3: memref<1x64xf32, #tpu.memory_space<vmem>>, %arg4: memref<64x128xbf16, #tpu.memory_space<vmem>>, %arg5: memref<1x128xf32, #tpu.memory_space<vmem>>, %arg6: memref<8x128xf32, #tpu.memory_space<vmem>>) attributes {dimension_semantics = [#tpu.dimension_semantics<parallel>], iteration_bounds = array<i64: 1>, scalar_prefetch = 0 : i64, scratch_operands = 0 : i64, tpu.core_type = #tpu.core_type<tc>, window_params = [{transform_indices = @transform_0, window_bounds = array<i64: 8, 128>}, {pipeline_mode = #tpu.pipeline_mode<synchronous>, transform_indices = @transform_1, window_bounds = array<i64: 128, 64>}, {pipeline_mode = #tpu.pipeline_mode<synchronous>, transform_indices = @transform_2, window_bounds = array<i64: 1, 64>}, {pipeline_mode = #tpu.pipeline_mode<synchronous>, transform_indices = @transform_3, window_bounds = array<i64: 64, 128>}, {pipeline_mode = #tpu.pipeline_mode<synchronous>, transform_indices = @transform_4, window_bounds = array<i64: 1, 128>}, {transform_indices = @transform_5, window_bounds = array<i64: 8, 128>}]} {
    %c0 = arith.constant 0 : index
    %c0_0 = arith.constant 0 : index
    %0 = vector.load %arg1[%c0, %c0_0] : memref<8x128xbf16, #tpu.memory_space<vmem>>, vector<8x128xbf16>
    %c0_1 = arith.constant 0 : index
    %c0_2 = arith.constant 0 : index
    %1 = vector.load %arg2[%c0_1, %c0_2] : memref<128x64xbf16, #tpu.memory_space<vmem>>, vector<128x64xbf16>
    %cst = arith.constant dense<0.000000e+00> : vector<8x64xf32>
    %2 = tpu.matmul %0, %1, %cst {dimension_numbers = #tpu.dot_dimension_numbers<[1], [0], [0], [1], [0, 0, 1, 1], [], []>} : vector<8x128xbf16>, vector<128x64xbf16>, vector<8x64xf32> -> vector<8x64xf32>
    %c0_3 = arith.constant 0 : index
    %c0_4 = arith.constant 0 : index
    %3 = vector.load %arg3[%c0_3, %c0_4] : memref<1x64xf32, #tpu.memory_space<vmem>>, vector<1x64xf32>
    %4 = vector.broadcast %3 : vector<1x64xf32> to vector<8x64xf32>
    %5 = arith.addf %2, %4 : vector<8x64xf32>
    %cst_5 = arith.constant 0.000000e+00 : f32
    %6 = vector.broadcast %cst_5 : f32 to vector<8x64xf32>
    %7 = arith.maximumf %5, %6 : vector<8x64xf32>
    %8 = arith.truncf %7 : vector<8x64xf32> to vector<8x64xbf16>
    %c0_6 = arith.constant 0 : index
    %c0_7 = arith.constant 0 : index
    %9 = vector.load %arg4[%c0_6, %c0_7] : memref<64x128xbf16, #tpu.memory_space<vmem>>, vector<64x128xbf16>
    %cst_8 = arith.constant dense<0.000000e+00> : vector<8x128xf32>
    %10 = tpu.matmul %8, %9, %cst_8 {dimension_numbers = #tpu.dot_dimension_numbers<[1], [0], [0], [1], [0, 0, 1, 1], [], []>} : vector<8x64xbf16>, vector<64x128xbf16>, vector<8x128xf32> -> vector<8x128xf32>
    %c0_9 = arith.constant 0 : index
    %c0_10 = arith.constant 0 : index
    %11 = vector.load %arg5[%c0_9, %c0_10] : memref<1x128xf32, #tpu.memory_space<vmem>>, vector<1x128xf32>
    %12 = vector.broadcast %11 : vector<1x128xf32> to vector<8x128xf32>
    %13 = arith.addf %10, %12 : vector<8x128xf32>
    %c0_11 = arith.constant 0 : index
    %c0_12 = arith.constant 0 : index
    %14 = vector.load %arg6[%c0_11, %c0_12] : memref<8x128xf32, #tpu.memory_space<vmem>>, vector<8x128xf32>
    tpu.vector_store %arg6[%c0_11, %c0_12], %13 {strides = array<i32>} : memref<8x128xf32, #tpu.memory_space<vmem>>, vector<8x128xf32>,
    return
  }
  func.func @transform_0(%arg0: i32) -> (i32, i32) {
    %c0_i32 = arith.constant 0 : i32
    %c0_i32_0 = arith.constant 0 : i32
    return %arg0, %c0_i32 : i32, i32
  }
  func.func @transform_1(%arg0: i32) -> (i32, i32) {
    %c0_i32 = arith.constant 0 : i32
    %c0_i32_0 = arith.constant 0 : i32
    %c0_i32_1 = arith.constant 0 : i32
    return %c0_i32, %c0_i32_0 : i32, i32
  }
  func.func @transform_2(%arg0: i32) -> (i32, i32) {
    %c0_i32 = arith.constant 0 : i32
    %c0_i32_0 = arith.constant 0 : i32
    %c0_i32_1 = arith.constant 0 : i32
    return %c0_i32, %c0_i32_0 : i32, i32
  }
  func.func @transform_3(%arg0: i32) -> (i32, i32) {
    %c0_i32 = arith.constant 0 : i32
    %c0_i32_0 = arith.constant 0 : i32
    %c0_i32_1 = arith.constant 0 : i32
    return %c0_i32, %c0_i32_0 : i32, i32
  }
  func.func @transform_4(%arg0: i32) -> (i32, i32) {
    %c0_i32 = arith.constant 0 : i32
    %c0_i32_0 = arith.constant 0 : i32
    %c0_i32_1 = arith.constant 0 : i32
    return %c0_i32, %c0_i32_0 : i32, i32
  }
  func.func @transform_5(%arg0: i32) -> (i32, i32) {
    %c0_i32 = arith.constant 0 : i32
    %c0_i32_0 = arith.constant 0 : i32
    return %arg0, %c0_i32 : i32, i32
  }
}

</mosaic_0001>

<llo_original>
// kernel: accident_xai_forward.4
$region0: #{accident_xai_forward.4}
  #allocation0 [shape = 'u32[]', space=smem, size = 0x4, offset = 0x4, fixed_abs, tag = 'smem constant byte address 0x4 - core index']
  #allocation1 [shape = 'u32[144,128]{1,0:T(1,128)}', space=vmem, size = 0x12000, scoped, tag = 'internal scratch']
  #allocation2 [shape = 'f32[8,128]{1,0:T(8,128)}', space=vmem, size = 0x1000, scoped, tag = 'scratch operand']
  %s0 = inlined_call_operand.vmem [shape: bf16[8,256,32], index: 0, kind: input, shape index: {}]
  %s1 = inlined_call_operand.vmem [shape: bf16[32,128], index: 1, kind: input, shape index: {}]
  %s2 = inlined_call_operand.vmem [shape: f32[1,128], index: 2, kind: input, shape index: {}]
  %s3 = inlined_call_operand.vmem [shape: bf16[8,128], index: 3, kind: output, shape index: {}]
  %s4 = sld [smem:[#allocation0]]
  $region30: #{accident_xai_forward.4} parent=0
    _
  %s6 = ssub.s32 1, %s4
  %s7 = scalar_select 0, %s6, %s4
  // Predicated region
  $region2: #{accident_xai_forward.4} parent=0 // pred_check
    _
  $region3: #{accident_xai_forward.4} parent=0 // pred_check_branch
    %9 = sbr.rel (0) target = $region5
  $region4: #{accident_xai_forward.4} parent=0 // pred_region
    _
  $region5: #{accident_xai_forward.4} parent=0 // pred_fallthru
    _
  // Predicated region
  $region6: #{accident_xai_forward.4} parent=0 // pred_check
    _
  $region7: #{accident_xai_forward.4} parent=0 // pred_check_branch
    %11 = sbr.rel (0) target = $region9
  $region8: #{accident_xai_forward.4} parent=0 // pred_region
    _
  $region9: #{accident_xai_forward.4} parent=0 // pred_fallthru
    _
  // Predicated region
  $region10: #{accident_xai_forward.4} parent=0 // pred_check
    _
  $region11: #{accident_xai_forward.4} parent=0 // pred_check_branch
    %13 = sbr.rel (0) target = $region13
  $region12: #{accident_xai_forward.4} parent=0 // pred_region
    _
  $region13: #{accident_xai_forward.4} parent=0 // pred_fallthru
    _
  %p15 = scmp.eq.s32.totalorder 0, 0
  // Predicated region
  $region14: #{accident_xai_forward.4} parent=0 // pred_check
    %p16 = pneg %p15
  $region15: #{accident_xai_forward.4} parent=0 // pred_check_branch
    %18 = sbr.rel (%p16) target = $region17
  $region16: #{accident_xai_forward.4} parent=0 // pred_region
    %19 = vst [vmem:[#allocation2] sm:$0xff] 0.0
  $region17: #{accident_xai_forward.4} parent=0 // pred_fallthru
    _
  %v20 = vld [vmem:[%s1] sm:$0xf]
  %v21 = vld [vmem:[%s1 + $0x4] sm:$0xf]
  %v22 = vld [vmem:[%s1 + $0x8] sm:$0xf]
  %v23 = vld [vmem:[%s1 + $0xc] sm:$0xf]
  %v24 = vld [vmem:[%s2] sm:$0x1]
  %v25 = vld [vmem:[%s0] sm:$0xf]
  %v26 = vld [vmem:[%s0 + $0x4] sm:$0xf]
  %v27 = vld [vmem:[%s0 + $0x8] sm:$0xf]
  %v28 = vld [vmem:[%s0 + $0xc] sm:$0xf]
  %v29 = vld [vmem:[%s0 + $0x10] sm:$0xf]
  %v30 = vld [vmem:[%s0 + $0x14] sm:$0xf]
  %v31 = vld [vmem:[%s0 + $0x18] sm:$0xf]
  %v32 = vld [vmem:[%s0 + $0x1c] sm:$0xf]
  %v33 = vld [vmem:[%s0 + $0x20] sm:$0xf]
  %v34 = vld [vmem:[%s0 + $0x24] sm:$0xf]
  %v35 = vld [vmem:[%s0 + $0x28] sm:$0xf]
  %v36 = vld [vmem:[%s0 + $0x2c] sm:$0xf]
  %v37 = vld [vmem:[%s0 + $0x30] sm:$0xf]
  %v38 = vld [vmem:[%s0 + $0x34] sm:$0xf]
  %v39 = vld [vmem:[%s0 + $0x38] sm:$0xf]
  %v40 = vld [vmem:[%s0 + $0x3c] sm:$0xf]
  %v41 = vld [vmem:[%s0 + $0x40] sm:$0xf]
  %v42 = vld [vmem:[%s0 + $0x44] sm:$0xf]
  %v43 = vld [vmem:[%s0 + $0x48] sm:$0xf]
  %v44 = vld [vmem:[%s0 + $0x4c] sm:$0xf]
  %v45 = vld [vmem:[%s0 + $0x50] sm:$0xf]
  %v46 = vld [vmem:[%s0 + $0x54] sm:$0xf]
  %v47 = vld [vmem:[%s0 + $0x58] sm:$0xf]
  %v48 = vld [vmem:[%s0 + $0x5c] sm:$0xf]
  %v49 = vld [vmem:[%s0 + $0x60] sm:$0xf]
  %v50 = vld [vmem:[%s0 + $0x64] sm:$0xf]
  %v51 = vld [vmem:[%s0 + $0x68] sm:$0xf]
  %v52 = vld [vmem:[%s0 + $0x6c] sm:$0xf]
  %v53 = vld [vmem:[%s0 + $0x70] sm:$0xf]
  %v54 = vld [vmem:[%s0 + $0x74] sm:$0xf]
  %v55 = vld [vmem:[%s0 + $0x78] sm:$0xf]
  %v56 = vld [vmem:[%s0 + $0x7c] sm:$0xf]
  %v58 = vlaneseq
  %v59 = vshrl.u32 %v58, 7
  %v60 = vsub.s32 0, %v59
  %v61 = vrot.slane %v24, %v60
  %v95 = vunpack.c.l.b16 %v25
  %v96 = vunpack.c.l.b16 %v26
  %v97 = vunpack.c.l.b16 %v27
  %v98 = vunpack.c.l.b16 %v28
  %v99 = vunpack.c.l.b16 %v29
  %v100 = vunpack.c.l.b16 %v30
  %v101 = vunpack.c.l.b16 %v31
  %v102 = vunpack.c.l.b16 %v32
  %v103 = vunpack.c.l.b16 %v33
  %v104 = vunpack.c.l.b16 %v34
  %v105 = vunpack.c.l.b16 %v35
  %v106 = vunpack.c.l.b16 %v36
  %v107 = vunpack.c.l.b16 %v37
  %v108 = vunpack.c.l.b16 %v38
  %v109 = vunpack.c.l.b16 %v39
  %v110 = vunpack.c.l.b16 %v40
  %v111 = vunpack.c.l.b16 %v41
  %v112 = vunpack.c.l.b16 %v42
  %v113 = vunpack.c.l.b16 %v43
  %v114 = vunpack.c.l.b16 %v44
  %v115 = vunpack.c.l.b16 %v45
  %v116 = vunpack.c.l.b16 %v46
  %v117 = vunpack.c.l.b16 %v47
  %v118 = vunpack.c.l.b16 %v48
  %v119 = vunpack.c.l.b16 %v49
  %v120 = vunpack.c.l.b16 %v50
  %v121 = vunpack.c.l.b16 %v51
  %v122 = vunpack.c.l.b16 %v52
  %v123 = vunpack.c.l.b16 %v53
  %v124 = vunpack.c.l.b16 %v54
  %v125 = vunpack.c.l.b16 %v55
  %v126 = vunpack.c.l.b16 %v56
  %v127 = vpack.c.b16 %v96, %v95
  %v128 = vpack.c.b16 %v98, %v97
  %v129 = vpack.c.b16 %v100, %v99
  %v130 = vpack.c.b16 %v102, %v101
  %v131 = vpack.c.b16 %v104, %v103
  %v132 = vpack.c.b16 %v106, %v105
  %v133 = vpack.c.b16 %v108, %v107
  %v134 = vpack.c.b16 %v110, %v109
  %v135 = vpack.c.b16 %v112, %v111
  %v136 = vpack.c.b16 %v114, %v113
  %v137 = vpack.c.b16 %v116, %v115
  %v138 = vpack.c.b16 %v118, %v117
  %v139 = vpack.c.b16 %v120, %v119
  %v140 = vpack.c.b16 %v122, %v121
  %v141 = vpack.c.b16 %v124, %v123
  %v142 = vpack.c.b16 %v126, %v125
  %v147 = vunpack.c.l.b16 %v20
  %v148 = vunpack.c.l.b16 %v21
  %v149 = vunpack.c.l.b16 %v22
  %v150 = vunpack.c.l.b16 %v23
  %v151 = vpack.c.b16 %v148, %v147
  %v152 = vpack.c.b16 %v150, %v149
  %vm155 = vcmask 261120
  %v157 = vsel %vm155, %v127, 0
  %v160 = vsel %vm155, %v128, 0
  %v163 = vsel %vm155, %v129, 0
  %v166 = vsel %vm155, %v130, 0
  %v169 = vsel %vm155, %v131, 0
  %v172 = vsel %vm155, %v132, 0
  %v175 = vsel %vm155, %v133, 0
  %v178 = vsel %vm155, %v134, 0
  %v181 = vsel %vm155, %v135, 0
  %v184 = vsel %vm155, %v136, 0
  %v187 = vsel %vm155, %v137, 0
  %v190 = vsel %vm155, %v138, 0
  %v193 = vsel %vm155, %v139, 0
  %v196 = vsel %vm155, %v140, 0
  %v199 = vsel %vm155, %v141, 0
  %v202 = vsel %vm155, %v142, 0
  %204 = vmatprep.subr.bf16.mxu0 0
  %205 = vmatpush1.bf16.msra.mxu0 %v151
  %206 = vmatprep.subr.bf16.mxu0 0
  %207 = vmatpush1.bf16.msra.mxu0 %v152
  %208 = vmatprep.subr.bf16.mxu0 0
  %209 = vmatpush1.bf16.msra.mxu0 0
  %210 = vmatprep.subr.bf16.mxu0 0
  %211 = vmatpush1.bf16.msra.mxu0 0
  %212 = vmatprep.subr.bf16.mxu0 0
  %213 = vmatpush1.bf16.msra.mxu0 0
  %214 = vmatprep.subr.bf16.mxu0 0
  %215 = vmatpush1.bf16.msra.mxu0 0
  %216 = vmatprep.subr.bf16.mxu0 0
  %217 = vmatpush1.bf16.msra.mxu0 0
  %218 = vmatprep.subr.bf16.mxu0 0
  %219 = vmatpush1.bf16.msra.mxu0 0
  %220 = vmatprep.subr.bf16.mxu0 0
  %221 = vmatpush1.bf16.msra.mxu0 0
  %222 = vmatprep.subr.bf16.mxu0 0
  %223 = vmatpush1.bf16.msra.mxu0 0
  %224 = vmatprep.subr.bf16.mxu0 0
  %225 = vmatpush1.bf16.msra.mxu0 0
  %226 = vmatprep.subr.bf16.mxu0 0
  %227 = vmatpush1.bf16.msra.mxu0 0
  %228 = vmatprep.subr.bf16.mxu0 0
  %229 = vmatpush1.bf16.msra.mxu0 0
  %230 = vmatprep.subr.bf16.mxu0 0
  %231 = vmatpush1.bf16.msra.mxu0 0
  %232 = vmatprep.subr.bf16.mxu0 0
  %233 = vmatpush1.bf16.msra.mxu0 0
  %234 = vmatprep.subr.bf16.mxu0 0
  %235 = vmatpush1.bf16.msra.mxu0 0
  %236 = vmatprep.mubr.bf16.mxu0 0
  %237 = vmatmul.mubr.bf16.gmra.mrb[0].mxu0 %v157
  %v238 = vpop.f32.mrb[0].mxu0
  %v239 = vadd.f32 %v61, %v238
  %v240 = vpop.f32.mrb[0].mxu0
  %v241 = vpop.f32.mrb[0].mxu0
  %v242 = vadd.f32 %v61, %v241
  %v243 = vpop.f32.mrb[0].mxu0
  %244 = vmatprep.mubr.bf16.mxu0 0
  %245 = vmatmul.mubr.bf16.gmra.mrb[0].mxu0 %v160
  %v246 = vpop.f32.mrb[0].mxu0
  %v247 = vadd.f32 %v61, %v246
  %v248 = vpop.f32.mrb[0].mxu0
  %v249 = vpop.f32.mrb[0].mxu0
  %v250 = vadd.f32 %v61, %v249
  %v251 = vpop.f32.mrb[0].mxu0
  %252 = vmatprep.mubr.bf16.mxu0 0
  %253 = vmatmul.mubr.bf16.gmra.mrb[0].mxu0 %v163
  %v254 = vpop.f32.mrb[0].mxu0
  %v255 = vadd.f32 %v61, %v254
  %v256 = vpop.f32.mrb[0].mxu0
  %v257 = vpop.f32.mrb[0].mxu0
  %v258 = vadd.f32 %v61, %v257
  %v259 = vpop.f32.mrb[0].mxu0
  %260 = vmatprep.mubr.bf16.mxu0 0
  %261 = vmatmul.mubr.bf16.gmra.mrb[0].mxu0 %v166
  %v262 = vpop.f32.mrb[0].mxu0
  %v263 = vadd.f32 %v61, %v262
  %v264 = vpop.f32.mrb[0].mxu0
  %v265 = vpop.f32.mrb[0].mxu0
  %v266 = vadd.f32 %v61, %v265
  %v267 = vpop.f32.mrb[0].mxu0
  %268 = vmatprep.mubr.bf16.mxu0 0
  %269 = vmatmul.mubr.bf16.gmra.mrb[0].mxu0 %v169
  %v270 = vpop.f32.mrb[0].mxu0
  %v271 = vadd.f32 %v61, %v270
  %v272 = vpop.f32.mrb[0].mxu0
  %v273 = vpop.f32.mrb[0].mxu0
  %v274 = vadd.f32 %v61, %v273
  %v275 = vpop.f32.mrb[0].mxu0
  %276 = vmatprep.mubr.bf16.mxu0 0
  %277 = vmatmul.mubr.bf16.gmra.mrb[0].mxu0 %v172
  %v278 = vpop.f32.mrb[0].mxu0
  %v279 = vadd.f32 %v61, %v278
  %v280 = vpop.f32.mrb[0].mxu0
  %v281 = vpop.f32.mrb[0].mxu0
  %v282 = vadd.f32 %v61, %v281
  %v283 = vpop.f32.mrb[0].mxu0
  %284 = vmatprep.mubr.bf16.mxu0 0
  %285 = vmatmul.mubr.bf16.gmra.mrb[0].mxu0 %v175
  %v286 = vpop.f32.mrb[0].mxu0
  %v287 = vadd.f32 %v61, %v286
  %v288 = vpop.f32.mrb[0].mxu0
  %v289 = vpop.f32.mrb[0].mxu0
  %v290 = vadd.f32 %v61, %v289
  %v291 = vpop.f32.mrb[0].mxu0
  %292 = vmatprep.mubr.bf16.mxu0 0
  %293 = vmatmul.mubr.bf16.gmra.mrb[0].mxu0 %v178
  %v294 = vpop.f32.mrb[0].mxu0
  %v295 = vadd.f32 %v61, %v294
  %v296 = vpop.f32.mrb[0].mxu0
  %v297 = vpop.f32.mrb[0].mxu0
  %v298 = vadd.f32 %v61, %v297
  %v299 = vpop.f32.mrb[0].mxu0
  %300 = vmatprep.mubr.bf16.mxu0 0
  %301 = vmatmul.mubr.bf16.gmra.mrb[0].mxu0 %v181
  %v302 = vpop.f32.mrb[0].mxu0
  %v303 = vadd.f32 %v61, %v302
  %v304 = vpop.f32.mrb[0].mxu0
  %v305 = vpop.f32.mrb[0].mxu0
  %v306 = vadd.f32 %v61, %v305
  %v307 = vpop.f32.mrb[0].mxu0
  %308 = vmatprep.mubr.bf16.mxu0 0
  %309 = vmatmul.mubr.bf16.gmra.mrb[0].mxu0 %v184
  %v310 = vpop.f32.mrb[0].mxu0
  %v311 = vadd.f32 %v61, %v310
  %v312 = vpop.f32.mrb[0].mxu0
  %v313 = vpop.f32.mrb[0].mxu0
  %v314 = vadd.f32 %v61, %v313
  %v315 = vpop.f32.mrb[0].mxu0
  %316 = vmatprep.mubr.bf16.mxu0 0
  %317 = vmatmul.mubr.bf16.gmra.mrb[0].mxu0 %v187
  %v318 = vpop.f32.mrb[0].mxu0
  %v319 = vadd.f32 %v61, %v318
  %v320 = vpop.f32.mrb[0].mxu0
  %v321 = vpop.f32.mrb[0].mxu0
  %v322 = vadd.f32 %v61, %v321
  %v323 = vpop.f32.mrb[0].mxu0
  %324 = vmatprep.mubr.bf16.mxu0 0
  %325 = vmatmul.mubr.bf16.gmra.mrb[0].mxu0 %v190
  %v326 = vpop.f32.mrb[0].mxu0
  %v327 = vadd.f32 %v61, %v326
  %v328 = vpop.f32.mrb[0].mxu0
  %v329 = vpop.f32.mrb[0].mxu0
  %v330 = vadd.f32 %v61, %v329
  %v331 = vpop.f32.mrb[0].mxu0
  %332 = vmatprep.mubr.bf16.mxu0 0
  %333 = vmatmul.mubr.bf16.gmra.mrb[0].mxu0 %v193
  %v334 = vpop.f32.mrb[0].mxu0
  %v335 = vadd.f32 %v61, %v334
  %v336 = vpop.f32.mrb[0].mxu0
  %v337 = vpop.f32.mrb[0].mxu0
  %v338 = vadd.f32 %v61, %v337
  %v339 = vpop.f32.mrb[0].mxu0
  %340 = vmatprep.mubr.bf16.mxu0 0
  %341 = vmatmul.mubr.bf16.gmra.mrb[0].mxu0 %v196
  %v342 = vpop.f32.mrb[0].mxu0
  %v343 = vadd.f32 %v61, %v342
  %v344 = vpop.f32.mrb[0].mxu0
  %v345 = vpop.f32.mrb[0].mxu0
  %v346 = vadd.f32 %v61, %v345
  %v347 = vpop.f32.mrb[0].mxu0
  %348 = vmatprep.mubr.bf16.mxu0 0
  %349 = vmatmul.mubr.bf16.gmra.mrb[0].mxu0 %v199
  %v350 = vpop.f32.mrb[0].mxu0
  %v351 = vadd.f32 %v61, %v350
  %v352 = vpop.f32.mrb[0].mxu0
  %v353 = vpop.f32.mrb[0].mxu0
  %v354 = vadd.f32 %v61, %v353
  %v355 = vpop.f32.mrb[0].mxu0
  %356 = vmatprep.mubr.bf16.mxu0 0
  %357 = vmatmul.mubr.bf16.gmra.mrb[0].mxu0 %v202
  %v358 = vpop.f32.mrb[0].mxu0
  %v359 = vadd.f32 %v61, %v358
  %v360 = vpop.f32.mrb[0].mxu0
  %v361 = vpop.f32.mrb[0].mxu0
  %v362 = vadd.f32 %v61, %v361
  %v363 = vpop.f32.mrb[0].mxu0
  %364 = vdwg.mxu0
  %v365 = vmax.f32 %v239, 0.0
  %v366 = vmax.f32 %v242, 0.0
  %v367 = vmax.f32 %v247, 0.0
  %v368 = vmax.f32 %v250, 0.0
  %v369 = vmax.f32 %v255, 0.0
  %v370 = vmax.f32 %v258, 0.0
  %v371 = vmax.f32 %v263, 0.0
  %v372 = vmax.f32 %v266, 0.0
  %v373 = vmax.f32 %v271, 0.0
  %v374 = vmax.f32 %v274, 0.0
  %v375 = vmax.f32 %v279, 0.0
  %v376 = vmax.f32 %v282, 0.0
  %v377 = vmax.f32 %v287, 0.0
  %v378 = vmax.f32 %v290, 0.0
  %v379 = vmax.f32 %v295, 0.0
  %v380 = vmax.f32 %v298, 0.0
  %v381 = vmax.f32 %v303, 0.0
  %v382 = vmax.f32 %v306, 0.0
  %v383 = vmax.f32 %v311, 0.0
  %v384 = vmax.f32 %v314, 0.0
  %v385 = vmax.f32 %v319, 0.0
  %v386 = vmax.f32 %v322, 0.0
  %v387 = vmax.f32 %v327, 0.0
  %v388 = vmax.f32 %v330, 0.0
  %v389 = vmax.f32 %v335, 0.0
  %v390 = vmax.f32 %v338, 0.0
  %v391 = vmax.f32 %v343, 0.0
  %v392 = vmax.f32 %v346, 0.0
  %v393 = vmax.f32 %v351, 0.0
  %v394 = vmax.f32 %v354, 0.0
  %v395 = vmax.f32 %v359, 0.0
  %v396 = vmax.f32 %v362, 0.0
  %v397 = vadd.f32 %v365, %v366
  %v398 = vadd.f32 %v397, %v367
  %v399 = vadd.f32 %v398, %v368
  %v400 = vadd.f32 %v399, %v369
  %v401 = vadd.f32 %v400, %v370
  %v402 = vadd.f32 %v401, %v371
  %v403 = vadd.f32 %v402, %v372
  %v404 = vadd.f32 %v403, %v373
  %v405 = vadd.f32 %v404, %v374
  %v406 = vadd.f32 %v405, %v375
  %v407 = vadd.f32 %v406, %v376
  %v408 = vadd.f32 %v407, %v377
  %v409 = vadd.f32 %v408, %v378
  %v410 = vadd.f32 %v409, %v379
  %v411 = vadd.f32 %v410, %v380
  %v412 = vadd.f32 %v411, %v381
  %v413 = vadd.f32 %v412, %v382
  %v414 = vadd.f32 %v413, %v383
  %v415 = vadd.f32 %v414, %v384
  %v416 = vadd.f32 %v415, %v385
  %v417 = vadd.f32 %v416, %v386
  %v418 = vadd.f32 %v417, %v387
  %v419 = vadd.f32 %v418, %v388
  %v420 = vadd.f32 %v419, %v389
  %v421 = vadd.f32 %v420, %v390
  %v422 = vadd.f32 %v421, %v391
  %v423 = vadd.f32 %v422, %v392
  %v424 = vadd.f32 %v423, %v393
  %v425 = vadd.f32 %v424, %v394
  %v426 = vadd.f32 %v425, %v395
  %v427 = vadd.f32 %v426, %v396
  %v428 = vrot.slane %v427, 4
  %v429 = vadd.f32 %v427, %v428
  %v430 = vrot.slane %v429, 2
  %v431 = vadd.f32 %v429, %v430
  %v432 = vrot.slane %v431, 1
  %v433 = vadd.f32 %v431, %v432
  %s434 = scalar_lea.vmem %s0, 128
  %v435 = vld [vmem:[%s434] sm:$0xf]
  %v436 = vld [vmem:[%s434 + $0x4] sm:$0xf]
  %v437 = vld [vmem:[%s434 + $0x8] sm:$0xf]
  %v438 = vld [vmem:[%s434 + $0xc] sm:$0xf]
  %v439 = vld [vmem:[%s434 + $0x10] sm:$0xf]
  %v440 = vld [vmem:[%s434 + $0x14] sm:$0xf]
  %v441 = vld [vmem:[%s434 + $0x18] sm:$0xf]
  %v442 = vld [vmem:[%s434 + $0x1c] sm:$0xf]
  %v443 = vld [vmem:[%s434 + $0x20] sm:$0xf]
  %v444 = vld [vmem:[%s434 + $0x24] sm:$0xf]
  %v445 = vld [vmem:[%s434 + $0x28] sm:$0xf]
  %v446 = vld [vmem:[%s434 + $0x2c] sm:$0xf]
  %v447 = vld [vmem:[%s434 + $0x30] sm:$0xf]
  %v448 = vld [vmem:[%s434 + $0x34] sm:$0xf]
  %v449 = vld [vmem:[%s434 + $0x38] sm:$0xf]
  %v450 = vld [vmem:[%s434 + $0x3c] sm:$0xf]
  %v451 = vld [vmem:[%s434 + $0x40] sm:$0xf]
  %v452 = vld [vmem:[%s434 + $0x44] sm:$0xf]
  %v453 = vld [vmem:[%s434 + $0x48] sm:$0xf]
  %v454 = vld [vmem:[%s434 + $0x4c] sm:$0xf]
  %v455 = vld [vmem:[%s434 + $0x50] sm:$0xf]
  %v456 = vld [vmem:[%s434 + $0x54] sm:$0xf]
  %v457 = vld [vmem:[%s434 + $0x58] sm:$0xf]
  %v458 = vld [vmem:[%s434 + $0x5c] sm:$0xf]
  %v459 = vld [vmem:[%s434 + $0x60] sm:$0xf]
  %v460 = vld [vmem:[%s434 + $0x64] sm:$0xf]
  %v461 = vld [vmem:[%s434 + $0x68] sm:$0xf]
  %v462 = vld [vmem:[%s434 + $0x6c] sm:$0xf]
  %v463 = vld [vmem:[%s434 + $0x70] sm:$0xf]
  %v464 = vld [vmem:[%s434 + $0x74] sm:$0xf]
  %v465 = vld [vmem:[%s434 + $0x78] sm:$0xf]
  %v466 = vld [vmem:[%s434 + $0x7c] sm:$0xf]
  %v499 = vunpack.c.l.b16 %v435
  %v500 = vunpack.c.l.b16 %v436
  %v501 = vunpack.c.l.b16 %v437
  %v502 = vunpack.c.l.b16 %v438
  %v503 = vunpack.c.l.b16 %v439
  %v504 = vunpack.c.l.b16 %v440
  %v505 = vunpack.c.l.b16 %v441
  %v506 = vunpack.c.l.b16 %v442
  %v507 = vunpack.c.l.b16 %v443
  %v508 = vunpack.c.l.b16 %v444
  %v509 = vunpack.c.l.b16 %v445
  %v510 = vunpack.c.l.b16 %v446
  %v511 = vunpack.c.l.b16 %v447
  %v512 = vunpack.c.l.b16 %v448
  %v513 = vunpack.c.l.b16 %v449
  %v514 = vunpack.c.l.b16 %v450
  %v515 = vunpack.c.l.b16 %v451
  %v516 = vunpack.c.l.b16 %v452
  %v517 = vunpack.c.l.b16 %v453
  %v518 = vunpack.c.l.b16 %v454
  %v519 = vunpack.c.l.b16 %v455
  %v520 = vunpack.c.l.b16 %v456
  %v521 = vunpack.c.l.b16 %v457
  %v522 = vunpack.c.l.b16 %v458
  %v523 = vunpack.c.l.b16 %v459
  %v524 = vunpack.c.l.b16 %v460
  %v525 = vunpack.c.l.b16 %v461
  %v526 = vunpack.c.l.b16 %v462
  %v527 = vunpack.c.l.b16 %v463
  %v528 = vunpack.c.l.b16 %v464
  %v529 = vunpack.c.l.b16 %v465
  %v530 = vunpack.c.l.b16 %v466
  %v531 = vpack.c.b16 %v500, %v499
  %v532 = vpack.c.b16 %v502, %v501
  %v533 = vpack.c.b16 %v504, %v503
  %v534 = vpack.c.b16 %v506, %v505
  %v535 = vpack.c.b16 %v508, %v507
  %v536 = vpack.c.b16 %v510, %v509
  %v537 = vpack.c.b16 %v512, %v511
  %v538 = vpack.c.b16 %v514, %v513
  %v539 = vpack.c.b16 %v516, %v515
  %v540 = vpack.c.b16 %v518, %v517
  %v541 = vpack.c.b16 %v520, %v519
  %v542 = vpack.c.b16 %v522, %v521
  %v543 = vpack.c.b16 %v524, %v523
  %v544 = vpack.c.b16 %v526, %v525
  %v545 = vpack.c.b16 %v528, %v527
  %v546 = vpack.c.b16 %v530, %v529
  %v548 = vsel %vm155, %v531, 0
  %v551 = vsel %vm155, %v532, 0
  %v554 = vsel %vm155, %v533, 0
  %v557 = vsel %vm155, %v534, 0
  %v560 = vsel %vm155, %v535, 0
  %v563 = vsel %vm155, %v536, 0
  %v566 = vsel %vm155, %v537, 0
  %v569 = vsel %vm155, %v538, 0
  %v572 = vsel %vm155, %v539, 0
  %v575 = vsel %vm155, %v540, 0
  %v578 = vsel %vm155, %v541, 0
  %v581 = vsel %vm155, %v542, 0
  %v584 = vsel %vm155, %v543, 0
  %v587 = vsel %vm155, %v544, 0
  %v590 = vsel %vm155, %v545, 0
  %v593 = vsel %vm155, %v546, 0
  %595 = vmatprep.subr.bf16.mxu0 0
  %596 = vmatpush1.bf16.msra.mxu0 %v151
  %597 = vmatprep.subr.bf16.mxu0 0
  %598 = vmatpush1.bf16.msra.mxu0 %v152
  %599 = vmatprep.subr.bf16.mxu0 0
  %600 = vmatpush1.bf16.msra.mxu0 0
  %601 = vmatprep.subr.bf16.mxu0 0
  %602 = vmatpush1.bf16.msra.mxu0 0
  %603 = vmatprep.subr.bf16.mxu0 0
  %604 = vmatpush1.bf16.msra.mxu0 0
  %605 = vmatprep.subr.bf16.mxu0 0
  %606 = vmatpush1.bf16.msra.mxu0 0
  %607 = vmatprep.subr.bf16.mxu0 0
  %608 = vmatpush1.bf16.msra.mxu0 0
  %609 = vmatprep.subr.bf16.mxu0 0
  %610 = vmatpush1.bf16.msra.mxu0 0
  %611 = vmatprep.subr.bf16.mxu0 0
  %612 = vmatpush1.bf16.msra.mxu0 0
  %613 = vmatprep.subr.bf16.mxu0 0
  %614 = vmatpush1.bf16.msra.mxu0 0
  %615 = vmatprep.subr.bf16.mxu0 0
  %616 = vmatpush1.bf16.msra.mxu0 0
  %617 = vmatprep.subr.bf16.mxu0 0
  %618 = vmatpush1.bf16.msra.mxu0 0
  %619 = vmatprep.subr.bf16.mxu0 0
  %620 = vmatpush1.bf16.msra.mxu0 0
  %621 = vmatprep.subr.bf16.mxu0 0
  %622 = vmatpush1.bf16.msra.mxu0 0
  %623 = vmatprep.subr.bf16.mxu0 0
  %624 = vmatpush1.bf16.msra.mxu0 0
  %625 = vmatprep.subr.bf16.mxu0 0
  %626 = vmatpush1.bf16.msra.mxu0 0
  %627 = vmatprep.mubr.bf16.mxu0 0
  %628 = vmatmul.mubr.bf16.gmra.mrb[0].mxu0 %v548
  %v629 = vpop.f32.mrb[0].mxu0
  %v630 = vadd.f32 %v61, %v629
  %v631 = vpop.f32.mrb[0].mxu0
  %v632 = vpop.f32.mrb[0].mxu0
  %v633 = vadd.f32 %v61, %v632
  %v634 = vpop.f32.mrb[0].mxu0
  %635 = vmatprep.mubr.bf16.mxu0 0
  %636 = vmatmul.mubr.bf16.gmra.mrb[0].mxu0 %v551
  %v637 = vpop.f32.mrb[0].mxu0
  %v638 = vadd.f32 %v61, %v637
  %v639 = vpop.f32.mrb[0].mxu0
  %v640 = vpop.f32.mrb[0].mxu0
  %v641 = vadd.f32 %v61, %v640
  %v642 = vpop.f32.mrb[0].mxu0
  %643 = vmatprep.mubr.bf16.mxu0 0
  %644 = vmatmul.mubr.bf16.gmra.mrb[0].mxu0 %v554
  %v645 = vpop.f32.mrb[0].mxu0
  %v646 = vadd.f32 %v61, %v645
  %v647 = vpop.f32.mrb[0].mxu0
  %v648 = vpop.f32.mrb[0].mxu0
  %v649 = vadd.f32 %v61, %v648
  %v650 = vpop.f32.mrb[0].mxu0
  %651 = vmatprep.mubr.bf16.mxu0 0
  %652 = vmatmul.mubr.bf16.gmra.mrb[0].mxu0 %v557
  %v653 = vpop.f32.mrb[0].mxu0
  %v654 = vadd.f32 %v61, %v653
  %v655 = vpop.f32.mrb[0].mxu0
  %v656 = vpop.f32.mrb[0].mxu0
  %v657 = vadd.f32 %v61, %v656
  %v658 = vpop.f32.mrb[0].mxu0
  %659 = vmatprep.mubr.bf16.mxu0 0
  %660 = vmatmul.mubr.bf16.gmra.mrb[0].mxu0 %v560
  %v661 = vpop.f32.mrb[0].mxu0
  %v662 = vadd.f32 %v61, %v661
  %v663 = vpop.f32.mrb[0].mxu0
  %v664 = vpop.f32.mrb[0].mxu0
  %v665 = vadd.f32 %v61, %v664
  %v666 = vpop.f32.mrb[0].mxu0
  %667 = vmatprep.mubr.bf16.mxu0 0
  %668 = vmatmul.mubr.bf16.gmra.mrb[0].mxu0 %v563
  %v669 = vpop.f32.mrb[0].mxu0
  %v670 = vadd.f32 %v61, %v669
  %v671 = vpop.f32.mrb[0].mxu0
  %v672 = vpop.f32.mrb[0].mxu0
  %v673 = vadd.f32 %v61, %v672
  %v674 = vpop.f32.mrb[0].mxu0
  %675 = vmatprep.mubr.bf16.mxu0 0
  %676 = vmatmul.mubr.bf16.gmra.mrb[0].mxu0 %v566
  %v677 = vpop.f32.mrb[0].mxu0
  %v678 = vadd.f32 %v61, %v677
  %v679 = vpop.f32.mrb[0].mxu0
  %v680 = vpop.f32.mrb[0].mxu0
  %v681 = vadd.f32 %v61, %v680
  %v682 = vpop.f32.mrb[0].mxu0
  %683 = vmatprep.mubr.bf16.mxu0 0
  %684 = vmatmul.mubr.bf16.gmra.mrb[0].mxu0 %v569
  %v685 = vpop.f32.mrb[0].mxu0
  %v686 = vadd.f32 %v61, %v685
  %v687 = vpop.f32.mrb[0].mxu0
  %v688 = vpop.f32.mrb[0].mxu0
  %v689 = vadd.f32 %v61, %v688
  %v690 = vpop.f32.mrb[0].mxu0
  %691 = vmatprep.mubr.bf16.mxu0 0
  %692 = vmatmul.mubr.bf16.gmra.mrb[0].mxu0 %v572
  %v693 = vpop.f32.mrb[0].mxu0
  %v694 = vadd.f32 %v61, %v693
  %v695 = vpop.f32.mrb[0].mxu0
  %v696 = vpop.f32.mrb[0].mxu0
  %v697 = vadd.f32 %v61, %v696
  %v698 = vpop.f32.mrb[0].mxu0
  %699 = vmatprep.mubr.bf16.mxu0 0
  %700 = vmatmul.mubr.bf16.gmra.mrb[0].mxu0 %v575
  %v701 = vpop.f32.mrb[0].mxu0
  %v702 = vadd.f32 %v61, %v701
  %v703 = vpop.f32.mrb[0].mxu0
  %v704 = vpop.f32.mrb[0].mxu0
  %v705 = vadd.f32 %v61, %v704
  %v706 = vpop.f32.mrb[0].mxu0
  %707 = vmatprep.mubr.bf16.mxu0 0
  %708 = vmatmul.mubr.bf16.gmra.mrb[0].mxu0 %v578
  %v709 = vpop.f32.mrb[0].mxu0
  %v710 = vadd.f32 %v61, %v709
  %v711 = vpop.f32.mrb[0].mxu0
  %v712 = vpop.f32.mrb[0].mxu0
  %v713 = vadd.f32 %v61, %v712
  %v714 = vpop.f32.mrb[0].mxu0
  %715 = vmatprep.mubr.bf16.mxu0 0
  %716 = vmatmul.mubr.bf16.gmra.mrb[0].mxu0 %v581
  %v717 = vpop.f32.mrb[0].mxu0
  %v718 = vadd.f32 %v61, %v717
  %v719 = vpop.f32.mrb[0].mxu0
  %v720 = vpop.f32.mrb[0].mxu0
  %v721 = vadd.f32 %v61, %v720
  %v722 = vpop.f32.mrb[0].mxu0
  %723 = vmatprep.mubr.bf16.mxu0 0
  %724 = vmatmul.mubr.bf16.gmra.mrb[0].mxu0 %v584
  %v725 = vpop.f32.mrb[0].mxu0
  %v726 = vadd.f32 %v61, %v725
  %v727 = vpop.f32.mrb[0].mxu0
  %v728 = vpop.f32.mrb[0].mxu0
  %v729 = vadd.f32 %v61, %v728
  %v730 = vpop.f32.mrb[0].mxu0
  %731 = vmatprep.mubr.bf16.mxu0 0
  %732 = vmatmul.mubr.bf16.gmra.mrb[0].mxu0 %v587
  %v733 = vpop.f32.mrb[0].mxu0
  %v734 = vadd.f32 %v61, %v733
  %v735 = vpop.f32.mrb[0].mxu0
  %v736 = vpop.f32.mrb[0].mxu0
  %v737 = vadd.f32 %v61, %v736
  %v738 = vpop.f32.mrb[0].mxu0
  %739 = vmatprep.mubr.bf16.mxu0 0
  %740 = vmatmul.mubr.bf16.gmra.mrb[0].mxu0 %v590
  %v741 = vpop.f32.mrb[0].mxu0
  %v742 = vadd.f32 %v61, %v741
  %v743 = vpop.f32.mrb[0].mxu0
  %v744 = vpop.f32.mrb[0].mxu0
  %v745 = vadd.f32 %v61, %v744
  %v746 = vpop.f32.mrb[0].mxu0
  %747 = vmatprep.mubr.bf16.mxu0 0
  %748 = vmatmul.mubr.bf16.gmra.mrb[0].mxu0 %v593
  %v749 = vpop.f32.mrb[0].mxu0
  %v750 = vadd.f32 %v61, %v749
  %v751 = vpop.f32.mrb[0].mxu0
  %v752 = vpop.f32.mrb[0].mxu0
  %v753 = vadd.f32 %v61, %v752
  %v754 = vpop.f32.mrb[0].mxu0
  %755 = vdwg.mxu0
  %v756 = vmax.f32 %v630, 0.0
  %v757 = vmax.f32 %v633, 0.0
  %v758 = vmax.f32 %v638, 0.0
  %v759 = vmax.f32 %v641, 0.0
  %v760 = vmax.f32 %v646, 0.0
  %v761 = vmax.f32 %v649, 0.0
  %v762 = vmax.f32 %v654, 0.0
  %v763 = vmax.f32 %v657, 0.0
  %v764 = vmax.f32 %v662, 0.0
  %v765 = vmax.f32 %v665, 0.0
  %v766 = vmax.f32 %v670, 0.0
  %v767 = vmax.f32 %v673, 0.0
  %v768 = vmax.f32 %v678, 0.0
  %v769 = vmax.f32 %v681, 0.0
  %v770 = vmax.f32 %v686, 0.0
  %v771 = vmax.f32 %v689, 0.0
  %v772 = vmax.f32 %v694, 0.0
  %v773 = vmax.f32 %v697, 0.0
  %v774 = vmax.f32 %v702, 0.0
  %v775 = vmax.f32 %v705, 0.0
  %v776 = vmax.f32 %v710, 0.0
  %v777 = vmax.f32 %v713, 0.0
  %v778 = vmax.f32 %v718, 0.0
  %v779 = vmax.f32 %v721, 0.0
  %v780 = vmax.f32 %v726, 0.0
  %v781 = vmax.f32 %v729, 0.0
  %v782 = vmax.f32 %v734, 0.0
  %v783 = vmax.f32 %v737, 0.0
  %v784 = vmax.f32 %v742, 0.0
  %v785 = vmax.f32 %v745, 0.0
  %v786 = vmax.f32 %v750, 0.0
  %v787 = vmax.f32 %v753, 0.0
  %v788 = vadd.f32 %v756, %v757
  %v789 = vadd.f32 %v788, %v758
  %v790 = vadd.f32 %v789, %v759
  %v791 = vadd.f32 %v790, %v760
  %v792 = vadd.f32 %v791, %v761
  %v793 = vadd.f32 %v792, %v762
  %v794 = vadd.f32 %v793, %v763
  %v795 = vadd.f32 %v794, %v764
  %v796 = vadd.f32 %v795, %v765
  %v797 = vadd.f32 %v796, %v766
  %v798 = vadd.f32 %v797, %v767
  %v799 = vadd.f32 %v798, %v768
  %v800 = vadd.f32 %v799, %v769
  %v801 = vadd.f32 %v800, %v770
  %v802 = vadd.f32 %v801, %v771
  %v803 = vadd.f32 %v802, %v772
  %v804 = vadd.f32 %v803, %v773
  %v805 = vadd.f32 %v804, %v774
  %v806 = vadd.f32 %v805, %v775
  %v807 = vadd.f32 %v806, %v776
  %v808 = vadd.f32 %v807, %v777
  %v809 = vadd.f32 %v808, %v778
  %v810 = vadd.f32 %v809, %v779
  %v811 = vadd.f32 %v810, %v780
  %v812 = vadd.f32 %v811, %v781
  %v813 = vadd.f32 %v812, %v782
  %v814 = vadd.f32 %v813, %v783
  %v815 = vadd.f32 %v814, %v784
  %v816 = vadd.f32 %v815, %v785
  %v817 = vadd.f32 %v816, %v786
  %v818 = vadd.f32 %v817, %v787
  %v819 = vrot.slane %v818, 4
  %v820 = vadd.f32 %v818, %v819
  %v821 = vrot.slane %v820, 2
  %v822 = vadd.f32 %v820, %v821
  %v823 = vrot.slane %v822, 1
  %v824 = vadd.f32 %v822, %v823
  %s825 = scalar_lea.vmem %s0, 256
  %v826 = vld [vmem:[%s825] sm:$0xf]
  %v827 = vld [vmem:[%s825 + $0x4] sm:$0xf]
  %v828 = vld [vmem:[%s825 + $0x8] sm:$0xf]
  %v829 = vld [vmem:[%s825 + $0xc] sm:$0xf]
  %v830 = vld [vmem:[%s825 + $0x10] sm:$0xf]
  %v831 = vld [vmem:[%s825 + $0x14] sm:$0xf]
  %v832 = vld [vmem:[%s825 + $0x18] sm:$0xf]
  %v833 = vld [vmem:[%s825 + $0x1c] sm:$0xf]
  %v834 = vld [vmem:[%s825 + $0x20] sm:$0xf]
  %v835 = vld [vmem:[%s825 + $0x24] sm:$0xf]
  %v836 = vld [vmem:[%s825 + $0x28] sm:$0xf]
  %v837 = vld [vmem:[%s825 + $0x2c] sm:$0xf]
  %v838 = vld [vmem:[%s825 + $0x30] sm:$0xf]
  %v839 = vld [vmem:[%s825 + $0x34] sm:$0xf]
  %v840 = vld [vmem:[%s825 + $0x38] sm:$0xf]
  %v841 = vld [vmem:[%s825 + $0x3c] sm:$0xf]
  %v842 = vld [vmem:[%s825 + $0x40] sm:$0xf]
  %v843 = vld [vmem:[%s825 + $0x44] sm:$0xf]
  %v844 = vld [vmem:[%s825 + $0x48] sm:$0xf]
  %v845 = vld [vmem:[%s825 + $0x4c] sm:$0xf]
  %v846 = vld [vmem:[%s825 + $0x50] sm:$0xf]
  %v847 = vld [vmem:[%s825 + $0x54] sm:$0xf]
  %v848 = vld [vmem:[%s825 + $0x58] sm:$0xf]
  %v849 = vld [vmem:[%s825 + $0x5c] sm:$0xf]
  %v850 = vld [vmem:[%s825 + $0x60] sm:$0xf]
  %v851 = vld [vmem:[%s825 + $0x64] sm:$0xf]
  %v852 = vld [vmem:[%s825 + $0x68] sm:$0xf]
  %v853 = vld [vmem:[%s825 + $0x6c] sm:$0xf]
  %v854 = vld [vmem:[%s825 + $0x70] sm:$0xf]
  %v855 = vld [vmem:[%s825 + $0x74] sm:$0xf]
  %v856 = vld [vmem:[%s825 + $0x78] sm:$0xf]
  %v857 = vld [vmem:[%s825 + $0x7c] sm:$0xf]
  %v890 = vunpack.c.l.b16 %v826
  %v891 = vunpack.c.l.b16 %v827
  %v892 = vunpack.c.l.b16 %v828
  %v893 = vunpack.c.l.b16 %v829
  %v894 = vunpack.c.l.b16 %v830
  %v895 = vunpack.c.l.b16 %v831
  %v896 = vunpack.c.l.b16 %v832
  %v897 = vunpack.c.l.b16 %v833
  %v898 = vunpack.c.l.b16 %v834
  %v899 = vunpack.c.l.b16 %v835
  %v900 = vunpack.c.l.b16 %v836
  %v901 = vunpack.c.l.b16 %v837
  %v902 = vunpack.c.l.b16 %v838
  %v903 = vunpack.c.l.b16 %v839
  %v904 = vunpack.c.l.b16 %v840
  %v905 = vunpack.c.l.b16 %v841
  %v906 = vunpack.c.l.b16 %v842
  %v907 = vunpack.c.l.b16 %v843
  %v908 = vunpack.c.l.b16 %v844
  %v909 = vunpack.c.l.b16 %v845
  %v910 = vunpack.c.l.b16 %v846
  %v911 = vunpack.c.l.b16 %v847
  %v912 = vunpack.c.l.b16 %v848
  %v913 = vunpack.c.l.b16 %v849
  %v914 = vunpack.c.l.b16 %v850
  %v915 = vunpack.c.l.b16 %v851
  %v916 = vunpack.c.l.b16 %v852
  %v917 = vunpack.c.l.b16 %v853
  %v918 = vunpack.c.l.b16 %v854
  %v919 = vunpack.c.l.b16 %v855
  %v920 = vunpack.c.l.b16 %v856
  %v921 = vunpack.c.l.b16 %v857
  %v922 = vpack.c.b16 %v891, %v890
  %v923 = vpack.c.b16 %v893, %v892
  %v924 = vpack.c.b16 %v895, %v894
  %v925 = vpack.c.b16 %v897, %v896
  %v926 = vpack.c.b16 %v899, %v898
  %v927 = vpack.c.b16 %v901, %v900
  %v928 = vpack.c.b16 %v903, %v902
  %v929 = vpack.c.b16 %v905, %v904
  %v930 = vpack.c.b16 %v907, %v906
  %v931 = vpack.c.b16 %v909, %v908
  %v932 = vpack.c.b16 %v911, %v910
  %v933 = vpack.c.b16 %v913, %v912
  %v934 = vpack.c.b16 %v915, %v914
  %v935 = vpack.c.b16 %v917, %v916
  %v936 = vpack.c.b16 %v919, %v918
  %v937 = vpack.c.b16 %v921, %v920
  %v939 = vsel %vm155, %v922, 0
  %v942 = vsel %vm155, %v923, 0
  %v945 = vsel %vm155, %v924, 0
  %v948 = vsel %vm155, %v925, 0
  %v951 = vsel %vm155, %v926, 0
  %v954 = vsel %vm155, %v927, 0
  %v957 = vsel %vm155, %v928, 0
  %v960 = vsel %vm155, %v929, 0
  %v963 = vsel %vm155, %v930, 0
  %v966 = vsel %vm155, %v931, 0
  %v969 = vsel %vm155, %v932, 0
  %v972 = vsel %vm155, %v933, 0
  %v975 = vsel %vm155, %v934, 0
  %v978 = vsel %vm155, %v935, 0
  %v981 = vsel %vm155, %v936, 0
  %v984 = vsel %vm155, %v937, 0
  %986 = vmatprep.subr.bf16.mxu0 0
  %987 = vmatpush1.bf16.msra.mxu0 %v151
  %988 = vmatprep.subr.bf16.mxu0 0
  %989 = vmatpush1.bf16.msra.mxu0 %v152
  %990 = vmatprep.subr.bf16.mxu0 0
  %991 = vmatpush1.bf16.msra.mxu0 0
  %992 = vmatprep.subr.bf16.mxu0 0
  %993 = vmatpush1.bf16.msra.mxu0 0
  %994 = vmatprep.subr.bf16.mxu0 0
  %995 = vmatpush1.bf16.msra.mxu0 0
  %996 = vmatprep.subr.bf16.mxu0 0
  %997 = vmatpush1.bf16.msra.mxu0 0
  %998 = vmatprep.subr.bf16.mxu0 0
  %999 = vmatpush1.bf16.msra.mxu0 0
  %1000 = vmatprep.subr.bf16.mxu0 0
  %1001 = vmatpush1.bf16.msra.mxu0 0
  %1002 = vmatprep.subr.bf16.mxu0 0
  %1003 = vmatpush1.bf16.msra.mxu0 0
  %1004 = vmatprep.subr.bf16.mxu0 0
  %1005 = vmatpush1.bf16.msra.mxu0 0
  %1006 = vmatprep.subr.bf16.mxu0 0
  %1007 = vmatpush1.bf16.msra.mxu0 0
  %1008 = vmatprep.subr.bf16.mxu0 0
  %1009 = vmatpush1.bf16.msra.mxu0 0
  %1010 = vmatprep.subr.bf16.mxu0 0
  %1011 = vmatpush1.bf16.msra.mxu0 0
  %1012 = vmatprep.subr.bf16.mxu0 0
  %1013 = vmatpush1.bf16.msra.mxu0 0
  %1014 = vmatprep.subr.bf16.mxu0 0
  %1015 = vmatpush1.bf16.msra.mxu0 0
  %1016 = vmatprep.subr.bf16.mxu0 0
  %1017 = vmatpush1.bf16.msra.mxu0 0
  %1018 = vmatprep.mubr.bf16.mxu0 0
  %1019 = vmatmul.mubr.bf16.gmra.mrb[0].mxu0 %v939
  %v1020 = vpop.f32.mrb[0].mxu0
  %v1021 = vadd.f32 %v61, %v1020
  %v1022 = vpop.f32.mrb[0].mxu0
  %v1023 = vpop.f32.mrb[0].mxu0
  %v1024 = vadd.f32 %v61, %v1023
  %v1025 = vpop.f32.mrb[0].mxu0
  %1026 = vmatprep.mubr.bf16.mxu0 0
  %1027 = vmatmul.mubr.bf16.gmra.mrb[0].mxu0 %v942
  %v1028 = vpop.f32.mrb[0].mxu0
  %v1029 = vadd.f32 %v61, %v1028
  %v1030 = vpop.f32.mrb[0].mxu0
  %v1031 = vpop.f32.mrb[0].mxu0
  %v1032 = vadd.f32 %v61, %v1031
  %v1033 = vpop.f32.mrb[0].mxu0
  %1034 = vmatprep.mubr.bf16.mxu0 0
  %1035 = vmatmul.mubr.bf16.gmra.mrb[0].mxu0 %v945
  %v1036 = vpop.f32.mrb[0].mxu0
  %v1037 = vadd.f32 %v61, %v1036
  %v1038 = vpop.f32.mrb[0].mxu0
  %v1039 = vpop.f32.mrb[0].mxu0
  %v1040 = vadd.f32 %v61, %v1039
  %v1041 = vpop.f32.mrb[0].mxu0
  %1042 = vmatprep.mubr.bf16.mxu0 0
  %1043 = vmatmul.mubr.bf16.gmra.mrb[0].mxu0 %v948
  %v1044 = vpop.f32.mrb[0].mxu0
  %v1045 = vadd.f32 %v61, %v1044
  %v1046 = vpop.f32.mrb[0].mxu0
  %v1047 = vpop.f32.mrb[0].mxu0
  %v1048 = vadd.f32 %v61, %v1047
  %v1049 = vpop.f32.mrb[0].mxu0
  %1050 = vmatprep.mubr.bf16.mxu0 0
  %1051 = vmatmul.mubr.bf16.gmra.mrb[0].mxu0 %v951
  %v1052 = vpop.f32.mrb[0].mxu0
  %v1053 = vadd.f32 %v61, %v1052
  %v1054 = vpop.f32.mrb[0].mxu0
  %v1055 = vpop.f32.mrb[0].mxu0
  %v1056 = vadd.f32 %v61, %v1055
  %v1057 = vpop.f32.mrb[0].mxu0
  %1058 = vmatprep.mubr.bf16.mxu0 0
  %1059 = vmatmul.mubr.bf16.gmra.mrb[0].mxu0 %v954
  %v1060 = vpop.f32.mrb[0].mxu0
  %v1061 = vadd.f32 %v61, %v1060
  %v1062 = vpop.f32.mrb[0].mxu0
  %v1063 = vpop.f32.mrb[0].mxu0
  %v1064 = vadd.f32 %v61, %v1063
  %v1065 = vpop.f32.mrb[0].mxu0
  %1066 = vmatprep.mubr.bf16.mxu0 0
  %1067 = vmatmul.mubr.bf16.gmra.mrb[0].mxu0 %v957
  %v1068 = vpop.f32.mrb[0].mxu0
  %v1069 = vadd.f32 %v61, %v1068
  %v1070 = vpop.f32.mrb[0].mxu0
  %v1071 = vpop.f32.mrb[0].mxu0
  %v1072 = vadd.f32 %v61, %v1071
  %v1073 = vpop.f32.mrb[0].mxu0
  %1074 = vmatprep.mubr.bf16.mxu0 0
  %1075 = vmatmul.mubr.bf16.gmra.mrb[0].mxu0 %v960
  %v1076 = vpop.f32.mrb[0].mxu0
  %v1077 = vadd.f32 %v61, %v1076
  %v1078 = vpop.f32.mrb[0].mxu0
  %v1079 = vpop.f32.mrb[0].mxu0
  %v1080 = vadd.f32 %v61, %v1079
  %v1081 = vpop.f32.mrb[0].mxu0
  %1082 = vmatprep.mubr.bf16.mxu0 0
  %1083 = vmatmul.mubr.bf16.gmra.mrb[0].mxu0 %v963
  %v1084 = vpop.f32.mrb[0].mxu0
  %v1085 = vadd.f32 %v61, %v1084
  %v1086 = vpop.f32.mrb[0].mxu0
  %v1087 = vpop.f32.mrb[0].mxu0
  %v1088 = vadd.f32 %v61, %v1087
  %v1089 = vpop.f32.mrb[0].mxu0
  %1090 = vmatprep.mubr.bf16.mxu0 0
  %1091 = vmatmul.mubr.bf16.gmra.mrb[0].mxu0 %v966
  %v1092 = vpop.f32.mrb[0].mxu0
  %v1093 = vadd.f32 %v61, %v1092
  %v1094 = vpop.f32.mrb[0].mxu0
  %v1095 = vpop.f32.mrb[0].mxu0
  %v1096 = vadd.f32 %v61, %v1095
  %v1097 = vpop.f32.mrb[0].mxu0
  %1098 = vmatprep.mubr.bf16.mxu0 0
  %1099 = vmatmul.mubr.bf16.gmra.mrb[0].mxu0 %v969
  %v1100 = vpop.f32.mrb[0].mxu0
  %v1101 = vadd.f32 %v61, %v1100
  %v1102 = vpop.f32.mrb[0].mxu0
  %v1103 = vpop.f32.mrb[0].mxu0
  %v1104 = vadd.f32 %v61, %v1103
  %v1105 = vpop.f32.mrb[0].mxu0
  %1106 = vmatprep.mubr.bf16.mxu0 0
  %1107 = vmatmul.mubr.bf16.gmra.mrb[0].mxu0 %v972
  %v1108 = vpop.f32.mrb[0].mxu0
  %v1109 = vadd.f32 %v61, %v1108
  %v1110 = vpop.f32.mrb[0].mxu0
  %v1111 = vpop.f32.mrb[0].mxu0
  %v1112 = vadd.f32 %v61, %v1111
  %v1113 = vpop.f32.mrb[0].mxu0
  %1114 = vmatprep.mubr.bf16.mxu0 0
  %1115 = vmatmul.mubr.bf16.gmra.mrb[0].mxu0 %v975
  %v1116 = vpop.f32.mrb[0].mxu0
  %v1117 = vadd.f32 %v61, %v1116
  %v1118 = vpop.f32.mrb[0].mxu0
  %v1119 = vpop.f32.mrb[0].mxu0
  %v1120 = vadd.f32 %v61, %v1119
  %v1121 = vpop.f32.mrb[0].mxu0
  %1122 = vmatprep.mubr.bf16.mxu0 0
  %1123 = vmatmul.mubr.bf16.gmra.mrb[0].mxu0 %v978
  %v1124 = vpop.f32.mrb[0].mxu0
  %v1125 = vadd.f32 %v61, %v1124
  %v1126 = vpop.f32.mrb[0].mxu0
  %v1127 = vpop.f32.mrb[0].mxu0
  %v1128 = vadd.f32 %v61, %v1127
  %v1129 = vpop.f32.mrb[0].mxu0
  %1130 = vmatprep.mubr.bf16.mxu0 0
  %1131 = vmatmul.mubr.bf16.gmra.mrb[0].mxu0 %v981
  %v1132 = vpop.f32.mrb[0].mxu0
  %v1133 = vadd.f32 %v61, %v1132
  %v1134 = vpop.f32.mrb[0].mxu0
  %v1135 = vpop.f32.mrb[0].mxu0
  %v1136 = vadd.f32 %v61, %v1135
  %v1137 = vpop.f32.mrb[0].mxu0
  %1138 = vmatprep.mubr.bf16.mxu0 0
  %1139 = vmatmul.mubr.bf16.gmra.mrb[0].mxu0 %v984
  %v1140 = vpop.f32.mrb[0].mxu0
  %v1141 = vadd.f32 %v61, %v1140
  %v1142 = vpop.f32.mrb[0].mxu0
  %v1143 = vpop.f32.mrb[0].mxu0
  %v1144 = vadd.f32 %v61, %v1143
  %v1145 = vpop.f32.mrb[0].mxu0
  %1146 = vdwg.mxu0
  %v1147 = vmax.f32 %v1021, 0.0
  %v1148 = vmax.f32 %v1024, 0.0
  %v1149 = vmax.f32 %v1029, 0.0
  %v1150 = vmax.f32 %v1032, 0.0
  %v1151 = vmax.f32 %v1037, 0.0
  %v1152 = vmax.f32 %v1040, 0.0
  %v1153 = vmax.f32 %v1045, 0.0
  %v1154 = vmax.f32 %v1048, 0.0
  %v1155 = vmax.f32 %v1053, 0.0
  %v1156 = vmax.f32 %v1056, 0.0
  %v1157 = vmax.f32 %v1061, 0.0
  %v1158 = vmax.f32 %v1064, 0.0
  %v1159 = vmax.f32 %v1069, 0.0
  %v1160 = vmax.f32 %v1072, 0.0
  %v1161 = vmax.f32 %v1077, 0.0
  %v1162 = vmax.f32 %v1080, 0.0
  %v1163 = vmax.f32 %v1085, 0.0
  %v1164 = vmax.f32 %v1088, 0.0
  %v1165 = vmax.f32 %v1093, 0.0
  %v1166 = vmax.f32 %v1096, 0.0
  %v1167 = vmax.f32 %v1101, 0.0
  %v1168 = vmax.f32 %v1104, 0.0
  %v1169 = vmax.f32 %v1109, 0.0
  %v1170 = vmax.f32 %v1112, 0.0
  %v1171 = vmax.f32 %v1117, 0.0
  %v1172 = vmax.f32 %v1120, 0.0
  %v1173 = vmax.f32 %v1125, 0.0
  %v1174 = vmax.f32 %v1128, 0.0
  %v1175 = vmax.f32 %v1133, 0.0
  %v1176 = vmax.f32 %v1136, 0.0
  %v1177 = vmax.f32 %v1141, 0.0
  %v1178 = vmax.f32 %v1144, 0.0
  %v1179 = vadd.f32 %v1147, %v1148
  %v1180 = vadd.f32 %v1179, %v1149
  %v1181 = vadd.f32 %v1180, %v1150
  %v1182 = vadd.f32 %v1181, %v1151
  %v1183 = vadd.f32 %v1182, %v1152
  %v1184 = vadd.f32 %v1183, %v1153
  %v1185 = vadd.f32 %v1184, %v1154
  %v1186 = vadd.f32 %v1185, %v1155
  %v1187 = vadd.f32 %v1186, %v1156
  %v1188 = vadd.f32 %v1187, %v1157
  %v1189 = vadd.f32 %v1188, %v1158
  %v1190 = vadd.f32 %v1189, %v1159
  %v1191 = vadd.f32 %v1190, %v1160
  %v1192 = vadd.f32 %v1191, %v1161
  %v1193 = vadd.f32 %v1192, %v1162
  %v1194 = vadd.f32 %v1193, %v1163
  %v1195 = vadd.f32 %v1194, %v1164
  %v1196 = vadd.f32 %v1195, %v1165
  %v1197 = vadd.f32 %v1196, %v1166
  %v1198 = vadd.f32 %v1197, %v1167
  %v1199 = vadd.f32 %v1198, %v1168
  %v1200 = vadd.f32 %v1199, %v1169
  %v1201 = vadd.f32 %v1200, %v1170
  %v1202 = vadd.f32 %v1201, %v1171
  %v1203 = vadd.f32 %v1202, %v1172
  %v1204 = vadd.f32 %v1203, %v1173
  %v1205 = vadd.f32 %v1204, %v1174
  %v1206 = vadd.f32 %v1205, %v1175
  %v1207 = vadd.f32 %v1206, %v1176
  %v1208 = vadd.f32 %v1207, %v1177
  %v1209 = vadd.f32 %v1208, %v1178
  %v1210 = vrot.slane %v1209, 4
  %v1211 = vadd.f32 %v1209, %v1210
  %v1212 = vrot.slane %v1211, 2
  %v1213 = vadd.f32 %v1211, %v1212
  %v1214 = vrot.slane %v1213, 1
  %v1215 = vadd.f32 %v1213, %v1214
  %s1216 = scalar_lea.vmem %s0, 384
  %v1217 = vld [vmem:[%s1216] sm:$0xf]
  %v1218 = vld [vmem:[%s1216 + $0x4] sm:$0xf]
  %v1219 = vld [vmem:[%s1216 + $0x8] sm:$0xf]
  %v1220 = vld [vmem:[%s1216 + $0xc] sm:$0xf]
  %v1221 = vld [vmem:[%s1216 + $0x10] sm:$0xf]
  %v1222 = vld [vmem:[%s1216 + $0x14] sm:$0xf]
  %v1223 = vld [vmem:[%s1216 + $0x18] sm:$0xf]
  %v1224 = vld [vmem:[%s1216 + $0x1c] sm:$0xf]
  %v1225 = vld [vmem:[%s1216 + $0x20] sm:$0xf]
  %v1226 = vld [vmem:[%s1216 + $0x24] sm:$0xf]
  %v1227 = vld [vmem:[%s1216 + $0x28] sm:$0xf]
  %v1228 = vld [vmem:[%s1216 + $0x2c] sm:$0xf]
  %v1229 = vld [vmem:[%s1216 + $0x30] sm:$0xf]
  %v1230 = vld [vmem:[%s1216 + $0x34] sm:$0xf]
  %v1231 = vld [vmem:[%s1216 + $0x38] sm:$0xf]
  %v1232 = vld [vmem:[%s1216 + $0x3c] sm:$0xf]
  %v1233 = vld [vmem:[%s1216 + $0x40] sm:$0xf]
  %v1234 = vld [vmem:[%s1216 + $0x44] sm:$0xf]
  %v1235 = vld [vmem:[%s1216 + $0x48] sm:$0xf]
  %v1236 = vld [vmem:[%s1216 + $0x4c] sm:$0xf]
  %v1237 = vld [vmem:[%s1216 + $0x50] sm:$0xf]
  %v1238 = vld [vmem:[%s1216 + $0x54] sm:$0xf]
  %v1239 = vld [vmem:[%s1216 + $0x58] sm:$0xf]
  %v1240 = vld [vmem:[%s1216 + $0x5c] sm:$0xf]
  %v1241 = vld [vmem:[%s1216 + $0x60] sm:$0xf]
  %v1242 = vld [vmem:[%s1216 + $0x64] sm:$0xf]
  %v1243 = vld [vmem:[%s1216 + $0x68] sm:$0xf]
  %v1244 = vld [vmem:[%s1216 + $0x6c] sm:$0xf]
  %v1245 = vld [vmem:[%s1216 + $0x70] sm:$0xf]
  %v1246 = vld [vmem:[%s1216 + $0x74] sm:$0xf]
  %v1247 = vld [vmem:[%s1216 + $0x78] sm:$0xf]
  %v1248 = vld [vmem:[%s1216 + $0x7c] sm:$0xf]
  %v1281 = vunpack.c.l.b16 %v1217
  %v1282 = vunpack.c.l.b16 %v1218
  %v1283 = vunpack.c.l.b16 %v1219
  %v1284 = vunpack.c.l.b16 %v1220
  %v1285 = vunpack.c.l.b16 %v1221
  %v1286 = vunpack.c.l.b16 %v1222
  %v1287 = vunpack.c.l.b16 %v1223
  %v1288 = vunpack.c.l.b16 %v1224
  %v1289 = vunpack.c.l.b16 %v1225
  %v1290 = vunpack.c.l.b16 %v1226
  %v1291 = vunpack.c.l.b16 %v1227
  %v1292 = vunpack.c.l.b16 %v1228
  %v1293 = vunpack.c.l.b16 %v1229
  %v1294 = vunpack.c.l.b16 %v1230
  %v1295 = vunpack.c.l.b16 %v1231
  %v1296 = vunpack.c.l.b16 %v1232
  %v1297 = vunpack.c.l.b16 %v1233
  %v1298 = vunpack.c.l.b16 %v1234
  %v1299 = vunpack.c.l.b16 %v1235
  %v1300 = vunpack.c.l.b16 %v1236
  %v1301 = vunpack.c.l.b16 %v1237
  %v1302 = vunpack.c.l.b16 %v1238
  %v1303 = vunpack.c.l.b16 %v1239
  %v1304 = vunpack.c.l.b16 %v1240
  %v1305 = vunpack.c.l.b16 %v1241
  %v1306 = vunpack.c.l.b16 %v1242
  %v1307 = vunpack.c.l.b16 %v1243
  %v1308 = vunpack.c.l.b16 %v1244
  %v1309 = vunpack.c.l.b16 %v1245
  %v1310 = vunpack.c.l.b16 %v1246
  %v1311 = vunpack.c.l.b16 %v1247
  %v1312 = vunpack.c.l.b16 %v1248
  %v1313 = vpack.c.b16 %v1282, %v1281
  %v1314 = vpack.c.b16 %v1284, %v1283
  %v1315 = vpack.c.b16 %v1286, %v1285
  %v1316 = vpack.c.b16 %v1288, %v1287
  %v1317 = vpack.c.b16 %v1290, %v1289
  %v1318 = vpack.c.b16 %v1292, %v1291
  %v1319 = vpack.c.b16 %v1294, %v1293
  %v1320 = vpack.c.b16 %v1296, %v1295
  %v1321 = vpack.c.b16 %v1298, %v1297
  %v1322 = vpack.c.b16 %v1300, %v1299
  %v1323 = vpack.c.b16 %v1302, %v1301
  %v1324 = vpack.c.b16 %v1304, %v1303
  %v1325 = vpack.c.b16 %v1306, %v1305
  %v1326 = vpack.c.b16 %v1308, %v1307
  %v1327 = vpack.c.b16 %v1310, %v1309
  %v1328 = vpack.c.b16 %v1312, %v1311
  %v1330 = vsel %vm155, %v1313, 0
  %v1333 = vsel %vm155, %v1314, 0
  %v1336 = vsel %vm155, %v1315, 0
  %v1339 = vsel %vm155, %v1316, 0
  %v1342 = vsel %vm155, %v1317, 0
  %v1345 = vsel %vm155, %v1318, 0
  %v1348 = vsel %vm155, %v1319, 0
  %v1351 = vsel %vm155, %v1320, 0
  %v1354 = vsel %vm155, %v1321, 0
  %v1357 = vsel %vm155, %v1322, 0
  %v1360 = vsel %vm155, %v1323, 0
  %v1363 = vsel %vm155, %v1324, 0
  %v1366 = vsel %vm155, %v1325, 0
  %v1369 = vsel %vm155, %v1326, 0
  %v1372 = vsel %vm155, %v1327, 0
  %v1375 = vsel %vm155, %v1328, 0
  %1377 = vmatprep.subr.bf16.mxu0 0
  %1378 = vmatpush1.bf16.msra.mxu0 %v151
  %1379 = vmatprep.subr.bf16.mxu0 0
  %1380 = vmatpush1.bf16.msra.mxu0 %v152
  %1381 = vmatprep.subr.bf16.mxu0 0
  %1382 = vmatpush1.bf16.msra.mxu0 0
  %1383 = vmatprep.subr.bf16.mxu0 0
  %1384 = vmatpush1.bf16.msra.mxu0 0
  %1385 = vmatprep.subr.bf16.mxu0 0
  %1386 = vmatpush1.bf16.msra.mxu0 0
  %1387 = vmatprep.subr.bf16.mxu0 0
  %1388 = vmatpush1.bf16.msra.mxu0 0
  %1389 = vmatprep.subr.bf16.mxu0 0
  %1390 = vmatpush1.bf16.msra.mxu0 0
  %1391 = vmatprep.subr.bf16.mxu0 0
  %1392 = vmatpush1.bf16.msra.mxu0 0
  %1393 = vmatprep.subr.bf16.mxu0 0
  %1394 = vmatpush1.bf16.msra.mxu0 0
  %1395 = vmatprep.subr.bf16.mxu0 0
  %1396 = vmatpush1.bf16.msra.mxu0 0
  %1397 = vmatprep.subr.bf16.mxu0 0
  %1398 = vmatpush1.bf16.msra.mxu0 0
  %1399 = vmatprep.subr.bf16.mxu0 0
  %1400 = vmatpush1.bf16.msra.mxu0 0
  %1401 = vmatprep.subr.bf16.mxu0 0
  %1402 = vmatpush1.bf16.msra.mxu0 0
  %1403 = vmatprep.subr.bf16.mxu0 0
  %1404 = vmatpush1.bf16.msra.mxu0 0
  %1405 = vmatprep.subr.bf16.mxu0 0
  %1406 = vmatpush1.bf16.msra.mxu0 0
  %1407 = vmatprep.subr.bf16.mxu0 0
  %1408 = vmatpush1.bf16.msra.mxu0 0
  %1409 = vmatprep.mubr.bf16.mxu0 0
  %1410 = vmatmul.mubr.bf16.gmra.mrb[0].mxu0 %v1330
  %v1411 = vpop.f32.mrb[0].mxu0
  %v1412 = vadd.f32 %v61, %v1411
  %v1413 = vpop.f32.mrb[0].mxu0
  %v1414 = vpop.f32.mrb[0].mxu0
  %v1415 = vadd.f32 %v61, %v1414
  %v1416 = vpop.f32.mrb[0].mxu0
  %1417 = vmatprep.mubr.bf16.mxu0 0
  %1418 = vmatmul.mubr.bf16.gmra.mrb[0].mxu0 %v1333
  %v1419 = vpop.f32.mrb[0].mxu0
  %v1420 = vadd.f32 %v61, %v1419
  %v1421 = vpop.f32.mrb[0].mxu0
  %v1422 = vpop.f32.mrb[0].mxu0
  %v1423 = vadd.f32 %v61, %v1422
  %v1424 = vpop.f32.mrb[0].mxu0
  %1425 = vmatprep.mubr.bf16.mxu0 0
  %1426 = vmatmul.mubr.bf16.gmra.mrb[0].mxu0 %v1336
  %v1427 = vpop.f32.mrb[0].mxu0
  %v1428 = vadd.f32 %v61, %v1427
  %v1429 = vpop.f32.mrb[0].mxu0
  %v1430 = vpop.f32.mrb[0].mxu0
  %v1431 = vadd.f32 %v61, %v1430
  %v1432 = vpop.f32.mrb[0].mxu0
  %1433 = vmatprep.mubr.bf16.mxu0 0
  %1434 = vmatmul.mubr.bf16.gmra.mrb[0].mxu0 %v1339
  %v1435 = vpop.f32.mrb[0].mxu0
  %v1436 = vadd.f32 %v61, %v1435
  %v1437 = vpop.f32.mrb[0].mxu0
  %v1438 = vpop.f32.mrb[0].mxu0
  %v1439 = vadd.f32 %v61, %v1438
  %v1440 = vpop.f32.mrb[0].mxu0
  %1441 = vmatprep.mubr.bf16.mxu0 0
  %1442 = vmatmul.mubr.bf16.gmra.mrb[0].mxu0 %v1342
  %v1443 = vpop.f32.mrb[0].mxu0
  %v1444 = vadd.f32 %v61, %v1443
  %v1445 = vpop.f32.mrb[0].mxu0
  %v1446 = vpop.f32.mrb[0].mxu0
  %v1447 = vadd.f32 %v61, %v1446
  %v1448 = vpop.f32.mrb[0].mxu0
  %1449 = vmatprep.mubr.bf16.mxu0 0
  %1450 = vmatmul.mubr.bf16.gmra.mrb[0].mxu0 %v1345
  %v1451 = vpop.f32.mrb[0].mxu0
  %v1452 = vadd.f32 %v61, %v1451
  %v1453 = vpop.f32.mrb[0].mxu0
  %v1454 = vpop.f32.mrb[0].mxu0
  %v1455 = vadd.f32 %v61, %v1454
  %v1456 = vpop.f32.mrb[0].mxu0
  %1457 = vmatprep.mubr.bf16.mxu0 0
  %1458 = vmatmul.mubr.bf16.gmra.mrb[0].mxu0 %v1348
  %v1459 = vpop.f32.mrb[0].mxu0
  %v1460 = vadd.f32 %v61, %v1459
  %v1461 = vpop.f32.mrb[0].mxu0
  %v1462 = vpop.f32.mrb[0].mxu0
  %v1463 = vadd.f32 %v61, %v1462
  %v1464 = vpop.f32.mrb[0].mxu0
  %1465 = vmatprep.mubr.bf16.mxu0 0
  %1466 = vmatmul.mubr.bf16.gmra.mrb[0].mxu0 %v1351
  %v1467 = vpop.f32.mrb[0].mxu0
  %v1468 = vadd.f32 %v61, %v1467
  %v1469 = vpop.f32.mrb[0].mxu0
  %v1470 = vpop.f32.mrb[0].mxu0
  %v1471 = vadd.f32 %v61, %v1470
  %v1472 = vpop.f32.mrb[0].mxu0
  %1473 = vmatprep.mubr.bf16.mxu0 0
  %1474 = vmatmul.mubr.bf16.gmra.mrb[0].mxu0 %v1354
  %v1475 = vpop.f32.mrb[0].mxu0
  %v1476 = vadd.f32 %v61, %v1475
  %v1477 = vpop.f32.mrb[0].mxu0
  %v1478 = vpop.f32.mrb[0].mxu0
  %v1479 = vadd.f32 %v61, %v1478
  %v1480 = vpop.f32.mrb[0].mxu0
  %1481 = vmatprep.mubr.bf16.mxu0 0
  %1482 = vmatmul.mubr.bf16.gmra.mrb[0].mxu0 %v1357
  %v1483 = vpop.f32.mrb[0].mxu0
  %v1484 = vadd.f32 %v61, %v1483
  %v1485 = vpop.f32.mrb[0].mxu0
  %v1486 = vpop.f32.mrb[0].mxu0
  %v1487 = vadd.f32 %v61, %v1486
  %v1488 = vpop.f32.mrb[0].mxu0
  %1489 = vmatprep.mubr.bf16.mxu0 0
  %1490 = vmatmul.mubr.bf16.gmra.mrb[0].mxu0 %v1360
  %v1491 = vpop.f32.mrb[0].mxu0
  %v1492 = vadd.f32 %v61, %v1491
  %v1493 = vpop.f32.mrb[0].mxu0
  %v1494 = vpop.f32.mrb[0].mxu0
  %v1495 = vadd.f32 %v61, %v1494
  %v1496 = vpop.f32.mrb[0].mxu0
  %1497 = vmatprep.mubr.bf16.mxu0 0
  %1498 = vmatmul.mubr.bf16.gmra.mrb[0].mxu0 %v1363
  %v1499 = vpop.f32.mrb[0].mxu0
  %v1500 = vadd.f32 %v61, %v1499
  %v1501 = vpop.f32.mrb[0].mxu0
  %v1502 = vpop.f32.mrb[0].mxu0
  %v1503 = vadd.f32 %v61, %v1502
  %v1504 = vpop.f32.mrb[0].mxu0
  %1505 = vmatprep.mubr.bf16.mxu0 0
  %1506 = vmatmul.mubr.bf16.gmra.mrb[0].mxu0 %v1366
  %v1507 = vpop.f32.mrb[0].mxu0
  %v1508 = vadd.f32 %v61, %v1507
  %v1509 = vpop.f32.mrb[0].mxu0
  %v1510 = vpop.f32.mrb[0].mxu0
  %v1511 = vadd.f32 %v61, %v1510
  %v1512 = vpop.f32.mrb[0].mxu0
  %1513 = vmatprep.mubr.bf16.mxu0 0
  %1514 = vmatmul.mubr.bf16.gmra.mrb[0].mxu0 %v1369
  %v1515 = vpop.f32.mrb[0].mxu0
  %v1516 = vadd.f32 %v61, %v1515
  %v1517 = vpop.f32.mrb[0].mxu0
  %v1518 = vpop.f32.mrb[0].mxu0
  %v1519 = vadd.f32 %v61, %v1518
  %v1520 = vpop.f32.mrb[0].mxu0
  %1521 = vmatprep.mubr.bf16.mxu0 0
  %1522 = vmatmul.mubr.bf16.gmra.mrb[0].mxu0 %v1372
  %v1523 = vpop.f32.mrb[0].mxu0
  %v1524 = vadd.f32 %v61, %v1523
  %v1525 = vpop.f32.mrb[0].mxu0
  %v1526 = vpop.f32.mrb[0].mxu0
  %v1527 = vadd.f32 %v61, %v1526
  %v1528 = vpop.f32.mrb[0].mxu0
  %1529 = vmatprep.mubr.bf16.mxu0 0
  %1530 = vmatmul.mubr.bf16.gmra.mrb[0].mxu0 %v1375
  %v1531 = vpop.f32.mrb[0].mxu0
  %v1532 = vadd.f32 %v61, %v1531
  %v1533 = vpop.f32.mrb[0].mxu0
  %v1534 = vpop.f32.mrb[0].mxu0
  %v1535 = vadd.f32 %v61, %v1534
  %v1536 = vpop.f32.mrb[0].mxu0
  %1537 = vdwg.mxu0
  %v1538 = vmax.f32 %v1412, 0.0
  %v1539 = vmax.f32 %v1415, 0.0
  %v1540 = vmax.f32 %v1420, 0.0
  %v1541 = vmax.f32 %v1423, 0.0
  %v1542 = vmax.f32 %v1428, 0.0
  %v1543 = vmax.f32 %v1431, 0.0
  %v1544 = vmax.f32 %v1436, 0.0
  %v1545 = vmax.f32 %v1439, 0.0
  %v1546 = vmax.f32 %v1444, 0.0
  %v1547 = vmax.f32 %v1447, 0.0
  %v1548 = vmax.f32 %v1452, 0.0
  %v1549 = vmax.f32 %v1455, 0.0
  %v1550 = vmax.f32 %v1460, 0.0
  %v1551 = vmax.f32 %v1463, 0.0
  %v1552 = vmax.f32 %v1468, 0.0
  %v1553 = vmax.f32 %v1471, 0.0
  %v1554 = vmax.f32 %v1476, 0.0
  %v1555 = vmax.f32 %v1479, 0.0
  %v1556 = vmax.f32 %v1484, 0.0
  %v1557 = vmax.f32 %v1487, 0.0
  %v1558 = vmax.f32 %v1492, 0.0
  %v1559 = vmax.f32 %v1495, 0.0
  %v1560 = vmax.f32 %v1500, 0.0
  %v1561 = vmax.f32 %v1503, 0.0
  %v1562 = vmax.f32 %v1508, 0.0
  %v1563 = vmax.f32 %v1511, 0.0
  %v1564 = vmax.f32 %v1516, 0.0
  %v1565 = vmax.f32 %v1519, 0.0
  %v1566 = vmax.f32 %v1524, 0.0
  %v1567 = vmax.f32 %v1527, 0.0
  %v1568 = vmax.f32 %v1532, 0.0
  %v1569 = vmax.f32 %v1535, 0.0
  %v1570 = vadd.f32 %v1538, %v1539
  %v1571 = vadd.f32 %v1570, %v1540
  %v1572 = vadd.f32 %v1571, %v1541
  %v1573 = vadd.f32 %v1572, %v1542
  %v1574 = vadd.f32 %v1573, %v1543
  %v1575 = vadd.f32 %v1574, %v1544
  %v1576 = vadd.f32 %v1575, %v1545
  %v1577 = vadd.f32 %v1576, %v1546
  %v1578 = vadd.f32 %v1577, %v1547
  %v1579 = vadd.f32 %v1578, %v1548
  %v1580 = vadd.f32 %v1579, %v1549
  %v1581 = vadd.f32 %v1580, %v1550
  %v1582 = vadd.f32 %v1581, %v1551
  %v1583 = vadd.f32 %v1582, %v1552
  %v1584 = vadd.f32 %v1583, %v1553
  %v1585 = vadd.f32 %v1584, %v1554
  %v1586 = vadd.f32 %v1585, %v1555
  %v1587 = vadd.f32 %v1586, %v1556
  %v1588 = vadd.f32 %v1587, %v1557
  %v1589 = vadd.f32 %v1588, %v1558
  %v1590 = vadd.f32 %v1589, %v1559
  %v1591 = vadd.f32 %v1590, %v1560
  %v1592 = vadd.f32 %v1591, %v1561
  %v1593 = vadd.f32 %v1592, %v1562
  %v1594 = vadd.f32 %v1593, %v1563
  %v1595 = vadd.f32 %v1594, %v1564
  %v1596 = vadd.f32 %v1595, %v1565
  %v1597 = vadd.f32 %v1596, %v1566
  %v1598 = vadd.f32 %v1597, %v1567
  %v1599 = vadd.f32 %v1598, %v1568
  %v1600 = vadd.f32 %v1599, %v1569
  %v1601 = vrot.slane %v1600, 4
  %v1602 = vadd.f32 %v1600, %v1601
  %v1603 = vrot.slane %v1602, 2
  %v1604 = vadd.f32 %v1602, %v1603
  %v1605 = vrot.slane %v1604, 1
  %v1606 = vadd.f32 %v1604, %v1605
  %s1607 = scalar_lea.vmem %s0, 512
  %v1608 = vld [vmem:[%s1607] sm:$0xf]
  %v1609 = vld [vmem:[%s1607 + $0x4] sm:$0xf]
  %v1610 = vld [vmem:[%s1607 + $0x8] sm:$0xf]
  %v1611 = vld [vmem:[%s1607 + $0xc] sm:$0xf]
  %v1612 = vld [vmem:[%s1607 + $0x10] sm:$0xf]
  %v1613 = vld [vmem:[%s1607 + $0x14] sm:$0xf]
  %v1614 = vld [vmem:[%s1607 + $0x18] sm:$0xf]
  %v1615 = vld [vmem:[%s1607 + $0x1c] sm:$0xf]
  %v1616 = vld [vmem:[%s1607 + $0x20] sm:$0xf]
  %v1617 = vld [vmem:[%s1607 + $0x24] sm:$0xf]
  %v1618 = vld [vmem:[%s1607 + $0x28] sm:$0xf]
  %v1619 = vld [vmem:[%s1607 + $0x2c] sm:$0xf]
  %v1620 = vld [vmem:[%s1607 + $0x30] sm:$0xf]
  %v1621 = vld [vmem:[%s1607 + $0x34] sm:$0xf]
  %v1622 = vld [vmem:[%s1607 + $0x38] sm:$0xf]
  %v1623 = vld [vmem:[%s1607 + $0x3c] sm:$0xf]
  %v1624 = vld [vmem:[%s1607 + $0x40] sm:$0xf]
  %v1625 = vld [vmem:[%s1607 + $0x44] sm:$0xf]
  %v1626 = vld [vmem:[%s1607 + $0x48] sm:$0xf]
  %v1627 = vld [vmem:[%s1607 + $0x4c] sm:$0xf]
  %v1628 = vld [vmem:[%s1607 + $0x50] sm:$0xf]
  %v1629 = vld [vmem:[%s1607 + $0x54] sm:$0xf]
  %v1630 = vld [vmem:[%s1607 + $0x58] sm:$0xf]
  %v1631 = vld [vmem:[%s1607 + $0x5c] sm:$0xf]
  %v1632 = vld [vmem:[%s1607 + $0x60] sm:$0xf]
  %v1633 = vld [vmem:[%s1607 + $0x64] sm:$0xf]
  %v1634 = vld [vmem:[%s1607 + $0x68] sm:$0xf]
  %v1635 = vld [vmem:[%s1607 + $0x6c] sm:$0xf]
  %v1636 = vld [vmem:[%s1607 + $0x70] sm:$0xf]
  %v1637 = vld [vmem:[%s1607 + $0x74] sm:$0xf]
  %v1638 = vld [vmem:[%s1607 + $0x78] sm:$0xf]
  %v1639 = vld [vmem:[%s1607 + $0x7c] sm:$0xf]
  %v1672 = vunpack.c.l.b16 %v1608
  %v1673 = vunpack.c.l.b16 %v1609
  %v1674 = vunpack.c.l.b16 %v1610
  %v1675 = vunpack.c.l.b16 %v1611
  %v1676 = vunpack.c.l.b16 %v1612
  %v1677 = vunpack.c.l.b16 %v1613
  %v1678 = vunpack.c.l.b16 %v1614
  %v1679 = vunpack.c.l.b16 %v1615
  %v1680 = vunpack.c.l.b16 %v1616
  %v1681 = vunpack.c.l.b16 %v1617
  %v1682 = vunpack.c.l.b16 %v1618
  %v1683 = vunpack.c.l.b16 %v1619
  %v1684 = vunpack.c.l.b16 %v1620
  %v1685 = vunpack.c.l.b16 %v1621
  %v1686 = vunpack.c.l.b16 %v1622
  %v1687 = vunpack.c.l.b16 %v1623
  %v1688 = vunpack.c.l.b16 %v1624
  %v1689 = vunpack.c.l.b16 %v1625
  %v1690 = vunpack.c.l.b16 %v1626
  %v1691 = vunpack.c.l.b16 %v1627
  %v1692 = vunpack.c.l.b16 %v1628
  %v1693 = vunpack.c.l.b16 %v1629
  %v1694 = vunpack.c.l.b16 %v1630
  %v1695 = vunpack.c.l.b16 %v1631
  %v1696 = vunpack.c.l.b16 %v1632
  %v1697 = vunpack.c.l.b16 %v1633
  %v1698 = vunpack.c.l.b16 %v1634
  %v1699 = vunpack.c.l.b16 %v1635
  %v1700 = vunpack.c.l.b16 %v1636
  %v1701 = vunpack.c.l.b16 %v1637
  %v1702 = vunpack.c.l.b16 %v1638
  %v1703 = vunpack.c.l.b16 %v1639
  %v1704 = vpack.c.b16 %v1673, %v1672
  %v1705 = vpack.c.b16 %v1675, %v1674
  %v1706 = vpack.c.b16 %v1677, %v1676
  %v1707 = vpack.c.b16 %v1679, %v1678
  %v1708 = vpack.c.b16 %v1681, %v1680
  %v1709 = vpack.c.b16 %v1683, %v1682
  %v1710 = vpack.c.b16 %v1685, %v1684
  %v1711 = vpack.c.b16 %v1687, %v1686
  %v1712 = vpack.c.b16 %v1689, %v1688
  %v1713 = vpack.c.b16 %v1691, %v1690
  %v1714 = vpack.c.b16 %v1693, %v1692
  %v1715 = vpack.c.b16 %v1695, %v1694
  %v1716 = vpack.c.b16 %v1697, %v1696
  %v1717 = vpack.c.b16 %v1699, %v1698
  %v1718 = vpack.c.b16 %v1701, %v1700
  %v1719 = vpack.c.b16 %v1703, %v1702
  %v1721 = vsel %vm155, %v1704, 0
  %v1724 = vsel %vm155, %v1705, 0
  %v1727 = vsel %vm155, %v1706, 0
  %v1730 = vsel %vm155, %v1707, 0
  %v1733 = vsel %vm155, %v1708, 0
  %v1736 = vsel %vm155, %v1709, 0
  %v1739 = vsel %vm155, %v1710, 0
  %v1742 = vsel %vm155, %v1711, 0
  %v1745 = vsel %vm155, %v1712, 0
  %v1748 = vsel %vm155, %v1713, 0
  %v1751 = vsel %vm155, %v1714, 0
  %v1754 = vsel %vm155, %v1715, 0
  %v1757 = vsel %vm155, %v1716, 0
  %v1760 = vsel %vm155, %v1717, 0
  %v1763 = vsel %vm155, %v1718, 0
  %v1766 = vsel %vm155, %v1719, 0
  %1768 = vmatprep.subr.bf16.mxu0 0
  %1769 = vmatpush1.bf16.msra.mxu0 %v151
  %1770 = vmatprep.subr.bf16.mxu0 0
  %1771 = vmatpush1.bf16.msra.mxu0 %v152
  %1772 = vmatprep.subr.bf16.mxu0 0
  %1773 = vmatpush1.bf16.msra.mxu0 0
  %1774 = vmatprep.subr.bf16.mxu0 0
  %1775 = vmatpush1.bf16.msra.mxu0 0
  %1776 = vmatprep.subr.bf16.mxu0 0
  %1777 = vmatpush1.bf16.msra.mxu0 0
  %1778 = vmatprep.subr.bf16.mxu0 0
  %1779 = vmatpush1.bf16.msra.mxu0 0
  %1780 = vmatprep.subr.bf16.mxu0 0
  %1781 = vmatpush1.bf16.msra.mxu0 0
  %1782 = vmatprep.subr.bf16.mxu0 0
  %1783 = vmatpush1.bf16.msra.mxu0 0
  %1784 = vmatprep.subr.bf16.mxu0 0
  %1785 = vmatpush1.bf16.msra.mxu0 0
  %1786 = vmatprep.subr.bf16.mxu0 0
  %1787 = vmatpush1.bf16.msra.mxu0 0
  %1788 = vmatprep.subr.bf16.mxu0 0
  %1789 = vmatpush1.bf16.msra.mxu0 0
  %1790 = vmatprep.subr.bf16.mxu0 0
  %1791 = vmatpush1.bf16.msra.mxu0 0
  %1792 = vmatprep.subr.bf16.mxu0 0
  %1793 = vmatpush1.bf16.msra.mxu0 0
  %1794 = vmatprep.subr.bf16.mxu0 0
  %1795 = vmatpush1.bf16.msra.mxu0 0
  %1796 = vmatprep.subr.bf16.mxu0 0
  %1797 = vmatpush1.bf16.msra.mxu0 0
  %1798 = vmatprep.subr.bf16.mxu0 0
  %1799 = vmatpush1.bf16.msra.mxu0 0
  %1800 = vmatprep.mubr.bf16.mxu0 0
  %1801 = vmatmul.mubr.bf16.gmra.mrb[0].mxu0 %v1721
  %v1802 = vpop.f32.mrb[0].mxu0
  %v1803 = vadd.f32 %v61, %v1802
  %v1804 = vpop.f32.mrb[0].mxu0
  %v1805 = vpop.f32.mrb[0].mxu0
  %v1806 = vadd.f32 %v61, %v1805
  %v1807 = vpop.f32.mrb[0].mxu0
  %1808 = vmatprep.mubr.bf16.mxu0 0
  %1809 = vmatmul.mubr.bf16.gmra.mrb[0].mxu0 %v1724
  %v1810 = vpop.f32.mrb[0].mxu0
  %v1811 = vadd.f32 %v61, %v1810
  %v1812 = vpop.f32.mrb[0].mxu0
  %v1813 = vpop.f32.mrb[0].mxu0
  %v1814 = vadd.f32 %v61, %v1813
  %v1815 = vpop.f32.mrb[0].mxu0
  %1816 = vmatprep.mubr.bf16.mxu0 0
  %1817 = vmatmul.mubr.bf16.gmra.mrb[0].mxu0 %v1727
  %v1818 = vpop.f32.mrb[0].mxu0
  %v1819 = vadd.f32 %v61, %v1818
  %v1820 = vpop.f32.mrb[0].mxu0
  %v1821 = vpop.f32.mrb[0].mxu0
  %v1822 = vadd.f32 %v61, %v1821
  %v1823 = vpop.f32.mrb[0].mxu0
  %1824 = vmatprep.mubr.bf16.mxu0 0
  %1825 = vmatmul.mubr.bf16.gmra.mrb[0].mxu0 %v1730
  %v1826 = vpop.f32.mrb[0].mxu0
  %v1827 = vadd.f32 %v61, %v1826
  %v1828 = vpop.f32.mrb[0].mxu0
  %v1829 = vpop.f32.mrb[0].mxu0
  %v1830 = vadd.f32 %v61, %v1829
  %v1831 = vpop.f32.mrb[0].mxu0
  %1832 = vmatprep.mubr.bf16.mxu0 0
  %1833 = vmatmul.mubr.bf16.gmra.mrb[0].mxu0 %v1733
  %v1834 = vpop.f32.mrb[0].mxu0
  %v1835 = vadd.f32 %v61, %v1834
  %v1836 = vpop.f32.mrb[0].mxu0
  %v1837 = vpop.f32.mrb[0].mxu0
  %v1838 = vadd.f32 %v61, %v1837
  %v1839 = vpop.f32.mrb[0].mxu0
  %1840 = vmatprep.mubr.bf16.mxu0 0
  %1841 = vmatmul.mubr.bf16.gmra.mrb[0].mxu0 %v1736
  %v1842 = vpop.f32.mrb[0].mxu0
  %v1843 = vadd.f32 %v61, %v1842
  %v1844 = vpop.f32.mrb[0].mxu0
  %v1845 = vpop.f32.mrb[0].mxu0
  %v1846 = vadd.f32 %v61, %v1845
  %v1847 = vpop.f32.mrb[0].mxu0
  %1848 = vmatprep.mubr.bf16.mxu0 0
  %1849 = vmatmul.mubr.bf16.gmra.mrb[0].mxu0 %v1739
  %v1850 = vpop.f32.mrb[0].mxu0
  %v1851 = vadd.f32 %v61, %v1850
  %v1852 = vpop.f32.mrb[0].mxu0
  %v1853 = vpop.f32.mrb[0].mxu0
  %v1854 = vadd.f32 %v61, %v1853
  %v1855 = vpop.f32.mrb[0].mxu0
  %1856 = vmatprep.mubr.bf16.mxu0 0
  %1857 = vmatmul.mubr.bf16.gmra.mrb[0].mxu0 %v1742
  %v1858 = vpop.f32.mrb[0].mxu0
  %v1859 = vadd.f32 %v61, %v1858
  %v1860 = vpop.f32.mrb[0].mxu0
  %v1861 = vpop.f32.mrb[0].mxu0
  %v1862 = vadd.f32 %v61, %v1861
  %v1863 = vpop.f32.mrb[0].mxu0
  %1864 = vmatprep.mubr.bf16.mxu0 0
  %1865 = vmatmul.mubr.bf16.gmra.mrb[0].mxu0 %v1745
  %v1866 = vpop.f32.mrb[0].mxu0
  %v1867 = vadd.f32 %v61, %v1866
  %v1868 = vpop.f32.mrb[0].mxu0
  %v1869 = vpop.f32.mrb[0].mxu0
  %v1870 = vadd.f32 %v61, %v1869
  %v1871 = vpop.f32.mrb[0].mxu0
  %1872 = vmatprep.mubr.bf16.mxu0 0
  %1873 = vmatmul.mubr.bf16.gmra.mrb[0].mxu0 %v1748
  %v1874 = vpop.f32.mrb[0].mxu0
  %v1875 = vadd.f32 %v61, %v1874
  %v1876 = vpop.f32.mrb[0].mxu0
  %v1877 = vpop.f32.mrb[0].mxu0
  %v1878 = vadd.f32 %v61, %v1877
  %v1879 = vpop.f32.mrb[0].mxu0
  %1880 = vmatprep.mubr.bf16.mxu0 0
  %1881 = vmatmul.mubr.bf16.gmra.mrb[0].mxu0 %v1751
  %v1882 = vpop.f32.mrb[0].mxu0
  %v1883 = vadd.f32 %v61, %v1882
  %v1884 = vpop.f32.mrb[0].mxu0
  %v1885 = vpop.f32.mrb[0].mxu0
  %v1886 = vadd.f32 %v61, %v1885
  %v1887 = vpop.f32.mrb[0].mxu0
  %1888 = vmatprep.mubr.bf16.mxu0 0
  %1889 = vmatmul.mubr.bf16.gmra.mrb[0].mxu0 %v1754
  %v1890 = vpop.f32.mrb[0].mxu0
  %v1891 = vadd.f32 %v61, %v1890
  %v1892 = vpop.f32.mrb[0].mxu0
  %v1893 = vpop.f32.mrb[0].mxu0
  %v1894 = vadd.f32 %v61, %v1893
  %v1895 = vpop.f32.mrb[0].mxu0
  %1896 = vmatprep.mubr.bf16.mxu0 0
  %1897 = vmatmul.mubr.bf16.gmra.mrb[0].mxu0 %v1757
  %v1898 = vpop.f32.mrb[0].mxu0
  %v1899 = vadd.f32 %v61, %v1898
  %v1900 = vpop.f32.mrb[0].mxu0
  %v1901 = vpop.f32.mrb[0].mxu0
  %v1902 = vadd.f32 %v61, %v1901
  %v1903 = vpop.f32.mrb[0].mxu0
  %1904 = vmatprep.mubr.bf16.mxu0 0
  %1905 = vmatmul.mubr.bf16.gmra.mrb[0].mxu0 %v1760
  %v1906 = vpop.f32.mrb[0].mxu0
  %v1907 = vadd.f32 %v61, %v1906
  %v1908 = vpop.f32.mrb[0].mxu0
  %v1909 = vpop.f32.mrb[0].mxu0
  %v1910 = vadd.f32 %v61, %v1909
  %v1911 = vpop.f32.mrb[0].mxu0
  %1912 = vmatprep.mubr.bf16.mxu0 0
  %1913 = vmatmul.mubr.bf16.gmra.mrb[0].mxu0 %v1763
  %v1914 = vpop.f32.mrb[0].mxu0
  %v1915 = vadd.f32 %v61, %v1914
  %v1916 = vpop.f32.mrb[0].mxu0
  %v1917 = vpop.f32.mrb[0].mxu0
  %v1918 = vadd.f32 %v61, %v1917
  %v1919 = vpop.f32.mrb[0].mxu0
  %1920 = vmatprep.mubr.bf16.mxu0 0
  %1921 = vmatmul.mubr.bf16.gmra.mrb[0].mxu0 %v1766
  %v1922 = vpop.f32.mrb[0].mxu0
  %v1923 = vadd.f32 %v61, %v1922
  %v1924 = vpop.f32.mrb[0].mxu0
  %v1925 = vpop.f32.mrb[0].mxu0
  %v1926 = vadd.f32 %v61, %v1925
  %v1927 = vpop.f32.mrb[0].mxu0
  %1928 = vdwg.mxu0
  %v1929 = vmax.f32 %v1803, 0.0
  %v1930 = vmax.f32 %v1806, 0.0
  %v1931 = vmax.f32 %v1811, 0.0
  %v1932 = vmax.f32 %v1814, 0.0
  %v1933 = vmax.f32 %v1819, 0.0
  %v1934 = vmax.f32 %v1822, 0.0
  %v1935 = vmax.f32 %v1827, 0.0
  %v1936 = vmax.f32 %v1830, 0.0
  %v1937 = vmax.f32 %v1835, 0.0
  %v1938 = vmax.f32 %v1838, 0.0
  %v1939 = vmax.f32 %v1843, 0.0
  %v1940 = vmax.f32 %v1846, 0.0
  %v1941 = vmax.f32 %v1851, 0.0
  %v1942 = vmax.f32 %v1854, 0.0
  %v1943 = vmax.f32 %v1859, 0.0
  %v1944 = vmax.f32 %v1862, 0.0
  %v1945 = vmax.f32 %v1867, 0.0
  %v1946 = vmax.f32 %v1870, 0.0
  %v1947 = vmax.f32 %v1875, 0.0
  %v1948 = vmax.f32 %v1878, 0.0
  %v1949 = vmax.f32 %v1883, 0.0
  %v1950 = vmax.f32 %v1886, 0.0
  %v1951 = vmax.f32 %v1891, 0.0
  %v1952 = vmax.f32 %v1894, 0.0
  %v1953 = vmax.f32 %v1899, 0.0
  %v1954 = vmax.f32 %v1902, 0.0
  %v1955 = vmax.f32 %v1907, 0.0
  %v1956 = vmax.f32 %v1910, 0.0
  %v1957 = vmax.f32 %v1915, 0.0
  %v1958 = vmax.f32 %v1918, 0.0
  %v1959 = vmax.f32 %v1923, 0.0
  %v1960 = vmax.f32 %v1926, 0.0
  %v1961 = vadd.f32 %v1929, %v1930
  %v1962 = vadd.f32 %v1961, %v1931
  %v1963 = vadd.f32 %v1962, %v1932
  %v1964 = vadd.f32 %v1963, %v1933
  %v1965 = vadd.f32 %v1964, %v1934
  %v1966 = vadd.f32 %v1965, %v1935
  %v1967 = vadd.f32 %v1966, %v1936
  %v1968 = vadd.f32 %v1967, %v1937
  %v1969 = vadd.f32 %v1968, %v1938
  %v1970 = vadd.f32 %v1969, %v1939
  %v1971 = vadd.f32 %v1970, %v1940
  %v1972 = vadd.f32 %v1971, %v1941
  %v1973 = vadd.f32 %v1972, %v1942
  %v1974 = vadd.f32 %v1973, %v1943
  %v1975 = vadd.f32 %v1974, %v1944
  %v1976 = vadd.f32 %v1975, %v1945
  %v1977 = vadd.f32 %v1976, %v1946
  %v1978 = vadd.f32 %v1977, %v1947
  %v1979 = vadd.f32 %v1978, %v1948
  %v1980 = vadd.f32 %v1979, %v1949
  %v1981 = vadd.f32 %v1980, %v1950
  %v1982 = vadd.f32 %v1981, %v1951
  %v1983 = vadd.f32 %v1982, %v1952
  %v1984 = vadd.f32 %v1983, %v1953
  %v1985 = vadd.f32 %v1984, %v1954
  %v1986 = vadd.f32 %v1985, %v1955
  %v1987 = vadd.f32 %v1986, %v1956
  %v1988 = vadd.f32 %v1987, %v1957
  %v1989 = vadd.f32 %v1988, %v1958
  %v1990 = vadd.f32 %v1989, %v1959
  %v1991 = vadd.f32 %v1990, %v1960
  %v1992 = vrot.slane %v1991, 4
  %v1993 = vadd.f32 %v1991, %v1992
  %v1994 = vrot.slane %v1993, 2
  %v1995 = vadd.f32 %v1993, %v1994
  %v1996 = vrot.slane %v1995, 1
  %v1997 = vadd.f32 %v1995, %v1996
  %s1998 = scalar_lea.vmem %s0, 640
  %v1999 = vld [vmem:[%s1998] sm:$0xf]
  %v2000 = vld [vmem:[%s1998 + $0x4] sm:$0xf]
  %v2001 = vld [vmem:[%s1998 + $0x8] sm:$0xf]
  %v2002 = vld [vmem:[%s1998 + $0xc] sm:$0xf]
  %v2003 = vld [vmem:[%s1998 + $0x10] sm:$0xf]
  %v2004 = vld [vmem:[%s1998 + $0x14] sm:$0xf]
  %v2005 = vld [vmem:[%s1998 + $0x18] sm:$0xf]
  %v2006 = vld [vmem:[%s1998 + $0x1c] sm:$0xf]
  %v2007 = vld [vmem:[%s1998 + $0x20] sm:$0xf]
  %v2008 = vld [vmem:[%s1998 + $0x24] sm:$0xf]
  %v2009 = vld [vmem:[%s1998 + $0x28] sm:$0xf]
  %v2010 = vld [vmem:[%s1998 + $0x2c] sm:$0xf]
  %v2011 = vld [vmem:[%s1998 + $0x30] sm:$0xf]
  %v2012 = vld [vmem:[%s1998 + $0x34] sm:$0xf]
  %v2013 = vld [vmem:[%s1998 + $0x38] sm:$0xf]
  %v2014 = vld [vmem:[%s1998 + $0x3c] sm:$0xf]
  %v2015 = vld [vmem:[%s1998 + $0x40] sm:$0xf]
  %v2016 = vld [vmem:[%s1998 + $0x44] sm:$0xf]
  %v2017 = vld [vmem:[%s1998 + $0x48] sm:$0xf]
  %v2018 = vld [vmem:[%s1998 + $0x4c] sm:$0xf]
  %v2019 = vld [vmem:[%s1998 + $0x50] sm:$0xf]
  %v2020 = vld [vmem:[%s1998 + $0x54] sm:$0xf]
  %v2021 = vld [vmem:[%s1998 + $0x58] sm:$0xf]
  %v2022 = vld [vmem:[%s1998 + $0x5c] sm:$0xf]
  %v2023 = vld [vmem:[%s1998 + $0x60] sm:$0xf]
  %v2024 = vld [vmem:[%s1998 + $0x64] sm:$0xf]
  %v2025 = vld [vmem:[%s1998 + $0x68] sm:$0xf]
  %v2026 = vld [vmem:[%s1998 + $0x6c] sm:$0xf]
  %v2027 = vld [vmem:[%s1998 + $0x70] sm:$0xf]
  %v2028 = vld [vmem:[%s1998 + $0x74] sm:$0xf]
  %v2029 = vld [vmem:[%s1998 + $0x78] sm:$0xf]
  %v2030 = vld [vmem:[%s1998 + $0x7c] sm:$0xf]
  %v2063 = vunpack.c.l.b16 %v1999
  %v2064 = vunpack.c.l.b16 %v2000
  %v2065 = vunpack.c.l.b16 %v2001
  %v2066 = vunpack.c.l.b16 %v2002
  %v2067 = vunpack.c.l.b16 %v2003
  %v2068 = vunpack.c.l.b16 %v2004
  %v2069 = vunpack.c.l.b16 %v2005
  %v2070 = vunpack.c.l.b16 %v2006
  %v2071 = vunpack.c.l.b16 %v2007
  %v2072 = vunpack.c.l.b16 %v2008
  %v2073 = vunpack.c.l.b16 %v2009
  %v2074 = vunpack.c.l.b16 %v2010
  %v2075 = vunpack.c.l.b16 %v2011
  %v2076 = vunpack.c.l.b16 %v2012
  %v2077 = vunpack.c.l.b16 %v2013
  %v2078 = vunpack.c.l.b16 %v2014
  %v2079 = vunpack.c.l.b16 %v2015
  %v2080 = vunpack.c.l.b16 %v2016
  %v2081 = vunpack.c.l.b16 %v2017
  %v2082 = vunpack.c.l.b16 %v2018
  %v2083 = vunpack.c.l.b16 %v2019
  %v2084 = vunpack.c.l.b16 %v2020
  %v2085 = vunpack.c.l.b16 %v2021
  %v2086 = vunpack.c.l.b16 %v2022
  %v2087 = vunpack.c.l.b16 %v2023
  %v2088 = vunpack.c.l.b16 %v2024
  %v2089 = vunpack.c.l.b16 %v2025
  %v2090 = vunpack.c.l.b16 %v2026
  %v2091 = vunpack.c.l.b16 %v2027
  %v2092 = vunpack.c.l.b16 %v2028
  %v2093 = vunpack.c.l.b16 %v2029
  %v2094 = vunpack.c.l.b16 %v2030
  %v2095 = vpack.c.b16 %v2064, %v2063
  %v2096 = vpack.c.b16 %v2066, %v2065
  %v2097 = vpack.c.b16 %v2068, %v2067
  %v2098 = vpack.c.b16 %v2070, %v2069
  %v2099 = vpack.c.b16 %v2072, %v2071
  %v2100 = vpack.c.b16 %v2074, %v2073
  %v2101 = vpack.c.b16 %v2076, %v2075
  %v2102 = vpack.c.b16 %v2078, %v2077
  %v2103 = vpack.c.b16 %v2080, %v2079
  %v2104 = vpack.c.b16 %v2082, %v2081
  %v2105 = vpack.c.b16 %v2084, %v2083
  %v2106 = vpack.c.b16 %v2086, %v2085
  %v2107 = vpack.c.b16 %v2088, %v2087
  %v2108 = vpack.c.b16 %v2090, %v2089
  %v2109 = vpack.c.b16 %v2092, %v2091
  %v2110 = vpack.c.b16 %v2094, %v2093
  %v2112 = vsel %vm155, %v2095, 0
  %v2115 = vsel %vm155, %v2096, 0
  %v2118 = vsel %vm155, %v2097, 0
  %v2121 = vsel %vm155, %v2098, 0
  %v2124 = vsel %vm155, %v2099, 0
  %v2127 = vsel %vm155, %v2100, 0
  %v2130 = vsel %vm155, %v2101, 0
  %v2133 = vsel %vm155, %v2102, 0
  %v2136 = vsel %vm155, %v2103, 0
  %v2139 = vsel %vm155, %v2104, 0
  %v2142 = vsel %vm155, %v2105, 0
  %v2145 = vsel %vm155, %v2106, 0
  %v2148 = vsel %vm155, %v2107, 0
  %v2151 = vsel %vm155, %v2108, 0
  %v2154 = vsel %vm155, %v2109, 0
  %v2157 = vsel %vm155, %v2110, 0
  %2159 = vmatprep.subr.bf16.mxu0 0
  %2160 = vmatpush1.bf16.msra.mxu0 %v151
  %2161 = vmatprep.subr.bf16.mxu0 0
  %2162 = vmatpush1.bf16.msra.mxu0 %v152
  %2163 = vmatprep.subr.bf16.mxu0 0
  %2164 = vmatpush1.bf16.msra.mxu0 0
  %2165 = vmatprep.subr.bf16.mxu0 0
  %2166 = vmatpush1.bf16.msra.mxu0 0
  %2167 = vmatprep.subr.bf16.mxu0 0
  %2168 = vmatpush1.bf16.msra.mxu0 0
  %2169 = vmatprep.subr.bf16.mxu0 0
  %2170 = vmatpush1.bf16.msra.mxu0 0
  %2171 = vmatprep.subr.bf16.mxu0 0
  %2172 = vmatpush1.bf16.msra.mxu0 0
  %2173 = vmatprep.subr.bf16.mxu0 0
  %2174 = vmatpush1.bf16.msra.mxu0 0
  %2175 = vmatprep.subr.bf16.mxu0 0
  %2176 = vmatpush1.bf16.msra.mxu0 0
  %2177 = vmatprep.subr.bf16.mxu0 0
  %2178 = vmatpush1.bf16.msra.mxu0 0
  %2179 = vmatprep.subr.bf16.mxu0 0
  %2180 = vmatpush1.bf16.msra.mxu0 0
  %2181 = vmatprep.subr.bf16.mxu0 0
  %2182 = vmatpush1.bf16.msra.mxu0 0
  %2183 = vmatprep.subr.bf16.mxu0 0
  %2184 = vmatpush1.bf16.msra.mxu0 0
  %2185 = vmatprep.subr.bf16.mxu0 0
  %2186 = vmatpush1.bf16.msra.mxu0 0
  %2187 = vmatprep.subr.bf16.mxu0 0
  %2188 = vmatpush1.bf16.msra.mxu0 0
  %2189 = vmatprep.subr.bf16.mxu0 0
  %2190 = vmatpush1.bf16.msra.mxu0 0
  %2191 = vmatprep.mubr.bf16.mxu0 0
  %2192 = vmatmul.mubr.bf16.gmra.mrb[0].mxu0 %v2112
  %v2193 = vpop.f32.mrb[0].mxu0
  %v2194 = vadd.f32 %v61, %v2193
  %v2195 = vpop.f32.mrb[0].mxu0
  %v2196 = vpop.f32.mrb[0].mxu0
  %v2197 = vadd.f32 %v61, %v2196
  %v2198 = vpop.f32.mrb[0].mxu0
  %2199 = vmatprep.mubr.bf16.mxu0 0
  %2200 = vmatmul.mubr.bf16.gmra.mrb[0].mxu0 %v2115
  %v2201 = vpop.f32.mrb[0].mxu0
  %v2202 = vadd.f32 %v61, %v2201
  %v2203 = vpop.f32.mrb[0].mxu0
  %v2204 = vpop.f32.mrb[0].mxu0
  %v2205 = vadd.f32 %v61, %v2204
  %v2206 = vpop.f32.mrb[0].mxu0
  %2207 = vmatprep.mubr.bf16.mxu0 0
  %2208 = vmatmul.mubr.bf16.gmra.mrb[0].mxu0 %v2118
  %v2209 = vpop.f32.mrb[0].mxu0
  %v2210 = vadd.f32 %v61, %v2209
  %v2211 = vpop.f32.mrb[0].mxu0
  %v2212 = vpop.f32.mrb[0].mxu0
  %v2213 = vadd.f32 %v61, %v2212
  %v2214 = vpop.f32.mrb[0].mxu0
  %2215 = vmatprep.mubr.bf16.mxu0 0
  %2216 = vmatmul.mubr.bf16.gmra.mrb[0].mxu0 %v2121
  %v2217 = vpop.f32.mrb[0].mxu0
  %v2218 = vadd.f32 %v61, %v2217
  %v2219 = vpop.f32.mrb[0].mxu0
  %v2220 = vpop.f32.mrb[0].mxu0
  %v2221 = vadd.f32 %v61, %v2220
  %v2222 = vpop.f32.mrb[0].mxu0
  %2223 = vmatprep.mubr.bf16.mxu0 0
  %2224 = vmatmul.mubr.bf16.gmra.mrb[0].mxu0 %v2124
  %v2225 = vpop.f32.mrb[0].mxu0
  %v2226 = vadd.f32 %v61, %v2225
  %v2227 = vpop.f32.mrb[0].mxu0
  %v2228 = vpop.f32.mrb[0].mxu0
  %v2229 = vadd.f32 %v61, %v2228
  %v2230 = vpop.f32.mrb[0].mxu0
  %2231 = vmatprep.mubr.bf16.mxu0 0
  %2232 = vmatmul.mubr.bf16.gmra.mrb[0].mxu0 %v2127
  %v2233 = vpop.f32.mrb[0].mxu0
  %v2234 = vadd.f32 %v61, %v2233
  %v2235 = vpop.f32.mrb[0].mxu0
  %v2236 = vpop.f32.mrb[0].mxu0
  %v2237 = vadd.f32 %v61, %v2236
  %v2238 = vpop.f32.mrb[0].mxu0
  %2239 = vmatprep.mubr.bf16.mxu0 0
  %2240 = vmatmul.mubr.bf16.gmra.mrb[0].mxu0 %v2130
  %v2241 = vpop.f32.mrb[0].mxu0
  %v2242 = vadd.f32 %v61, %v2241
  %v2243 = vpop.f32.mrb[0].mxu0
  %v2244 = vpop.f32.mrb[0].mxu0
  %v2245 = vadd.f32 %v61, %v2244
  %v2246 = vpop.f32.mrb[0].mxu0
  %2247 = vmatprep.mubr.bf16.mxu0 0
  %2248 = vmatmul.mubr.bf16.gmra.mrb[0].mxu0 %v2133
  %v2249 = vpop.f32.mrb[0].mxu0
  %v2250 = vadd.f32 %v61, %v2249
  %v2251 = vpop.f32.mrb[0].mxu0
  %v2252 = vpop.f32.mrb[0].mxu0
  %v2253 = vadd.f32 %v61, %v2252
  %v2254 = vpop.f32.mrb[0].mxu0
  %2255 = vmatprep.mubr.bf16.mxu0 0
  %2256 = vmatmul.mubr.bf16.gmra.mrb[0].mxu0 %v2136
  %v2257 = vpop.f32.mrb[0].mxu0
  %v2258 = vadd.f32 %v61, %v2257
  %v2259 = vpop.f32.mrb[0].mxu0
  %v2260 = vpop.f32.mrb[0].mxu0
  %v2261 = vadd.f32 %v61, %v2260
  %v2262 = vpop.f32.mrb[0].mxu0
  %2263 = vmatprep.mubr.bf16.mxu0 0
  %2264 = vmatmul.mubr.bf16.gmra.mrb[0].mxu0 %v2139
  %v2265 = vpop.f32.mrb[0].mxu0
  %v2266 = vadd.f32 %v61, %v2265
  %v2267 = vpop.f32.mrb[0].mxu0
  %v2268 = vpop.f32.mrb[0].mxu0
  %v2269 = vadd.f32 %v61, %v2268
  %v2270 = vpop.f32.mrb[0].mxu0
  %2271 = vmatprep.mubr.bf16.mxu0 0
  %2272 = vmatmul.mubr.bf16.gmra.mrb[0].mxu0 %v2142
  %v2273 = vpop.f32.mrb[0].mxu0
  %v2274 = vadd.f32 %v61, %v2273
  %v2275 = vpop.f32.mrb[0].mxu0
  %v2276 = vpop.f32.mrb[0].mxu0
  %v2277 = vadd.f32 %v61, %v2276
  %v2278 = vpop.f32.mrb[0].mxu0
  %2279 = vmatprep.mubr.bf16.mxu0 0
  %2280 = vmatmul.mubr.bf16.gmra.mrb[0].mxu0 %v2145
  %v2281 = vpop.f32.mrb[0].mxu0
  %v2282 = vadd.f32 %v61, %v2281
  %v2283 = vpop.f32.mrb[0].mxu0
  %v2284 = vpop.f32.mrb[0].mxu0
  %v2285 = vadd.f32 %v61, %v2284
  %v2286 = vpop.f32.mrb[0].mxu0
  %2287 = vmatprep.mubr.bf16.mxu0 0
  %2288 = vmatmul.mubr.bf16.gmra.mrb[0].mxu0 %v2148
  %v2289 = vpop.f32.mrb[0].mxu0
  %v2290 = vadd.f32 %v61, %v2289
  %v2291 = vpop.f32.mrb[0].mxu0
  %v2292 = vpop.f32.mrb[0].mxu0
  %v2293 = vadd.f32 %v61, %v2292
  %v2294 = vpop.f32.mrb[0].mxu0
  %2295 = vmatprep.mubr.bf16.mxu0 0
  %2296 = vmatmul.mubr.bf16.gmra.mrb[0].mxu0 %v2151
  %v2297 = vpop.f32.mrb[0].mxu0
  %v2298 = vadd.f32 %v61, %v2297
  %v2299 = vpop.f32.mrb[0].mxu0
  %v2300 = vpop.f32.mrb[0].mxu0
  %v2301 = vadd.f32 %v61, %v2300
  %v2302 = vpop.f32.mrb[0].mxu0
  %2303 = vmatprep.mubr.bf16.mxu0 0
  %2304 = vmatmul.mubr.bf16.gmra.mrb[0].mxu0 %v2154
  %v2305 = vpop.f32.mrb[0].mxu0
  %v2306 = vadd.f32 %v61, %v2305
  %v2307 = vpop.f32.mrb[0].mxu0
  %v2308 = vpop.f32.mrb[0].mxu0
  %v2309 = vadd.f32 %v61, %v2308
  %v2310 = vpop.f32.mrb[0].mxu0
  %2311 = vmatprep.mubr.bf16.mxu0 0
  %2312 = vmatmul.mubr.bf16.gmra.mrb[0].mxu0 %v2157
  %v2313 = vpop.f32.mrb[0].mxu0
  %v2314 = vadd.f32 %v61, %v2313
  %v2315 = vpop.f32.mrb[0].mxu0
  %v2316 = vpop.f32.mrb[0].mxu0
  %v2317 = vadd.f32 %v61, %v2316
  %v2318 = vpop.f32.mrb[0].mxu0
  %2319 = vdwg.mxu0
  %v2320 = vmax.f32 %v2194, 0.0
  %v2321 = vmax.f32 %v2197, 0.0
  %v2322 = vmax.f32 %v2202, 0.0
  %v2323 = vmax.f32 %v2205, 0.0
  %v2324 = vmax.f32 %v2210, 0.0
  %v2325 = vmax.f32 %v2213, 0.0
  %v2326 = vmax.f32 %v2218, 0.0
  %v2327 = vmax.f32 %v2221, 0.0
  %v2328 = vmax.f32 %v2226, 0.0
  %v2329 = vmax.f32 %v2229, 0.0
  %v2330 = vmax.f32 %v2234, 0.0
  %v2331 = vmax.f32 %v2237, 0.0
  %v2332 = vmax.f32 %v2242, 0.0
  %v2333 = vmax.f32 %v2245, 0.0
  %v2334 = vmax.f32 %v2250, 0.0
  %v2335 = vmax.f32 %v2253, 0.0
  %v2336 = vmax.f32 %v2258, 0.0
  %v2337 = vmax.f32 %v2261, 0.0
  %v2338 = vmax.f32 %v2266, 0.0
  %v2339 = vmax.f32 %v2269, 0.0
  %v2340 = vmax.f32 %v2274, 0.0
  %v2341 = vmax.f32 %v2277, 0.0
  %v2342 = vmax.f32 %v2282, 0.0
  %v2343 = vmax.f32 %v2285, 0.0
  %v2344 = vmax.f32 %v2290, 0.0
  %v2345 = vmax.f32 %v2293, 0.0
  %v2346 = vmax.f32 %v2298, 0.0
  %v2347 = vmax.f32 %v2301, 0.0
  %v2348 = vmax.f32 %v2306, 0.0
  %v2349 = vmax.f32 %v2309, 0.0
  %v2350 = vmax.f32 %v2314, 0.0
  %v2351 = vmax.f32 %v2317, 0.0
  %v2352 = vadd.f32 %v2320, %v2321
  %v2353 = vadd.f32 %v2352, %v2322
  %v2354 = vadd.f32 %v2353, %v2323
  %v2355 = vadd.f32 %v2354, %v2324
  %v2356 = vadd.f32 %v2355, %v2325
  %v2357 = vadd.f32 %v2356, %v2326
  %v2358 = vadd.f32 %v2357, %v2327
  %v2359 = vadd.f32 %v2358, %v2328
  %v2360 = vadd.f32 %v2359, %v2329
  %v2361 = vadd.f32 %v2360, %v2330
  %v2362 = vadd.f32 %v2361, %v2331
  %v2363 = vadd.f32 %v2362, %v2332
  %v2364 = vadd.f32 %v2363, %v2333
  %v2365 = vadd.f32 %v2364, %v2334
  %v2366 = vadd.f32 %v2365, %v2335
  %v2367 = vadd.f32 %v2366, %v2336
  %v2368 = vadd.f32 %v2367, %v2337
  %v2369 = vadd.f32 %v2368, %v2338
  %v2370 = vadd.f32 %v2369, %v2339
  %v2371 = vadd.f32 %v2370, %v2340
  %v2372 = vadd.f32 %v2371, %v2341
  %v2373 = vadd.f32 %v2372, %v2342
  %v2374 = vadd.f32 %v2373, %v2343
  %v2375 = vadd.f32 %v2374, %v2344
  %v2376 = vadd.f32 %v2375, %v2345
  %v2377 = vadd.f32 %v2376, %v2346
  %v2378 = vadd.f32 %v2377, %v2347
  %v2379 = vadd.f32 %v2378, %v2348
  %v2380 = vadd.f32 %v2379, %v2349
  %v2381 = vadd.f32 %v2380, %v2350
  %v2382 = vadd.f32 %v2381, %v2351
  %v2383 = vrot.slane %v2382, 4
  %v2384 = vadd.f32 %v2382, %v2383
  %v2385 = vrot.slane %v2384, 2
  %v2386 = vadd.f32 %v2384, %v2385
  %v2387 = vrot.slane %v2386, 1
  %v2388 = vadd.f32 %v2386, %v2387
  %s2389 = scalar_lea.vmem %s0, 768
  %v2390 = vld [vmem:[%s2389] sm:$0xf]
  %v2391 = vld [vmem:[%s2389 + $0x4] sm:$0xf]
  %v2392 = vld [vmem:[%s2389 + $0x8] sm:$0xf]
  %v2393 = vld [vmem:[%s2389 + $0xc] sm:$0xf]
  %v2394 = vld [vmem:[%s2389 + $0x10] sm:$0xf]
  %v2395 = vld [vmem:[%s2389 + $0x14] sm:$0xf]
  %v2396 = vld [vmem:[%s2389 + $0x18] sm:$0xf]
  %v2397 = vld [vmem:[%s2389 + $0x1c] sm:$0xf]
  %v2398 = vld [vmem:[%s2389 + $0x20] sm:$0xf]
  %v2399 = vld [vmem:[%s2389 + $0x24] sm:$0xf]
  %v2400 = vld [vmem:[%s2389 + $0x28] sm:$0xf]
  %v2401 = vld [vmem:[%s2389 + $0x2c] sm:$0xf]
  %v2402 = vld [vmem:[%s2389 + $0x30] sm:$0xf]
  %v2403 = vld [vmem:[%s2389 + $0x34] sm:$0xf]
  %v2404 = vld [vmem:[%s2389 + $0x38] sm:$0xf]
  %v2405 = vld [vmem:[%s2389 + $0x3c] sm:$0xf]
  %v2406 = vld [vmem:[%s2389 + $0x40] sm:$0xf]
  %v2407 = vld [vmem:[%s2389 + $0x44] sm:$0xf]
  %v2408 = vld [vmem:[%s2389 + $0x48] sm:$0xf]
  %v2409 = vld [vmem:[%s2389 + $0x4c] sm:$0xf]
  %v2410 = vld [vmem:[%s2389 + $0x50] sm:$0xf]
  %v2411 = vld [vmem:[%s2389 + $0x54] sm:$0xf]
  %v2412 = vld [vmem:[%s2389 + $0x58] sm:$0xf]
  %v2413 = vld [vmem:[%s2389 + $0x5c] sm:$0xf]
  %v2414 = vld [vmem:[%s2389 + $0x60] sm:$0xf]
  %v2415 = vld [vmem:[%s2389 + $0x64] sm:$0xf]
  %v2416 = vld [vmem:[%s2389 + $0x68] sm:$0xf]
  %v2417 = vld [vmem:[%s2389 + $0x6c] sm:$0xf]
  %v2418 = vld [vmem:[%s2389 + $0x70] sm:$0xf]
  %v2419 = vld [vmem:[%s2389 + $0x74] sm:$0xf]
  %v2420 = vld [vmem:[%s2389 + $0x78] sm:$0xf]
  %v2421 = vld [vmem:[%s2389 + $0x7c] sm:$0xf]
  %v2454 = vunpack.c.l.b16 %v2390
  %v2455 = vunpack.c.l.b16 %v2391
  %v2456 = vunpack.c.l.b16 %v2392
  %v2457 = vunpack.c.l.b16 %v2393
  %v2458 = vunpack.c.l.b16 %v2394
  %v2459 = vunpack.c.l.b16 %v2395
  %v2460 = vunpack.c.l.b16 %v2396
  %v2461 = vunpack.c.l.b16 %v2397
  %v2462 = vunpack.c.l.b16 %v2398
  %v2463 = vunpack.c.l.b16 %v2399
  %v2464 = vunpack.c.l.b16 %v2400
  %v2465 = vunpack.c.l.b16 %v2401
  %v2466 = vunpack.c.l.b16 %v2402
  %v2467 = vunpack.c.l.b16 %v2403
  %v2468 = vunpack.c.l.b16 %v2404
  %v2469 = vunpack.c.l.b16 %v2405
  %v2470 = vunpack.c.l.b16 %v2406
  %v2471 = vunpack.c.l.b16 %v2407
  %v2472 = vunpack.c.l.b16 %v2408
  %v2473 = vunpack.c.l.b16 %v2409
  %v2474 = vunpack.c.l.b16 %v2410
  %v2475 = vunpack.c.l.b16 %v2411
  %v2476 = vunpack.c.l.b16 %v2412
  %v2477 = vunpack.c.l.b16 %v2413
  %v2478 = vunpack.c.l.b16 %v2414
  %v2479 = vunpack.c.l.b16 %v2415
  %v2480 = vunpack.c.l.b16 %v2416
  %v2481 = vunpack.c.l.b16 %v2417
  %v2482 = vunpack.c.l.b16 %v2418
  %v2483 = vunpack.c.l.b16 %v2419
  %v2484 = vunpack.c.l.b16 %v2420
  %v2485 = vunpack.c.l.b16 %v2421
  %v2486 = vpack.c.b16 %v2455, %v2454
  %v2487 = vpack.c.b16 %v2457, %v2456
  %v2488 = vpack.c.b16 %v2459, %v2458
  %v2489 = vpack.c.b16 %v2461, %v2460
  %v2490 = vpack.c.b16 %v2463, %v2462
  %v2491 = vpack.c.b16 %v2465, %v2464
  %v2492 = vpack.c.b16 %v2467, %v2466
  %v2493 = vpack.c.b16 %v2469, %v2468
  %v2494 = vpack.c.b16 %v2471, %v2470
  %v2495 = vpack.c.b16 %v2473, %v2472
  %v2496 = vpack.c.b16 %v2475, %v2474
  %v2497 = vpack.c.b16 %v2477, %v2476
  %v2498 = vpack.c.b16 %v2479, %v2478
  %v2499 = vpack.c.b16 %v2481, %v2480
  %v2500 = vpack.c.b16 %v2483, %v2482
  %v2501 = vpack.c.b16 %v2485, %v2484
  %v2503 = vsel %vm155, %v2486, 0
  %v2506 = vsel %vm155, %v2487, 0
  %v2509 = vsel %vm155, %v2488, 0
  %v2512 = vsel %vm155, %v2489, 0
  %v2515 = vsel %vm155, %v2490, 0
  %v2518 = vsel %vm155, %v2491, 0
  %v2521 = vsel %vm155, %v2492, 0
  %v2524 = vsel %vm155, %v2493, 0
  %v2527 = vsel %vm155, %v2494, 0
  %v2530 = vsel %vm155, %v2495, 0
  %v2533 = vsel %vm155, %v2496, 0
  %v2536 = vsel %vm155, %v2497, 0
  %v2539 = vsel %vm155, %v2498, 0
  %v2542 = vsel %vm155, %v2499, 0
  %v2545 = vsel %vm155, %v2500, 0
  %v2548 = vsel %vm155, %v2501, 0
  %2550 = vmatprep.subr.bf16.mxu0 0
  %2551 = vmatpush1.bf16.msra.mxu0 %v151
  %2552 = vmatprep.subr.bf16.mxu0 0
  %2553 = vmatpush1.bf16.msra.mxu0 %v152
  %2554 = vmatprep.subr.bf16.mxu0 0
  %2555 = vmatpush1.bf16.msra.mxu0 0
  %2556 = vmatprep.subr.bf16.mxu0 0
  %2557 = vmatpush1.bf16.msra.mxu0 0
  %2558 = vmatprep.subr.bf16.mxu0 0
  %2559 = vmatpush1.bf16.msra.mxu0 0
  %2560 = vmatprep.subr.bf16.mxu0 0
  %2561 = vmatpush1.bf16.msra.mxu0 0
  %2562 = vmatprep.subr.bf16.mxu0 0
  %2563 = vmatpush1.bf16.msra.mxu0 0
  %2564 = vmatprep.subr.bf16.mxu0 0
  %2565 = vmatpush1.bf16.msra.mxu0 0
  %2566 = vmatprep.subr.bf16.mxu0 0
  %2567 = vmatpush1.bf16.msra.mxu0 0
  %2568 = vmatprep.subr.bf16.mxu0 0
  %2569 = vmatpush1.bf16.msra.mxu0 0
  %2570 = vmatprep.subr.bf16.mxu0 0
  %2571 = vmatpush1.bf16.msra.mxu0 0
  %2572 = vmatprep.subr.bf16.mxu0 0
  %2573 = vmatpush1.bf16.msra.mxu0 0
  %2574 = vmatprep.subr.bf16.mxu0 0
  %2575 = vmatpush1.bf16.msra.mxu0 0
  %2576 = vmatprep.subr.bf16.mxu0 0
  %2577 = vmatpush1.bf16.msra.mxu0 0
  %2578 = vmatprep.subr.bf16.mxu0 0
  %2579 = vmatpush1.bf16.msra.mxu0 0
  %2580 = vmatprep.subr.bf16.mxu0 0
  %2581 = vmatpush1.bf16.msra.mxu0 0
  %2582 = vmatprep.mubr.bf16.mxu0 0
  %2583 = vmatmul.mubr.bf16.gmra.mrb[0].mxu0 %v2503
  %v2584 = vpop.f32.mrb[0].mxu0
  %v2585 = vadd.f32 %v61, %v2584
  %v2586 = vpop.f32.mrb[0].mxu0
  %v2587 = vpop.f32.mrb[0].mxu0
  %v2588 = vadd.f32 %v61, %v2587
  %v2589 = vpop.f32.mrb[0].mxu0
  %2590 = vmatprep.mubr.bf16.mxu0 0
  %2591 = vmatmul.mubr.bf16.gmra.mrb[0].mxu0 %v2506
  %v2592 = vpop.f32.mrb[0].mxu0
  %v2593 = vadd.f32 %v61, %v2592
  %v2594 = vpop.f32.mrb[0].mxu0
  %v2595 = vpop.f32.mrb[0].mxu0
  %v2596 = vadd.f32 %v61, %v2595
  %v2597 = vpop.f32.mrb[0].mxu0
  %2598 = vmatprep.mubr.bf16.mxu0 0
  %2599 = vmatmul.mubr.bf16.gmra.mrb[0].mxu0 %v2509
  %v2600 = vpop.f32.mrb[0].mxu0
  %v2601 = vadd.f32 %v61, %v2600
  %v2602 = vpop.f32.mrb[0].mxu0
  %v2603 = vpop.f32.mrb[0].mxu0
  %v2604 = vadd.f32 %v61, %v2603
  %v2605 = vpop.f32.mrb[0].mxu0
  %2606 = vmatprep.mubr.bf16.mxu0 0
  %2607 = vmatmul.mubr.bf16.gmra.mrb[0].mxu0 %v2512
  %v2608 = vpop.f32.mrb[0].mxu0
  %v2609 = vadd.f32 %v61, %v2608
  %v2610 = vpop.f32.mrb[0].mxu0
  %v2611 = vpop.f32.mrb[0].mxu0
  %v2612 = vadd.f32 %v61, %v2611
  %v2613 = vpop.f32.mrb[0].mxu0
  %2614 = vmatprep.mubr.bf16.mxu0 0
  %2615 = vmatmul.mubr.bf16.gmra.mrb[0].mxu0 %v2515
  %v2616 = vpop.f32.mrb[0].mxu0
  %v2617 = vadd.f32 %v61, %v2616
  %v2618 = vpop.f32.mrb[0].mxu0
  %v2619 = vpop.f32.mrb[0].mxu0
  %v2620 = vadd.f32 %v61, %v2619
  %v2621 = vpop.f32.mrb[0].mxu0
  %2622 = vmatprep.mubr.bf16.mxu0 0
  %2623 = vmatmul.mubr.bf16.gmra.mrb[0].mxu0 %v2518
  %v2624 = vpop.f32.mrb[0].mxu0
  %v2625 = vadd.f32 %v61, %v2624
  %v2626 = vpop.f32.mrb[0].mxu0
  %v2627 = vpop.f32.mrb[0].mxu0
  %v2628 = vadd.f32 %v61, %v2627
  %v2629 = vpop.f32.mrb[0].mxu0
  %2630 = vmatprep.mubr.bf16.mxu0 0
  %2631 = vmatmul.mubr.bf16.gmra.mrb[0].mxu0 %v2521
  %v2632 = vpop.f32.mrb[0].mxu0
  %v2633 = vadd.f32 %v61, %v2632
  %v2634 = vpop.f32.mrb[0].mxu0
  %v2635 = vpop.f32.mrb[0].mxu0
  %v2636 = vadd.f32 %v61, %v2635
  %v2637 = vpop.f32.mrb[0].mxu0
  %2638 = vmatprep.mubr.bf16.mxu0 0
  %2639 = vmatmul.mubr.bf16.gmra.mrb[0].mxu0 %v2524
  %v2640 = vpop.f32.mrb[0].mxu0
  %v2641 = vadd.f32 %v61, %v2640
  %v2642 = vpop.f32.mrb[0].mxu0
  %v2643 = vpop.f32.mrb[0].mxu0
  %v2644 = vadd.f32 %v61, %v2643
  %v2645 = vpop.f32.mrb[0].mxu0
  %2646 = vmatprep.mubr.bf16.mxu0 0
  %2647 = vmatmul.mubr.bf16.gmra.mrb[0].mxu0 %v2527
  %v2648 = vpop.f32.mrb[0].mxu0
  %v2649 = vadd.f32 %v61, %v2648
  %v2650 = vpop.f32.mrb[0].mxu0
  %v2651 = vpop.f32.mrb[0].mxu0
  %v2652 = vadd.f32 %v61, %v2651
  %v2653 = vpop.f32.mrb[0].mxu0
  %2654 = vmatprep.mubr.bf16.mxu0 0
  %2655 = vmatmul.mubr.bf16.gmra.mrb[0].mxu0 %v2530
  %v2656 = vpop.f32.mrb[0].mxu0
  %v2657 = vadd.f32 %v61, %v2656
  %v2658 = vpop.f32.mrb[0].mxu0
  %v2659 = vpop.f32.mrb[0].mxu0
  %v2660 = vadd.f32 %v61, %v2659
  %v2661 = vpop.f32.mrb[0].mxu0
  %2662 = vmatprep.mubr.bf16.mxu0 0
  %2663 = vmatmul.mubr.bf16.gmra.mrb[0].mxu0 %v2533
  %v2664 = vpop.f32.mrb[0].mxu0
  %v2665 = vadd.f32 %v61, %v2664
  %v2666 = vpop.f32.mrb[0].mxu0
  %v2667 = vpop.f32.mrb[0].mxu0
  %v2668 = vadd.f32 %v61, %v2667
  %v2669 = vpop.f32.mrb[0].mxu0
  %2670 = vmatprep.mubr.bf16.mxu0 0
  %2671 = vmatmul.mubr.bf16.gmra.mrb[0].mxu0 %v2536
  %v2672 = vpop.f32.mrb[0].mxu0
  %v2673 = vadd.f32 %v61, %v2672
  %v2674 = vpop.f32.mrb[0].mxu0
  %v2675 = vpop.f32.mrb[0].mxu0
  %v2676 = vadd.f32 %v61, %v2675
  %v2677 = vpop.f32.mrb[0].mxu0
  %2678 = vmatprep.mubr.bf16.mxu0 0
  %2679 = vmatmul.mubr.bf16.gmra.mrb[0].mxu0 %v2539
  %v2680 = vpop.f32.mrb[0].mxu0
  %v2681 = vadd.f32 %v61, %v2680
  %v2682 = vpop.f32.mrb[0].mxu0
  %v2683 = vpop.f32.mrb[0].mxu0
  %v2684 = vadd.f32 %v61, %v2683
  %v2685 = vpop.f32.mrb[0].mxu0
  %2686 = vmatprep.mubr.bf16.mxu0 0
  %2687 = vmatmul.mubr.bf16.gmra.mrb[0].mxu0 %v2542
  %v2688 = vpop.f32.mrb[0].mxu0
  %v2689 = vadd.f32 %v61, %v2688
  %v2690 = vpop.f32.mrb[0].mxu0
  %v2691 = vpop.f32.mrb[0].mxu0
  %v2692 = vadd.f32 %v61, %v2691
  %v2693 = vpop.f32.mrb[0].mxu0
  %2694 = vmatprep.mubr.bf16.mxu0 0
  %2695 = vmatmul.mubr.bf16.gmra.mrb[0].mxu0 %v2545
  %v2696 = vpop.f32.mrb[0].mxu0
  %v2697 = vadd.f32 %v61, %v2696
  %v2698 = vpop.f32.mrb[0].mxu0
  %v2699 = vpop.f32.mrb[0].mxu0
  %v2700 = vadd.f32 %v61, %v2699
  %v2701 = vpop.f32.mrb[0].mxu0
  %2702 = vmatprep.mubr.bf16.mxu0 0
  %2703 = vmatmul.mubr.bf16.gmra.mrb[0].mxu0 %v2548
  %v2704 = vpop.f32.mrb[0].mxu0
  %v2705 = vadd.f32 %v61, %v2704
  %v2706 = vpop.f32.mrb[0].mxu0
  %v2707 = vpop.f32.mrb[0].mxu0
  %v2708 = vadd.f32 %v61, %v2707
  %v2709 = vpop.f32.mrb[0].mxu0
  %2710 = vdwg.mxu0
  %v2711 = vmax.f32 %v2585, 0.0
  %v2712 = vmax.f32 %v2588, 0.0
  %v2713 = vmax.f32 %v2593, 0.0
  %v2714 = vmax.f32 %v2596, 0.0
  %v2715 = vmax.f32 %v2601, 0.0
  %v2716 = vmax.f32 %v2604, 0.0
  %v2717 = vmax.f32 %v2609, 0.0
  %v2718 = vmax.f32 %v2612, 0.0
  %v2719 = vmax.f32 %v2617, 0.0
  %v2720 = vmax.f32 %v2620, 0.0
  %v2721 = vmax.f32 %v2625, 0.0
  %v2722 = vmax.f32 %v2628, 0.0
  %v2723 = vmax.f32 %v2633, 0.0
  %v2724 = vmax.f32 %v2636, 0.0
  %v2725 = vmax.f32 %v2641, 0.0
  %v2726 = vmax.f32 %v2644, 0.0
  %v2727 = vmax.f32 %v2649, 0.0
  %v2728 = vmax.f32 %v2652, 0.0
  %v2729 = vmax.f32 %v2657, 0.0
  %v2730 = vmax.f32 %v2660, 0.0
  %v2731 = vmax.f32 %v2665, 0.0
  %v2732 = vmax.f32 %v2668, 0.0
  %v2733 = vmax.f32 %v2673, 0.0
  %v2734 = vmax.f32 %v2676, 0.0
  %v2735 = vmax.f32 %v2681, 0.0
  %v2736 = vmax.f32 %v2684, 0.0
  %v2737 = vmax.f32 %v2689, 0.0
  %v2738 = vmax.f32 %v2692, 0.0
  %v2739 = vmax.f32 %v2697, 0.0
  %v2740 = vmax.f32 %v2700, 0.0
  %v2741 = vmax.f32 %v2705, 0.0
  %v2742 = vmax.f32 %v2708, 0.0
  %v2743 = vadd.f32 %v2711, %v2712
  %v2744 = vadd.f32 %v2743, %v2713
  %v2745 = vadd.f32 %v2744, %v2714
  %v2746 = vadd.f32 %v2745, %v2715
  %v2747 = vadd.f32 %v2746, %v2716
  %v2748 = vadd.f32 %v2747, %v2717
  %v2749 = vadd.f32 %v2748, %v2718
  %v2750 = vadd.f32 %v2749, %v2719
  %v2751 = vadd.f32 %v2750, %v2720
  %v2752 = vadd.f32 %v2751, %v2721
  %v2753 = vadd.f32 %v2752, %v2722
  %v2754 = vadd.f32 %v2753, %v2723
  %v2755 = vadd.f32 %v2754, %v2724
  %v2756 = vadd.f32 %v2755, %v2725
  %v2757 = vadd.f32 %v2756, %v2726
  %v2758 = vadd.f32 %v2757, %v2727
  %v2759 = vadd.f32 %v2758, %v2728
  %v2760 = vadd.f32 %v2759, %v2729
  %v2761 = vadd.f32 %v2760, %v2730
  %v2762 = vadd.f32 %v2761, %v2731
  %v2763 = vadd.f32 %v2762, %v2732
  %v2764 = vadd.f32 %v2763, %v2733
  %v2765 = vadd.f32 %v2764, %v2734
  %v2766 = vadd.f32 %v2765, %v2735
  %v2767 = vadd.f32 %v2766, %v2736
  %v2768 = vadd.f32 %v2767, %v2737
  %v2769 = vadd.f32 %v2768, %v2738
  %v2770 = vadd.f32 %v2769, %v2739
  %v2771 = vadd.f32 %v2770, %v2740
  %v2772 = vadd.f32 %v2771, %v2741
  %v2773 = vadd.f32 %v2772, %v2742
  %v2774 = vrot.slane %v2773, 4
  %v2775 = vadd.f32 %v2773, %v2774
  %v2776 = vrot.slane %v2775, 2
  %v2777 = vadd.f32 %v2775, %v2776
  %v2778 = vrot.slane %v2777, 1
  %v2779 = vadd.f32 %v2777, %v2778
  %s2780 = scalar_lea.vmem %s0, 896
  %v2781 = vld [vmem:[%s2780] sm:$0xf]
  %v2782 = vld [vmem:[%s2780 + $0x4] sm:$0xf]
  %v2783 = vld [vmem:[%s2780 + $0x8] sm:$0xf]
  %v2784 = vld [vmem:[%s2780 + $0xc] sm:$0xf]
  %v2785 = vld [vmem:[%s2780 + $0x10] sm:$0xf]
  %v2786 = vld [vmem:[%s2780 + $0x14] sm:$0xf]
  %v2787 = vld [vmem:[%s2780 + $0x18] sm:$0xf]
  %v2788 = vld [vmem:[%s2780 + $0x1c] sm:$0xf]
  %v2789 = vld [vmem:[%s2780 + $0x20] sm:$0xf]
  %v2790 = vld [vmem:[%s2780 + $0x24] sm:$0xf]
  %v2791 = vld [vmem:[%s2780 + $0x28] sm:$0xf]
  %v2792 = vld [vmem:[%s2780 + $0x2c] sm:$0xf]
  %v2793 = vld [vmem:[%s2780 + $0x30] sm:$0xf]
  %v2794 = vld [vmem:[%s2780 + $0x34] sm:$0xf]
  %v2795 = vld [vmem:[%s2780 + $0x38] sm:$0xf]
  %v2796 = vld [vmem:[%s2780 + $0x3c] sm:$0xf]
  %v2797 = vld [vmem:[%s2780 + $0x40] sm:$0xf]
  %v2798 = vld [vmem:[%s2780 + $0x44] sm:$0xf]
  %v2799 = vld [vmem:[%s2780 + $0x48] sm:$0xf]
  %v2800 = vld [vmem:[%s2780 + $0x4c] sm:$0xf]
  %v2801 = vld [vmem:[%s2780 + $0x50] sm:$0xf]
  %v2802 = vld [vmem:[%s2780 + $0x54] sm:$0xf]
  %v2803 = vld [vmem:[%s2780 + $0x58] sm:$0xf]
  %v2804 = vld [vmem:[%s2780 + $0x5c] sm:$0xf]
  %v2805 = vld [vmem:[%s2780 + $0x60] sm:$0xf]
  %v2806 = vld [vmem:[%s2780 + $0x64] sm:$0xf]
  %v2807 = vld [vmem:[%s2780 + $0x68] sm:$0xf]
  %v2808 = vld [vmem:[%s2780 + $0x6c] sm:$0xf]
  %v2809 = vld [vmem:[%s2780 + $0x70] sm:$0xf]
  %v2810 = vld [vmem:[%s2780 + $0x74] sm:$0xf]
  %v2811 = vld [vmem:[%s2780 + $0x78] sm:$0xf]
  %v2812 = vld [vmem:[%s2780 + $0x7c] sm:$0xf]
  %v2845 = vunpack.c.l.b16 %v2781
  %v2846 = vunpack.c.l.b16 %v2782
  %v2847 = vunpack.c.l.b16 %v2783
  %v2848 = vunpack.c.l.b16 %v2784
  %v2849 = vunpack.c.l.b16 %v2785
  %v2850 = vunpack.c.l.b16 %v2786
  %v2851 = vunpack.c.l.b16 %v2787
  %v2852 = vunpack.c.l.b16 %v2788
  %v2853 = vunpack.c.l.b16 %v2789
  %v2854 = vunpack.c.l.b16 %v2790
  %v2855 = vunpack.c.l.b16 %v2791
  %v2856 = vunpack.c.l.b16 %v2792
  %v2857 = vunpack.c.l.b16 %v2793
  %v2858 = vunpack.c.l.b16 %v2794
  %v2859 = vunpack.c.l.b16 %v2795
  %v2860 = vunpack.c.l.b16 %v2796
  %v2861 = vunpack.c.l.b16 %v2797
  %v2862 = vunpack.c.l.b16 %v2798
  %v2863 = vunpack.c.l.b16 %v2799
  %v2864 = vunpack.c.l.b16 %v2800
  %v2865 = vunpack.c.l.b16 %v2801
  %v2866 = vunpack.c.l.b16 %v2802
  %v2867 = vunpack.c.l.b16 %v2803
  %v2868 = vunpack.c.l.b16 %v2804
  %v2869 = vunpack.c.l.b16 %v2805
  %v2870 = vunpack.c.l.b16 %v2806
  %v2871 = vunpack.c.l.b16 %v2807
  %v2872 = vunpack.c.l.b16 %v2808
  %v2873 = vunpack.c.l.b16 %v2809
  %v2874 = vunpack.c.l.b16 %v2810
  %v2875 = vunpack.c.l.b16 %v2811
  %v2876 = vunpack.c.l.b16 %v2812
  %v2877 = vpack.c.b16 %v2846, %v2845
  %v2878 = vpack.c.b16 %v2848, %v2847
  %v2879 = vpack.c.b16 %v2850, %v2849
  %v2880 = vpack.c.b16 %v2852, %v2851
  %v2881 = vpack.c.b16 %v2854, %v2853
  %v2882 = vpack.c.b16 %v2856, %v2855
  %v2883 = vpack.c.b16 %v2858, %v2857
  %v2884 = vpack.c.b16 %v2860, %v2859
  %v2885 = vpack.c.b16 %v2862, %v2861
  %v2886 = vpack.c.b16 %v2864, %v2863
  %v2887 = vpack.c.b16 %v2866, %v2865
  %v2888 = vpack.c.b16 %v2868, %v2867
  %v2889 = vpack.c.b16 %v2870, %v2869
  %v2890 = vpack.c.b16 %v2872, %v2871
  %v2891 = vpack.c.b16 %v2874, %v2873
  %v2892 = vpack.c.b16 %v2876, %v2875
  %v2894 = vsel %vm155, %v2877, 0
  %v2897 = vsel %vm155, %v2878, 0
  %v2900 = vsel %vm155, %v2879, 0
  %v2903 = vsel %vm155, %v2880, 0
  %v2906 = vsel %vm155, %v2881, 0
  %v2909 = vsel %vm155, %v2882, 0
  %v2912 = vsel %vm155, %v2883, 0
  %v2915 = vsel %vm155, %v2884, 0
  %v2918 = vsel %vm155, %v2885, 0
  %v2921 = vsel %vm155, %v2886, 0
  %v2924 = vsel %vm155, %v2887, 0
  %v2927 = vsel %vm155, %v2888, 0
  %v2930 = vsel %vm155, %v2889, 0
  %v2933 = vsel %vm155, %v2890, 0
  %v2936 = vsel %vm155, %v2891, 0
  %v2939 = vsel %vm155, %v2892, 0
  %2941 = vmatprep.subr.bf16.mxu0 0
  %2942 = vmatpush1.bf16.msra.mxu0 %v151
  %2943 = vmatprep.subr.bf16.mxu0 0
  %2944 = vmatpush1.bf16.msra.mxu0 %v152
  %2945 = vmatprep.subr.bf16.mxu0 0
  %2946 = vmatpush1.bf16.msra.mxu0 0
  %2947 = vmatprep.subr.bf16.mxu0 0
  %2948 = vmatpush1.bf16.msra.mxu0 0
  %2949 = vmatprep.subr.bf16.mxu0 0
  %2950 = vmatpush1.bf16.msra.mxu0 0
  %2951 = vmatprep.subr.bf16.mxu0 0
  %2952 = vmatpush1.bf16.msra.mxu0 0
  %2953 = vmatprep.subr.bf16.mxu0 0
  %2954 = vmatpush1.bf16.msra.mxu0 0
  %2955 = vmatprep.subr.bf16.mxu0 0
  %2956 = vmatpush1.bf16.msra.mxu0 0
  %2957 = vmatprep.subr.bf16.mxu0 0
  %2958 = vmatpush1.bf16.msra.mxu0 0
  %2959 = vmatprep.subr.bf16.mxu0 0
  %2960 = vmatpush1.bf16.msra.mxu0 0
  %2961 = vmatprep.subr.bf16.mxu0 0
  %2962 = vmatpush1.bf16.msra.mxu0 0
  %2963 = vmatprep.subr.bf16.mxu0 0
  %2964 = vmatpush1.bf16.msra.mxu0 0
  %2965 = vmatprep.subr.bf16.mxu0 0
  %2966 = vmatpush1.bf16.msra.mxu0 0
  %2967 = vmatprep.subr.bf16.mxu0 0
  %2968 = vmatpush1.bf16.msra.mxu0 0
  %2969 = vmatprep.subr.bf16.mxu0 0
  %2970 = vmatpush1.bf16.msra.mxu0 0
  %2971 = vmatprep.subr.bf16.mxu0 0
  %2972 = vmatpush1.bf16.msra.mxu0 0
  %2973 = vmatprep.mubr.bf16.mxu0 0
  %2974 = vmatmul.mubr.bf16.gmra.mrb[0].mxu0 %v2894
  %v2975 = vpop.f32.mrb[0].mxu0
  %v2976 = vadd.f32 %v61, %v2975
  %v2977 = vpop.f32.mrb[0].mxu0
  %v2978 = vpop.f32.mrb[0].mxu0
  %v2979 = vadd.f32 %v61, %v2978
  %v2980 = vpop.f32.mrb[0].mxu0
  %2981 = vmatprep.mubr.bf16.mxu0 0
  %2982 = vmatmul.mubr.bf16.gmra.mrb[0].mxu0 %v2897
  %v2983 = vpop.f32.mrb[0].mxu0
  %v2984 = vadd.f32 %v61, %v2983
  %v2985 = vpop.f32.mrb[0].mxu0
  %v2986 = vpop.f32.mrb[0].mxu0
  %v2987 = vadd.f32 %v61, %v2986
  %v2988 = vpop.f32.mrb[0].mxu0
  %2989 = vmatprep.mubr.bf16.mxu0 0
  %2990 = vmatmul.mubr.bf16.gmra.mrb[0].mxu0 %v2900
  %v2991 = vpop.f32.mrb[0].mxu0
  %v2992 = vadd.f32 %v61, %v2991
  %v2993 = vpop.f32.mrb[0].mxu0
  %v2994 = vpop.f32.mrb[0].mxu0
  %v2995 = vadd.f32 %v61, %v2994
  %v2996 = vpop.f32.mrb[0].mxu0
  %2997 = vmatprep.mubr.bf16.mxu0 0
  %2998 = vmatmul.mubr.bf16.gmra.mrb[0].mxu0 %v2903
  %v2999 = vpop.f32.mrb[0].mxu0
  %v3000 = vadd.f32 %v61, %v2999
  %v3001 = vpop.f32.mrb[0].mxu0
  %v3002 = vpop.f32.mrb[0].mxu0
  %v3003 = vadd.f32 %v61, %v3002
  %v3004 = vpop.f32.mrb[0].mxu0
  %3005 = vmatprep.mubr.bf16.mxu0 0
  %3006 = vmatmul.mubr.bf16.gmra.mrb[0].mxu0 %v2906
  %v3007 = vpop.f32.mrb[0].mxu0
  %v3008 = vadd.f32 %v61, %v3007
  %v3009 = vpop.f32.mrb[0].mxu0
  %v3010 = vpop.f32.mrb[0].mxu0
  %v3011 = vadd.f32 %v61, %v3010
  %v3012 = vpop.f32.mrb[0].mxu0
  %3013 = vmatprep.mubr.bf16.mxu0 0
  %3014 = vmatmul.mubr.bf16.gmra.mrb[0].mxu0 %v2909
  %v3015 = vpop.f32.mrb[0].mxu0
  %v3016 = vadd.f32 %v61, %v3015
  %v3017 = vpop.f32.mrb[0].mxu0
  %v3018 = vpop.f32.mrb[0].mxu0
  %v3019 = vadd.f32 %v61, %v3018
  %v3020 = vpop.f32.mrb[0].mxu0
  %3021 = vmatprep.mubr.bf16.mxu0 0
  %3022 = vmatmul.mubr.bf16.gmra.mrb[0].mxu0 %v2912
  %v3023 = vpop.f32.mrb[0].mxu0
  %v3024 = vadd.f32 %v61, %v3023
  %v3025 = vpop.f32.mrb[0].mxu0
  %v3026 = vpop.f32.mrb[0].mxu0
  %v3027 = vadd.f32 %v61, %v3026
  %v3028 = vpop.f32.mrb[0].mxu0
  %3029 = vmatprep.mubr.bf16.mxu0 0
  %3030 = vmatmul.mubr.bf16.gmra.mrb[0].mxu0 %v2915
  %v3031 = vpop.f32.mrb[0].mxu0
  %v3032 = vadd.f32 %v61, %v3031
  %v3033 = vpop.f32.mrb[0].mxu0
  %v3034 = vpop.f32.mrb[0].mxu0
  %v3035 = vadd.f32 %v61, %v3034
  %v3036 = vpop.f32.mrb[0].mxu0
  %3037 = vmatprep.mubr.bf16.mxu0 0
  %3038 = vmatmul.mubr.bf16.gmra.mrb[0].mxu0 %v2918
  %v3039 = vpop.f32.mrb[0].mxu0
  %v3040 = vadd.f32 %v61, %v3039
  %v3041 = vpop.f32.mrb[0].mxu0
  %v3042 = vpop.f32.mrb[0].mxu0
  %v3043 = vadd.f32 %v61, %v3042
  %v3044 = vpop.f32.mrb[0].mxu0
  %3045 = vmatprep.mubr.bf16.mxu0 0
  %3046 = vmatmul.mubr.bf16.gmra.mrb[0].mxu0 %v2921
  %v3047 = vpop.f32.mrb[0].mxu0
  %v3048 = vadd.f32 %v61, %v3047
  %v3049 = vpop.f32.mrb[0].mxu0
  %v3050 = vpop.f32.mrb[0].mxu0
  %v3051 = vadd.f32 %v61, %v3050
  %v3052 = vpop.f32.mrb[0].mxu0
  %3053 = vmatprep.mubr.bf16.mxu0 0
  %3054 = vmatmul.mubr.bf16.gmra.mrb[0].mxu0 %v2924
  %v3055 = vpop.f32.mrb[0].mxu0
  %v3056 = vadd.f32 %v61, %v3055
  %v3057 = vpop.f32.mrb[0].mxu0
  %v3058 = vpop.f32.mrb[0].mxu0
  %v3059 = vadd.f32 %v61, %v3058
  %v3060 = vpop.f32.mrb[0].mxu0
  %3061 = vmatprep.mubr.bf16.mxu0 0
  %3062 = vmatmul.mubr.bf16.gmra.mrb[0].mxu0 %v2927
  %v3063 = vpop.f32.mrb[0].mxu0
  %v3064 = vadd.f32 %v61, %v3063
  %v3065 = vpop.f32.mrb[0].mxu0
  %v3066 = vpop.f32.mrb[0].mxu0
  %v3067 = vadd.f32 %v61, %v3066
  %v3068 = vpop.f32.mrb[0].mxu0
  %3069 = vmatprep.mubr.bf16.mxu0 0
  %3070 = vmatmul.mubr.bf16.gmra.mrb[0].mxu0 %v2930
  %v3071 = vpop.f32.mrb[0].mxu0
  %v3072 = vadd.f32 %v61, %v3071
  %v3073 = vpop.f32.mrb[0].mxu0
  %v3074 = vpop.f32.mrb[0].mxu0
  %v3075 = vadd.f32 %v61, %v3074
  %v3076 = vpop.f32.mrb[0].mxu0
  %3077 = vmatprep.mubr.bf16.mxu0 0
  %3078 = vmatmul.mubr.bf16.gmra.mrb[0].mxu0 %v2933
  %v3079 = vpop.f32.mrb[0].mxu0
  %v3080 = vadd.f32 %v61, %v3079
  %v3081 = vpop.f32.mrb[0].mxu0
  %v3082 = vpop.f32.mrb[0].mxu0
  %v3083 = vadd.f32 %v61, %v3082
  %v3084 = vpop.f32.mrb[0].mxu0
  %3085 = vmatprep.mubr.bf16.mxu0 0
  %3086 = vmatmul.mubr.bf16.gmra.mrb[0].mxu0 %v2936
  %v3087 = vpop.f32.mrb[0].mxu0
  %v3088 = vadd.f32 %v61, %v3087
  %v3089 = vpop.f32.mrb[0].mxu0
  %v3090 = vpop.f32.mrb[0].mxu0
  %v3091 = vadd.f32 %v61, %v3090
  %v3092 = vpop.f32.mrb[0].mxu0
  %3093 = vmatprep.mubr.bf16.mxu0 0
  %3094 = vmatmul.mubr.bf16.gmra.mrb[0].mxu0 %v2939
  %v3095 = vpop.f32.mrb[0].mxu0
  %v3096 = vadd.f32 %v61, %v3095
  %v3097 = vpop.f32.mrb[0].mxu0
  %v3098 = vpop.f32.mrb[0].mxu0
  %v3099 = vadd.f32 %v61, %v3098
  %v3100 = vpop.f32.mrb[0].mxu0
  %3101 = vdwg.mxu0
  %v3102 = vmax.f32 %v2976, 0.0
  %v3103 = vmax.f32 %v2979, 0.0
  %v3104 = vmax.f32 %v2984, 0.0
  %v3105 = vmax.f32 %v2987, 0.0
  %v3106 = vmax.f32 %v2992, 0.0
  %v3107 = vmax.f32 %v2995, 0.0
  %v3108 = vmax.f32 %v3000, 0.0
  %v3109 = vmax.f32 %v3003, 0.0
  %v3110 = vmax.f32 %v3008, 0.0
  %v3111 = vmax.f32 %v3011, 0.0
  %v3112 = vmax.f32 %v3016, 0.0
  %v3113 = vmax.f32 %v3019, 0.0
  %v3114 = vmax.f32 %v3024, 0.0
  %v3115 = vmax.f32 %v3027, 0.0
  %v3116 = vmax.f32 %v3032, 0.0
  %v3117 = vmax.f32 %v3035, 0.0
  %v3118 = vmax.f32 %v3040, 0.0
  %v3119 = vmax.f32 %v3043, 0.0
  %v3120 = vmax.f32 %v3048, 0.0
  %v3121 = vmax.f32 %v3051, 0.0
  %v3122 = vmax.f32 %v3056, 0.0
  %v3123 = vmax.f32 %v3059, 0.0
  %v3124 = vmax.f32 %v3064, 0.0
  %v3125 = vmax.f32 %v3067, 0.0
  %v3126 = vmax.f32 %v3072, 0.0
  %v3127 = vmax.f32 %v3075, 0.0
  %v3128 = vmax.f32 %v3080, 0.0
  %v3129 = vmax.f32 %v3083, 0.0
  %v3130 = vmax.f32 %v3088, 0.0
  %v3131 = vmax.f32 %v3091, 0.0
  %v3132 = vmax.f32 %v3096, 0.0
  %v3133 = vmax.f32 %v3099, 0.0
  %v3134 = vadd.f32 %v3102, %v3103
  %v3135 = vadd.f32 %v3134, %v3104
  %v3136 = vadd.f32 %v3135, %v3105
  %v3137 = vadd.f32 %v3136, %v3106
  %v3138 = vadd.f32 %v3137, %v3107
  %v3139 = vadd.f32 %v3138, %v3108
  %v3140 = vadd.f32 %v3139, %v3109
  %v3141 = vadd.f32 %v3140, %v3110
  %v3142 = vadd.f32 %v3141, %v3111
  %v3143 = vadd.f32 %v3142, %v3112
  %v3144 = vadd.f32 %v3143, %v3113
  %v3145 = vadd.f32 %v3144, %v3114
  %v3146 = vadd.f32 %v3145, %v3115
  %v3147 = vadd.f32 %v3146, %v3116
  %v3148 = vadd.f32 %v3147, %v3117
  %v3149 = vadd.f32 %v3148, %v3118
  %v3150 = vadd.f32 %v3149, %v3119
  %v3151 = vadd.f32 %v3150, %v3120
  %v3152 = vadd.f32 %v3151, %v3121
  %v3153 = vadd.f32 %v3152, %v3122
  %v3154 = vadd.f32 %v3153, %v3123
  %v3155 = vadd.f32 %v3154, %v3124
  %v3156 = vadd.f32 %v3155, %v3125
  %v3157 = vadd.f32 %v3156, %v3126
  %v3158 = vadd.f32 %v3157, %v3127
  %v3159 = vadd.f32 %v3158, %v3128
  %v3160 = vadd.f32 %v3159, %v3129
  %v3161 = vadd.f32 %v3160, %v3130
  %v3162 = vadd.f32 %v3161, %v3131
  %v3163 = vadd.f32 %v3162, %v3132
  %v3164 = vadd.f32 %v3163, %v3133
  %v3165 = vrot.slane %v3164, 4
  %v3166 = vadd.f32 %v3164, %v3165
  %v3167 = vrot.slane %v3166, 2
  %v3168 = vadd.f32 %v3166, %v3167
  %v3169 = vrot.slane %v3168, 1
  %v3170 = vadd.f32 %v3168, %v3169
  %v3171 = vld [vmem:[#allocation2] sm:$0xff]
  %vm3172 = vcmask 1040384
  %v3173 = vsel %vm3172, %v433, %v824
  %vm3174 = vcmask 1041408
  %v3175 = vsel %vm3174, %v3173, %v1215
  %vm3176 = vcmask 1042432
  %v3177 = vsel %vm3176, %v3175, %v1606
  %vm3178 = vcmask 1043456
  %v3179 = vsel %vm3178, %v3177, %v1997
  %vm3180 = vcmask 1044480
  %v3181 = vsel %vm3180, %v3179, %v2388
  %vm3182 = vcmask 1045504
  %v3183 = vsel %vm3182, %v3181, %v2779
  %vm3184 = vcmask 1046528
  %v3185 = vsel %vm3184, %v3183, %v3170
  %v3186 = vadd.f32 %v3171, %v3185
  %3187 = vst [vmem:[#allocation2] sm:$0xff] %v3186
  // Predicated region
  $region18: #{accident_xai_forward.4} parent=0 // pred_check
    %p3188 = pneg %p15
  $region19: #{accident_xai_forward.4} parent=0 // pred_check_branch
    %3190 = sbr.rel (%p3188) target = $region21
  $region20: #{accident_xai_forward.4} parent=0 // pred_region
    %v3191 = vld [vmem:[#allocation2] sm:$0xff]
    %v3192 = vmul.f32 %v3191, 0.00390625
    %v3193 = vpack.c.bf16 %v3192, %v3192
    %3194 = vst [vmem:[%s3] sm:$0xf] %v3193
  $region21: #{accident_xai_forward.4} parent=0 // pred_fallthru
    _
  // Predicated region
  $region22: #{accident_xai_forward.4} parent=0 // pred_check
    _
  $region23: #{accident_xai_forward.4} parent=0 // pred_check_branch
    %3196 = sbr.rel (0) target = $region25
  $region24: #{accident_xai_forward.4} parent=0 // pred_region
    _
  $region25: #{accident_xai_forward.4} parent=0 // pred_fallthru
    _
  // Predicated region
  $region26: #{accident_xai_forward.4} parent=0 // pred_check
    _
  $region27: #{accident_xai_forward.4} parent=0 // pred_check_branch
    %3198 = sbr.rel (0) target = $region29
  $region28: #{accident_xai_forward.4} parent=0 // pred_region
    _
  $region29: #{accident_xai_forward.4} parent=0 // pred_fallthru
    _

// kernel: accident_xai_forward.6
$region0: #{accident_xai_forward.6}
  #allocation0 [shape = 'u32[]', space=smem, size = 0x4, offset = 0x4, fixed_abs, tag = 'smem constant byte address 0x4 - core index']
  #allocation1 [shape = 'u32[144,128]{1,0:T(1,128)}', space=vmem, size = 0x12000, scoped, tag = 'internal scratch']
  #allocation2 [shape = 'f32[2,128]{1,0:T(2,128)}', space=vmem, size = 0x400, scoped, tag = 'scratch operand']
  %s0 = inlined_call_operand.vmem [shape: f32[4,2,384], index: 0, kind: input, shape index: {}]
  %s1 = inlined_call_operand.vmem [shape: bf16[128,384], index: 1, kind: input, shape index: {}]
  %s2 = inlined_call_operand.vmem [shape: f32[1,384], index: 2, kind: input, shape index: {}]
  %s3 = inlined_call_operand.vmem [shape: bf16[4,2,128], index: 3, kind: output, shape index: {}]
  %s4 = sld [smem:[#allocation0]]
  $region22: #{accident_xai_forward.6} parent=0
    _
  %s6 = ssub.s32 1, %s4
  %s7 = scalar_select 0, %s6, %s4
  // Predicated region
  $region2: #{accident_xai_forward.6} parent=0 // pred_check
    _
  $region3: #{accident_xai_forward.6} parent=0 // pred_check_branch
    %9 = sbr.rel (0) target = $region5
  $region4: #{accident_xai_forward.6} parent=0 // pred_region
    _
  $region5: #{accident_xai_forward.6} parent=0 // pred_fallthru
    _
  // Predicated region
  $region6: #{accident_xai_forward.6} parent=0 // pred_check
    _
  $region7: #{accident_xai_forward.6} parent=0 // pred_check_branch
    %11 = sbr.rel (0) target = $region9
  $region8: #{accident_xai_forward.6} parent=0 // pred_region
    _
  $region9: #{accident_xai_forward.6} parent=0 // pred_fallthru
    _
  // Predicated region
  $region10: #{accident_xai_forward.6} parent=0 // pred_check
    _
  $region11: #{accident_xai_forward.6} parent=0 // pred_check_branch
    %13 = sbr.rel (0) target = $region13
  $region12: #{accident_xai_forward.6} parent=0 // pred_region
    _
  $region13: #{accident_xai_forward.6} parent=0 // pred_fallthru
    _
  %15 = vst [vmem:[#allocation2] sm:$0x3] 0.0
  %v16 = vld [vmem:[%s1] sm:$0xff]
  %v17 = vld [vmem:[%s1 + $0x8] sm:$0xf]
  %v18 = vld [vmem:[%s1 + $0xc] sm:$0xff]
  %v19 = vld [vmem:[%s1 + $0x14] sm:$0xf]
  %v20 = vld [vmem:[%s1 + $0x18] sm:$0xff]
  %v21 = vld [vmem:[%s1 + $0x20] sm:$0xf]
  %v22 = vld [vmem:[%s1 + $0x24] sm:$0xff]
  %v23 = vld [vmem:[%s1 + $0x2c] sm:$0xf]
  %v24 = vld [vmem:[%s1 + $0x30] sm:$0xff]
  %v25 = vld [vmem:[%s1 + $0x38] sm:$0xf]
  %v26 = vld [vmem:[%s1 + $0x3c] sm:$0xff]
  %v27 = vld [vmem:[%s1 + $0x44] sm:$0xf]
  %v28 = vld [vmem:[%s1 + $0x48] sm:$0xff]
  %v29 = vld [vmem:[%s1 + $0x50] sm:$0xf]
  %v30 = vld [vmem:[%s1 + $0x54] sm:$0xff]
  %v31 = vld [vmem:[%s1 + $0x5c] sm:$0xf]
  %v32 = vld [vmem:[%s1 + $0x60] sm:$0xff]
  %v33 = vld [vmem:[%s1 + $0x68] sm:$0xf]
  %v34 = vld [vmem:[%s1 + $0x6c] sm:$0xff]
  %v35 = vld [vmem:[%s1 + $0x74] sm:$0xf]
  %v36 = vld [vmem:[%s1 + $0x78] sm:$0xff]
  %v37 = vld [vmem:[%s1 + $0x80] sm:$0xf]
  %v38 = vld [vmem:[%s1 + $0x84] sm:$0xff]
  %v39 = vld [vmem:[%s1 + $0x8c] sm:$0xf]
  %v40 = vld [vmem:[%s1 + $0x90] sm:$0xff]
  %v41 = vld [vmem:[%s1 + $0x98] sm:$0xf]
  %v42 = vld [vmem:[%s1 + $0x9c] sm:$0xff]
  %v43 = vld [vmem:[%s1 + $0xa4] sm:$0xf]
  %v44 = vld [vmem:[%s1 + $0xa8] sm:$0xff]
  %v45 = vld [vmem:[%s1 + $0xb0] sm:$0xf]
  %v46 = vld [vmem:[%s1 + $0xb4] sm:$0xff]
  %v47 = vld [vmem:[%s1 + $0xbc] sm:$0xf]
  %v48 = vld [vmem:[%s2] sm:$0x7]
  %v49 = vld [vmem:[%s0] sm:$0x3f]
  %v50 = vld [vmem:[#allocation2] sm:$0x3]
  %v51 = vpack.c.bf16 %v50, %v50
  %v53 = vlaneseq
  %v54 = vshrl.u32 %v53, 7
  %v55 = vsub.s32 0, %v54
  %v56 = vrot.slane %v48, %v55
  %v57 = vlaneseq
  %v58 = vshrl.u32 %v57, 7
  %v59 = vsub.s32 1, %v58
  %v60 = vrot.slane %v48, %v59
  %v61 = vlaneseq
  %v62 = vshrl.u32 %v61, 7
  %v63 = vsub.s32 2, %v62
  %v64 = vrot.slane %v48, %v63
  %v100 = vunpack.c.l.b16 %v16
  %v101 = vunpack.c.h.b16 %v16
  %v102 = vunpack.c.l.b16 %v17
  %v103 = vunpack.c.l.b16 %v18
  %v104 = vunpack.c.h.b16 %v18
  %v105 = vunpack.c.l.b16 %v19
  %v106 = vunpack.c.l.b16 %v20
  %v107 = vunpack.c.h.b16 %v20
  %v108 = vunpack.c.l.b16 %v21
  %v109 = vunpack.c.l.b16 %v22
  %v110 = vunpack.c.h.b16 %v22
  %v111 = vunpack.c.l.b16 %v23
  %v112 = vunpack.c.l.b16 %v24
  %v113 = vunpack.c.h.b16 %v24
  %v114 = vunpack.c.l.b16 %v25
  %v115 = vunpack.c.l.b16 %v26
  %v116 = vunpack.c.h.b16 %v26
  %v117 = vunpack.c.l.b16 %v27
  %v118 = vunpack.c.l.b16 %v28
  %v119 = vunpack.c.h.b16 %v28
  %v120 = vunpack.c.l.b16 %v29
  %v121 = vunpack.c.l.b16 %v30
  %v122 = vunpack.c.h.b16 %v30
  %v123 = vunpack.c.l.b16 %v31
  %v124 = vunpack.c.l.b16 %v32
  %v125 = vunpack.c.h.b16 %v32
  %v126 = vunpack.c.l.b16 %v33
  %v127 = vunpack.c.l.b16 %v34
  %v128 = vunpack.c.h.b16 %v34
  %v129 = vunpack.c.l.b16 %v35
  %v130 = vunpack.c.l.b16 %v36
  %v131 = vunpack.c.h.b16 %v36
  %v132 = vunpack.c.l.b16 %v37
  %v133 = vunpack.c.l.b16 %v38
  %v134 = vunpack.c.h.b16 %v38
  %v135 = vunpack.c.l.b16 %v39
  %v136 = vunpack.c.l.b16 %v40
  %v137 = vunpack.c.h.b16 %v40
  %v138 = vunpack.c.l.b16 %v41
  %v139 = vunpack.c.l.b16 %v42
  %v140 = vunpack.c.h.b16 %v42
  %v141 = vunpack.c.l.b16 %v43
  %v142 = vunpack.c.l.b16 %v44
  %v143 = vunpack.c.h.b16 %v44
  %v144 = vunpack.c.l.b16 %v45
  %v145 = vunpack.c.l.b16 %v46
  %v146 = vunpack.c.h.b16 %v46
  %v147 = vunpack.c.l.b16 %v47
  %v148 = vpack.c.b16 %v103, %v100
  %v149 = vpack.c.b16 %v104, %v101
  %v150 = vpack.c.b16 %v105, %v102
  %v151 = vpack.c.b16 %v109, %v106
  %v152 = vpack.c.b16 %v110, %v107
  %v153 = vpack.c.b16 %v111, %v108
  %v154 = vpack.c.b16 %v115, %v112
  %v155 = vpack.c.b16 %v116, %v113
  %v156 = vpack.c.b16 %v117, %v114
  %v157 = vpack.c.b16 %v121, %v118
  %v158 = vpack.c.b16 %v122, %v119
  %v159 = vpack.c.b16 %v123, %v120
  %v160 = vpack.c.b16 %v127, %v124
  %v161 = vpack.c.b16 %v128, %v125
  %v162 = vpack.c.b16 %v129, %v126
  %v163 = vpack.c.b16 %v133, %v130
  %v164 = vpack.c.b16 %v134, %v131
  %v165 = vpack.c.b16 %v135, %v132
  %v166 = vpack.c.b16 %v139, %v136
  %v167 = vpack.c.b16 %v140, %v137
  %v168 = vpack.c.b16 %v141, %v138
  %v169 = vpack.c.b16 %v145, %v142
  %v170 = vpack.c.b16 %v146, %v143
  %v171 = vpack.c.b16 %v147, %v144
  %196 = vmatprep.subr.bf16.mxu0 %v149
  %197 = vmatpush1.bf16.msra.mxu0 %v148
  %198 = vmatprep.subr.bf16.mxu0 %v152
  %199 = vmatpush1.bf16.msra.mxu0 %v151
  %200 = vmatprep.subr.bf16.mxu0 %v155
  %201 = vmatpush1.bf16.msra.mxu0 %v154
  %202 = vmatprep.subr.bf16.mxu0 %v158
  %203 = vmatpush1.bf16.msra.mxu0 %v157
  %204 = vmatprep.subr.bf16.mxu0 %v161
  %205 = vmatpush1.bf16.msra.mxu0 %v160
  %206 = vmatprep.subr.bf16.mxu0 %v164
  %207 = vmatpush1.bf16.msra.mxu0 %v163
  %208 = vmatprep.subr.bf16.mxu0 %v167
  %209 = vmatpush1.bf16.msra.mxu0 %v166
  %210 = vmatprep.subr.bf16.mxu0 %v170
  %211 = vmatpush1.bf16.msra.mxu0 %v169
  %212 = vmatprep.subr.bf16.mxu0 0
  %213 = vmatpush1.bf16.msra.mxu0 0
  %214 = vmatprep.subr.bf16.mxu0 0
  %215 = vmatpush1.bf16.msra.mxu0 0
  %216 = vmatprep.subr.bf16.mxu0 0
  %217 = vmatpush1.bf16.msra.mxu0 0
  %218 = vmatprep.subr.bf16.mxu0 0
  %219 = vmatpush1.bf16.msra.mxu0 0
  %220 = vmatprep.subr.bf16.mxu0 0
  %221 = vmatpush1.bf16.msra.mxu0 0
  %222 = vmatprep.subr.bf16.mxu0 0
  %223 = vmatpush1.bf16.msra.mxu0 0
  %224 = vmatprep.subr.bf16.mxu0 0
  %225 = vmatpush1.bf16.msra.mxu0 0
  %226 = vmatprep.subr.bf16.mxu0 0
  %227 = vmatpush1.bf16.msra.mxu0 0
  %228 = vmatprep.mubr.bf16.mxu0 0
  %229 = vmatmul.mubr.bf16.gmra.mrb[0].mxu0 %v51
  %v230 = vpop.f32.mrb[0].mxu0
  %v231 = vadd.f32 %v56, %v230
  %v232 = vpop.f32.mrb[0].mxu0
  %v233 = vadd.f32 %v60, %v232
  %v234 = vpop.f32.mrb[0].mxu0
  %v235 = vpop.f32.mrb[0].mxu0
  %236 = vdwg.mxu0
  %237 = vmatprep.subr.bf16.mxu0 0
  %238 = vmatpush1.bf16.msra.mxu0 %v150
  %239 = vmatprep.subr.bf16.mxu0 0
  %240 = vmatpush1.bf16.msra.mxu0 %v153
  %241 = vmatprep.subr.bf16.mxu0 0
  %242 = vmatpush1.bf16.msra.mxu0 %v156
  %243 = vmatprep.subr.bf16.mxu0 0
  %244 = vmatpush1.bf16.msra.mxu0 %v159
  %245 = vmatprep.subr.bf16.mxu0 0
  %246 = vmatpush1.bf16.msra.mxu0 %v162
  %247 = vmatprep.subr.bf16.mxu0 0
  %248 = vmatpush1.bf16.msra.mxu0 %v165
  %249 = vmatprep.subr.bf16.mxu0 0
  %250 = vmatpush1.bf16.msra.mxu0 %v168
  %251 = vmatprep.subr.bf16.mxu0 0
  %252 = vmatpush1.bf16.msra.mxu0 %v171
  %253 = vmatprep.subr.bf16.mxu0 0
  %254 = vmatpush1.bf16.msra.mxu0 0
  %255 = vmatprep.subr.bf16.mxu0 0
  %256 = vmatpush1.bf16.msra.mxu0 0
  %257 = vmatprep.subr.bf16.mxu0 0
  %258 = vmatpush1.bf16.msra.mxu0 0
  %259 = vmatprep.subr.bf16.mxu0 0
  %260 = vmatpush1.bf16.msra.mxu0 0
  %261 = vmatprep.subr.bf16.mxu0 0
  %262 = vmatpush1.bf16.msra.mxu0 0
  %263 = vmatprep.subr.bf16.mxu0 0
  %264 = vmatpush1.bf16.msra.mxu0 0
  %265 = vmatprep.subr.bf16.mxu0 0
  %266 = vmatpush1.bf16.msra.mxu0 0
  %267 = vmatprep.subr.bf16.mxu0 0
  %268 = vmatpush1.bf16.msra.mxu0 0
  %269 = vmatprep.mubr.bf16.mxu0 0
  %270 = vmatmul.mubr.bf16.gmra.mrb[0].mxu0 %v51
  %v271 = vpop.f32.mrb[0].mxu0
  %v272 = vadd.f32 %v64, %v271
  %v273 = vpop.f32.mrb[0].mxu0
  %v274 = vpop.f32.mrb[0].mxu0
  %v275 = vpop.f32.mrb[0].mxu0
  %276 = vdwg.mxu0
  %v277 = vadd.f32 %v49, %v231
  %v278 = vxor.u32 %v277, 2147483648
  %v279 = vmul.f32 %v278, 1.442695
  %v280 = vpow.pop %v279
  %v281 = vadd.f32 %v280, 1.0
  %v282 = vrcp.pop %v281
  %v283 = vmul.f32 1.0, %v282
  %v285 = vrot.slane %v49, 2
  %v287 = vadd.f32 %v285, %v233
  %v288 = vxor.u32 %v287, 2147483648
  %v289 = vmul.f32 %v288, 1.442695
  %v290 = vpow.pop %v289
  %v291 = vadd.f32 %v290, 1.0
  %v292 = vrcp.pop %v291
  %v293 = vmul.f32 1.0, %v292
  %v294 = vmul.f32 %v283, %v272
  %v295 = vrot.slane %v49, 4
  %v297 = vadd.f32 %v295, %v294
  %v298 = vtanh.pop %v297
  %v299 = vsub.f32 1.0, %v293
  %v300 = vmul.f32 %v299, %v298
  %v301 = vmul.f32 %v293, %v50
  %v302 = vadd.f32 %v300, %v301
  %303 = vst [vmem:[#allocation2] sm:$0x3] %v302
  %v304 = vpack.c.bf16 %v302, %v302
  %305 = vst [vmem:[%s3] sm:$0x1] %v304
  %s306 = scalar_lea.vmem %s0, 6
  %v307 = vld [vmem:[%s306] sm:$0x3f]
  %v308 = vld [vmem:[#allocation2] sm:$0x3]
  %v309 = vpack.c.bf16 %v308, %v308
  %310 = vmatprep.subr.bf16.mxu0 %v149
  %311 = vmatpush1.bf16.msra.mxu0 %v148
  %312 = vmatprep.subr.bf16.mxu0 %v152
  %313 = vmatpush1.bf16.msra.mxu0 %v151
  %314 = vmatprep.subr.bf16.mxu0 %v155
  %315 = vmatpush1.bf16.msra.mxu0 %v154
  %316 = vmatprep.subr.bf16.mxu0 %v158
  %317 = vmatpush1.bf16.msra.mxu0 %v157
  %318 = vmatprep.subr.bf16.mxu0 %v161
  %319 = vmatpush1.bf16.msra.mxu0 %v160
  %320 = vmatprep.subr.bf16.mxu0 %v164
  %321 = vmatpush1.bf16.msra.mxu0 %v163
  %322 = vmatprep.subr.bf16.mxu0 %v167
  %323 = vmatpush1.bf16.msra.mxu0 %v166
  %324 = vmatprep.subr.bf16.mxu0 %v170
  %325 = vmatpush1.bf16.msra.mxu0 %v169
  %326 = vmatprep.subr.bf16.mxu0 0
  %327 = vmatpush1.bf16.msra.mxu0 0
  %328 = vmatprep.subr.bf16.mxu0 0
  %329 = vmatpush1.bf16.msra.mxu0 0
  %330 = vmatprep.subr.bf16.mxu0 0
  %331 = vmatpush1.bf16.msra.mxu0 0
  %332 = vmatprep.subr.bf16.mxu0 0
  %333 = vmatpush1.bf16.msra.mxu0 0
  %334 = vmatprep.subr.bf16.mxu0 0
  %335 = vmatpush1.bf16.msra.mxu0 0
  %336 = vmatprep.subr.bf16.mxu0 0
  %337 = vmatpush1.bf16.msra.mxu0 0
  %338 = vmatprep.subr.bf16.mxu0 0
  %339 = vmatpush1.bf16.msra.mxu0 0
  %340 = vmatprep.subr.bf16.mxu0 0
  %341 = vmatpush1.bf16.msra.mxu0 0
  %342 = vmatprep.mubr.bf16.mxu0 0
  %343 = vmatmul.mubr.bf16.gmra.mrb[0].mxu0 %v309
  %v344 = vpop.f32.mrb[0].mxu0
  %v345 = vadd.f32 %v56, %v344
  %v346 = vpop.f32.mrb[0].mxu0
  %v347 = vadd.f32 %v60, %v346
  %v348 = vpop.f32.mrb[0].mxu0
  %v349 = vpop.f32.mrb[0].mxu0
  %350 = vdwg.mxu0
  %351 = vmatprep.subr.bf16.mxu0 0
  %352 = vmatpush1.bf16.msra.mxu0 %v150
  %353 = vmatprep.subr.bf16.mxu0 0
  %354 = vmatpush1.bf16.msra.mxu0 %v153
  %355 = vmatprep.subr.bf16.mxu0 0
  %356 = vmatpush1.bf16.msra.mxu0 %v156
  %357 = vmatprep.subr.bf16.mxu0 0
  %358 = vmatpush1.bf16.msra.mxu0 %v159
  %359 = vmatprep.subr.bf16.mxu0 0
  %360 = vmatpush1.bf16.msra.mxu0 %v162
  %361 = vmatprep.subr.bf16.mxu0 0
  %362 = vmatpush1.bf16.msra.mxu0 %v165
  %363 = vmatprep.subr.bf16.mxu0 0
  %364 = vmatpush1.bf16.msra.mxu0 %v168
  %365 = vmatprep.subr.bf16.mxu0 0
  %366 = vmatpush1.bf16.msra.mxu0 %v171
  %367 = vmatprep.subr.bf16.mxu0 0
  %368 = vmatpush1.bf16.msra.mxu0 0
  %369 = vmatprep.subr.bf16.mxu0 0
  %370 = vmatpush1.bf16.msra.mxu0 0
  %371 = vmatprep.subr.bf16.mxu0 0
  %372 = vmatpush1.bf16.msra.mxu0 0
  %373 = vmatprep.subr.bf16.mxu0 0
  %374 = vmatpush1.bf16.msra.mxu0 0
  %375 = vmatprep.subr.bf16.mxu0 0
  %376 = vmatpush1.bf16.msra.mxu0 0
  %377 = vmatprep.subr.bf16.mxu0 0
  %378 = vmatpush1.bf16.msra.mxu0 0
  %379 = vmatprep.subr.bf16.mxu0 0
  %380 = vmatpush1.bf16.msra.mxu0 0
  %381 = vmatprep.subr.bf16.mxu0 0
  %382 = vmatpush1.bf16.msra.mxu0 0
  %383 = vmatprep.mubr.bf16.mxu0 0
  %384 = vmatmul.mubr.bf16.gmra.mrb[0].mxu0 %v309
  %v385 = vpop.f32.mrb[0].mxu0
  %v386 = vadd.f32 %v64, %v385
  %v387 = vpop.f32.mrb[0].mxu0
  %v388 = vpop.f32.mrb[0].mxu0
  %v389 = vpop.f32.mrb[0].mxu0
  %390 = vdwg.mxu0
  %v391 = vadd.f32 %v307, %v345
  %v392 = vxor.u32 %v391, 2147483648
  %v393 = vmul.f32 %v392, 1.442695
  %v394 = vpow.pop %v393
  %v395 = vadd.f32 %v394, 1.0
  %v396 = vrcp.pop %v395
  %v397 = vmul.f32 1.0, %v396
  %v399 = vrot.slane %v307, 2
  %v401 = vadd.f32 %v399, %v347
  %v402 = vxor.u32 %v401, 2147483648
  %v403 = vmul.f32 %v402, 1.442695
  %v404 = vpow.pop %v403
  %v405 = vadd.f32 %v404, 1.0
  %v406 = vrcp.pop %v405
  %v407 = vmul.f32 1.0, %v406
  %v408 = vmul.f32 %v397, %v386
  %v409 = vrot.slane %v307, 4
  %v411 = vadd.f32 %v409, %v408
  %v412 = vtanh.pop %v411
  %v413 = vsub.f32 1.0, %v407
  %v414 = vmul.f32 %v413, %v412
  %v415 = vmul.f32 %v407, %v308
  %v416 = vadd.f32 %v414, %v415
  %417 = vst [vmem:[#allocation2] sm:$0x3] %v416
  %v418 = vpack.c.bf16 %v416, %v416
  %s419 = scalar_lea.vmem %s3, 1
  %420 = vst [vmem:[%s419] sm:$0x1] %v418
  %s421 = scalar_lea.vmem %s0, 12
  %v422 = vld [vmem:[%s421] sm:$0x3f]
  %v423 = vld [vmem:[#allocation2] sm:$0x3]
  %v424 = vpack.c.bf16 %v423, %v423
  %425 = vmatprep.subr.bf16.mxu0 %v149
  %426 = vmatpush1.bf16.msra.mxu0 %v148
  %427 = vmatprep.subr.bf16.mxu0 %v152
  %428 = vmatpush1.bf16.msra.mxu0 %v151
  %429 = vmatprep.subr.bf16.mxu0 %v155
  %430 = vmatpush1.bf16.msra.mxu0 %v154
  %431 = vmatprep.subr.bf16.mxu0 %v158
  %432 = vmatpush1.bf16.msra.mxu0 %v157
  %433 = vmatprep.subr.bf16.mxu0 %v161
  %434 = vmatpush1.bf16.msra.mxu0 %v160
  %435 = vmatprep.subr.bf16.mxu0 %v164
  %436 = vmatpush1.bf16.msra.mxu0 %v163
  %437 = vmatprep.subr.bf16.mxu0 %v167
  %438 = vmatpush1.bf16.msra.mxu0 %v166
  %439 = vmatprep.subr.bf16.mxu0 %v170
  %440 = vmatpush1.bf16.msra.mxu0 %v169
  %441 = vmatprep.subr.bf16.mxu0 0
  %442 = vmatpush1.bf16.msra.mxu0 0
  %443 = vmatprep.subr.bf16.mxu0 0
  %444 = vmatpush1.bf16.msra.mxu0 0
  %445 = vmatprep.subr.bf16.mxu0 0
  %446 = vmatpush1.bf16.msra.mxu0 0
  %447 = vmatprep.subr.bf16.mxu0 0
  %448 = vmatpush1.bf16.msra.mxu0 0
  %449 = vmatprep.subr.bf16.mxu0 0
  %450 = vmatpush1.bf16.msra.mxu0 0
  %451 = vmatprep.subr.bf16.mxu0 0
  %452 = vmatpush1.bf16.msra.mxu0 0
  %453 = vmatprep.subr.bf16.mxu0 0
  %454 = vmatpush1.bf16.msra.mxu0 0
  %455 = vmatprep.subr.bf16.mxu0 0
  %456 = vmatpush1.bf16.msra.mxu0 0
  %457 = vmatprep.mubr.bf16.mxu0 0
  %458 = vmatmul.mubr.bf16.gmra.mrb[0].mxu0 %v424
  %v459 = vpop.f32.mrb[0].mxu0
  %v460 = vadd.f32 %v56, %v459
  %v461 = vpop.f32.mrb[0].mxu0
  %v462 = vadd.f32 %v60, %v461
  %v463 = vpop.f32.mrb[0].mxu0
  %v464 = vpop.f32.mrb[0].mxu0
  %465 = vdwg.mxu0
  %466 = vmatprep.subr.bf16.mxu0 0
  %467 = vmatpush1.bf16.msra.mxu0 %v150
  %468 = vmatprep.subr.bf16.mxu0 0
  %469 = vmatpush1.bf16.msra.mxu0 %v153
  %470 = vmatprep.subr.bf16.mxu0 0
  %471 = vmatpush1.bf16.msra.mxu0 %v156
  %472 = vmatprep.subr.bf16.mxu0 0
  %473 = vmatpush1.bf16.msra.mxu0 %v159
  %474 = vmatprep.subr.bf16.mxu0 0
  %475 = vmatpush1.bf16.msra.mxu0 %v162
  %476 = vmatprep.subr.bf16.mxu0 0
  %477 = vmatpush1.bf16.msra.mxu0 %v165
  %478 = vmatprep.subr.bf16.mxu0 0
  %479 = vmatpush1.bf16.msra.mxu0 %v168
  %480 = vmatprep.subr.bf16.mxu0 0
  %481 = vmatpush1.bf16.msra.mxu0 %v171
  %482 = vmatprep.subr.bf16.mxu0 0
  %483 = vmatpush1.bf16.msra.mxu0 0
  %484 = vmatprep.subr.bf16.mxu0 0
  %485 = vmatpush1.bf16.msra.mxu0 0
  %486 = vmatprep.subr.bf16.mxu0 0
  %487 = vmatpush1.bf16.msra.mxu0 0
  %488 = vmatprep.subr.bf16.mxu0 0
  %489 = vmatpush1.bf16.msra.mxu0 0
  %490 = vmatprep.subr.bf16.mxu0 0
  %491 = vmatpush1.bf16.msra.mxu0 0
  %492 = vmatprep.subr.bf16.mxu0 0
  %493 = vmatpush1.bf16.msra.mxu0 0
  %494 = vmatprep.subr.bf16.mxu0 0
  %495 = vmatpush1.bf16.msra.mxu0 0
  %496 = vmatprep.subr.bf16.mxu0 0
  %497 = vmatpush1.bf16.msra.mxu0 0
  %498 = vmatprep.mubr.bf16.mxu0 0
  %499 = vmatmul.mubr.bf16.gmra.mrb[0].mxu0 %v424
  %v500 = vpop.f32.mrb[0].mxu0
  %v501 = vadd.f32 %v64, %v500
  %v502 = vpop.f32.mrb[0].mxu0
  %v503 = vpop.f32.mrb[0].mxu0
  %v504 = vpop.f32.mrb[0].mxu0
  %505 = vdwg.mxu0
  %v506 = vadd.f32 %v422, %v460
  %v507 = vxor.u32 %v506, 2147483648
  %v508 = vmul.f32 %v507, 1.442695
  %v509 = vpow.pop %v508
  %v510 = vadd.f32 %v509, 1.0
  %v511 = vrcp.pop %v510
  %v512 = vmul.f32 1.0, %v511
  %v514 = vrot.slane %v422, 2
  %v516 = vadd.f32 %v514, %v462
  %v517 = vxor.u32 %v516, 2147483648
  %v518 = vmul.f32 %v517, 1.442695
  %v519 = vpow.pop %v518
  %v520 = vadd.f32 %v519, 1.0
  %v521 = vrcp.pop %v520
  %v522 = vmul.f32 1.0, %v521
  %v523 = vmul.f32 %v512, %v501
  %v524 = vrot.slane %v422, 4
  %v526 = vadd.f32 %v524, %v523
  %v527 = vtanh.pop %v526
  %v528 = vsub.f32 1.0, %v522
  %v529 = vmul.f32 %v528, %v527
  %v530 = vmul.f32 %v522, %v423
  %v531 = vadd.f32 %v529, %v530
  %532 = vst [vmem:[#allocation2] sm:$0x3] %v531
  %v533 = vpack.c.bf16 %v531, %v531
  %s534 = scalar_lea.vmem %s3, 2
  %535 = vst [vmem:[%s534] sm:$0x1] %v533
  %s536 = scalar_lea.vmem %s0, 18
  %v537 = vld [vmem:[%s536] sm:$0x3f]
  %v538 = vld [vmem:[#allocation2] sm:$0x3]
  %v539 = vpack.c.bf16 %v538, %v538
  %540 = vmatprep.subr.bf16.mxu0 %v149
  %541 = vmatpush1.bf16.msra.mxu0 %v148
  %542 = vmatprep.subr.bf16.mxu0 %v152
  %543 = vmatpush1.bf16.msra.mxu0 %v151
  %544 = vmatprep.subr.bf16.mxu0 %v155
  %545 = vmatpush1.bf16.msra.mxu0 %v154
  %546 = vmatprep.subr.bf16.mxu0 %v158
  %547 = vmatpush1.bf16.msra.mxu0 %v157
  %548 = vmatprep.subr.bf16.mxu0 %v161
  %549 = vmatpush1.bf16.msra.mxu0 %v160
  %550 = vmatprep.subr.bf16.mxu0 %v164
  %551 = vmatpush1.bf16.msra.mxu0 %v163
  %552 = vmatprep.subr.bf16.mxu0 %v167
  %553 = vmatpush1.bf16.msra.mxu0 %v166
  %554 = vmatprep.subr.bf16.mxu0 %v170
  %555 = vmatpush1.bf16.msra.mxu0 %v169
  %556 = vmatprep.subr.bf16.mxu0 0
  %557 = vmatpush1.bf16.msra.mxu0 0
  %558 = vmatprep.subr.bf16.mxu0 0
  %559 = vmatpush1.bf16.msra.mxu0 0
  %560 = vmatprep.subr.bf16.mxu0 0
  %561 = vmatpush1.bf16.msra.mxu0 0
  %562 = vmatprep.subr.bf16.mxu0 0
  %563 = vmatpush1.bf16.msra.mxu0 0
  %564 = vmatprep.subr.bf16.mxu0 0
  %565 = vmatpush1.bf16.msra.mxu0 0
  %566 = vmatprep.subr.bf16.mxu0 0
  %567 = vmatpush1.bf16.msra.mxu0 0
  %568 = vmatprep.subr.bf16.mxu0 0
  %569 = vmatpush1.bf16.msra.mxu0 0
  %570 = vmatprep.subr.bf16.mxu0 0
  %571 = vmatpush1.bf16.msra.mxu0 0
  %572 = vmatprep.mubr.bf16.mxu0 0
  %573 = vmatmul.mubr.bf16.gmra.mrb[0].mxu0 %v539
  %v574 = vpop.f32.mrb[0].mxu0
  %v575 = vadd.f32 %v56, %v574
  %v576 = vpop.f32.mrb[0].mxu0
  %v577 = vadd.f32 %v60, %v576
  %v578 = vpop.f32.mrb[0].mxu0
  %v579 = vpop.f32.mrb[0].mxu0
  %580 = vdwg.mxu0
  %581 = vmatprep.subr.bf16.mxu0 0
  %582 = vmatpush1.bf16.msra.mxu0 %v150
  %583 = vmatprep.subr.bf16.mxu0 0
  %584 = vmatpush1.bf16.msra.mxu0 %v153
  %585 = vmatprep.subr.bf16.mxu0 0
  %586 = vmatpush1.bf16.msra.mxu0 %v156
  %587 = vmatprep.subr.bf16.mxu0 0
  %588 = vmatpush1.bf16.msra.mxu0 %v159
  %589 = vmatprep.subr.bf16.mxu0 0
  %590 = vmatpush1.bf16.msra.mxu0 %v162
  %591 = vmatprep.subr.bf16.mxu0 0
  %592 = vmatpush1.bf16.msra.mxu0 %v165
  %593 = vmatprep.subr.bf16.mxu0 0
  %594 = vmatpush1.bf16.msra.mxu0 %v168
  %595 = vmatprep.subr.bf16.mxu0 0
  %596 = vmatpush1.bf16.msra.mxu0 %v171
  %597 = vmatprep.subr.bf16.mxu0 0
  %598 = vmatpush1.bf16.msra.mxu0 0
  %599 = vmatprep.subr.bf16.mxu0 0
  %600 = vmatpush1.bf16.msra.mxu0 0
  %601 = vmatprep.subr.bf16.mxu0 0
  %602 = vmatpush1.bf16.msra.mxu0 0
  %603 = vmatprep.subr.bf16.mxu0 0
  %604 = vmatpush1.bf16.msra.mxu0 0
  %605 = vmatprep.subr.bf16.mxu0 0
  %606 = vmatpush1.bf16.msra.mxu0 0
  %607 = vmatprep.subr.bf16.mxu0 0
  %608 = vmatpush1.bf16.msra.mxu0 0
  %609 = vmatprep.subr.bf16.mxu0 0
  %610 = vmatpush1.bf16.msra.mxu0 0
  %611 = vmatprep.subr.bf16.mxu0 0
  %612 = vmatpush1.bf16.msra.mxu0 0
  %613 = vmatprep.mubr.bf16.mxu0 0
  %614 = vmatmul.mubr.bf16.gmra.mrb[0].mxu0 %v539
  %v615 = vpop.f32.mrb[0].mxu0
  %v616 = vadd.f32 %v64, %v615
  %v617 = vpop.f32.mrb[0].mxu0
  %v618 = vpop.f32.mrb[0].mxu0
  %v619 = vpop.f32.mrb[0].mxu0
  %620 = vdwg.mxu0
  %v621 = vadd.f32 %v537, %v575
  %v622 = vxor.u32 %v621, 2147483648
  %v623 = vmul.f32 %v622, 1.442695
  %v624 = vpow.pop %v623
  %v625 = vadd.f32 %v624, 1.0
  %v626 = vrcp.pop %v625
  %v627 = vmul.f32 1.0, %v626
  %v629 = vrot.slane %v537, 2
  %v631 = vadd.f32 %v629, %v577
  %v632 = vxor.u32 %v631, 2147483648
  %v633 = vmul.f32 %v632, 1.442695
  %v634 = vpow.pop %v633
  %v635 = vadd.f32 %v634, 1.0
  %v636 = vrcp.pop %v635
  %v637 = vmul.f32 1.0, %v636
  %v638 = vmul.f32 %v627, %v616
  %v639 = vrot.slane %v537, 4
  %v641 = vadd.f32 %v639, %v638
  %v642 = vtanh.pop %v641
  %v643 = vsub.f32 1.0, %v637
  %v644 = vmul.f32 %v643, %v642
  %v645 = vmul.f32 %v637, %v538
  %v646 = vadd.f32 %v644, %v645
  %647 = vst [vmem:[#allocation2] sm:$0x3] %v646
  %v648 = vpack.c.bf16 %v646, %v646
  %s649 = scalar_lea.vmem %s3, 3
  %650 = vst [vmem:[%s649] sm:$0x1] %v648
  // Predicated region
  $region14: #{accident_xai_forward.6} parent=0 // pred_check
    _
  $region15: #{accident_xai_forward.6} parent=0 // pred_check_branch
    %652 = sbr.rel (0) target = $region17
  $region16: #{accident_xai_forward.6} parent=0 // pred_region
    _
  $region17: #{accident_xai_forward.6} parent=0 // pred_fallthru
    _
  // Predicated region
  $region18: #{accident_xai_forward.6} parent=0 // pred_check
    _
  $region19: #{accident_xai_forward.6} parent=0 // pred_check_branch
    %654 = sbr.rel (0) target = $region21
  $region20: #{accident_xai_forward.6} parent=0 // pred_region
    _
  $region21: #{accident_xai_forward.6} parent=0 // pred_fallthru
    _

// kernel: accident_xai_forward.7
$region0: #{accident_xai_forward.7}
  #allocation0 [shape = 'u32[]', space=smem, size = 0x4, offset = 0x4, fixed_abs, tag = 'smem constant byte address 0x4 - core index']
  #allocation1 [shape = 'u32[144,128]{1,0:T(1,128)}', space=vmem, size = 0x12000, scoped, tag = 'internal scratch']
  %s0 = inlined_call_operand.vmem [shape: bf16[8,128], index: 0, kind: input, shape index: {}]
  %s1 = inlined_call_operand.vmem [shape: bf16[128,64], index: 1, kind: input, shape index: {}]
  %s2 = inlined_call_operand.vmem [shape: f32[1,64], index: 2, kind: input, shape index: {}]
  %s3 = inlined_call_operand.vmem [shape: bf16[64,128], index: 3, kind: input, shape index: {}]
  %s4 = inlined_call_operand.vmem [shape: f32[1,128], index: 4, kind: input, shape index: {}]
  %s5 = inlined_call_operand.vmem [shape: f32[8,128], index: 5, kind: output, shape index: {}]
  %s6 = sld [smem:[#allocation0]]
  $region30: #{accident_xai_forward.7} parent=0
    _
  %s8 = ssub.s32 1, %s6
  %s9 = scalar_select 0, %s8, %s6
  // Predicated region
  $region2: #{accident_xai_forward.7} parent=0 // pred_check
    _
  $region3: #{accident_xai_forward.7} parent=0 // pred_check_branch
    %11 = sbr.rel (0) target = $region5
  $region4: #{accident_xai_forward.7} parent=0 // pred_region
    _
  $region5: #{accident_xai_forward.7} parent=0 // pred_fallthru
    _
  // Predicated region
  $region6: #{accident_xai_forward.7} parent=0 // pred_check
    _
  $region7: #{accident_xai_forward.7} parent=0 // pred_check_branch
    %13 = sbr.rel (0) target = $region9
  $region8: #{accident_xai_forward.7} parent=0 // pred_region
    _
  $region9: #{accident_xai_forward.7} parent=0 // pred_fallthru
    _
  // Predicated region
  $region10: #{accident_xai_forward.7} parent=0 // pred_check
    _
  $region11: #{accident_xai_forward.7} parent=0 // pred_check_branch
    %15 = sbr.rel (0) target = $region13
  $region12: #{accident_xai_forward.7} parent=0 // pred_region
    _
  $region13: #{accident_xai_forward.7} parent=0 // pred_fallthru
    _
  // Predicated region
  $region14: #{accident_xai_forward.7} parent=0 // pred_check
    _
  $region15: #{accident_xai_forward.7} parent=0 // pred_check_branch
    %17 = sbr.rel (0) target = $region17
  $region16: #{accident_xai_forward.7} parent=0 // pred_region
    _
  $region17: #{accident_xai_forward.7} parent=0 // pred_fallthru
    _
  // Predicated region
  $region18: #{accident_xai_forward.7} parent=0 // pred_check
    _
  $region19: #{accident_xai_forward.7} parent=0 // pred_check_branch
    %19 = sbr.rel (0) target = $region21
  $region20: #{accident_xai_forward.7} parent=0 // pred_region
    _
  $region21: #{accident_xai_forward.7} parent=0 // pred_fallthru
    _
  %v21 = vld [vmem:[%s0] sm:$0xf]
  %v22 = vld [vmem:[%s1] sm:$0xf]
  %v23 = vld [vmem:[%s1 + $0x4] sm:$0xf]
  %v24 = vld [vmem:[%s1 + $0x8] sm:$0xf]
  %v25 = vld [vmem:[%s1 + $0xc] sm:$0xf]
  %v26 = vld [vmem:[%s1 + $0x10] sm:$0xf]
  %v27 = vld [vmem:[%s1 + $0x14] sm:$0xf]
  %v28 = vld [vmem:[%s1 + $0x18] sm:$0xf]
  %v29 = vld [vmem:[%s1 + $0x1c] sm:$0xf]
  %v30 = vld [vmem:[%s1 + $0x20] sm:$0xf]
  %v31 = vld [vmem:[%s1 + $0x24] sm:$0xf]
  %v32 = vld [vmem:[%s1 + $0x28] sm:$0xf]
  %v33 = vld [vmem:[%s1 + $0x2c] sm:$0xf]
  %v34 = vld [vmem:[%s1 + $0x30] sm:$0xf]
  %v35 = vld [vmem:[%s1 + $0x34] sm:$0xf]
  %v36 = vld [vmem:[%s1 + $0x38] sm:$0xf]
  %v37 = vld [vmem:[%s1 + $0x3c] sm:$0xf]
  %v38 = vld [vmem:[%s2] sm:$0x1]
  %v40 = vlaneseq
  %v41 = vshrl.u32 %v40, 7
  %v42 = vsub.s32 0, %v41
  %v43 = vrot.slane %v38, %v42
  %v61 = vunpack.c.l.b16 %v22
  %v62 = vunpack.c.l.b16 %v23
  %v63 = vunpack.c.l.b16 %v24
  %v64 = vunpack.c.l.b16 %v25
  %v65 = vunpack.c.l.b16 %v26
  %v66 = vunpack.c.l.b16 %v27
  %v67 = vunpack.c.l.b16 %v28
  %v68 = vunpack.c.l.b16 %v29
  %v69 = vunpack.c.l.b16 %v30
  %v70 = vunpack.c.l.b16 %v31
  %v71 = vunpack.c.l.b16 %v32
  %v72 = vunpack.c.l.b16 %v33
  %v73 = vunpack.c.l.b16 %v34
  %v74 = vunpack.c.l.b16 %v35
  %v75 = vunpack.c.l.b16 %v36
  %v76 = vunpack.c.l.b16 %v37
  %v77 = vpack.c.b16 %v62, %v61
  %v78 = vpack.c.b16 %v64, %v63
  %v79 = vpack.c.b16 %v66, %v65
  %v80 = vpack.c.b16 %v68, %v67
  %v81 = vpack.c.b16 %v70, %v69
  %v82 = vpack.c.b16 %v72, %v71
  %v83 = vpack.c.b16 %v74, %v73
  %v84 = vpack.c.b16 %v76, %v75
  %93 = vmatprep.subr.bf16.mxu0 0
  %94 = vmatpush1.bf16.msra.mxu0 %v77
  %95 = vmatprep.subr.bf16.mxu0 0
  %96 = vmatpush1.bf16.msra.mxu0 %v78
  %97 = vmatprep.subr.bf16.mxu0 0
  %98 = vmatpush1.bf16.msra.mxu0 %v79
  %99 = vmatprep.subr.bf16.mxu0 0
  %100 = vmatpush1.bf16.msra.mxu0 %v80
  %101 = vmatprep.subr.bf16.mxu0 0
  %102 = vmatpush1.bf16.msra.mxu0 %v81
  %103 = vmatprep.subr.bf16.mxu0 0
  %104 = vmatpush1.bf16.msra.mxu0 %v82
  %105 = vmatprep.subr.bf16.mxu0 0
  %106 = vmatpush1.bf16.msra.mxu0 %v83
  %107 = vmatprep.subr.bf16.mxu0 0
  %108 = vmatpush1.bf16.msra.mxu0 %v84
  %109 = vmatprep.subr.bf16.mxu0 0
  %110 = vmatpush1.bf16.msra.mxu0 0
  %111 = vmatprep.subr.bf16.mxu0 0
  %112 = vmatpush1.bf16.msra.mxu0 0
  %113 = vmatprep.subr.bf16.mxu0 0
  %114 = vmatpush1.bf16.msra.mxu0 0
  %115 = vmatprep.subr.bf16.mxu0 0
  %116 = vmatpush1.bf16.msra.mxu0 0
  %117 = vmatprep.subr.bf16.mxu0 0
  %118 = vmatpush1.bf16.msra.mxu0 0
  %119 = vmatprep.subr.bf16.mxu0 0
  %120 = vmatpush1.bf16.msra.mxu0 0
  %121 = vmatprep.subr.bf16.mxu0 0
  %122 = vmatpush1.bf16.msra.mxu0 0
  %123 = vmatprep.subr.bf16.mxu0 0
  %124 = vmatpush1.bf16.msra.mxu0 0
  %125 = vmatprep.mubr.bf16.mxu0 0
  %126 = vmatmul.mubr.bf16.gmra.mrb[0].mxu0 %v21
  %v127 = vpop.f32.mrb[0].mxu0
  %v128 = vadd.f32 %v43, %v127
  %v129 = vpop.f32.mrb[0].mxu0
  %v130 = vpop.f32.mrb[0].mxu0
  %v131 = vpop.f32.mrb[0].mxu0
  %132 = vdwg.mxu0
  %v133 = vmax.f32 %v128, 0.0
  %v134 = vpack.c.bf16 %v133, %v133
  %v135 = vld [vmem:[%s3] sm:$0xf]
  %v136 = vld [vmem:[%s3 + $0x4] sm:$0xf]
  %v137 = vld [vmem:[%s3 + $0x8] sm:$0xf]
  %v138 = vld [vmem:[%s3 + $0xc] sm:$0xf]
  %v139 = vld [vmem:[%s3 + $0x10] sm:$0xf]
  %v140 = vld [vmem:[%s3 + $0x14] sm:$0xf]
  %v141 = vld [vmem:[%s3 + $0x18] sm:$0xf]
  %v142 = vld [vmem:[%s3 + $0x1c] sm:$0xf]
  %v143 = vld [vmem:[%s4] sm:$0x1]
  %v145 = vlaneseq
  %v146 = vshrl.u32 %v145, 7
  %v147 = vsub.s32 0, %v146
  %v148 = vrot.slane %v143, %v147
  %v158 = vunpack.c.l.b16 %v135
  %v159 = vunpack.c.l.b16 %v136
  %v160 = vunpack.c.l.b16 %v137
  %v161 = vunpack.c.l.b16 %v138
  %v162 = vunpack.c.l.b16 %v139
  %v163 = vunpack.c.l.b16 %v140
  %v164 = vunpack.c.l.b16 %v141
  %v165 = vunpack.c.l.b16 %v142
  %v166 = vpack.c.b16 %v159, %v158
  %v167 = vpack.c.b16 %v161, %v160
  %v168 = vpack.c.b16 %v163, %v162
  %v169 = vpack.c.b16 %v165, %v164
  %vm174 = vcmask 523264
  %v176 = vsel %vm174, %v134, 0
  %178 = vmatprep.subr.bf16.mxu0 0
  %179 = vmatpush1.bf16.msra.mxu0 %v166
  %180 = vmatprep.subr.bf16.mxu0 0
  %181 = vmatpush1.bf16.msra.mxu0 %v167
  %182 = vmatprep.subr.bf16.mxu0 0
  %183 = vmatpush1.bf16.msra.mxu0 %v168
  %184 = vmatprep.subr.bf16.mxu0 0
  %185 = vmatpush1.bf16.msra.mxu0 %v169
  %186 = vmatprep.subr.bf16.mxu0 0
  %187 = vmatpush1.bf16.msra.mxu0 0
  %188 = vmatprep.subr.bf16.mxu0 0
  %189 = vmatpush1.bf16.msra.mxu0 0
  %190 = vmatprep.subr.bf16.mxu0 0
  %191 = vmatpush1.bf16.msra.mxu0 0
  %192 = vmatprep.subr.bf16.mxu0 0
  %193 = vmatpush1.bf16.msra.mxu0 0
  %194 = vmatprep.subr.bf16.mxu0 0
  %195 = vmatpush1.bf16.msra.mxu0 0
  %196 = vmatprep.subr.bf16.mxu0 0
  %197 = vmatpush1.bf16.msra.mxu0 0
  %198 = vmatprep.subr.bf16.mxu0 0
  %199 = vmatpush1.bf16.msra.mxu0 0
  %200 = vmatprep.subr.bf16.mxu0 0
  %201 = vmatpush1.bf16.msra.mxu0 0
  %202 = vmatprep.subr.bf16.mxu0 0
  %203 = vmatpush1.bf16.msra.mxu0 0
  %204 = vmatprep.subr.bf16.mxu0 0
  %205 = vmatpush1.bf16.msra.mxu0 0
  %206 = vmatprep.subr.bf16.mxu0 0
  %207 = vmatpush1.bf16.msra.mxu0 0
  %208 = vmatprep.subr.bf16.mxu0 0
  %209 = vmatpush1.bf16.msra.mxu0 0
  %210 = vmatprep.mubr.bf16.mxu0 0
  %211 = vmatmul.mubr.bf16.gmra.mrb[0].mxu0 %v176
  %v212 = vpop.f32.mrb[0].mxu0
  %v213 = vadd.f32 %v148, %v212
  %v214 = vpop.f32.mrb[0].mxu0
  %v215 = vpop.f32.mrb[0].mxu0
  %v216 = vpop.f32.mrb[0].mxu0
  %217 = vdwg.mxu0
  %218 = vst [vmem:[%s5] sm:$0xff] %v213
  // Predicated region
  $region22: #{accident_xai_forward.7} parent=0 // pred_check
    _
  $region23: #{accident_xai_forward.7} parent=0 // pred_check_branch
    %220 = sbr.rel (0) target = $region25
  $region24: #{accident_xai_forward.7} parent=0 // pred_region
    _
  $region25: #{accident_xai_forward.7} parent=0 // pred_fallthru
    _
  // Predicated region
  $region26: #{accident_xai_forward.7} parent=0 // pred_check
    _
  $region27: #{accident_xai_forward.7} parent=0 // pred_check_branch
    %222 = sbr.rel (0) target = $region29
  $region28: #{accident_xai_forward.7} parent=0 // pred_region
    _
  $region29: #{accident_xai_forward.7} parent=0 // pred_fallthru
    _

// kernel: accident_xai_forward.5
$region0: #{accident_xai_forward.5}
  #allocation0 [shape = 'u32[]', space=smem, size = 0x4, offset = 0x4, fixed_abs, tag = 'smem constant byte address 0x4 - core index']
  #allocation1 [shape = 'u32[144,128]{1,0:T(1,128)}', space=vmem, size = 0x12000, scoped, tag = 'internal scratch']
  %s0 = inlined_call_operand.vmem [shape: bf16[8,128], index: 0, kind: input, shape index: {}]
  %s1 = inlined_call_operand.vmem [shape: bf16[128,2048], index: 1, kind: input, shape index: {}]
  %s2 = inlined_call_operand.vmem [shape: f32[1,2048], index: 2, kind: input, shape index: {}]
  %s3 = inlined_call_operand.vmem [shape: bf16[2048,256], index: 3, kind: input, shape index: {}]
  %s4 = inlined_call_operand.vmem [shape: f32[1,256], index: 4, kind: input, shape index: {}]
  %s5 = inlined_call_operand.vmem [shape: bf16[256,384], index: 5, kind: input, shape index: {}]
  %s6 = inlined_call_operand.vmem [shape: f32[1,384], index: 6, kind: input, shape index: {}]
  %s7 = inlined_call_operand.vmem [shape: f32[8,384], index: 7, kind: output, shape index: {}]
  %s8 = sld [smem:[#allocation0]]
  $region38: #{accident_xai_forward.5} parent=0
    _
  %s10 = ssub.s32 1, %s8
  %s11 = scalar_select 0, %s10, %s8
  // Predicated region
  $region2: #{accident_xai_forward.5} parent=0 // pred_check
    _
  $region3: #{accident_xai_forward.5} parent=0 // pred_check_branch
    %13 = sbr.rel (0) target = $region5
  $region4: #{accident_xai_forward.5} parent=0 // pred_region
    _
  $region5: #{accident_xai_forward.5} parent=0 // pred_fallthru
    _
  // Predicated region
  $region6: #{accident_xai_forward.5} parent=0 // pred_check
    _
  $region7: #{accident_xai_forward.5} parent=0 // pred_check_branch
    %15 = sbr.rel (0) target = $region9
  $region8: #{accident_xai_forward.5} parent=0 // pred_region
    _
  $region9: #{accident_xai_forward.5} parent=0 // pred_fallthru
    _
  // Predicated region
  $region10: #{accident_xai_forward.5} parent=0 // pred_check
    _
  $region11: #{accident_xai_forward.5} parent=0 // pred_check_branch
    %17 = sbr.rel (0) target = $region13
  $region12: #{accident_xai_forward.5} parent=0 // pred_region
    _
  $region13: #{accident_xai_forward.5} parent=0 // pred_fallthru
    _
  // Predicated region
  $region14: #{accident_xai_forward.5} parent=0 // pred_check
    _
  $region15: #{accident_xai_forward.5} parent=0 // pred_check_branch
    %19 = sbr.rel (0) target = $region17
  $region16: #{accident_xai_forward.5} parent=0 // pred_region
    _
  $region17: #{accident_xai_forward.5} parent=0 // pred_fallthru
    _
  // Predicated region
  $region18: #{accident_xai_forward.5} parent=0 // pred_check
    _
  $region19: #{accident_xai_forward.5} parent=0 // pred_check_branch
    %21 = sbr.rel (0) target = $region21
  $region20: #{accident_xai_forward.5} parent=0 // pred_region
    _
  $region21: #{accident_xai_forward.5} parent=0 // pred_fallthru
    _
  // Predicated region
  $region22: #{accident_xai_forward.5} parent=0 // pred_check
    _
  $region23: #{accident_xai_forward.5} parent=0 // pred_check_branch
    %23 = sbr.rel (0) target = $region25
  $region24: #{accident_xai_forward.5} parent=0 // pred_region
    _
  $region25: #{accident_xai_forward.5} parent=0 // pred_fallthru
    _
  // Predicated region
  $region26: #{accident_xai_forward.5} parent=0 // pred_check
    _
  $region27: #{accident_xai_forward.5} parent=0 // pred_check_branch
    %25 = sbr.rel (0) target = $region29
  $region28: #{accident_xai_forward.5} parent=0 // pred_region
    _
  $region29: #{accident_xai_forward.5} parent=0 // pred_fallthru
    _
  %v27 = vld [vmem:[%s0] sm:$0xf]
  %v28 = vld [vmem:[%s1] sm:$0xff]
  %v29 = vld [vmem:[%s1 + $0x8] sm:$0xff]
  %v30 = vld [vmem:[%s1 + $0x10] sm:$0xff]
  %v31 = vld [vmem:[%s1 + $0x18] sm:$0xff]
  %v32 = vld [vmem:[%s1 + $0x20] sm:$0xff]
  %v33 = vld [vmem:[%s1 + $0x28] sm:$0xff]
  %v34 = vld [vmem:[%s1 + $0x30] sm:$0xff]
  %v35 = vld [vmem:[%s1 + $0x38] sm:$0xff]
  %v36 = vld [vmem:[%s1 + $0x40] sm:$0xff]
  %v37 = vld [vmem:[%s1 + $0x48] sm:$0xff]
  %v38 = vld [vmem:[%s1 + $0x50] sm:$0xff]
  %v39 = vld [vmem:[%s1 + $0x58] sm:$0xff]
  %v40 = vld [vmem:[%s1 + $0x60] sm:$0xff]
  %v41 = vld [vmem:[%s1 + $0x68] sm:$0xff]
  %v42 = vld [vmem:[%s1 + $0x70] sm:$0xff]
  %v43 = vld [vmem:[%s1 + $0x78] sm:$0xff]
  %v44 = vld [vmem:[%s1 + $0x80] sm:$0xff]
  %v45 = vld [vmem:[%s1 + $0x88] sm:$0xff]
  %v46 = vld [vmem:[%s1 + $0x90] sm:$0xff]
  %v47 = vld [vmem:[%s1 + $0x98] sm:$0xff]
  %v48 = vld [vmem:[%s1 + $0xa0] sm:$0xff]
  %v49 = vld [vmem:[%s1 + $0xa8] sm:$0xff]
  %v50 = vld [vmem:[%s1 + $0xb0] sm:$0xff]
  %v51 = vld [vmem:[%s1 + $0xb8] sm:$0xff]
  %v52 = vld [vmem:[%s1 + $0xc0] sm:$0xff]
  %v53 = vld [vmem:[%s1 + $0xc8] sm:$0xff]
  %v54 = vld [vmem:[%s1 + $0xd0] sm:$0xff]
  %v55 = vld [vmem:[%s1 + $0xd8] sm:$0xff]
  %v56 = vld [vmem:[%s1 + $0xe0] sm:$0xff]
  %v57 = vld [vmem:[%s1 + $0xe8] sm:$0xff]
  %v58 = vld [vmem:[%s1 + $0xf0] sm:$0xff]
  %v59 = vld [vmem:[%s1 + $0xf8] sm:$0xff]
  %v60 = vld [vmem:[%s1 + $0x100] sm:$0xff]
  %v61 = vld [vmem:[%s1 + $0x108] sm:$0xff]
  %v62 = vld [vmem:[%s1 + $0x110] sm:$0xff]
  %v63 = vld [vmem:[%s1 + $0x118] sm:$0xff]
  %v64 = vld [vmem:[%s1 + $0x120] sm:$0xff]
  %v65 = vld [vmem:[%s1 + $0x128] sm:$0xff]
  %v66 = vld [vmem:[%s1 + $0x130] sm:$0xff]
  %v67 = vld [vmem:[%s1 + $0x138] sm:$0xff]
  %v68 = vld [vmem:[%s1 + $0x140] sm:$0xff]
  %v69 = vld [vmem:[%s1 + $0x148] sm:$0xff]
  %v70 = vld [vmem:[%s1 + $0x150] sm:$0xff]
  %v71 = vld [vmem:[%s1 + $0x158] sm:$0xff]
  %v72 = vld [vmem:[%s1 + $0x160] sm:$0xff]
  %v73 = vld [vmem:[%s1 + $0x168] sm:$0xff]
  %v74 = vld [vmem:[%s1 + $0x170] sm:$0xff]
  %v75 = vld [vmem:[%s1 + $0x178] sm:$0xff]
  %v76 = vld [vmem:[%s1 + $0x180] sm:$0xff]
  %v77 = vld [vmem:[%s1 + $0x188] sm:$0xff]
  %v78 = vld [vmem:[%s1 + $0x190] sm:$0xff]
  %v79 = vld [vmem:[%s1 + $0x198] sm:$0xff]
  %v80 = vld [vmem:[%s1 + $0x1a0] sm:$0xff]
  %v81 = vld [vmem:[%s1 + $0x1a8] sm:$0xff]
  %v82 = vld [vmem:[%s1 + $0x1b0] sm:$0xff]
  %v83 = vld [vmem:[%s1 + $0x1b8] sm:$0xff]
  %v84 = vld [vmem:[%s1 + $0x1c0] sm:$0xff]
  %v85 = vld [vmem:[%s1 + $0x1c8] sm:$0xff]
  %v86 = vld [vmem:[%s1 + $0x1d0] sm:$0xff]
  %v87 = vld [vmem:[%s1 + $0x1d8] sm:$0xff]
  %v88 = vld [vmem:[%s1 + $0x1e0] sm:$0xff]
  %v89 = vld [vmem:[%s1 + $0x1e8] sm:$0xff]
  %v90 = vld [vmem:[%s1 + $0x1f0] sm:$0xff]
  %v91 = vld [vmem:[%s1 + $0x1f8] sm:$0xff]
  %v92 = vld [vmem:[%s1 + $0x200] sm:$0xff]
  %v93 = vld [vmem:[%s1 + $0x208] sm:$0xff]
  %v94 = vld [vmem:[%s1 + $0x210] sm:$0xff]
  %v95 = vld [vmem:[%s1 + $0x218] sm:$0xff]
  %v96 = vld [vmem:[%s1 + $0x220] sm:$0xff]
  %v97 = vld [vmem:[%s1 + $0x228] sm:$0xff]
  %v98 = vld [vmem:[%s1 + $0x230] sm:$0xff]
  %v99 = vld [vmem:[%s1 + $0x238] sm:$0xff]
  %v100 = vld [vmem:[%s1 + $0x240] sm:$0xff]
  %v101 = vld [vmem:[%s1 + $0x248] sm:$0xff]
  %v102 = vld [vmem:[%s1 + $0x250] sm:$0xff]
  %v103 = vld [vmem:[%s1 + $0x258] sm:$0xff]
  %v104 = vld [vmem:[%s1 + $0x260] sm:$0xff]
  %v105 = vld [vmem:[%s1 + $0x268] sm:$0xff]
  %v106 = vld [vmem:[%s1 + $0x270] sm:$0xff]
  %v107 = vld [vmem:[%s1 + $0x278] sm:$0xff]
  %v108 = vld [vmem:[%s1 + $0x280] sm:$0xff]
  %v109 = vld [vmem:[%s1 + $0x288] sm:$0xff]
  %v110 = vld [vmem:[%s1 + $0x290] sm:$0xff]
  %v111 = vld [vmem:[%s1 + $0x298] sm:$0xff]
  %v112 = vld [vmem:[%s1 + $0x2a0] sm:$0xff]
  %v113 = vld [vmem:[%s1 + $0x2a8] sm:$0xff]
  %v114 = vld [vmem:[%s1 + $0x2b0] sm:$0xff]
  %v115 = vld [vmem:[%s1 + $0x2b8] sm:$0xff]
  %v116 = vld [vmem:[%s1 + $0x2c0] sm:$0xff]
  %v117 = vld [vmem:[%s1 + $0x2c8] sm:$0xff]
  %v118 = vld [vmem:[%s1 + $0x2d0] sm:$0xff]
  %v119 = vld [vmem:[%s1 + $0x2d8] sm:$0xff]
  %v120 = vld [vmem:[%s1 + $0x2e0] sm:$0xff]
  %v121 = vld [vmem:[%s1 + $0x2e8] sm:$0xff]
  %v122 = vld [vmem:[%s1 + $0x2f0] sm:$0xff]
  %v123 = vld [vmem:[%s1 + $0x2f8] sm:$0xff]
  %v124 = vld [vmem:[%s1 + $0x300] sm:$0xff]
  %v125 = vld [vmem:[%s1 + $0x308] sm:$0xff]
  %v126 = vld [vmem:[%s1 + $0x310] sm:$0xff]
  %v127 = vld [vmem:[%s1 + $0x318] sm:$0xff]
  %v128 = vld [vmem:[%s1 + $0x320] sm:$0xff]
  %v129 = vld [vmem:[%s1 + $0x328] sm:$0xff]
  %v130 = vld [vmem:[%s1 + $0x330] sm:$0xff]
  %v131 = vld [vmem:[%s1 + $0x338] sm:$0xff]
  %v132 = vld [vmem:[%s1 + $0x340] sm:$0xff]
  %v133 = vld [vmem:[%s1 + $0x348] sm:$0xff]
  %v134 = vld [vmem:[%s1 + $0x350] sm:$0xff]
  %v135 = vld [vmem:[%s1 + $0x358] sm:$0xff]
  %v136 = vld [vmem:[%s1 + $0x360] sm:$0xff]
  %v137 = vld [vmem:[%s1 + $0x368] sm:$0xff]
  %v138 = vld [vmem:[%s1 + $0x370] sm:$0xff]
  %v139 = vld [vmem:[%s1 + $0x378] sm:$0xff]
  %v140 = vld [vmem:[%s1 + $0x380] sm:$0xff]
  %v141 = vld [vmem:[%s1 + $0x388] sm:$0xff]
  %v142 = vld [vmem:[%s1 + $0x390] sm:$0xff]
  %v143 = vld [vmem:[%s1 + $0x398] sm:$0xff]
  %v144 = vld [vmem:[%s1 + $0x3a0] sm:$0xff]
  %v145 = vld [vmem:[%s1 + $0x3a8] sm:$0xff]
  %v146 = vld [vmem:[%s1 + $0x3b0] sm:$0xff]
  %v147 = vld [vmem:[%s1 + $0x3b8] sm:$0xff]
  %v148 = vld [vmem:[%s1 + $0x3c0] sm:$0xff]
  %v149 = vld [vmem:[%s1 + $0x3c8] sm:$0xff]
  %v150 = vld [vmem:[%s1 + $0x3d0] sm:$0xff]
  %v151 = vld [vmem:[%s1 + $0x3d8] sm:$0xff]
  %v152 = vld [vmem:[%s1 + $0x3e0] sm:$0xff]
  %v153 = vld [vmem:[%s1 + $0x3e8] sm:$0xff]
  %v154 = vld [vmem:[%s1 + $0x3f0] sm:$0xff]
  %v155 = vld [vmem:[%s1 + $0x3f8] sm:$0xff]
  %v156 = vld [vmem:[%s2] sm:$0xff]
  %v157 = vld [vmem:[%s2 + $0x8] sm:$0xff]
  %v160 = vlaneseq
  %v161 = vshrl.u32 %v160, 7
  %v162 = vsub.s32 0, %v161
  %v163 = vrot.slane %v156, %v162
  %v164 = vlaneseq
  %v165 = vshrl.u32 %v164, 7
  %v166 = vsub.s32 1, %v165
  %v167 = vrot.slane %v156, %v166
  %v168 = vlaneseq
  %v169 = vshrl.u32 %v168, 7
  %v170 = vsub.s32 2, %v169
  %v171 = vrot.slane %v156, %v170
  %v172 = vlaneseq
  %v173 = vshrl.u32 %v172, 7
  %v174 = vsub.s32 3, %v173
  %v175 = vrot.slane %v156, %v174
  %v176 = vlaneseq
  %v177 = vshrl.u32 %v176, 7
  %v178 = vsub.s32 4, %v177
  %v179 = vrot.slane %v156, %v178
  %v180 = vlaneseq
  %v181 = vshrl.u32 %v180, 7
  %v182 = vsub.s32 5, %v181
  %v183 = vrot.slane %v156, %v182
  %v184 = vlaneseq
  %v185 = vshrl.u32 %v184, 7
  %v186 = vsub.s32 6, %v185
  %v187 = vrot.slane %v156, %v186
  %v188 = vlaneseq
  %v189 = vshrl.u32 %v188, 7
  %v190 = vsub.s32 7, %v189
  %v191 = vrot.slane %v156, %v190
  %v192 = vlaneseq
  %v193 = vshrl.u32 %v192, 7
  %v194 = vsub.s32 0, %v193
  %v195 = vrot.slane %v157, %v194
  %v196 = vlaneseq
  %v197 = vshrl.u32 %v196, 7
  %v198 = vsub.s32 1, %v197
  %v199 = vrot.slane %v157, %v198
  %v200 = vlaneseq
  %v201 = vshrl.u32 %v200, 7
  %v202 = vsub.s32 2, %v201
  %v203 = vrot.slane %v157, %v202
  %v204 = vlaneseq
  %v205 = vshrl.u32 %v204, 7
  %v206 = vsub.s32 3, %v205
  %v207 = vrot.slane %v157, %v206
  %v208 = vlaneseq
  %v209 = vshrl.u32 %v208, 7
  %v210 = vsub.s32 4, %v209
  %v211 = vrot.slane %v157, %v210
  %v212 = vlaneseq
  %v213 = vshrl.u32 %v212, 7
  %v214 = vsub.s32 5, %v213
  %v215 = vrot.slane %v157, %v214
  %v216 = vlaneseq
  %v217 = vshrl.u32 %v216, 7
  %v218 = vsub.s32 6, %v217
  %v219 = vrot.slane %v157, %v218
  %v220 = vlaneseq
  %v221 = vshrl.u32 %v220, 7
  %v222 = vsub.s32 7, %v221
  %v223 = vrot.slane %v157, %v222
  %v368 = vunpack.c.l.b16 %v28
  %v369 = vunpack.c.h.b16 %v28
  %v370 = vunpack.c.l.b16 %v29
  %v371 = vunpack.c.h.b16 %v29
  %v372 = vunpack.c.l.b16 %v30
  %v373 = vunpack.c.h.b16 %v30
  %v374 = vunpack.c.l.b16 %v31
  %v375 = vunpack.c.h.b16 %v31
  %v376 = vunpack.c.l.b16 %v32
  %v377 = vunpack.c.h.b16 %v32
  %v378 = vunpack.c.l.b16 %v33
  %v379 = vunpack.c.h.b16 %v33
  %v380 = vunpack.c.l.b16 %v34
  %v381 = vunpack.c.h.b16 %v34
  %v382 = vunpack.c.l.b16 %v35
  %v383 = vunpack.c.h.b16 %v35
  %v384 = vunpack.c.l.b16 %v36
  %v385 = vunpack.c.h.b16 %v36
  %v386 = vunpack.c.l.b16 %v37
  %v387 = vunpack.c.h.b16 %v37
  %v388 = vunpack.c.l.b16 %v38
  %v389 = vunpack.c.h.b16 %v38
  %v390 = vunpack.c.l.b16 %v39
  %v391 = vunpack.c.h.b16 %v39
  %v392 = vunpack.c.l.b16 %v40
  %v393 = vunpack.c.h.b16 %v40
  %v394 = vunpack.c.l.b16 %v41
  %v395 = vunpack.c.h.b16 %v41
  %v396 = vunpack.c.l.b16 %v42
  %v397 = vunpack.c.h.b16 %v42
  %v398 = vunpack.c.l.b16 %v43
  %v399 = vunpack.c.h.b16 %v43
  %v400 = vunpack.c.l.b16 %v44
  %v401 = vunpack.c.h.b16 %v44
  %v402 = vunpack.c.l.b16 %v45
  %v403 = vunpack.c.h.b16 %v45
  %v404 = vunpack.c.l.b16 %v46
  %v405 = vunpack.c.h.b16 %v46
  %v406 = vunpack.c.l.b16 %v47
  %v407 = vunpack.c.h.b16 %v47
  %v408 = vunpack.c.l.b16 %v48
  %v409 = vunpack.c.h.b16 %v48
  %v410 = vunpack.c.l.b16 %v49
  %v411 = vunpack.c.h.b16 %v49
  %v412 = vunpack.c.l.b16 %v50
  %v413 = vunpack.c.h.b16 %v50
  %v414 = vunpack.c.l.b16 %v51
  %v415 = vunpack.c.h.b16 %v51
  %v416 = vunpack.c.l.b16 %v52
  %v417 = vunpack.c.h.b16 %v52
  %v418 = vunpack.c.l.b16 %v53
  %v419 = vunpack.c.h.b16 %v53
  %v420 = vunpack.c.l.b16 %v54
  %v421 = vunpack.c.h.b16 %v54
  %v422 = vunpack.c.l.b16 %v55
  %v423 = vunpack.c.h.b16 %v55
  %v424 = vunpack.c.l.b16 %v56
  %v425 = vunpack.c.h.b16 %v56
  %v426 = vunpack.c.l.b16 %v57
  %v427 = vunpack.c.h.b16 %v57
  %v428 = vunpack.c.l.b16 %v58
  %v429 = vunpack.c.h.b16 %v58
  %v430 = vunpack.c.l.b16 %v59
  %v431 = vunpack.c.h.b16 %v59
  %v432 = vunpack.c.l.b16 %v60
  %v433 = vunpack.c.h.b16 %v60
  %v434 = vunpack.c.l.b16 %v61
  %v435 = vunpack.c.h.b16 %v61
  %v436 = vunpack.c.l.b16 %v62
  %v437 = vunpack.c.h.b16 %v62
  %v438 = vunpack.c.l.b16 %v63
  %v439 = vunpack.c.h.b16 %v63
  %v440 = vunpack.c.l.b16 %v64
  %v441 = vunpack.c.h.b16 %v64
  %v442 = vunpack.c.l.b16 %v65
  %v443 = vunpack.c.h.b16 %v65
  %v444 = vunpack.c.l.b16 %v66
  %v445 = vunpack.c.h.b16 %v66
  %v446 = vunpack.c.l.b16 %v67
  %v447 = vunpack.c.h.b16 %v67
  %v448 = vunpack.c.l.b16 %v68
  %v449 = vunpack.c.h.b16 %v68
  %v450 = vunpack.c.l.b16 %v69
  %v451 = vunpack.c.h.b16 %v69
  %v452 = vunpack.c.l.b16 %v70
  %v453 = vunpack.c.h.b16 %v70
  %v454 = vunpack.c.l.b16 %v71
  %v455 = vunpack.c.h.b16 %v71
  %v456 = vunpack.c.l.b16 %v72
  %v457 = vunpack.c.h.b16 %v72
  %v458 = vunpack.c.l.b16 %v73
  %v459 = vunpack.c.h.b16 %v73
  %v460 = vunpack.c.l.b16 %v74
  %v461 = vunpack.c.h.b16 %v74
  %v462 = vunpack.c.l.b16 %v75
  %v463 = vunpack.c.h.b16 %v75
  %v464 = vunpack.c.l.b16 %v76
  %v465 = vunpack.c.h.b16 %v76
  %v466 = vunpack.c.l.b16 %v77
  %v467 = vunpack.c.h.b16 %v77
  %v468 = vunpack.c.l.b16 %v78
  %v469 = vunpack.c.h.b16 %v78
  %v470 = vunpack.c.l.b16 %v79
  %v471 = vunpack.c.h.b16 %v79
  %v472 = vunpack.c.l.b16 %v80
  %v473 = vunpack.c.h.b16 %v80
  %v474 = vunpack.c.l.b16 %v81
  %v475 = vunpack.c.h.b16 %v81
  %v476 = vunpack.c.l.b16 %v82
  %v477 = vunpack.c.h.b16 %v82
  %v478 = vunpack.c.l.b16 %v83
  %v479 = vunpack.c.h.b16 %v83
  %v480 = vunpack.c.l.b16 %v84
  %v481 = vunpack.c.h.b16 %v84
  %v482 = vunpack.c.l.b16 %v85
  %v483 = vunpack.c.h.b16 %v85
  %v484 = vunpack.c.l.b16 %v86
  %v485 = vunpack.c.h.b16 %v86
  %v486 = vunpack.c.l.b16 %v87
  %v487 = vunpack.c.h.b16 %v87
  %v488 = vunpack.c.l.b16 %v88
  %v489 = vunpack.c.h.b16 %v88
  %v490 = vunpack.c.l.b16 %v89
  %v491 = vunpack.c.h.b16 %v89
  %v492 = vunpack.c.l.b16 %v90
  %v493 = vunpack.c.h.b16 %v90
  %v494 = vunpack.c.l.b16 %v91
  %v495 = vunpack.c.h.b16 %v91
  %v496 = vunpack.c.l.b16 %v92
  %v497 = vunpack.c.h.b16 %v92
  %v498 = vunpack.c.l.b16 %v93
  %v499 = vunpack.c.h.b16 %v93
  %v500 = vunpack.c.l.b16 %v94
  %v501 = vunpack.c.h.b16 %v94
  %v502 = vunpack.c.l.b16 %v95
  %v503 = vunpack.c.h.b16 %v95
  %v504 = vunpack.c.l.b16 %v96
  %v505 = vunpack.c.h.b16 %v96
  %v506 = vunpack.c.l.b16 %v97
  %v507 = vunpack.c.h.b16 %v97
  %v508 = vunpack.c.l.b16 %v98
  %v509 = vunpack.c.h.b16 %v98
  %v510 = vunpack.c.l.b16 %v99
  %v511 = vunpack.c.h.b16 %v99
  %v512 = vunpack.c.l.b16 %v100
  %v513 = vunpack.c.h.b16 %v100
  %v514 = vunpack.c.l.b16 %v101
  %v515 = vunpack.c.h.b16 %v101
  %v516 = vunpack.c.l.b16 %v102
  %v517 = vunpack.c.h.b16 %v102
  %v518 = vunpack.c.l.b16 %v103
  %v519 = vunpack.c.h.b16 %v103
  %v520 = vunpack.c.l.b16 %v104
  %v521 = vunpack.c.h.b16 %v104
  %v522 = vunpack.c.l.b16 %v105
  %v523 = vunpack.c.h.b16 %v105
  %v524 = vunpack.c.l.b16 %v106
  %v525 = vunpack.c.h.b16 %v106
  %v526 = vunpack.c.l.b16 %v107
  %v527 = vunpack.c.h.b16 %v107
  %v528 = vunpack.c.l.b16 %v108
  %v529 = vunpack.c.h.b16 %v108
  %v530 = vunpack.c.l.b16 %v109
  %v531 = vunpack.c.h.b16 %v109
  %v532 = vunpack.c.l.b16 %v110
  %v533 = vunpack.c.h.b16 %v110
  %v534 = vunpack.c.l.b16 %v111
  %v535 = vunpack.c.h.b16 %v111
  %v536 = vunpack.c.l.b16 %v112
  %v537 = vunpack.c.h.b16 %v112
  %v538 = vunpack.c.l.b16 %v113
  %v539 = vunpack.c.h.b16 %v113
  %v540 = vunpack.c.l.b16 %v114
  %v541 = vunpack.c.h.b16 %v114
  %v542 = vunpack.c.l.b16 %v115
  %v543 = vunpack.c.h.b16 %v115
  %v544 = vunpack.c.l.b16 %v116
  %v545 = vunpack.c.h.b16 %v116
  %v546 = vunpack.c.l.b16 %v117
  %v547 = vunpack.c.h.b16 %v117
  %v548 = vunpack.c.l.b16 %v118
  %v549 = vunpack.c.h.b16 %v118
  %v550 = vunpack.c.l.b16 %v119
  %v551 = vunpack.c.h.b16 %v119
  %v552 = vunpack.c.l.b16 %v120
  %v553 = vunpack.c.h.b16 %v120
  %v554 = vunpack.c.l.b16 %v121
  %v555 = vunpack.c.h.b16 %v121
  %v556 = vunpack.c.l.b16 %v122
  %v557 = vunpack.c.h.b16 %v122
  %v558 = vunpack.c.l.b16 %v123
  %v559 = vunpack.c.h.b16 %v123
  %v560 = vunpack.c.l.b16 %v124
  %v561 = vunpack.c.h.b16 %v124
  %v562 = vunpack.c.l.b16 %v125
  %v563 = vunpack.c.h.b16 %v125
  %v564 = vunpack.c.l.b16 %v126
  %v565 = vunpack.c.h.b16 %v126
  %v566 = vunpack.c.l.b16 %v127
  %v567 = vunpack.c.h.b16 %v127
  %v568 = vunpack.c.l.b16 %v128
  %v569 = vunpack.c.h.b16 %v128
  %v570 = vunpack.c.l.b16 %v129
  %v571 = vunpack.c.h.b16 %v129
  %v572 = vunpack.c.l.b16 %v130
  %v573 = vunpack.c.h.b16 %v130
  %v574 = vunpack.c.l.b16 %v131
  %v575 = vunpack.c.h.b16 %v131
  %v576 = vunpack.c.l.b16 %v132
  %v577 = vunpack.c.h.b16 %v132
  %v578 = vunpack.c.l.b16 %v133
  %v579 = vunpack.c.h.b16 %v133
  %v580 = vunpack.c.l.b16 %v134
  %v581 = vunpack.c.h.b16 %v134
  %v582 = vunpack.c.l.b16 %v135
  %v583 = vunpack.c.h.b16 %v135
  %v584 = vunpack.c.l.b16 %v136
  %v585 = vunpack.c.h.b16 %v136
  %v586 = vunpack.c.l.b16 %v137
  %v587 = vunpack.c.h.b16 %v137
  %v588 = vunpack.c.l.b16 %v138
  %v589 = vunpack.c.h.b16 %v138
  %v590 = vunpack.c.l.b16 %v139
  %v591 = vunpack.c.h.b16 %v139
  %v592 = vunpack.c.l.b16 %v140
  %v593 = vunpack.c.h.b16 %v140
  %v594 = vunpack.c.l.b16 %v141
  %v595 = vunpack.c.h.b16 %v141
  %v596 = vunpack.c.l.b16 %v142
  %v597 = vunpack.c.h.b16 %v142
  %v598 = vunpack.c.l.b16 %v143
  %v599 = vunpack.c.h.b16 %v143
  %v600 = vunpack.c.l.b16 %v144
  %v601 = vunpack.c.h.b16 %v144
  %v602 = vunpack.c.l.b16 %v145
  %v603 = vunpack.c.h.b16 %v145
  %v604 = vunpack.c.l.b16 %v146
  %v605 = vunpack.c.h.b16 %v146
  %v606 = vunpack.c.l.b16 %v147
  %v607 = vunpack.c.h.b16 %v147
  %v608 = vunpack.c.l.b16 %v148
  %v609 = vunpack.c.h.b16 %v148
  %v610 = vunpack.c.l.b16 %v149
  %v611 = vunpack.c.h.b16 %v149
  %v612 = vunpack.c.l.b16 %v150
  %v613 = vunpack.c.h.b16 %v150
  %v614 = vunpack.c.l.b16 %v151
  %v615 = vunpack.c.h.b16 %v151
  %v616 = vunpack.c.l.b16 %v152
  %v617 = vunpack.c.h.b16 %v152
  %v618 = vunpack.c.l.b16 %v153
  %v619 = vunpack.c.h.b16 %v153
  %v620 = vunpack.c.l.b16 %v154
  %v621 = vunpack.c.h.b16 %v154
  %v622 = vunpack.c.l.b16 %v155
  %v623 = vunpack.c.h.b16 %v155
  %v624 = vpack.c.b16 %v384, %v368
  %v625 = vpack.c.b16 %v385, %v369
  %v626 = vpack.c.b16 %v386, %v370
  %v627 = vpack.c.b16 %v387, %v371
  %v628 = vpack.c.b16 %v388, %v372
  %v629 = vpack.c.b16 %v389, %v373
  %v630 = vpack.c.b16 %v390, %v374
  %v631 = vpack.c.b16 %v391, %v375
  %v632 = vpack.c.b16 %v392, %v376
  %v633 = vpack.c.b16 %v393, %v377
  %v634 = vpack.c.b16 %v394, %v378
  %v635 = vpack.c.b16 %v395, %v379
  %v636 = vpack.c.b16 %v396, %v380
  %v637 = vpack.c.b16 %v397, %v381
  %v638 = vpack.c.b16 %v398, %v382
  %v639 = vpack.c.b16 %v399, %v383
  %v640 = vpack.c.b16 %v416, %v400
  %v641 = vpack.c.b16 %v417, %v401
  %v642 = vpack.c.b16 %v418, %v402
  %v643 = vpack.c.b16 %v419, %v403
  %v644 = vpack.c.b16 %v420, %v404
  %v645 = vpack.c.b16 %v421, %v405
  %v646 = vpack.c.b16 %v422, %v406
  %v647 = vpack.c.b16 %v423, %v407
  %v648 = vpack.c.b16 %v424, %v408
  %v649 = vpack.c.b16 %v425, %v409
  %v650 = vpack.c.b16 %v426, %v410
  %v651 = vpack.c.b16 %v427, %v411
  %v652 = vpack.c.b16 %v428, %v412
  %v653 = vpack.c.b16 %v429, %v413
  %v654 = vpack.c.b16 %v430, %v414
  %v655 = vpack.c.b16 %v431, %v415
  %v656 = vpack.c.b16 %v448, %v432
  %v657 = vpack.c.b16 %v449, %v433
  %v658 = vpack.c.b16 %v450, %v434
  %v659 = vpack.c.b16 %v451, %v435
  %v660 = vpack.c.b16 %v452, %v436
  %v661 = vpack.c.b16 %v453, %v437
  %v662 = vpack.c.b16 %v454, %v438
  %v663 = vpack.c.b16 %v455, %v439
  %v664 = vpack.c.b16 %v456, %v440
  %v665 = vpack.c.b16 %v457, %v441
  %v666 = vpack.c.b16 %v458, %v442
  %v667 = vpack.c.b16 %v459, %v443
  %v668 = vpack.c.b16 %v460, %v444
  %v669 = vpack.c.b16 %v461, %v445
  %v670 = vpack.c.b16 %v462, %v446
  %v671 = vpack.c.b16 %v463, %v447
  %v672 = vpack.c.b16 %v480, %v464
  %v673 = vpack.c.b16 %v481, %v465
  %v674 = vpack.c.b16 %v482, %v466
  %v675 = vpack.c.b16 %v483, %v467
  %v676 = vpack.c.b16 %v484, %v468
  %v677 = vpack.c.b16 %v485, %v469
  %v678 = vpack.c.b16 %v486, %v470
  %v679 = vpack.c.b16 %v487, %v471
  %v680 = vpack.c.b16 %v488, %v472
  %v681 = vpack.c.b16 %v489, %v473
  %v682 = vpack.c.b16 %v490, %v474
  %v683 = vpack.c.b16 %v491, %v475
  %v684 = vpack.c.b16 %v492, %v476
  %v685 = vpack.c.b16 %v493, %v477
  %v686 = vpack.c.b16 %v494, %v478
  %v687 = vpack.c.b16 %v495, %v479
  %v688 = vpack.c.b16 %v512, %v496
  %v689 = vpack.c.b16 %v513, %v497
  %v690 = vpack.c.b16 %v514, %v498
  %v691 = vpack.c.b16 %v515, %v499
  %v692 = vpack.c.b16 %v516, %v500
  %v693 = vpack.c.b16 %v517, %v501
  %v694 = vpack.c.b16 %v518, %v502
  %v695 = vpack.c.b16 %v519, %v503
  %v696 = vpack.c.b16 %v520, %v504
  %v697 = vpack.c.b16 %v521, %v505
  %v698 = vpack.c.b16 %v522, %v506
  %v699 = vpack.c.b16 %v523, %v507
  %v700 = vpack.c.b16 %v524, %v508
  %v701 = vpack.c.b16 %v525, %v509
  %v702 = vpack.c.b16 %v526, %v510
  %v703 = vpack.c.b16 %v527, %v511
  %v704 = vpack.c.b16 %v544, %v528
  %v705 = vpack.c.b16 %v545, %v529
  %v706 = vpack.c.b16 %v546, %v530
  %v707 = vpack.c.b16 %v547, %v531
  %v708 = vpack.c.b16 %v548, %v532
  %v709 = vpack.c.b16 %v549, %v533
  %v710 = vpack.c.b16 %v550, %v534
  %v711 = vpack.c.b16 %v551, %v535
  %v712 = vpack.c.b16 %v552, %v536
  %v713 = vpack.c.b16 %v553, %v537
  %v714 = vpack.c.b16 %v554, %v538
  %v715 = vpack.c.b16 %v555, %v539
  %v716 = vpack.c.b16 %v556, %v540
  %v717 = vpack.c.b16 %v557, %v541
  %v718 = vpack.c.b16 %v558, %v542
  %v719 = vpack.c.b16 %v559, %v543
  %v720 = vpack.c.b16 %v576, %v560
  %v721 = vpack.c.b16 %v577, %v561
  %v722 = vpack.c.b16 %v578, %v562
  %v723 = vpack.c.b16 %v579, %v563
  %v724 = vpack.c.b16 %v580, %v564
  %v725 = vpack.c.b16 %v581, %v565
  %v726 = vpack.c.b16 %v582, %v566
  %v727 = vpack.c.b16 %v583, %v567
  %v728 = vpack.c.b16 %v584, %v568
  %v729 = vpack.c.b16 %v585, %v569
  %v730 = vpack.c.b16 %v586, %v570
  %v731 = vpack.c.b16 %v587, %v571
  %v732 = vpack.c.b16 %v588, %v572
  %v733 = vpack.c.b16 %v589, %v573
  %v734 = vpack.c.b16 %v590, %v574
  %v735 = vpack.c.b16 %v591, %v575
  %v736 = vpack.c.b16 %v608, %v592
  %v737 = vpack.c.b16 %v609, %v593
  %v738 = vpack.c.b16 %v610, %v594
  %v739 = vpack.c.b16 %v611, %v595
  %v740 = vpack.c.b16 %v612, %v596
  %v741 = vpack.c.b16 %v613, %v597
  %v742 = vpack.c.b16 %v614, %v598
  %v743 = vpack.c.b16 %v615, %v599
  %v744 = vpack.c.b16 %v616, %v600
  %v745 = vpack.c.b16 %v617, %v601
  %v746 = vpack.c.b16 %v618, %v602
  %v747 = vpack.c.b16 %v619, %v603
  %v748 = vpack.c.b16 %v620, %v604
  %v749 = vpack.c.b16 %v621, %v605
  %v750 = vpack.c.b16 %v622, %v606
  %v751 = vpack.c.b16 %v623, %v607
  %880 = vmatprep.subr.bf16.mxu0 %v625
  %881 = vmatpush1.bf16.msra.mxu0 %v624
  %882 = vmatprep.subr.bf16.mxu0 %v641
  %883 = vmatpush1.bf16.msra.mxu0 %v640
  %884 = vmatprep.subr.bf16.mxu0 %v657
  %885 = vmatpush1.bf16.msra.mxu0 %v656
  %886 = vmatprep.subr.bf16.mxu0 %v673
  %887 = vmatpush1.bf16.msra.mxu0 %v672
  %888 = vmatprep.subr.bf16.mxu0 %v689
  %889 = vmatpush1.bf16.msra.mxu0 %v688
  %890 = vmatprep.subr.bf16.mxu0 %v705
  %891 = vmatpush1.bf16.msra.mxu0 %v704
  %892 = vmatprep.subr.bf16.mxu0 %v721
  %893 = vmatpush1.bf16.msra.mxu0 %v720
  %894 = vmatprep.subr.bf16.mxu0 %v737
  %895 = vmatpush1.bf16.msra.mxu0 %v736
  %896 = vmatprep.subr.bf16.mxu0 0
  %897 = vmatpush1.bf16.msra.mxu0 0
  %898 = vmatprep.subr.bf16.mxu0 0
  %899 = vmatpush1.bf16.msra.mxu0 0
  %900 = vmatprep.subr.bf16.mxu0 0
  %901 = vmatpush1.bf16.msra.mxu0 0
  %902 = vmatprep.subr.bf16.mxu0 0
  %903 = vmatpush1.bf16.msra.mxu0 0
  %904 = vmatprep.subr.bf16.mxu0 0
  %905 = vmatpush1.bf16.msra.mxu0 0
  %906 = vmatprep.subr.bf16.mxu0 0
  %907 = vmatpush1.bf16.msra.mxu0 0
  %908 = vmatprep.subr.bf16.mxu0 0
  %909 = vmatpush1.bf16.msra.mxu0 0
  %910 = vmatprep.subr.bf16.mxu0 0
  %911 = vmatpush1.bf16.msra.mxu0 0
  %912 = vmatprep.mubr.bf16.mxu0 0
  %913 = vmatmul.mubr.bf16.gmra.mrb[0].mxu0 %v27
  %v914 = vpop.f32.mrb[0].mxu0
  %v915 = vadd.f32 %v163, %v914
  %v916 = vpop.f32.mrb[0].mxu0
  %v917 = vadd.f32 %v167, %v916
  %v918 = vpop.f32.mrb[0].mxu0
  %v919 = vpop.f32.mrb[0].mxu0
  %920 = vdwg.mxu0
  %921 = vmatprep.subr.bf16.mxu0 %v627
  %922 = vmatpush1.bf16.msra.mxu0 %v626
  %923 = vmatprep.subr.bf16.mxu0 %v643
  %924 = vmatpush1.bf16.msra.mxu0 %v642
  %925 = vmatprep.subr.bf16.mxu0 %v659
  %926 = vmatpush1.bf16.msra.mxu0 %v658
  %927 = vmatprep.subr.bf16.mxu0 %v675
  %928 = vmatpush1.bf16.msra.mxu0 %v674
  %929 = vmatprep.subr.bf16.mxu0 %v691
  %930 = vmatpush1.bf16.msra.mxu0 %v690
  %931 = vmatprep.subr.bf16.mxu0 %v707
  %932 = vmatpush1.bf16.msra.mxu0 %v706
  %933 = vmatprep.subr.bf16.mxu0 %v723
  %934 = vmatpush1.bf16.msra.mxu0 %v722
  %935 = vmatprep.subr.bf16.mxu0 %v739
  %936 = vmatpush1.bf16.msra.mxu0 %v738
  %937 = vmatprep.subr.bf16.mxu0 0
  %938 = vmatpush1.bf16.msra.mxu0 0
  %939 = vmatprep.subr.bf16.mxu0 0
  %940 = vmatpush1.bf16.msra.mxu0 0
  %941 = vmatprep.subr.bf16.mxu0 0
  %942 = vmatpush1.bf16.msra.mxu0 0
  %943 = vmatprep.subr.bf16.mxu0 0
  %944 = vmatpush1.bf16.msra.mxu0 0
  %945 = vmatprep.subr.bf16.mxu0 0
  %946 = vmatpush1.bf16.msra.mxu0 0
  %947 = vmatprep.subr.bf16.mxu0 0
  %948 = vmatpush1.bf16.msra.mxu0 0
  %949 = vmatprep.subr.bf16.mxu0 0
  %950 = vmatpush1.bf16.msra.mxu0 0
  %951 = vmatprep.subr.bf16.mxu0 0
  %952 = vmatpush1.bf16.msra.mxu0 0
  %953 = vmatprep.mubr.bf16.mxu0 0
  %954 = vmatmul.mubr.bf16.gmra.mrb[0].mxu0 %v27
  %v955 = vpop.f32.mrb[0].mxu0
  %v956 = vadd.f32 %v171, %v955
  %v957 = vpop.f32.mrb[0].mxu0
  %v958 = vadd.f32 %v175, %v957
  %v959 = vpop.f32.mrb[0].mxu0
  %v960 = vpop.f32.mrb[0].mxu0
  %961 = vdwg.mxu0
  %962 = vmatprep.subr.bf16.mxu0 %v629
  %963 = vmatpush1.bf16.msra.mxu0 %v628
  %964 = vmatprep.subr.bf16.mxu0 %v645
  %965 = vmatpush1.bf16.msra.mxu0 %v644
  %966 = vmatprep.subr.bf16.mxu0 %v661
  %967 = vmatpush1.bf16.msra.mxu0 %v660
  %968 = vmatprep.subr.bf16.mxu0 %v677
  %969 = vmatpush1.bf16.msra.mxu0 %v676
  %970 = vmatprep.subr.bf16.mxu0 %v693
  %971 = vmatpush1.bf16.msra.mxu0 %v692
  %972 = vmatprep.subr.bf16.mxu0 %v709
  %973 = vmatpush1.bf16.msra.mxu0 %v708
  %974 = vmatprep.subr.bf16.mxu0 %v725
  %975 = vmatpush1.bf16.msra.mxu0 %v724
  %976 = vmatprep.subr.bf16.mxu0 %v741
  %977 = vmatpush1.bf16.msra.mxu0 %v740
  %978 = vmatprep.subr.bf16.mxu0 0
  %979 = vmatpush1.bf16.msra.mxu0 0
  %980 = vmatprep.subr.bf16.mxu0 0
  %981 = vmatpush1.bf16.msra.mxu0 0
  %982 = vmatprep.subr.bf16.mxu0 0
  %983 = vmatpush1.bf16.msra.mxu0 0
  %984 = vmatprep.subr.bf16.mxu0 0
  %985 = vmatpush1.bf16.msra.mxu0 0
  %986 = vmatprep.subr.bf16.mxu0 0
  %987 = vmatpush1.bf16.msra.mxu0 0
  %988 = vmatprep.subr.bf16.mxu0 0
  %989 = vmatpush1.bf16.msra.mxu0 0
  %990 = vmatprep.subr.bf16.mxu0 0
  %991 = vmatpush1.bf16.msra.mxu0 0
  %992 = vmatprep.subr.bf16.mxu0 0
  %993 = vmatpush1.bf16.msra.mxu0 0
  %994 = vmatprep.mubr.bf16.mxu0 0
  %995 = vmatmul.mubr.bf16.gmra.mrb[0].mxu0 %v27
  %v996 = vpop.f32.mrb[0].mxu0
  %v997 = vadd.f32 %v179, %v996
  %v998 = vpop.f32.mrb[0].mxu0
  %v999 = vadd.f32 %v183, %v998
  %v1000 = vpop.f32.mrb[0].mxu0
  %v1001 = vpop.f32.mrb[0].mxu0
  %1002 = vdwg.mxu0
  %1003 = vmatprep.subr.bf16.mxu0 %v631
  %1004 = vmatpush1.bf16.msra.mxu0 %v630
  %1005 = vmatprep.subr.bf16.mxu0 %v647
  %1006 = vmatpush1.bf16.msra.mxu0 %v646
  %1007 = vmatprep.subr.bf16.mxu0 %v663
  %1008 = vmatpush1.bf16.msra.mxu0 %v662
  %1009 = vmatprep.subr.bf16.mxu0 %v679
  %1010 = vmatpush1.bf16.msra.mxu0 %v678
  %1011 = vmatprep.subr.bf16.mxu0 %v695
  %1012 = vmatpush1.bf16.msra.mxu0 %v694
  %1013 = vmatprep.subr.bf16.mxu0 %v711
  %1014 = vmatpush1.bf16.msra.mxu0 %v710
  %1015 = vmatprep.subr.bf16.mxu0 %v727
  %1016 = vmatpush1.bf16.msra.mxu0 %v726
  %1017 = vmatprep.subr.bf16.mxu0 %v743
  %1018 = vmatpush1.bf16.msra.mxu0 %v742
  %1019 = vmatprep.subr.bf16.mxu0 0
  %1020 = vmatpush1.bf16.msra.mxu0 0
  %1021 = vmatprep.subr.bf16.mxu0 0
  %1022 = vmatpush1.bf16.msra.mxu0 0
  %1023 = vmatprep.subr.bf16.mxu0 0
  %1024 = vmatpush1.bf16.msra.mxu0 0
  %1025 = vmatprep.subr.bf16.mxu0 0
  %1026 = vmatpush1.bf16.msra.mxu0 0
  %1027 = vmatprep.subr.bf16.mxu0 0
  %1028 = vmatpush1.bf16.msra.mxu0 0
  %1029 = vmatprep.subr.bf16.mxu0 0
  %1030 = vmatpush1.bf16.msra.mxu0 0
  %1031 = vmatprep.subr.bf16.mxu0 0
  %1032 = vmatpush1.bf16.msra.mxu0 0
  %1033 = vmatprep.subr.bf16.mxu0 0
  %1034 = vmatpush1.bf16.msra.mxu0 0
  %1035 = vmatprep.mubr.bf16.mxu0 0
  %1036 = vmatmul.mubr.bf16.gmra.mrb[0].mxu0 %v27
  %v1037 = vpop.f32.mrb[0].mxu0
  %v1038 = vadd.f32 %v187, %v1037
  %v1039 = vpop.f32.mrb[0].mxu0
  %v1040 = vadd.f32 %v191, %v1039
  %v1041 = vpop.f32.mrb[0].mxu0
  %v1042 = vpop.f32.mrb[0].mxu0
  %1043 = vdwg.mxu0
  %1044 = vmatprep.subr.bf16.mxu0 %v633
  %1045 = vmatpush1.bf16.msra.mxu0 %v632
  %1046 = vmatprep.subr.bf16.mxu0 %v649
  %1047 = vmatpush1.bf16.msra.mxu0 %v648
  %1048 = vmatprep.subr.bf16.mxu0 %v665
  %1049 = vmatpush1.bf16.msra.mxu0 %v664
  %1050 = vmatprep.subr.bf16.mxu0 %v681
  %1051 = vmatpush1.bf16.msra.mxu0 %v680
  %1052 = vmatprep.subr.bf16.mxu0 %v697
  %1053 = vmatpush1.bf16.msra.mxu0 %v696
  %1054 = vmatprep.subr.bf16.mxu0 %v713
  %1055 = vmatpush1.bf16.msra.mxu0 %v712
  %1056 = vmatprep.subr.bf16.mxu0 %v729
  %1057 = vmatpush1.bf16.msra.mxu0 %v728
  %1058 = vmatprep.subr.bf16.mxu0 %v745
  %1059 = vmatpush1.bf16.msra.mxu0 %v744
  %1060 = vmatprep.subr.bf16.mxu0 0
  %1061 = vmatpush1.bf16.msra.mxu0 0
  %1062 = vmatprep.subr.bf16.mxu0 0
  %1063 = vmatpush1.bf16.msra.mxu0 0
  %1064 = vmatprep.subr.bf16.mxu0 0
  %1065 = vmatpush1.bf16.msra.mxu0 0
  %1066 = vmatprep.subr.bf16.mxu0 0
  %1067 = vmatpush1.bf16.msra.mxu0 0
  %1068 = vmatprep.subr.bf16.mxu0 0
  %1069 = vmatpush1.bf16.msra.mxu0 0
  %1070 = vmatprep.subr.bf16.mxu0 0
  %1071 = vmatpush1.bf16.msra.mxu0 0
  %1072 = vmatprep.subr.bf16.mxu0 0
  %1073 = vmatpush1.bf16.msra.mxu0 0
  %1074 = vmatprep.subr.bf16.mxu0 0
  %1075 = vmatpush1.bf16.msra.mxu0 0
  %1076 = vmatprep.mubr.bf16.mxu0 0
  %1077 = vmatmul.mubr.bf16.gmra.mrb[0].mxu0 %v27
  %v1078 = vpop.f32.mrb[0].mxu0
  %v1079 = vadd.f32 %v195, %v1078
  %v1080 = vpop.f32.mrb[0].mxu0
  %v1081 = vadd.f32 %v199, %v1080
  %v1082 = vpop.f32.mrb[0].mxu0
  %v1083 = vpop.f32.mrb[0].mxu0
  %1084 = vdwg.mxu0
  %1085 = vmatprep.subr.bf16.mxu0 %v635
  %1086 = vmatpush1.bf16.msra.mxu0 %v634
  %1087 = vmatprep.subr.bf16.mxu0 %v651
  %1088 = vmatpush1.bf16.msra.mxu0 %v650
  %1089 = vmatprep.subr.bf16.mxu0 %v667
  %1090 = vmatpush1.bf16.msra.mxu0 %v666
  %1091 = vmatprep.subr.bf16.mxu0 %v683
  %1092 = vmatpush1.bf16.msra.mxu0 %v682
  %1093 = vmatprep.subr.bf16.mxu0 %v699
  %1094 = vmatpush1.bf16.msra.mxu0 %v698
  %1095 = vmatprep.subr.bf16.mxu0 %v715
  %1096 = vmatpush1.bf16.msra.mxu0 %v714
  %1097 = vmatprep.subr.bf16.mxu0 %v731
  %1098 = vmatpush1.bf16.msra.mxu0 %v730
  %1099 = vmatprep.subr.bf16.mxu0 %v747
  %1100 = vmatpush1.bf16.msra.mxu0 %v746
  %1101 = vmatprep.subr.bf16.mxu0 0
  %1102 = vmatpush1.bf16.msra.mxu0 0
  %1103 = vmatprep.subr.bf16.mxu0 0
  %1104 = vmatpush1.bf16.msra.mxu0 0
  %1105 = vmatprep.subr.bf16.mxu0 0
  %1106 = vmatpush1.bf16.msra.mxu0 0
  %1107 = vmatprep.subr.bf16.mxu0 0
  %1108 = vmatpush1.bf16.msra.mxu0 0
  %1109 = vmatprep.subr.bf16.mxu0 0
  %1110 = vmatpush1.bf16.msra.mxu0 0
  %1111 = vmatprep.subr.bf16.mxu0 0
  %1112 = vmatpush1.bf16.msra.mxu0 0
  %1113 = vmatprep.subr.bf16.mxu0 0
  %1114 = vmatpush1.bf16.msra.mxu0 0
  %1115 = vmatprep.subr.bf16.mxu0 0
  %1116 = vmatpush1.bf16.msra.mxu0 0
  %1117 = vmatprep.mubr.bf16.mxu0 0
  %1118 = vmatmul.mubr.bf16.gmra.mrb[0].mxu0 %v27
  %v1119 = vpop.f32.mrb[0].mxu0
  %v1120 = vadd.f32 %v203, %v1119
  %v1121 = vpop.f32.mrb[0].mxu0
  %v1122 = vadd.f32 %v207, %v1121
  %v1123 = vpop.f32.mrb[0].mxu0
  %v1124 = vpop.f32.mrb[0].mxu0
  %1125 = vdwg.mxu0
  %1126 = vmatprep.subr.bf16.mxu0 %v637
  %1127 = vmatpush1.bf16.msra.mxu0 %v636
  %1128 = vmatprep.subr.bf16.mxu0 %v653
  %1129 = vmatpush1.bf16.msra.mxu0 %v652
  %1130 = vmatprep.subr.bf16.mxu0 %v669
  %1131 = vmatpush1.bf16.msra.mxu0 %v668
  %1132 = vmatprep.subr.bf16.mxu0 %v685
  %1133 = vmatpush1.bf16.msra.mxu0 %v684
  %1134 = vmatprep.subr.bf16.mxu0 %v701
  %1135 = vmatpush1.bf16.msra.mxu0 %v700
  %1136 = vmatprep.subr.bf16.mxu0 %v717
  %1137 = vmatpush1.bf16.msra.mxu0 %v716
  %1138 = vmatprep.subr.bf16.mxu0 %v733
  %1139 = vmatpush1.bf16.msra.mxu0 %v732
  %1140 = vmatprep.subr.bf16.mxu0 %v749
  %1141 = vmatpush1.bf16.msra.mxu0 %v748
  %1142 = vmatprep.subr.bf16.mxu0 0
  %1143 = vmatpush1.bf16.msra.mxu0 0
  %1144 = vmatprep.subr.bf16.mxu0 0
  %1145 = vmatpush1.bf16.msra.mxu0 0
  %1146 = vmatprep.subr.bf16.mxu0 0
  %1147 = vmatpush1.bf16.msra.mxu0 0
  %1148 = vmatprep.subr.bf16.mxu0 0
  %1149 = vmatpush1.bf16.msra.mxu0 0
  %1150 = vmatprep.subr.bf16.mxu0 0
  %1151 = vmatpush1.bf16.msra.mxu0 0
  %1152 = vmatprep.subr.bf16.mxu0 0
  %1153 = vmatpush1.bf16.msra.mxu0 0
  %1154 = vmatprep.subr.bf16.mxu0 0
  %1155 = vmatpush1.bf16.msra.mxu0 0
  %1156 = vmatprep.subr.bf16.mxu0 0
  %1157 = vmatpush1.bf16.msra.mxu0 0
  %1158 = vmatprep.mubr.bf16.mxu0 0
  %1159 = vmatmul.mubr.bf16.gmra.mrb[0].mxu0 %v27
  %v1160 = vpop.f32.mrb[0].mxu0
  %v1161 = vadd.f32 %v211, %v1160
  %v1162 = vpop.f32.mrb[0].mxu0
  %v1163 = vadd.f32 %v215, %v1162
  %v1164 = vpop.f32.mrb[0].mxu0
  %v1165 = vpop.f32.mrb[0].mxu0
  %1166 = vdwg.mxu0
  %1167 = vmatprep.subr.bf16.mxu0 %v639
  %1168 = vmatpush1.bf16.msra.mxu0 %v638
  %1169 = vmatprep.subr.bf16.mxu0 %v655
  %1170 = vmatpush1.bf16.msra.mxu0 %v654
  %1171 = vmatprep.subr.bf16.mxu0 %v671
  %1172 = vmatpush1.bf16.msra.mxu0 %v670
  %1173 = vmatprep.subr.bf16.mxu0 %v687
  %1174 = vmatpush1.bf16.msra.mxu0 %v686
  %1175 = vmatprep.subr.bf16.mxu0 %v703
  %1176 = vmatpush1.bf16.msra.mxu0 %v702
  %1177 = vmatprep.subr.bf16.mxu0 %v719
  %1178 = vmatpush1.bf16.msra.mxu0 %v718
  %1179 = vmatprep.subr.bf16.mxu0 %v735
  %1180 = vmatpush1.bf16.msra.mxu0 %v734
  %1181 = vmatprep.subr.bf16.mxu0 %v751
  %1182 = vmatpush1.bf16.msra.mxu0 %v750
  %1183 = vmatprep.subr.bf16.mxu0 0
  %1184 = vmatpush1.bf16.msra.mxu0 0
  %1185 = vmatprep.subr.bf16.mxu0 0
  %1186 = vmatpush1.bf16.msra.mxu0 0
  %1187 = vmatprep.subr.bf16.mxu0 0
  %1188 = vmatpush1.bf16.msra.mxu0 0
  %1189 = vmatprep.subr.bf16.mxu0 0
  %1190 = vmatpush1.bf16.msra.mxu0 0
  %1191 = vmatprep.subr.bf16.mxu0 0
  %1192 = vmatpush1.bf16.msra.mxu0 0
  %1193 = vmatprep.subr.bf16.mxu0 0
  %1194 = vmatpush1.bf16.msra.mxu0 0
  %1195 = vmatprep.subr.bf16.mxu0 0
  %1196 = vmatpush1.bf16.msra.mxu0 0
  %1197 = vmatprep.subr.bf16.mxu0 0
  %1198 = vmatpush1.bf16.msra.mxu0 0
  %1199 = vmatprep.mubr.bf16.mxu0 0
  %1200 = vmatmul.mubr.bf16.gmra.mrb[0].mxu0 %v27
  %v1201 = vpop.f32.mrb[0].mxu0
  %v1202 = vadd.f32 %v219, %v1201
  %v1203 = vpop.f32.mrb[0].mxu0
  %v1204 = vadd.f32 %v223, %v1203
  %v1205 = vpop.f32.mrb[0].mxu0
  %v1206 = vpop.f32.mrb[0].mxu0
  %1207 = vdwg.mxu0
  %v1208 = vmax.f32 %v915, 0.0
  %v1209 = vmax.f32 %v917, 0.0
  %v1210 = vmax.f32 %v956, 0.0
  %v1211 = vmax.f32 %v958, 0.0
  %v1212 = vmax.f32 %v997, 0.0
  %v1213 = vmax.f32 %v999, 0.0
  %v1214 = vmax.f32 %v1038, 0.0
  %v1215 = vmax.f32 %v1040, 0.0
  %v1216 = vmax.f32 %v1079, 0.0
  %v1217 = vmax.f32 %v1081, 0.0
  %v1218 = vmax.f32 %v1120, 0.0
  %v1219 = vmax.f32 %v1122, 0.0
  %v1220 = vmax.f32 %v1161, 0.0
  %v1221 = vmax.f32 %v1163, 0.0
  %v1222 = vmax.f32 %v1202, 0.0
  %v1223 = vmax.f32 %v1204, 0.0
  %v1224 = vpack.c.bf16 %v1208, %v1208
  %v1225 = vpack.c.bf16 %v1209, %v1209
  %v1226 = vpack.c.bf16 %v1210, %v1210
  %v1227 = vpack.c.bf16 %v1211, %v1211
  %v1228 = vpack.c.bf16 %v1212, %v1212
  %v1229 = vpack.c.bf16 %v1213, %v1213
  %v1230 = vpack.c.bf16 %v1214, %v1214
  %v1231 = vpack.c.bf16 %v1215, %v1215
  %v1232 = vpack.c.bf16 %v1216, %v1216
  %v1233 = vpack.c.bf16 %v1217, %v1217
  %v1234 = vpack.c.bf16 %v1218, %v1218
  %v1235 = vpack.c.bf16 %v1219, %v1219
  %v1236 = vpack.c.bf16 %v1220, %v1220
  %v1237 = vpack.c.bf16 %v1221, %v1221
  %v1238 = vpack.c.bf16 %v1222, %v1222
  %v1239 = vpack.c.bf16 %v1223, %v1223
  %v1240 = vld [vmem:[%s3] sm:$0xff]
  %v1241 = vld [vmem:[%s3 + $0x8] sm:$0xff]
  %v1242 = vld [vmem:[%s3 + $0x10] sm:$0xff]
  %v1243 = vld [vmem:[%s3 + $0x18] sm:$0xff]
  %v1244 = vld [vmem:[%s3 + $0x20] sm:$0xff]
  %v1245 = vld [vmem:[%s3 + $0x28] sm:$0xff]
  %v1246 = vld [vmem:[%s3 + $0x30] sm:$0xff]
  %v1247 = vld [vmem:[%s3 + $0x38] sm:$0xff]
  %v1248 = vld [vmem:[%s3 + $0x40] sm:$0xff]
  %v1249 = vld [vmem:[%s3 + $0x48] sm:$0xff]
  %v1250 = vld [vmem:[%s3 + $0x50] sm:$0xff]
  %v1251 = vld [vmem:[%s3 + $0x58] sm:$0xff]
  %v1252 = vld [vmem:[%s3 + $0x60] sm:$0xff]
  %v1253 = vld [vmem:[%s3 + $0x68] sm:$0xff]
  %v1254 = vld [vmem:[%s3 + $0x70] sm:$0xff]
  %v1255 = vld [vmem:[%s3 + $0x78] sm:$0xff]
  %v1256 = vld [vmem:[%s3 + $0x80] sm:$0xff]
  %v1257 = vld [vmem:[%s3 + $0x88] sm:$0xff]
  %v1258 = vld [vmem:[%s3 + $0x90] sm:$0xff]
  %v1259 = vld [vmem:[%s3 + $0x98] sm:$0xff]
  %v1260 = vld [vmem:[%s3 + $0xa0] sm:$0xff]
  %v1261 = vld [vmem:[%s3 + $0xa8] sm:$0xff]
  %v1262 = vld [vmem:[%s3 + $0xb0] sm:$0xff]
  %v1263 = vld [vmem:[%s3 + $0xb8] sm:$0xff]
  %v1264 = vld [vmem:[%s3 + $0xc0] sm:$0xff]
  %v1265 = vld [vmem:[%s3 + $0xc8] sm:$0xff]
  %v1266 = vld [vmem:[%s3 + $0xd0] sm:$0xff]
  %v1267 = vld [vmem:[%s3 + $0xd8] sm:$0xff]
  %v1268 = vld [vmem:[%s3 + $0xe0] sm:$0xff]
  %v1269 = vld [vmem:[%s3 + $0xe8] sm:$0xff]
  %v1270 = vld [vmem:[%s3 + $0xf0] sm:$0xff]
  %v1271 = vld [vmem:[%s3 + $0xf8] sm:$0xff]
  %v1272 = vld [vmem:[%s3 + $0x100] sm:$0xff]
  %v1273 = vld [vmem:[%s3 + $0x108] sm:$0xff]
  %v1274 = vld [vmem:[%s3 + $0x110] sm:$0xff]
  %v1275 = vld [vmem:[%s3 + $0x118] sm:$0xff]
  %v1276 = vld [vmem:[%s3 + $0x120] sm:$0xff]
  %v1277 = vld [vmem:[%s3 + $0x128] sm:$0xff]
  %v1278 = vld [vmem:[%s3 + $0x130] sm:$0xff]
  %v1279 = vld [vmem:[%s3 + $0x138] sm:$0xff]
  %v1280 = vld [vmem:[%s3 + $0x140] sm:$0xff]
  %v1281 = vld [vmem:[%s3 + $0x148] sm:$0xff]
  %v1282 = vld [vmem:[%s3 + $0x150] sm:$0xff]
  %v1283 = vld [vmem:[%s3 + $0x158] sm:$0xff]
  %v1284 = vld [vmem:[%s3 + $0x160] sm:$0xff]
  %v1285 = vld [vmem:[%s3 + $0x168] sm:$0xff]
  %v1286 = vld [vmem:[%s3 + $0x170] sm:$0xff]
  %v1287 = vld [vmem:[%s3 + $0x178] sm:$0xff]
  %v1288 = vld [vmem:[%s3 + $0x180] sm:$0xff]
  %v1289 = vld [vmem:[%s3 + $0x188] sm:$0xff]
  %v1290 = vld [vmem:[%s3 + $0x190] sm:$0xff]
  %v1291 = vld [vmem:[%s3 + $0x198] sm:$0xff]
  %v1292 = vld [vmem:[%s3 + $0x1a0] sm:$0xff]
  %v1293 = vld [vmem:[%s3 + $0x1a8] sm:$0xff]
  %v1294 = vld [vmem:[%s3 + $0x1b0] sm:$0xff]
  %v1295 = vld [vmem:[%s3 + $0x1b8] sm:$0xff]
  %v1296 = vld [vmem:[%s3 + $0x1c0] sm:$0xff]
  %v1297 = vld [vmem:[%s3 + $0x1c8] sm:$0xff]
  %v1298 = vld [vmem:[%s3 + $0x1d0] sm:$0xff]
  %v1299 = vld [vmem:[%s3 + $0x1d8] sm:$0xff]
  %v1300 = vld [vmem:[%s3 + $0x1e0] sm:$0xff]
  %v1301 = vld [vmem:[%s3 + $0x1e8] sm:$0xff]
  %v1302 = vld [vmem:[%s3 + $0x1f0] sm:$0xff]
  %v1303 = vld [vmem:[%s3 + $0x1f8] sm:$0xff]
  %v1304 = vld [vmem:[%s3 + $0x200] sm:$0xff]
  %v1305 = vld [vmem:[%s3 + $0x208] sm:$0xff]
  %v1306 = vld [vmem:[%s3 + $0x210] sm:$0xff]
  %v1307 = vld [vmem:[%s3 + $0x218] sm:$0xff]
  %v1308 = vld [vmem:[%s3 + $0x220] sm:$0xff]
  %v1309 = vld [vmem:[%s3 + $0x228] sm:$0xff]
  %v1310 = vld [vmem:[%s3 + $0x230] sm:$0xff]
  %v1311 = vld [vmem:[%s3 + $0x238] sm:$0xff]
  %v1312 = vld [vmem:[%s3 + $0x240] sm:$0xff]
  %v1313 = vld [vmem:[%s3 + $0x248] sm:$0xff]
  %v1314 = vld [vmem:[%s3 + $0x250] sm:$0xff]
  %v1315 = vld [vmem:[%s3 + $0x258] sm:$0xff]
  %v1316 = vld [vmem:[%s3 + $0x260] sm:$0xff]
  %v1317 = vld [vmem:[%s3 + $0x268] sm:$0xff]
  %v1318 = vld [vmem:[%s3 + $0x270] sm:$0xff]
  %v1319 = vld [vmem:[%s3 + $0x278] sm:$0xff]
  %v1320 = vld [vmem:[%s3 + $0x280] sm:$0xff]
  %v1321 = vld [vmem:[%s3 + $0x288] sm:$0xff]
  %v1322 = vld [vmem:[%s3 + $0x290] sm:$0xff]
  %v1323 = vld [vmem:[%s3 + $0x298] sm:$0xff]
  %v1324 = vld [vmem:[%s3 + $0x2a0] sm:$0xff]
  %v1325 = vld [vmem:[%s3 + $0x2a8] sm:$0xff]
  %v1326 = vld [vmem:[%s3 + $0x2b0] sm:$0xff]
  %v1327 = vld [vmem:[%s3 + $0x2b8] sm:$0xff]
  %v1328 = vld [vmem:[%s3 + $0x2c0] sm:$0xff]
  %v1329 = vld [vmem:[%s3 + $0x2c8] sm:$0xff]
  %v1330 = vld [vmem:[%s3 + $0x2d0] sm:$0xff]
  %v1331 = vld [vmem:[%s3 + $0x2d8] sm:$0xff]
  %v1332 = vld [vmem:[%s3 + $0x2e0] sm:$0xff]
  %v1333 = vld [vmem:[%s3 + $0x2e8] sm:$0xff]
  %v1334 = vld [vmem:[%s3 + $0x2f0] sm:$0xff]
  %v1335 = vld [vmem:[%s3 + $0x2f8] sm:$0xff]
  %v1336 = vld [vmem:[%s3 + $0x300] sm:$0xff]
  %v1337 = vld [vmem:[%s3 + $0x308] sm:$0xff]
  %v1338 = vld [vmem:[%s3 + $0x310] sm:$0xff]
  %v1339 = vld [vmem:[%s3 + $0x318] sm:$0xff]
  %v1340 = vld [vmem:[%s3 + $0x320] sm:$0xff]
  %v1341 = vld [vmem:[%s3 + $0x328] sm:$0xff]
  %v1342 = vld [vmem:[%s3 + $0x330] sm:$0xff]
  %v1343 = vld [vmem:[%s3 + $0x338] sm:$0xff]
  %v1344 = vld [vmem:[%s3 + $0x340] sm:$0xff]
  %v1345 = vld [vmem:[%s3 + $0x348] sm:$0xff]
  %v1346 = vld [vmem:[%s3 + $0x350] sm:$0xff]
  %v1347 = vld [vmem:[%s3 + $0x358] sm:$0xff]
  %v1348 = vld [vmem:[%s3 + $0x360] sm:$0xff]
  %v1349 = vld [vmem:[%s3 + $0x368] sm:$0xff]
  %v1350 = vld [vmem:[%s3 + $0x370] sm:$0xff]
  %v1351 = vld [vmem:[%s3 + $0x378] sm:$0xff]
  %v1352 = vld [vmem:[%s3 + $0x380] sm:$0xff]
  %v1353 = vld [vmem:[%s3 + $0x388] sm:$0xff]
  %v1354 = vld [vmem:[%s3 + $0x390] sm:$0xff]
  %v1355 = vld [vmem:[%s3 + $0x398] sm:$0xff]
  %v1356 = vld [vmem:[%s3 + $0x3a0] sm:$0xff]
  %v1357 = vld [vmem:[%s3 + $0x3a8] sm:$0xff]
  %v1358 = vld [vmem:[%s3 + $0x3b0] sm:$0xff]
  %v1359 = vld [vmem:[%s3 + $0x3b8] sm:$0xff]
  %v1360 = vld [vmem:[%s3 + $0x3c0] sm:$0xff]
  %v1361 = vld [vmem:[%s3 + $0x3c8] sm:$0xff]
  %v1362 = vld [vmem:[%s3 + $0x3d0] sm:$0xff]
  %v1363 = vld [vmem:[%s3 + $0x3d8] sm:$0xff]
  %v1364 = vld [vmem:[%s3 + $0x3e0] sm:$0xff]
  %v1365 = vld [vmem:[%s3 + $0x3e8] sm:$0xff]
  %v1366 = vld [vmem:[%s3 + $0x3f0] sm:$0xff]
  %v1367 = vld [vmem:[%s3 + $0x3f8] sm:$0xff]
  %v1368 = vld [vmem:[%s3 + $0x400] sm:$0xff]
  %v1369 = vld [vmem:[%s3 + $0x408] sm:$0xff]
  %v1370 = vld [vmem:[%s3 + $0x410] sm:$0xff]
  %v1371 = vld [vmem:[%s3 + $0x418] sm:$0xff]
  %v1372 = vld [vmem:[%s3 + $0x420] sm:$0xff]
  %v1373 = vld [vmem:[%s3 + $0x428] sm:$0xff]
  %v1374 = vld [vmem:[%s3 + $0x430] sm:$0xff]
  %v1375 = vld [vmem:[%s3 + $0x438] sm:$0xff]
  %v1376 = vld [vmem:[%s3 + $0x440] sm:$0xff]
  %v1377 = vld [vmem:[%s3 + $0x448] sm:$0xff]
  %v1378 = vld [vmem:[%s3 + $0x450] sm:$0xff]
  %v1379 = vld [vmem:[%s3 + $0x458] sm:$0xff]
  %v1380 = vld [vmem:[%s3 + $0x460] sm:$0xff]
  %v1381 = vld [vmem:[%s3 + $0x468] sm:$0xff]
  %v1382 = vld [vmem:[%s3 + $0x470] sm:$0xff]
  %v1383 = vld [vmem:[%s3 + $0x478] sm:$0xff]
  %v1384 = vld [vmem:[%s3 + $0x480] sm:$0xff]
  %v1385 = vld [vmem:[%s3 + $0x488] sm:$0xff]
  %v1386 = vld [vmem:[%s3 + $0x490] sm:$0xff]
  %v1387 = vld [vmem:[%s3 + $0x498] sm:$0xff]
  %v1388 = vld [vmem:[%s3 + $0x4a0] sm:$0xff]
  %v1389 = vld [vmem:[%s3 + $0x4a8] sm:$0xff]
  %v1390 = vld [vmem:[%s3 + $0x4b0] sm:$0xff]
  %v1391 = vld [vmem:[%s3 + $0x4b8] sm:$0xff]
  %v1392 = vld [vmem:[%s3 + $0x4c0] sm:$0xff]
  %v1393 = vld [vmem:[%s3 + $0x4c8] sm:$0xff]
  %v1394 = vld [vmem:[%s3 + $0x4d0] sm:$0xff]
  %v1395 = vld [vmem:[%s3 + $0x4d8] sm:$0xff]
  %v1396 = vld [vmem:[%s3 + $0x4e0] sm:$0xff]
  %v1397 = vld [vmem:[%s3 + $0x4e8] sm:$0xff]
  %v1398 = vld [vmem:[%s3 + $0x4f0] sm:$0xff]
  %v1399 = vld [vmem:[%s3 + $0x4f8] sm:$0xff]
  %v1400 = vld [vmem:[%s3 + $0x500] sm:$0xff]
  %v1401 = vld [vmem:[%s3 + $0x508] sm:$0xff]
  %v1402 = vld [vmem:[%s3 + $0x510] sm:$0xff]
  %v1403 = vld [vmem:[%s3 + $0x518] sm:$0xff]
  %v1404 = vld [vmem:[%s3 + $0x520] sm:$0xff]
  %v1405 = vld [vmem:[%s3 + $0x528] sm:$0xff]
  %v1406 = vld [vmem:[%s3 + $0x530] sm:$0xff]
  %v1407 = vld [vmem:[%s3 + $0x538] sm:$0xff]
  %v1408 = vld [vmem:[%s3 + $0x540] sm:$0xff]
  %v1409 = vld [vmem:[%s3 + $0x548] sm:$0xff]
  %v1410 = vld [vmem:[%s3 + $0x550] sm:$0xff]
  %v1411 = vld [vmem:[%s3 + $0x558] sm:$0xff]
  %v1412 = vld [vmem:[%s3 + $0x560] sm:$0xff]
  %v1413 = vld [vmem:[%s3 + $0x568] sm:$0xff]
  %v1414 = vld [vmem:[%s3 + $0x570] sm:$0xff]
  %v1415 = vld [vmem:[%s3 + $0x578] sm:$0xff]
  %v1416 = vld [vmem:[%s3 + $0x580] sm:$0xff]
  %v1417 = vld [vmem:[%s3 + $0x588] sm:$0xff]
  %v1418 = vld [vmem:[%s3 + $0x590] sm:$0xff]
  %v1419 = vld [vmem:[%s3 + $0x598] sm:$0xff]
  %v1420 = vld [vmem:[%s3 + $0x5a0] sm:$0xff]
  %v1421 = vld [vmem:[%s3 + $0x5a8] sm:$0xff]
  %v1422 = vld [vmem:[%s3 + $0x5b0] sm:$0xff]
  %v1423 = vld [vmem:[%s3 + $0x5b8] sm:$0xff]
  %v1424 = vld [vmem:[%s3 + $0x5c0] sm:$0xff]
  %v1425 = vld [vmem:[%s3 + $0x5c8] sm:$0xff]
  %v1426 = vld [vmem:[%s3 + $0x5d0] sm:$0xff]
  %v1427 = vld [vmem:[%s3 + $0x5d8] sm:$0xff]
  %v1428 = vld [vmem:[%s3 + $0x5e0] sm:$0xff]
  %v1429 = vld [vmem:[%s3 + $0x5e8] sm:$0xff]
  %v1430 = vld [vmem:[%s3 + $0x5f0] sm:$0xff]
  %v1431 = vld [vmem:[%s3 + $0x5f8] sm:$0xff]
  %v1432 = vld [vmem:[%s3 + $0x600] sm:$0xff]
  %v1433 = vld [vmem:[%s3 + $0x608] sm:$0xff]
  %v1434 = vld [vmem:[%s3 + $0x610] sm:$0xff]
  %v1435 = vld [vmem:[%s3 + $0x618] sm:$0xff]
  %v1436 = vld [vmem:[%s3 + $0x620] sm:$0xff]
  %v1437 = vld [vmem:[%s3 + $0x628] sm:$0xff]
  %v1438 = vld [vmem:[%s3 + $0x630] sm:$0xff]
  %v1439 = vld [vmem:[%s3 + $0x638] sm:$0xff]
  %v1440 = vld [vmem:[%s3 + $0x640] sm:$0xff]
  %v1441 = vld [vmem:[%s3 + $0x648] sm:$0xff]
  %v1442 = vld [vmem:[%s3 + $0x650] sm:$0xff]
  %v1443 = vld [vmem:[%s3 + $0x658] sm:$0xff]
  %v1444 = vld [vmem:[%s3 + $0x660] sm:$0xff]
  %v1445 = vld [vmem:[%s3 + $0x668] sm:$0xff]
  %v1446 = vld [vmem:[%s3 + $0x670] sm:$0xff]
  %v1447 = vld [vmem:[%s3 + $0x678] sm:$0xff]
  %v1448 = vld [vmem:[%s3 + $0x680] sm:$0xff]
  %v1449 = vld [vmem:[%s3 + $0x688] sm:$0xff]
  %v1450 = vld [vmem:[%s3 + $0x690] sm:$0xff]
  %v1451 = vld [vmem:[%s3 + $0x698] sm:$0xff]
  %v1452 = vld [vmem:[%s3 + $0x6a0] sm:$0xff]
  %v1453 = vld [vmem:[%s3 + $0x6a8] sm:$0xff]
  %v1454 = vld [vmem:[%s3 + $0x6b0] sm:$0xff]
  %v1455 = vld [vmem:[%s3 + $0x6b8] sm:$0xff]
  %v1456 = vld [vmem:[%s3 + $0x6c0] sm:$0xff]
  %v1457 = vld [vmem:[%s3 + $0x6c8] sm:$0xff]
  %v1458 = vld [vmem:[%s3 + $0x6d0] sm:$0xff]
  %v1459 = vld [vmem:[%s3 + $0x6d8] sm:$0xff]
  %v1460 = vld [vmem:[%s3 + $0x6e0] sm:$0xff]
  %v1461 = vld [vmem:[%s3 + $0x6e8] sm:$0xff]
  %v1462 = vld [vmem:[%s3 + $0x6f0] sm:$0xff]
  %v1463 = vld [vmem:[%s3 + $0x6f8] sm:$0xff]
  %v1464 = vld [vmem:[%s3 + $0x700] sm:$0xff]
  %v1465 = vld [vmem:[%s3 + $0x708] sm:$0xff]
  %v1466 = vld [vmem:[%s3 + $0x710] sm:$0xff]
  %v1467 = vld [vmem:[%s3 + $0x718] sm:$0xff]
  %v1468 = vld [vmem:[%s3 + $0x720] sm:$0xff]
  %v1469 = vld [vmem:[%s3 + $0x728] sm:$0xff]
  %v1470 = vld [vmem:[%s3 + $0x730] sm:$0xff]
  %v1471 = vld [vmem:[%s3 + $0x738] sm:$0xff]
  %v1472 = vld [vmem:[%s3 + $0x740] sm:$0xff]
  %v1473 = vld [vmem:[%s3 + $0x748] sm:$0xff]
  %v1474 = vld [vmem:[%s3 + $0x750] sm:$0xff]
  %v1475 = vld [vmem:[%s3 + $0x758] sm:$0xff]
  %v1476 = vld [vmem:[%s3 + $0x760] sm:$0xff]
  %v1477 = vld [vmem:[%s3 + $0x768] sm:$0xff]
  %v1478 = vld [vmem:[%s3 + $0x770] sm:$0xff]
  %v1479 = vld [vmem:[%s3 + $0x778] sm:$0xff]
  %v1480 = vld [vmem:[%s3 + $0x780] sm:$0xff]
  %v1481 = vld [vmem:[%s3 + $0x788] sm:$0xff]
  %v1482 = vld [vmem:[%s3 + $0x790] sm:$0xff]
  %v1483 = vld [vmem:[%s3 + $0x798] sm:$0xff]
  %v1484 = vld [vmem:[%s3 + $0x7a0] sm:$0xff]
  %v1485 = vld [vmem:[%s3 + $0x7a8] sm:$0xff]
  %v1486 = vld [vmem:[%s3 + $0x7b0] sm:$0xff]
  %v1487 = vld [vmem:[%s3 + $0x7b8] sm:$0xff]
  %v1488 = vld [vmem:[%s3 + $0x7c0] sm:$0xff]
  %v1489 = vld [vmem:[%s3 + $0x7c8] sm:$0xff]
  %v1490 = vld [vmem:[%s3 + $0x7d0] sm:$0xff]
  %v1491 = vld [vmem:[%s3 + $0x7d8] sm:$0xff]
  %v1492 = vld [vmem:[%s3 + $0x7e0] sm:$0xff]
  %v1493 = vld [vmem:[%s3 + $0x7e8] sm:$0xff]
  %v1494 = vld [vmem:[%s3 + $0x7f0] sm:$0xff]
  %v1495 = vld [vmem:[%s3 + $0x7f8] sm:$0xff]
  %v1496 = vld [vmem:[%s4] sm:$0x3]
  %v1498 = vlaneseq
  %v1499 = vshrl.u32 %v1498, 7
  %v1500 = vsub.s32 0, %v1499
  %v1501 = vrot.slane %v1496, %v1500
  %v1502 = vlaneseq
  %v1503 = vshrl.u32 %v1502, 7
  %v1504 = vsub.s32 1, %v1503
  %v1505 = vrot.slane %v1496, %v1504
  %v1764 = vunpack.c.l.b16 %v1240
  %v1765 = vunpack.c.h.b16 %v1240
  %v1766 = vunpack.c.l.b16 %v1241
  %v1767 = vunpack.c.h.b16 %v1241
  %v1768 = vunpack.c.l.b16 %v1242
  %v1769 = vunpack.c.h.b16 %v1242
  %v1770 = vunpack.c.l.b16 %v1243
  %v1771 = vunpack.c.h.b16 %v1243
  %v1772 = vunpack.c.l.b16 %v1244
  %v1773 = vunpack.c.h.b16 %v1244
  %v1774 = vunpack.c.l.b16 %v1245
  %v1775 = vunpack.c.h.b16 %v1245
  %v1776 = vunpack.c.l.b16 %v1246
  %v1777 = vunpack.c.h.b16 %v1246
  %v1778 = vunpack.c.l.b16 %v1247
  %v1779 = vunpack.c.h.b16 %v1247
  %v1780 = vunpack.c.l.b16 %v1248
  %v1781 = vunpack.c.h.b16 %v1248
  %v1782 = vunpack.c.l.b16 %v1249
  %v1783 = vunpack.c.h.b16 %v1249
  %v1784 = vunpack.c.l.b16 %v1250
  %v1785 = vunpack.c.h.b16 %v1250
  %v1786 = vunpack.c.l.b16 %v1251
  %v1787 = vunpack.c.h.b16 %v1251
  %v1788 = vunpack.c.l.b16 %v1252
  %v1789 = vunpack.c.h.b16 %v1252
  %v1790 = vunpack.c.l.b16 %v1253
  %v1791 = vunpack.c.h.b16 %v1253
  %v1792 = vunpack.c.l.b16 %v1254
  %v1793 = vunpack.c.h.b16 %v1254
  %v1794 = vunpack.c.l.b16 %v1255
  %v1795 = vunpack.c.h.b16 %v1255
  %v1796 = vunpack.c.l.b16 %v1256
  %v1797 = vunpack.c.h.b16 %v1256
  %v1798 = vunpack.c.l.b16 %v1257
  %v1799 = vunpack.c.h.b16 %v1257
  %v1800 = vunpack.c.l.b16 %v1258
  %v1801 = vunpack.c.h.b16 %v1258
  %v1802 = vunpack.c.l.b16 %v1259
  %v1803 = vunpack.c.h.b16 %v1259
  %v1804 = vunpack.c.l.b16 %v1260
  %v1805 = vunpack.c.h.b16 %v1260
  %v1806 = vunpack.c.l.b16 %v1261
  %v1807 = vunpack.c.h.b16 %v1261
  %v1808 = vunpack.c.l.b16 %v1262
  %v1809 = vunpack.c.h.b16 %v1262
  %v1810 = vunpack.c.l.b16 %v1263
  %v1811 = vunpack.c.h.b16 %v1263
  %v1812 = vunpack.c.l.b16 %v1264
  %v1813 = vunpack.c.h.b16 %v1264
  %v1814 = vunpack.c.l.b16 %v1265
  %v1815 = vunpack.c.h.b16 %v1265
  %v1816 = vunpack.c.l.b16 %v1266
  %v1817 = vunpack.c.h.b16 %v1266
  %v1818 = vunpack.c.l.b16 %v1267
  %v1819 = vunpack.c.h.b16 %v1267
  %v1820 = vunpack.c.l.b16 %v1268
  %v1821 = vunpack.c.h.b16 %v1268
  %v1822 = vunpack.c.l.b16 %v1269
  %v1823 = vunpack.c.h.b16 %v1269
  %v1824 = vunpack.c.l.b16 %v1270
  %v1825 = vunpack.c.h.b16 %v1270
  %v1826 = vunpack.c.l.b16 %v1271
  %v1827 = vunpack.c.h.b16 %v1271
  %v1828 = vunpack.c.l.b16 %v1272
  %v1829 = vunpack.c.h.b16 %v1272
  %v1830 = vunpack.c.l.b16 %v1273
  %v1831 = vunpack.c.h.b16 %v1273
  %v1832 = vunpack.c.l.b16 %v1274
  %v1833 = vunpack.c.h.b16 %v1274
  %v1834 = vunpack.c.l.b16 %v1275
  %v1835 = vunpack.c.h.b16 %v1275
  %v1836 = vunpack.c.l.b16 %v1276
  %v1837 = vunpack.c.h.b16 %v1276
  %v1838 = vunpack.c.l.b16 %v1277
  %v1839 = vunpack.c.h.b16 %v1277
  %v1840 = vunpack.c.l.b16 %v1278
  %v1841 = vunpack.c.h.b16 %v1278
  %v1842 = vunpack.c.l.b16 %v1279
  %v1843 = vunpack.c.h.b16 %v1279
  %v1844 = vunpack.c.l.b16 %v1280
  %v1845 = vunpack.c.h.b16 %v1280
  %v1846 = vunpack.c.l.b16 %v1281
  %v1847 = vunpack.c.h.b16 %v1281
  %v1848 = vunpack.c.l.b16 %v1282
  %v1849 = vunpack.c.h.b16 %v1282
  %v1850 = vunpack.c.l.b16 %v1283
  %v1851 = vunpack.c.h.b16 %v1283
  %v1852 = vunpack.c.l.b16 %v1284
  %v1853 = vunpack.c.h.b16 %v1284
  %v1854 = vunpack.c.l.b16 %v1285
  %v1855 = vunpack.c.h.b16 %v1285
  %v1856 = vunpack.c.l.b16 %v1286
  %v1857 = vunpack.c.h.b16 %v1286
  %v1858 = vunpack.c.l.b16 %v1287
  %v1859 = vunpack.c.h.b16 %v1287
  %v1860 = vunpack.c.l.b16 %v1288
  %v1861 = vunpack.c.h.b16 %v1288
  %v1862 = vunpack.c.l.b16 %v1289
  %v1863 = vunpack.c.h.b16 %v1289
  %v1864 = vunpack.c.l.b16 %v1290
  %v1865 = vunpack.c.h.b16 %v1290
  %v1866 = vunpack.c.l.b16 %v1291
  %v1867 = vunpack.c.h.b16 %v1291
  %v1868 = vunpack.c.l.b16 %v1292
  %v1869 = vunpack.c.h.b16 %v1292
  %v1870 = vunpack.c.l.b16 %v1293
  %v1871 = vunpack.c.h.b16 %v1293
  %v1872 = vunpack.c.l.b16 %v1294
  %v1873 = vunpack.c.h.b16 %v1294
  %v1874 = vunpack.c.l.b16 %v1295
  %v1875 = vunpack.c.h.b16 %v1295
  %v1876 = vunpack.c.l.b16 %v1296
  %v1877 = vunpack.c.h.b16 %v1296
  %v1878 = vunpack.c.l.b16 %v1297
  %v1879 = vunpack.c.h.b16 %v1297
  %v1880 = vunpack.c.l.b16 %v1298
  %v1881 = vunpack.c.h.b16 %v1298
  %v1882 = vunpack.c.l.b16 %v1299
  %v1883 = vunpack.c.h.b16 %v1299
  %v1884 = vunpack.c.l.b16 %v1300
  %v1885 = vunpack.c.h.b16 %v1300
  %v1886 = vunpack.c.l.b16 %v1301
  %v1887 = vunpack.c.h.b16 %v1301
  %v1888 = vunpack.c.l.b16 %v1302
  %v1889 = vunpack.c.h.b16 %v1302
  %v1890 = vunpack.c.l.b16 %v1303
  %v1891 = vunpack.c.h.b16 %v1303
  %v1892 = vunpack.c.l.b16 %v1304
  %v1893 = vunpack.c.h.b16 %v1304
  %v1894 = vunpack.c.l.b16 %v1305
  %v1895 = vunpack.c.h.b16 %v1305
  %v1896 = vunpack.c.l.b16 %v1306
  %v1897 = vunpack.c.h.b16 %v1306
  %v1898 = vunpack.c.l.b16 %v1307
  %v1899 = vunpack.c.h.b16 %v1307
  %v1900 = vunpack.c.l.b16 %v1308
  %v1901 = vunpack.c.h.b16 %v1308
  %v1902 = vunpack.c.l.b16 %v1309
  %v1903 = vunpack.c.h.b16 %v1309
  %v1904 = vunpack.c.l.b16 %v1310
  %v1905 = vunpack.c.h.b16 %v1310
  %v1906 = vunpack.c.l.b16 %v1311
  %v1907 = vunpack.c.h.b16 %v1311
  %v1908 = vunpack.c.l.b16 %v1312
  %v1909 = vunpack.c.h.b16 %v1312
  %v1910 = vunpack.c.l.b16 %v1313
  %v1911 = vunpack.c.h.b16 %v1313
  %v1912 = vunpack.c.l.b16 %v1314
  %v1913 = vunpack.c.h.b16 %v1314
  %v1914 = vunpack.c.l.b16 %v1315
  %v1915 = vunpack.c.h.b16 %v1315
  %v1916 = vunpack.c.l.b16 %v1316
  %v1917 = vunpack.c.h.b16 %v1316
  %v1918 = vunpack.c.l.b16 %v1317
  %v1919 = vunpack.c.h.b16 %v1317
  %v1920 = vunpack.c.l.b16 %v1318
  %v1921 = vunpack.c.h.b16 %v1318
  %v1922 = vunpack.c.l.b16 %v1319
  %v1923 = vunpack.c.h.b16 %v1319
  %v1924 = vunpack.c.l.b16 %v1320
  %v1925 = vunpack.c.h.b16 %v1320
  %v1926 = vunpack.c.l.b16 %v1321
  %v1927 = vunpack.c.h.b16 %v1321
  %v1928 = vunpack.c.l.b16 %v1322
  %v1929 = vunpack.c.h.b16 %v1322
  %v1930 = vunpack.c.l.b16 %v1323
  %v1931 = vunpack.c.h.b16 %v1323
  %v1932 = vunpack.c.l.b16 %v1324
  %v1933 = vunpack.c.h.b16 %v1324
  %v1934 = vunpack.c.l.b16 %v1325
  %v1935 = vunpack.c.h.b16 %v1325
  %v1936 = vunpack.c.l.b16 %v1326
  %v1937 = vunpack.c.h.b16 %v1326
  %v1938 = vunpack.c.l.b16 %v1327
  %v1939 = vunpack.c.h.b16 %v1327
  %v1940 = vunpack.c.l.b16 %v1328
  %v1941 = vunpack.c.h.b16 %v1328
  %v1942 = vunpack.c.l.b16 %v1329
  %v1943 = vunpack.c.h.b16 %v1329
  %v1944 = vunpack.c.l.b16 %v1330
  %v1945 = vunpack.c.h.b16 %v1330
  %v1946 = vunpack.c.l.b16 %v1331
  %v1947 = vunpack.c.h.b16 %v1331
  %v1948 = vunpack.c.l.b16 %v1332
  %v1949 = vunpack.c.h.b16 %v1332
  %v1950 = vunpack.c.l.b16 %v1333
  %v1951 = vunpack.c.h.b16 %v1333
  %v1952 = vunpack.c.l.b16 %v1334
  %v1953 = vunpack.c.h.b16 %v1334
  %v1954 = vunpack.c.l.b16 %v1335
  %v1955 = vunpack.c.h.b16 %v1335
  %v1956 = vunpack.c.l.b16 %v1336
  %v1957 = vunpack.c.h.b16 %v1336
  %v1958 = vunpack.c.l.b16 %v1337
  %v1959 = vunpack.c.h.b16 %v1337
  %v1960 = vunpack.c.l.b16 %v1338
  %v1961 = vunpack.c.h.b16 %v1338
  %v1962 = vunpack.c.l.b16 %v1339
  %v1963 = vunpack.c.h.b16 %v1339
  %v1964 = vunpack.c.l.b16 %v1340
  %v1965 = vunpack.c.h.b16 %v1340
  %v1966 = vunpack.c.l.b16 %v1341
  %v1967 = vunpack.c.h.b16 %v1341
  %v1968 = vunpack.c.l.b16 %v1342
  %v1969 = vunpack.c.h.b16 %v1342
  %v1970 = vunpack.c.l.b16 %v1343
  %v1971 = vunpack.c.h.b16 %v1343
  %v1972 = vunpack.c.l.b16 %v1344
  %v1973 = vunpack.c.h.b16 %v1344
  %v1974 = vunpack.c.l.b16 %v1345
  %v1975 = vunpack.c.h.b16 %v1345
  %v1976 = vunpack.c.l.b16 %v1346
  %v1977 = vunpack.c.h.b16 %v1346
  %v1978 = vunpack.c.l.b16 %v1347
  %v1979 = vunpack.c.h.b16 %v1347
  %v1980 = vunpack.c.l.b16 %v1348
  %v1981 = vunpack.c.h.b16 %v1348
  %v1982 = vunpack.c.l.b16 %v1349
  %v1983 = vunpack.c.h.b16 %v1349
  %v1984 = vunpack.c.l.b16 %v1350
  %v1985 = vunpack.c.h.b16 %v1350
  %v1986 = vunpack.c.l.b16 %v1351
  %v1987 = vunpack.c.h.b16 %v1351
  %v1988 = vunpack.c.l.b16 %v1352
  %v1989 = vunpack.c.h.b16 %v1352
  %v1990 = vunpack.c.l.b16 %v1353
  %v1991 = vunpack.c.h.b16 %v1353
  %v1992 = vunpack.c.l.b16 %v1354
  %v1993 = vunpack.c.h.b16 %v1354
  %v1994 = vunpack.c.l.b16 %v1355
  %v1995 = vunpack.c.h.b16 %v1355
  %v1996 = vunpack.c.l.b16 %v1356
  %v1997 = vunpack.c.h.b16 %v1356
  %v1998 = vunpack.c.l.b16 %v1357
  %v1999 = vunpack.c.h.b16 %v1357
  %v2000 = vunpack.c.l.b16 %v1358
  %v2001 = vunpack.c.h.b16 %v1358
  %v2002 = vunpack.c.l.b16 %v1359
  %v2003 = vunpack.c.h.b16 %v1359
  %v2004 = vunpack.c.l.b16 %v1360
  %v2005 = vunpack.c.h.b16 %v1360
  %v2006 = vunpack.c.l.b16 %v1361
  %v2007 = vunpack.c.h.b16 %v1361
  %v2008 = vunpack.c.l.b16 %v1362
  %v2009 = vunpack.c.h.b16 %v1362
  %v2010 = vunpack.c.l.b16 %v1363
  %v2011 = vunpack.c.h.b16 %v1363
  %v2012 = vunpack.c.l.b16 %v1364
  %v2013 = vunpack.c.h.b16 %v1364
  %v2014 = vunpack.c.l.b16 %v1365
  %v2015 = vunpack.c.h.b16 %v1365
  %v2016 = vunpack.c.l.b16 %v1366
  %v2017 = vunpack.c.h.b16 %v1366
  %v2018 = vunpack.c.l.b16 %v1367
  %v2019 = vunpack.c.h.b16 %v1367
  %v2020 = vunpack.c.l.b16 %v1368
  %v2021 = vunpack.c.h.b16 %v1368
  %v2022 = vunpack.c.l.b16 %v1369
  %v2023 = vunpack.c.h.b16 %v1369
  %v2024 = vunpack.c.l.b16 %v1370
  %v2025 = vunpack.c.h.b16 %v1370
  %v2026 = vunpack.c.l.b16 %v1371
  %v2027 = vunpack.c.h.b16 %v1371
  %v2028 = vunpack.c.l.b16 %v1372
  %v2029 = vunpack.c.h.b16 %v1372
  %v2030 = vunpack.c.l.b16 %v1373
  %v2031 = vunpack.c.h.b16 %v1373
  %v2032 = vunpack.c.l.b16 %v1374
  %v2033 = vunpack.c.h.b16 %v1374
  %v2034 = vunpack.c.l.b16 %v1375
  %v2035 = vunpack.c.h.b16 %v1375
  %v2036 = vunpack.c.l.b16 %v1376
  %v2037 = vunpack.c.h.b16 %v1376
  %v2038 = vunpack.c.l.b16 %v1377
  %v2039 = vunpack.c.h.b16 %v1377
  %v2040 = vunpack.c.l.b16 %v1378
  %v2041 = vunpack.c.h.b16 %v1378
  %v2042 = vunpack.c.l.b16 %v1379
  %v2043 = vunpack.c.h.b16 %v1379
  %v2044 = vunpack.c.l.b16 %v1380
  %v2045 = vunpack.c.h.b16 %v1380
  %v2046 = vunpack.c.l.b16 %v1381
  %v2047 = vunpack.c.h.b16 %v1381
  %v2048 = vunpack.c.l.b16 %v1382
  %v2049 = vunpack.c.h.b16 %v1382
  %v2050 = vunpack.c.l.b16 %v1383
  %v2051 = vunpack.c.h.b16 %v1383
  %v2052 = vunpack.c.l.b16 %v1384
  %v2053 = vunpack.c.h.b16 %v1384
  %v2054 = vunpack.c.l.b16 %v1385
  %v2055 = vunpack.c.h.b16 %v1385
  %v2056 = vunpack.c.l.b16 %v1386
  %v2057 = vunpack.c.h.b16 %v1386
  %v2058 = vunpack.c.l.b16 %v1387
  %v2059 = vunpack.c.h.b16 %v1387
  %v2060 = vunpack.c.l.b16 %v1388
  %v2061 = vunpack.c.h.b16 %v1388
  %v2062 = vunpack.c.l.b16 %v1389
  %v2063 = vunpack.c.h.b16 %v1389
  %v2064 = vunpack.c.l.b16 %v1390
  %v2065 = vunpack.c.h.b16 %v1390
  %v2066 = vunpack.c.l.b16 %v1391
  %v2067 = vunpack.c.h.b16 %v1391
  %v2068 = vunpack.c.l.b16 %v1392
  %v2069 = vunpack.c.h.b16 %v1392
  %v2070 = vunpack.c.l.b16 %v1393
  %v2071 = vunpack.c.h.b16 %v1393
  %v2072 = vunpack.c.l.b16 %v1394
  %v2073 = vunpack.c.h.b16 %v1394
  %v2074 = vunpack.c.l.b16 %v1395
  %v2075 = vunpack.c.h.b16 %v1395
  %v2076 = vunpack.c.l.b16 %v1396
  %v2077 = vunpack.c.h.b16 %v1396
  %v2078 = vunpack.c.l.b16 %v1397
  %v2079 = vunpack.c.h.b16 %v1397
  %v2080 = vunpack.c.l.b16 %v1398
  %v2081 = vunpack.c.h.b16 %v1398
  %v2082 = vunpack.c.l.b16 %v1399
  %v2083 = vunpack.c.h.b16 %v1399
  %v2084 = vunpack.c.l.b16 %v1400
  %v2085 = vunpack.c.h.b16 %v1400
  %v2086 = vunpack.c.l.b16 %v1401
  %v2087 = vunpack.c.h.b16 %v1401
  %v2088 = vunpack.c.l.b16 %v1402
  %v2089 = vunpack.c.h.b16 %v1402
  %v2090 = vunpack.c.l.b16 %v1403
  %v2091 = vunpack.c.h.b16 %v1403
  %v2092 = vunpack.c.l.b16 %v1404
  %v2093 = vunpack.c.h.b16 %v1404
  %v2094 = vunpack.c.l.b16 %v1405
  %v2095 = vunpack.c.h.b16 %v1405
  %v2096 = vunpack.c.l.b16 %v1406
  %v2097 = vunpack.c.h.b16 %v1406
  %v2098 = vunpack.c.l.b16 %v1407
  %v2099 = vunpack.c.h.b16 %v1407
  %v2100 = vunpack.c.l.b16 %v1408
  %v2101 = vunpack.c.h.b16 %v1408
  %v2102 = vunpack.c.l.b16 %v1409
  %v2103 = vunpack.c.h.b16 %v1409
  %v2104 = vunpack.c.l.b16 %v1410
  %v2105 = vunpack.c.h.b16 %v1410
  %v2106 = vunpack.c.l.b16 %v1411
  %v2107 = vunpack.c.h.b16 %v1411
  %v2108 = vunpack.c.l.b16 %v1412
  %v2109 = vunpack.c.h.b16 %v1412
  %v2110 = vunpack.c.l.b16 %v1413
  %v2111 = vunpack.c.h.b16 %v1413
  %v2112 = vunpack.c.l.b16 %v1414
  %v2113 = vunpack.c.h.b16 %v1414
  %v2114 = vunpack.c.l.b16 %v1415
  %v2115 = vunpack.c.h.b16 %v1415
  %v2116 = vunpack.c.l.b16 %v1416
  %v2117 = vunpack.c.h.b16 %v1416
  %v2118 = vunpack.c.l.b16 %v1417
  %v2119 = vunpack.c.h.b16 %v1417
  %v2120 = vunpack.c.l.b16 %v1418
  %v2121 = vunpack.c.h.b16 %v1418
  %v2122 = vunpack.c.l.b16 %v1419
  %v2123 = vunpack.c.h.b16 %v1419
  %v2124 = vunpack.c.l.b16 %v1420
  %v2125 = vunpack.c.h.b16 %v1420
  %v2126 = vunpack.c.l.b16 %v1421
  %v2127 = vunpack.c.h.b16 %v1421
  %v2128 = vunpack.c.l.b16 %v1422
  %v2129 = vunpack.c.h.b16 %v1422
  %v2130 = vunpack.c.l.b16 %v1423
  %v2131 = vunpack.c.h.b16 %v1423
  %v2132 = vunpack.c.l.b16 %v1424
  %v2133 = vunpack.c.h.b16 %v1424
  %v2134 = vunpack.c.l.b16 %v1425
  %v2135 = vunpack.c.h.b16 %v1425
  %v2136 = vunpack.c.l.b16 %v1426
  %v2137 = vunpack.c.h.b16 %v1426
  %v2138 = vunpack.c.l.b16 %v1427
  %v2139 = vunpack.c.h.b16 %v1427
  %v2140 = vunpack.c.l.b16 %v1428
  %v2141 = vunpack.c.h.b16 %v1428
  %v2142 = vunpack.c.l.b16 %v1429
  %v2143 = vunpack.c.h.b16 %v1429
  %v2144 = vunpack.c.l.b16 %v1430
  %v2145 = vunpack.c.h.b16 %v1430
  %v2146 = vunpack.c.l.b16 %v1431
  %v2147 = vunpack.c.h.b16 %v1431
  %v2148 = vunpack.c.l.b16 %v1432
  %v2149 = vunpack.c.h.b16 %v1432
  %v2150 = vunpack.c.l.b16 %v1433
  %v2151 = vunpack.c.h.b16 %v1433
  %v2152 = vunpack.c.l.b16 %v1434
  %v2153 = vunpack.c.h.b16 %v1434
  %v2154 = vunpack.c.l.b16 %v1435
  %v2155 = vunpack.c.h.b16 %v1435
  %v2156 = vunpack.c.l.b16 %v1436
  %v2157 = vunpack.c.h.b16 %v1436
  %v2158 = vunpack.c.l.b16 %v1437
  %v2159 = vunpack.c.h.b16 %v1437
  %v2160 = vunpack.c.l.b16 %v1438
  %v2161 = vunpack.c.h.b16 %v1438
  %v2162 = vunpack.c.l.b16 %v1439
  %v2163 = vunpack.c.h.b16 %v1439
  %v2164 = vunpack.c.l.b16 %v1440
  %v2165 = vunpack.c.h.b16 %v1440
  %v2166 = vunpack.c.l.b16 %v1441
  %v2167 = vunpack.c.h.b16 %v1441
  %v2168 = vunpack.c.l.b16 %v1442
  %v2169 = vunpack.c.h.b16 %v1442
  %v2170 = vunpack.c.l.b16 %v1443
  %v2171 = vunpack.c.h.b16 %v1443
  %v2172 = vunpack.c.l.b16 %v1444
  %v2173 = vunpack.c.h.b16 %v1444
  %v2174 = vunpack.c.l.b16 %v1445
  %v2175 = vunpack.c.h.b16 %v1445
  %v2176 = vunpack.c.l.b16 %v1446
  %v2177 = vunpack.c.h.b16 %v1446
  %v2178 = vunpack.c.l.b16 %v1447
  %v2179 = vunpack.c.h.b16 %v1447
  %v2180 = vunpack.c.l.b16 %v1448
  %v2181 = vunpack.c.h.b16 %v1448
  %v2182 = vunpack.c.l.b16 %v1449
  %v2183 = vunpack.c.h.b16 %v1449
  %v2184 = vunpack.c.l.b16 %v1450
  %v2185 = vunpack.c.h.b16 %v1450
  %v2186 = vunpack.c.l.b16 %v1451
  %v2187 = vunpack.c.h.b16 %v1451
  %v2188 = vunpack.c.l.b16 %v1452
  %v2189 = vunpack.c.h.b16 %v1452
  %v2190 = vunpack.c.l.b16 %v1453
  %v2191 = vunpack.c.h.b16 %v1453
  %v2192 = vunpack.c.l.b16 %v1454
  %v2193 = vunpack.c.h.b16 %v1454
  %v2194 = vunpack.c.l.b16 %v1455
  %v2195 = vunpack.c.h.b16 %v1455
  %v2196 = vunpack.c.l.b16 %v1456
  %v2197 = vunpack.c.h.b16 %v1456
  %v2198 = vunpack.c.l.b16 %v1457
  %v2199 = vunpack.c.h.b16 %v1457
  %v2200 = vunpack.c.l.b16 %v1458
  %v2201 = vunpack.c.h.b16 %v1458
  %v2202 = vunpack.c.l.b16 %v1459
  %v2203 = vunpack.c.h.b16 %v1459
  %v2204 = vunpack.c.l.b16 %v1460
  %v2205 = vunpack.c.h.b16 %v1460
  %v2206 = vunpack.c.l.b16 %v1461
  %v2207 = vunpack.c.h.b16 %v1461
  %v2208 = vunpack.c.l.b16 %v1462
  %v2209 = vunpack.c.h.b16 %v1462
  %v2210 = vunpack.c.l.b16 %v1463
  %v2211 = vunpack.c.h.b16 %v1463
  %v2212 = vunpack.c.l.b16 %v1464
  %v2213 = vunpack.c.h.b16 %v1464
  %v2214 = vunpack.c.l.b16 %v1465
  %v2215 = vunpack.c.h.b16 %v1465
  %v2216 = vunpack.c.l.b16 %v1466
  %v2217 = vunpack.c.h.b16 %v1466
  %v2218 = vunpack.c.l.b16 %v1467
  %v2219 = vunpack.c.h.b16 %v1467
  %v2220 = vunpack.c.l.b16 %v1468
  %v2221 = vunpack.c.h.b16 %v1468
  %v2222 = vunpack.c.l.b16 %v1469
  %v2223 = vunpack.c.h.b16 %v1469
  %v2224 = vunpack.c.l.b16 %v1470
  %v2225 = vunpack.c.h.b16 %v1470
  %v2226 = vunpack.c.l.b16 %v1471
  %v2227 = vunpack.c.h.b16 %v1471
  %v2228 = vunpack.c.l.b16 %v1472
  %v2229 = vunpack.c.h.b16 %v1472
  %v2230 = vunpack.c.l.b16 %v1473
  %v2231 = vunpack.c.h.b16 %v1473
  %v2232 = vunpack.c.l.b16 %v1474
  %v2233 = vunpack.c.h.b16 %v1474
  %v2234 = vunpack.c.l.b16 %v1475
  %v2235 = vunpack.c.h.b16 %v1475
  %v2236 = vunpack.c.l.b16 %v1476
  %v2237 = vunpack.c.h.b16 %v1476
  %v2238 = vunpack.c.l.b16 %v1477
  %v2239 = vunpack.c.h.b16 %v1477
  %v2240 = vunpack.c.l.b16 %v1478
  %v2241 = vunpack.c.h.b16 %v1478
  %v2242 = vunpack.c.l.b16 %v1479
  %v2243 = vunpack.c.h.b16 %v1479
  %v2244 = vunpack.c.l.b16 %v1480
  %v2245 = vunpack.c.h.b16 %v1480
  %v2246 = vunpack.c.l.b16 %v1481
  %v2247 = vunpack.c.h.b16 %v1481
  %v2248 = vunpack.c.l.b16 %v1482
  %v2249 = vunpack.c.h.b16 %v1482
  %v2250 = vunpack.c.l.b16 %v1483
  %v2251 = vunpack.c.h.b16 %v1483
  %v2252 = vunpack.c.l.b16 %v1484
  %v2253 = vunpack.c.h.b16 %v1484
  %v2254 = vunpack.c.l.b16 %v1485
  %v2255 = vunpack.c.h.b16 %v1485
  %v2256 = vunpack.c.l.b16 %v1486
  %v2257 = vunpack.c.h.b16 %v1486
  %v2258 = vunpack.c.l.b16 %v1487
  %v2259 = vunpack.c.h.b16 %v1487
  %v2260 = vunpack.c.l.b16 %v1488
  %v2261 = vunpack.c.h.b16 %v1488
  %v2262 = vunpack.c.l.b16 %v1489
  %v2263 = vunpack.c.h.b16 %v1489
  %v2264 = vunpack.c.l.b16 %v1490
  %v2265 = vunpack.c.h.b16 %v1490
  %v2266 = vunpack.c.l.b16 %v1491
  %v2267 = vunpack.c.h.b16 %v1491
  %v2268 = vunpack.c.l.b16 %v1492
  %v2269 = vunpack.c.h.b16 %v1492
  %v2270 = vunpack.c.l.b16 %v1493
  %v2271 = vunpack.c.h.b16 %v1493
  %v2272 = vunpack.c.l.b16 %v1494
  %v2273 = vunpack.c.h.b16 %v1494
  %v2274 = vunpack.c.l.b16 %v1495
  %v2275 = vunpack.c.h.b16 %v1495
  %v2276 = vpack.c.b16 %v1766, %v1764
  %v2277 = vpack.c.b16 %v1767, %v1765
  %v2278 = vpack.c.b16 %v1770, %v1768
  %v2279 = vpack.c.b16 %v1771, %v1769
  %v2280 = vpack.c.b16 %v1774, %v1772
  %v2281 = vpack.c.b16 %v1775, %v1773
  %v2282 = vpack.c.b16 %v1778, %v1776
  %v2283 = vpack.c.b16 %v1779, %v1777
  %v2284 = vpack.c.b16 %v1782, %v1780
  %v2285 = vpack.c.b16 %v1783, %v1781
  %v2286 = vpack.c.b16 %v1786, %v1784
  %v2287 = vpack.c.b16 %v1787, %v1785
  %v2288 = vpack.c.b16 %v1790, %v1788
  %v2289 = vpack.c.b16 %v1791, %v1789
  %v2290 = vpack.c.b16 %v1794, %v1792
  %v2291 = vpack.c.b16 %v1795, %v1793
  %v2292 = vpack.c.b16 %v1798, %v1796
  %v2293 = vpack.c.b16 %v1799, %v1797
  %v2294 = vpack.c.b16 %v1802, %v1800
  %v2295 = vpack.c.b16 %v1803, %v1801
  %v2296 = vpack.c.b16 %v1806, %v1804
  %v2297 = vpack.c.b16 %v1807, %v1805
  %v2298 = vpack.c.b16 %v1810, %v1808
  %v2299 = vpack.c.b16 %v1811, %v1809
  %v2300 = vpack.c.b16 %v1814, %v1812
  %v2301 = vpack.c.b16 %v1815, %v1813
  %v2302 = vpack.c.b16 %v1818, %v1816
  %v2303 = vpack.c.b16 %v1819, %v1817
  %v2304 = vpack.c.b16 %v1822, %v1820
  %v2305 = vpack.c.b16 %v1823, %v1821
  %v2306 = vpack.c.b16 %v1826, %v1824
  %v2307 = vpack.c.b16 %v1827, %v1825
  %v2308 = vpack.c.b16 %v1830, %v1828
  %v2309 = vpack.c.b16 %v1831, %v1829
  %v2310 = vpack.c.b16 %v1834, %v1832
  %v2311 = vpack.c.b16 %v1835, %v1833
  %v2312 = vpack.c.b16 %v1838, %v1836
  %v2313 = vpack.c.b16 %v1839, %v1837
  %v2314 = vpack.c.b16 %v1842, %v1840
  %v2315 = vpack.c.b16 %v1843, %v1841
  %v2316 = vpack.c.b16 %v1846, %v1844
  %v2317 = vpack.c.b16 %v1847, %v1845
  %v2318 = vpack.c.b16 %v1850, %v1848
  %v2319 = vpack.c.b16 %v1851, %v1849
  %v2320 = vpack.c.b16 %v1854, %v1852
  %v2321 = vpack.c.b16 %v1855, %v1853
  %v2322 = vpack.c.b16 %v1858, %v1856
  %v2323 = vpack.c.b16 %v1859, %v1857
  %v2324 = vpack.c.b16 %v1862, %v1860
  %v2325 = vpack.c.b16 %v1863, %v1861
  %v2326 = vpack.c.b16 %v1866, %v1864
  %v2327 = vpack.c.b16 %v1867, %v1865
  %v2328 = vpack.c.b16 %v1870, %v1868
  %v2329 = vpack.c.b16 %v1871, %v1869
  %v2330 = vpack.c.b16 %v1874, %v1872
  %v2331 = vpack.c.b16 %v1875, %v1873
  %v2332 = vpack.c.b16 %v1878, %v1876
  %v2333 = vpack.c.b16 %v1879, %v1877
  %v2334 = vpack.c.b16 %v1882, %v1880
  %v2335 = vpack.c.b16 %v1883, %v1881
  %v2336 = vpack.c.b16 %v1886, %v1884
  %v2337 = vpack.c.b16 %v1887, %v1885
  %v2338 = vpack.c.b16 %v1890, %v1888
  %v2339 = vpack.c.b16 %v1891, %v1889
  %v2340 = vpack.c.b16 %v1894, %v1892
  %v2341 = vpack.c.b16 %v1895, %v1893
  %v2342 = vpack.c.b16 %v1898, %v1896
  %v2343 = vpack.c.b16 %v1899, %v1897
  %v2344 = vpack.c.b16 %v1902, %v1900
  %v2345 = vpack.c.b16 %v1903, %v1901
  %v2346 = vpack.c.b16 %v1906, %v1904
  %v2347 = vpack.c.b16 %v1907, %v1905
  %v2348 = vpack.c.b16 %v1910, %v1908
  %v2349 = vpack.c.b16 %v1911, %v1909
  %v2350 = vpack.c.b16 %v1914, %v1912
  %v2351 = vpack.c.b16 %v1915, %v1913
  %v2352 = vpack.c.b16 %v1918, %v1916
  %v2353 = vpack.c.b16 %v1919, %v1917
  %v2354 = vpack.c.b16 %v1922, %v1920
  %v2355 = vpack.c.b16 %v1923, %v1921
  %v2356 = vpack.c.b16 %v1926, %v1924
  %v2357 = vpack.c.b16 %v1927, %v1925
  %v2358 = vpack.c.b16 %v1930, %v1928
  %v2359 = vpack.c.b16 %v1931, %v1929
  %v2360 = vpack.c.b16 %v1934, %v1932
  %v2361 = vpack.c.b16 %v1935, %v1933
  %v2362 = vpack.c.b16 %v1938, %v1936
  %v2363 = vpack.c.b16 %v1939, %v1937
  %v2364 = vpack.c.b16 %v1942, %v1940
  %v2365 = vpack.c.b16 %v1943, %v1941
  %v2366 = vpack.c.b16 %v1946, %v1944
  %v2367 = vpack.c.b16 %v1947, %v1945
  %v2368 = vpack.c.b16 %v1950, %v1948
  %v2369 = vpack.c.b16 %v1951, %v1949
  %v2370 = vpack.c.b16 %v1954, %v1952
  %v2371 = vpack.c.b16 %v1955, %v1953
  %v2372 = vpack.c.b16 %v1958, %v1956
  %v2373 = vpack.c.b16 %v1959, %v1957
  %v2374 = vpack.c.b16 %v1962, %v1960
  %v2375 = vpack.c.b16 %v1963, %v1961
  %v2376 = vpack.c.b16 %v1966, %v1964
  %v2377 = vpack.c.b16 %v1967, %v1965
  %v2378 = vpack.c.b16 %v1970, %v1968
  %v2379 = vpack.c.b16 %v1971, %v1969
  %v2380 = vpack.c.b16 %v1974, %v1972
  %v2381 = vpack.c.b16 %v1975, %v1973
  %v2382 = vpack.c.b16 %v1978, %v1976
  %v2383 = vpack.c.b16 %v1979, %v1977
  %v2384 = vpack.c.b16 %v1982, %v1980
  %v2385 = vpack.c.b16 %v1983, %v1981
  %v2386 = vpack.c.b16 %v1986, %v1984
  %v2387 = vpack.c.b16 %v1987, %v1985
  %v2388 = vpack.c.b16 %v1990, %v1988
  %v2389 = vpack.c.b16 %v1991, %v1989
  %v2390 = vpack.c.b16 %v1994, %v1992
  %v2391 = vpack.c.b16 %v1995, %v1993
  %v2392 = vpack.c.b16 %v1998, %v1996
  %v2393 = vpack.c.b16 %v1999, %v1997
  %v2394 = vpack.c.b16 %v2002, %v2000
  %v2395 = vpack.c.b16 %v2003, %v2001
  %v2396 = vpack.c.b16 %v2006, %v2004
  %v2397 = vpack.c.b16 %v2007, %v2005
  %v2398 = vpack.c.b16 %v2010, %v2008
  %v2399 = vpack.c.b16 %v2011, %v2009
  %v2400 = vpack.c.b16 %v2014, %v2012
  %v2401 = vpack.c.b16 %v2015, %v2013
  %v2402 = vpack.c.b16 %v2018, %v2016
  %v2403 = vpack.c.b16 %v2019, %v2017
  %v2404 = vpack.c.b16 %v2022, %v2020
  %v2405 = vpack.c.b16 %v2023, %v2021
  %v2406 = vpack.c.b16 %v2026, %v2024
  %v2407 = vpack.c.b16 %v2027, %v2025
  %v2408 = vpack.c.b16 %v2030, %v2028
  %v2409 = vpack.c.b16 %v2031, %v2029
  %v2410 = vpack.c.b16 %v2034, %v2032
  %v2411 = vpack.c.b16 %v2035, %v2033
  %v2412 = vpack.c.b16 %v2038, %v2036
  %v2413 = vpack.c.b16 %v2039, %v2037
  %v2414 = vpack.c.b16 %v2042, %v2040
  %v2415 = vpack.c.b16 %v2043, %v2041
  %v2416 = vpack.c.b16 %v2046, %v2044
  %v2417 = vpack.c.b16 %v2047, %v2045
  %v2418 = vpack.c.b16 %v2050, %v2048
  %v2419 = vpack.c.b16 %v2051, %v2049
  %v2420 = vpack.c.b16 %v2054, %v2052
  %v2421 = vpack.c.b16 %v2055, %v2053
  %v2422 = vpack.c.b16 %v2058, %v2056
  %v2423 = vpack.c.b16 %v2059, %v2057
  %v2424 = vpack.c.b16 %v2062, %v2060
  %v2425 = vpack.c.b16 %v2063, %v2061
  %v2426 = vpack.c.b16 %v2066, %v2064
  %v2427 = vpack.c.b16 %v2067, %v2065
  %v2428 = vpack.c.b16 %v2070, %v2068
  %v2429 = vpack.c.b16 %v2071, %v2069
  %v2430 = vpack.c.b16 %v2074, %v2072
  %v2431 = vpack.c.b16 %v2075, %v2073
  %v2432 = vpack.c.b16 %v2078, %v2076
  %v2433 = vpack.c.b16 %v2079, %v2077
  %v2434 = vpack.c.b16 %v2082, %v2080
  %v2435 = vpack.c.b16 %v2083, %v2081
  %v2436 = vpack.c.b16 %v2086, %v2084
  %v2437 = vpack.c.b16 %v2087, %v2085
  %v2438 = vpack.c.b16 %v2090, %v2088
  %v2439 = vpack.c.b16 %v2091, %v2089
  %v2440 = vpack.c.b16 %v2094, %v2092
  %v2441 = vpack.c.b16 %v2095, %v2093
  %v2442 = vpack.c.b16 %v2098, %v2096
  %v2443 = vpack.c.b16 %v2099, %v2097
  %v2444 = vpack.c.b16 %v2102, %v2100
  %v2445 = vpack.c.b16 %v2103, %v2101
  %v2446 = vpack.c.b16 %v2106, %v2104
  %v2447 = vpack.c.b16 %v2107, %v2105
  %v2448 = vpack.c.b16 %v2110, %v2108
  %v2449 = vpack.c.b16 %v2111, %v2109
  %v2450 = vpack.c.b16 %v2114, %v2112
  %v2451 = vpack.c.b16 %v2115, %v2113
  %v2452 = vpack.c.b16 %v2118, %v2116
  %v2453 = vpack.c.b16 %v2119, %v2117
  %v2454 = vpack.c.b16 %v2122, %v2120
  %v2455 = vpack.c.b16 %v2123, %v2121
  %v2456 = vpack.c.b16 %v2126, %v2124
  %v2457 = vpack.c.b16 %v2127, %v2125
  %v2458 = vpack.c.b16 %v2130, %v2128
  %v2459 = vpack.c.b16 %v2131, %v2129
  %v2460 = vpack.c.b16 %v2134, %v2132
  %v2461 = vpack.c.b16 %v2135, %v2133
  %v2462 = vpack.c.b16 %v2138, %v2136
  %v2463 = vpack.c.b16 %v2139, %v2137
  %v2464 = vpack.c.b16 %v2142, %v2140
  %v2465 = vpack.c.b16 %v2143, %v2141
  %v2466 = vpack.c.b16 %v2146, %v2144
  %v2467 = vpack.c.b16 %v2147, %v2145
  %v2468 = vpack.c.b16 %v2150, %v2148
  %v2469 = vpack.c.b16 %v2151, %v2149
  %v2470 = vpack.c.b16 %v2154, %v2152
  %v2471 = vpack.c.b16 %v2155, %v2153
  %v2472 = vpack.c.b16 %v2158, %v2156
  %v2473 = vpack.c.b16 %v2159, %v2157
  %v2474 = vpack.c.b16 %v2162, %v2160
  %v2475 = vpack.c.b16 %v2163, %v2161
  %v2476 = vpack.c.b16 %v2166, %v2164
  %v2477 = vpack.c.b16 %v2167, %v2165
  %v2478 = vpack.c.b16 %v2170, %v2168
  %v2479 = vpack.c.b16 %v2171, %v2169
  %v2480 = vpack.c.b16 %v2174, %v2172
  %v2481 = vpack.c.b16 %v2175, %v2173
  %v2482 = vpack.c.b16 %v2178, %v2176
  %v2483 = vpack.c.b16 %v2179, %v2177
  %v2484 = vpack.c.b16 %v2182, %v2180
  %v2485 = vpack.c.b16 %v2183, %v2181
  %v2486 = vpack.c.b16 %v2186, %v2184
  %v2487 = vpack.c.b16 %v2187, %v2185
  %v2488 = vpack.c.b16 %v2190, %v2188
  %v2489 = vpack.c.b16 %v2191, %v2189
  %v2490 = vpack.c.b16 %v2194, %v2192
  %v2491 = vpack.c.b16 %v2195, %v2193
  %v2492 = vpack.c.b16 %v2198, %v2196
  %v2493 = vpack.c.b16 %v2199, %v2197
  %v2494 = vpack.c.b16 %v2202, %v2200
  %v2495 = vpack.c.b16 %v2203, %v2201
  %v2496 = vpack.c.b16 %v2206, %v2204
  %v2497 = vpack.c.b16 %v2207, %v2205
  %v2498 = vpack.c.b16 %v2210, %v2208
  %v2499 = vpack.c.b16 %v2211, %v2209
  %v2500 = vpack.c.b16 %v2214, %v2212
  %v2501 = vpack.c.b16 %v2215, %v2213
  %v2502 = vpack.c.b16 %v2218, %v2216
  %v2503 = vpack.c.b16 %v2219, %v2217
  %v2504 = vpack.c.b16 %v2222, %v2220
  %v2505 = vpack.c.b16 %v2223, %v2221
  %v2506 = vpack.c.b16 %v2226, %v2224
  %v2507 = vpack.c.b16 %v2227, %v2225
  %v2508 = vpack.c.b16 %v2230, %v2228
  %v2509 = vpack.c.b16 %v2231, %v2229
  %v2510 = vpack.c.b16 %v2234, %v2232
  %v2511 = vpack.c.b16 %v2235, %v2233
  %v2512 = vpack.c.b16 %v2238, %v2236
  %v2513 = vpack.c.b16 %v2239, %v2237
  %v2514 = vpack.c.b16 %v2242, %v2240
  %v2515 = vpack.c.b16 %v2243, %v2241
  %v2516 = vpack.c.b16 %v2246, %v2244
  %v2517 = vpack.c.b16 %v2247, %v2245
  %v2518 = vpack.c.b16 %v2250, %v2248
  %v2519 = vpack.c.b16 %v2251, %v2249
  %v2520 = vpack.c.b16 %v2254, %v2252
  %v2521 = vpack.c.b16 %v2255, %v2253
  %v2522 = vpack.c.b16 %v2258, %v2256
  %v2523 = vpack.c.b16 %v2259, %v2257
  %v2524 = vpack.c.b16 %v2262, %v2260
  %v2525 = vpack.c.b16 %v2263, %v2261
  %v2526 = vpack.c.b16 %v2266, %v2264
  %v2527 = vpack.c.b16 %v2267, %v2265
  %v2528 = vpack.c.b16 %v2270, %v2268
  %v2529 = vpack.c.b16 %v2271, %v2269
  %v2530 = vpack.c.b16 %v2274, %v2272
  %v2531 = vpack.c.b16 %v2275, %v2273
  %2788 = vmatprep.subr.bf16.mxu0 %v2277
  %2789 = vmatpush1.bf16.msra.mxu0 %v2276
  %2790 = vmatprep.subr.bf16.mxu0 %v2279
  %2791 = vmatpush1.bf16.msra.mxu0 %v2278
  %2792 = vmatprep.subr.bf16.mxu0 %v2281
  %2793 = vmatpush1.bf16.msra.mxu0 %v2280
  %2794 = vmatprep.subr.bf16.mxu0 %v2283
  %2795 = vmatpush1.bf16.msra.mxu0 %v2282
  %2796 = vmatprep.subr.bf16.mxu0 %v2285
  %2797 = vmatpush1.bf16.msra.mxu0 %v2284
  %2798 = vmatprep.subr.bf16.mxu0 %v2287
  %2799 = vmatpush1.bf16.msra.mxu0 %v2286
  %2800 = vmatprep.subr.bf16.mxu0 %v2289
  %2801 = vmatpush1.bf16.msra.mxu0 %v2288
  %2802 = vmatprep.subr.bf16.mxu0 %v2291
  %2803 = vmatpush1.bf16.msra.mxu0 %v2290
  %2804 = vmatprep.subr.bf16.mxu0 %v2293
  %2805 = vmatpush1.bf16.msra.mxu0 %v2292
  %2806 = vmatprep.subr.bf16.mxu0 %v2295
  %2807 = vmatpush1.bf16.msra.mxu0 %v2294
  %2808 = vmatprep.subr.bf16.mxu0 %v2297
  %2809 = vmatpush1.bf16.msra.mxu0 %v2296
  %2810 = vmatprep.subr.bf16.mxu0 %v2299
  %2811 = vmatpush1.bf16.msra.mxu0 %v2298
  %2812 = vmatprep.subr.bf16.mxu0 %v2301
  %2813 = vmatpush1.bf16.msra.mxu0 %v2300
  %2814 = vmatprep.subr.bf16.mxu0 %v2303
  %2815 = vmatpush1.bf16.msra.mxu0 %v2302
  %2816 = vmatprep.subr.bf16.mxu0 %v2305
  %2817 = vmatpush1.bf16.msra.mxu0 %v2304
  %2818 = vmatprep.subr.bf16.mxu0 %v2307
  %2819 = vmatpush1.bf16.msra.mxu0 %v2306
  %2820 = vmatprep.mubr.bf16.mxu0 %v1225
  %2821 = vmatmul.mubr.bf16.gmra.mrb[0].mxu0 %v1224
  %v2822 = vpop.f32.mrb[0].mxu0
  %v2823 = vadd.f32 %v1501, %v2822
  %v2824 = vpop.f32.mrb[0].mxu0
  %v2825 = vadd.f32 %v1505, %v2824
  %v2826 = vpop.f32.mrb[0].mxu0
  %v2827 = vpop.f32.mrb[0].mxu0
  %2828 = vdwg.mxu0
  %2829 = vmatprep.subr.bf16.mxu0 %v2309
  %2830 = vmatpush1.bf16.msra.mxu0 %v2308
  %2831 = vmatprep.subr.bf16.mxu0 %v2311
  %2832 = vmatpush1.bf16.msra.mxu0 %v2310
  %2833 = vmatprep.subr.bf16.mxu0 %v2313
  %2834 = vmatpush1.bf16.msra.mxu0 %v2312
  %2835 = vmatprep.subr.bf16.mxu0 %v2315
  %2836 = vmatpush1.bf16.msra.mxu0 %v2314
  %2837 = vmatprep.subr.bf16.mxu0 %v2317
  %2838 = vmatpush1.bf16.msra.mxu0 %v2316
  %2839 = vmatprep.subr.bf16.mxu0 %v2319
  %2840 = vmatpush1.bf16.msra.mxu0 %v2318
  %2841 = vmatprep.subr.bf16.mxu0 %v2321
  %2842 = vmatpush1.bf16.msra.mxu0 %v2320
  %2843 = vmatprep.subr.bf16.mxu0 %v2323
  %2844 = vmatpush1.bf16.msra.mxu0 %v2322
  %2845 = vmatprep.subr.bf16.mxu0 %v2325
  %2846 = vmatpush1.bf16.msra.mxu0 %v2324
  %2847 = vmatprep.subr.bf16.mxu0 %v2327
  %2848 = vmatpush1.bf16.msra.mxu0 %v2326
  %2849 = vmatprep.subr.bf16.mxu0 %v2329
  %2850 = vmatpush1.bf16.msra.mxu0 %v2328
  %2851 = vmatprep.subr.bf16.mxu0 %v2331
  %2852 = vmatpush1.bf16.msra.mxu0 %v2330
  %2853 = vmatprep.subr.bf16.mxu0 %v2333
  %2854 = vmatpush1.bf16.msra.mxu0 %v2332
  %2855 = vmatprep.subr.bf16.mxu0 %v2335
  %2856 = vmatpush1.bf16.msra.mxu0 %v2334
  %2857 = vmatprep.subr.bf16.mxu0 %v2337
  %2858 = vmatpush1.bf16.msra.mxu0 %v2336
  %2859 = vmatprep.subr.bf16.mxu0 %v2339
  %2860 = vmatpush1.bf16.msra.mxu0 %v2338
  %2861 = vmatprep.mubr.bf16.mxu0 %v1227
  %2862 = vmatmul.mubr.bf16.gmra.mrb[0].mxu0 %v1226
  %v2863 = vpop.f32.mrb[0].mxu0
  %v2864 = vadd.f32 %v2823, %v2863
  %v2865 = vpop.f32.mrb[0].mxu0
  %v2866 = vadd.f32 %v2825, %v2865
  %v2867 = vpop.f32.mrb[0].mxu0
  %v2868 = vpop.f32.mrb[0].mxu0
  %2869 = vdwg.mxu0
  %2870 = vmatprep.subr.bf16.mxu0 %v2341
  %2871 = vmatpush1.bf16.msra.mxu0 %v2340
  %2872 = vmatprep.subr.bf16.mxu0 %v2343
  %2873 = vmatpush1.bf16.msra.mxu0 %v2342
  %2874 = vmatprep.subr.bf16.mxu0 %v2345
  %2875 = vmatpush1.bf16.msra.mxu0 %v2344
  %2876 = vmatprep.subr.bf16.mxu0 %v2347
  %2877 = vmatpush1.bf16.msra.mxu0 %v2346
  %2878 = vmatprep.subr.bf16.mxu0 %v2349
  %2879 = vmatpush1.bf16.msra.mxu0 %v2348
  %2880 = vmatprep.subr.bf16.mxu0 %v2351
  %2881 = vmatpush1.bf16.msra.mxu0 %v2350
  %2882 = vmatprep.subr.bf16.mxu0 %v2353
  %2883 = vmatpush1.bf16.msra.mxu0 %v2352
  %2884 = vmatprep.subr.bf16.mxu0 %v2355
  %2885 = vmatpush1.bf16.msra.mxu0 %v2354
  %2886 = vmatprep.subr.bf16.mxu0 %v2357
  %2887 = vmatpush1.bf16.msra.mxu0 %v2356
  %2888 = vmatprep.subr.bf16.mxu0 %v2359
  %2889 = vmatpush1.bf16.msra.mxu0 %v2358
  %2890 = vmatprep.subr.bf16.mxu0 %v2361
  %2891 = vmatpush1.bf16.msra.mxu0 %v2360
  %2892 = vmatprep.subr.bf16.mxu0 %v2363
  %2893 = vmatpush1.bf16.msra.mxu0 %v2362
  %2894 = vmatprep.subr.bf16.mxu0 %v2365
  %2895 = vmatpush1.bf16.msra.mxu0 %v2364
  %2896 = vmatprep.subr.bf16.mxu0 %v2367
  %2897 = vmatpush1.bf16.msra.mxu0 %v2366
  %2898 = vmatprep.subr.bf16.mxu0 %v2369
  %2899 = vmatpush1.bf16.msra.mxu0 %v2368
  %2900 = vmatprep.subr.bf16.mxu0 %v2371
  %2901 = vmatpush1.bf16.msra.mxu0 %v2370
  %2902 = vmatprep.mubr.bf16.mxu0 %v1229
  %2903 = vmatmul.mubr.bf16.gmra.mrb[0].mxu0 %v1228
  %v2904 = vpop.f32.mrb[0].mxu0
  %v2905 = vadd.f32 %v2864, %v2904
  %v2906 = vpop.f32.mrb[0].mxu0
  %v2907 = vadd.f32 %v2866, %v2906
  %v2908 = vpop.f32.mrb[0].mxu0
  %v2909 = vpop.f32.mrb[0].mxu0
  %2910 = vdwg.mxu0
  %2911 = vmatprep.subr.bf16.mxu0 %v2373
  %2912 = vmatpush1.bf16.msra.mxu0 %v2372
  %2913 = vmatprep.subr.bf16.mxu0 %v2375
  %2914 = vmatpush1.bf16.msra.mxu0 %v2374
  %2915 = vmatprep.subr.bf16.mxu0 %v2377
  %2916 = vmatpush1.bf16.msra.mxu0 %v2376
  %2917 = vmatprep.subr.bf16.mxu0 %v2379
  %2918 = vmatpush1.bf16.msra.mxu0 %v2378
  %2919 = vmatprep.subr.bf16.mxu0 %v2381
  %2920 = vmatpush1.bf16.msra.mxu0 %v2380
  %2921 = vmatprep.subr.bf16.mxu0 %v2383
  %2922 = vmatpush1.bf16.msra.mxu0 %v2382
  %2923 = vmatprep.subr.bf16.mxu0 %v2385
  %2924 = vmatpush1.bf16.msra.mxu0 %v2384
  %2925 = vmatprep.subr.bf16.mxu0 %v2387
  %2926 = vmatpush1.bf16.msra.mxu0 %v2386
  %2927 = vmatprep.subr.bf16.mxu0 %v2389
  %2928 = vmatpush1.bf16.msra.mxu0 %v2388
  %2929 = vmatprep.subr.bf16.mxu0 %v2391
  %2930 = vmatpush1.bf16.msra.mxu0 %v2390
  %2931 = vmatprep.subr.bf16.mxu0 %v2393
  %2932 = vmatpush1.bf16.msra.mxu0 %v2392
  %2933 = vmatprep.subr.bf16.mxu0 %v2395
  %2934 = vmatpush1.bf16.msra.mxu0 %v2394
  %2935 = vmatprep.subr.bf16.mxu0 %v2397
  %2936 = vmatpush1.bf16.msra.mxu0 %v2396
  %2937 = vmatprep.subr.bf16.mxu0 %v2399
  %2938 = vmatpush1.bf16.msra.mxu0 %v2398
  %2939 = vmatprep.subr.bf16.mxu0 %v2401
  %2940 = vmatpush1.bf16.msra.mxu0 %v2400
  %2941 = vmatprep.subr.bf16.mxu0 %v2403
  %2942 = vmatpush1.bf16.msra.mxu0 %v2402
  %2943 = vmatprep.mubr.bf16.mxu0 %v1231
  %2944 = vmatmul.mubr.bf16.gmra.mrb[0].mxu0 %v1230
  %v2945 = vpop.f32.mrb[0].mxu0
  %v2946 = vadd.f32 %v2905, %v2945
  %v2947 = vpop.f32.mrb[0].mxu0
  %v2948 = vadd.f32 %v2907, %v2947
  %v2949 = vpop.f32.mrb[0].mxu0
  %v2950 = vpop.f32.mrb[0].mxu0
  %2951 = vdwg.mxu0
  %2952 = vmatprep.subr.bf16.mxu0 %v2405
  %2953 = vmatpush1.bf16.msra.mxu0 %v2404
  %2954 = vmatprep.subr.bf16.mxu0 %v2407
  %2955 = vmatpush1.bf16.msra.mxu0 %v2406
  %2956 = vmatprep.subr.bf16.mxu0 %v2409
  %2957 = vmatpush1.bf16.msra.mxu0 %v2408
  %2958 = vmatprep.subr.bf16.mxu0 %v2411
  %2959 = vmatpush1.bf16.msra.mxu0 %v2410
  %2960 = vmatprep.subr.bf16.mxu0 %v2413
  %2961 = vmatpush1.bf16.msra.mxu0 %v2412
  %2962 = vmatprep.subr.bf16.mxu0 %v2415
  %2963 = vmatpush1.bf16.msra.mxu0 %v2414
  %2964 = vmatprep.subr.bf16.mxu0 %v2417
  %2965 = vmatpush1.bf16.msra.mxu0 %v2416
  %2966 = vmatprep.subr.bf16.mxu0 %v2419
  %2967 = vmatpush1.bf16.msra.mxu0 %v2418
  %2968 = vmatprep.subr.bf16.mxu0 %v2421
  %2969 = vmatpush1.bf16.msra.mxu0 %v2420
  %2970 = vmatprep.subr.bf16.mxu0 %v2423
  %2971 = vmatpush1.bf16.msra.mxu0 %v2422
  %2972 = vmatprep.subr.bf16.mxu0 %v2425
  %2973 = vmatpush1.bf16.msra.mxu0 %v2424
  %2974 = vmatprep.subr.bf16.mxu0 %v2427
  %2975 = vmatpush1.bf16.msra.mxu0 %v2426
  %2976 = vmatprep.subr.bf16.mxu0 %v2429
  %2977 = vmatpush1.bf16.msra.mxu0 %v2428
  %2978 = vmatprep.subr.bf16.mxu0 %v2431
  %2979 = vmatpush1.bf16.msra.mxu0 %v2430
  %2980 = vmatprep.subr.bf16.mxu0 %v2433
  %2981 = vmatpush1.bf16.msra.mxu0 %v2432
  %2982 = vmatprep.subr.bf16.mxu0 %v2435
  %2983 = vmatpush1.bf16.msra.mxu0 %v2434
  %2984 = vmatprep.mubr.bf16.mxu0 %v1233
  %2985 = vmatmul.mubr.bf16.gmra.mrb[0].mxu0 %v1232
  %v2986 = vpop.f32.mrb[0].mxu0
  %v2987 = vadd.f32 %v2946, %v2986
  %v2988 = vpop.f32.mrb[0].mxu0
  %v2989 = vadd.f32 %v2948, %v2988
  %v2990 = vpop.f32.mrb[0].mxu0
  %v2991 = vpop.f32.mrb[0].mxu0
  %2992 = vdwg.mxu0
  %2993 = vmatprep.subr.bf16.mxu0 %v2437
  %2994 = vmatpush1.bf16.msra.mxu0 %v2436
  %2995 = vmatprep.subr.bf16.mxu0 %v2439
  %2996 = vmatpush1.bf16.msra.mxu0 %v2438
  %2997 = vmatprep.subr.bf16.mxu0 %v2441
  %2998 = vmatpush1.bf16.msra.mxu0 %v2440
  %2999 = vmatprep.subr.bf16.mxu0 %v2443
  %3000 = vmatpush1.bf16.msra.mxu0 %v2442
  %3001 = vmatprep.subr.bf16.mxu0 %v2445
  %3002 = vmatpush1.bf16.msra.mxu0 %v2444
  %3003 = vmatprep.subr.bf16.mxu0 %v2447
  %3004 = vmatpush1.bf16.msra.mxu0 %v2446
  %3005 = vmatprep.subr.bf16.mxu0 %v2449
  %3006 = vmatpush1.bf16.msra.mxu0 %v2448
  %3007 = vmatprep.subr.bf16.mxu0 %v2451
  %3008 = vmatpush1.bf16.msra.mxu0 %v2450
  %3009 = vmatprep.subr.bf16.mxu0 %v2453
  %3010 = vmatpush1.bf16.msra.mxu0 %v2452
  %3011 = vmatprep.subr.bf16.mxu0 %v2455
  %3012 = vmatpush1.bf16.msra.mxu0 %v2454
  %3013 = vmatprep.subr.bf16.mxu0 %v2457
  %3014 = vmatpush1.bf16.msra.mxu0 %v2456
  %3015 = vmatprep.subr.bf16.mxu0 %v2459
  %3016 = vmatpush1.bf16.msra.mxu0 %v2458
  %3017 = vmatprep.subr.bf16.mxu0 %v2461
  %3018 = vmatpush1.bf16.msra.mxu0 %v2460
  %3019 = vmatprep.subr.bf16.mxu0 %v2463
  %3020 = vmatpush1.bf16.msra.mxu0 %v2462
  %3021 = vmatprep.subr.bf16.mxu0 %v2465
  %3022 = vmatpush1.bf16.msra.mxu0 %v2464
  %3023 = vmatprep.subr.bf16.mxu0 %v2467
  %3024 = vmatpush1.bf16.msra.mxu0 %v2466
  %3025 = vmatprep.mubr.bf16.mxu0 %v1235
  %3026 = vmatmul.mubr.bf16.gmra.mrb[0].mxu0 %v1234
  %v3027 = vpop.f32.mrb[0].mxu0
  %v3028 = vadd.f32 %v2987, %v3027
  %v3029 = vpop.f32.mrb[0].mxu0
  %v3030 = vadd.f32 %v2989, %v3029
  %v3031 = vpop.f32.mrb[0].mxu0
  %v3032 = vpop.f32.mrb[0].mxu0
  %3033 = vdwg.mxu0
  %3034 = vmatprep.subr.bf16.mxu0 %v2469
  %3035 = vmatpush1.bf16.msra.mxu0 %v2468
  %3036 = vmatprep.subr.bf16.mxu0 %v2471
  %3037 = vmatpush1.bf16.msra.mxu0 %v2470
  %3038 = vmatprep.subr.bf16.mxu0 %v2473
  %3039 = vmatpush1.bf16.msra.mxu0 %v2472
  %3040 = vmatprep.subr.bf16.mxu0 %v2475
  %3041 = vmatpush1.bf16.msra.mxu0 %v2474
  %3042 = vmatprep.subr.bf16.mxu0 %v2477
  %3043 = vmatpush1.bf16.msra.mxu0 %v2476
  %3044 = vmatprep.subr.bf16.mxu0 %v2479
  %3045 = vmatpush1.bf16.msra.mxu0 %v2478
  %3046 = vmatprep.subr.bf16.mxu0 %v2481
  %3047 = vmatpush1.bf16.msra.mxu0 %v2480
  %3048 = vmatprep.subr.bf16.mxu0 %v2483
  %3049 = vmatpush1.bf16.msra.mxu0 %v2482
  %3050 = vmatprep.subr.bf16.mxu0 %v2485
  %3051 = vmatpush1.bf16.msra.mxu0 %v2484
  %3052 = vmatprep.subr.bf16.mxu0 %v2487
  %3053 = vmatpush1.bf16.msra.mxu0 %v2486
  %3054 = vmatprep.subr.bf16.mxu0 %v2489
  %3055 = vmatpush1.bf16.msra.mxu0 %v2488
  %3056 = vmatprep.subr.bf16.mxu0 %v2491
  %3057 = vmatpush1.bf16.msra.mxu0 %v2490
  %3058 = vmatprep.subr.bf16.mxu0 %v2493
  %3059 = vmatpush1.bf16.msra.mxu0 %v2492
  %3060 = vmatprep.subr.bf16.mxu0 %v2495
  %3061 = vmatpush1.bf16.msra.mxu0 %v2494
  %3062 = vmatprep.subr.bf16.mxu0 %v2497
  %3063 = vmatpush1.bf16.msra.mxu0 %v2496
  %3064 = vmatprep.subr.bf16.mxu0 %v2499
  %3065 = vmatpush1.bf16.msra.mxu0 %v2498
  %3066 = vmatprep.mubr.bf16.mxu0 %v1237
  %3067 = vmatmul.mubr.bf16.gmra.mrb[0].mxu0 %v1236
  %v3068 = vpop.f32.mrb[0].mxu0
  %v3069 = vadd.f32 %v3028, %v3068
  %v3070 = vpop.f32.mrb[0].mxu0
  %v3071 = vadd.f32 %v3030, %v3070
  %v3072 = vpop.f32.mrb[0].mxu0
  %v3073 = vpop.f32.mrb[0].mxu0
  %3074 = vdwg.mxu0
  %3075 = vmatprep.subr.bf16.mxu0 %v2501
  %3076 = vmatpush1.bf16.msra.mxu0 %v2500
  %3077 = vmatprep.subr.bf16.mxu0 %v2503
  %3078 = vmatpush1.bf16.msra.mxu0 %v2502
  %3079 = vmatprep.subr.bf16.mxu0 %v2505
  %3080 = vmatpush1.bf16.msra.mxu0 %v2504
  %3081 = vmatprep.subr.bf16.mxu0 %v2507
  %3082 = vmatpush1.bf16.msra.mxu0 %v2506
  %3083 = vmatprep.subr.bf16.mxu0 %v2509
  %3084 = vmatpush1.bf16.msra.mxu0 %v2508
  %3085 = vmatprep.subr.bf16.mxu0 %v2511
  %3086 = vmatpush1.bf16.msra.mxu0 %v2510
  %3087 = vmatprep.subr.bf16.mxu0 %v2513
  %3088 = vmatpush1.bf16.msra.mxu0 %v2512
  %3089 = vmatprep.subr.bf16.mxu0 %v2515
  %3090 = vmatpush1.bf16.msra.mxu0 %v2514
  %3091 = vmatprep.subr.bf16.mxu0 %v2517
  %3092 = vmatpush1.bf16.msra.mxu0 %v2516
  %3093 = vmatprep.subr.bf16.mxu0 %v2519
  %3094 = vmatpush1.bf16.msra.mxu0 %v2518
  %3095 = vmatprep.subr.bf16.mxu0 %v2521
  %3096 = vmatpush1.bf16.msra.mxu0 %v2520
  %3097 = vmatprep.subr.bf16.mxu0 %v2523
  %3098 = vmatpush1.bf16.msra.mxu0 %v2522
  %3099 = vmatprep.subr.bf16.mxu0 %v2525
  %3100 = vmatpush1.bf16.msra.mxu0 %v2524
  %3101 = vmatprep.subr.bf16.mxu0 %v2527
  %3102 = vmatpush1.bf16.msra.mxu0 %v2526
  %3103 = vmatprep.subr.bf16.mxu0 %v2529
  %3104 = vmatpush1.bf16.msra.mxu0 %v2528
  %3105 = vmatprep.subr.bf16.mxu0 %v2531
  %3106 = vmatpush1.bf16.msra.mxu0 %v2530
  %3107 = vmatprep.mubr.bf16.mxu0 %v1239
  %3108 = vmatmul.mubr.bf16.gmra.mrb[0].mxu0 %v1238
  %v3109 = vpop.f32.mrb[0].mxu0
  %v3110 = vadd.f32 %v3069, %v3109
  %v3111 = vpop.f32.mrb[0].mxu0
  %v3112 = vadd.f32 %v3071, %v3111
  %v3113 = vpop.f32.mrb[0].mxu0
  %v3114 = vpop.f32.mrb[0].mxu0
  %3115 = vdwg.mxu0
  %v3116 = vpack.c.bf16 %v3110, %v3110
  %v3117 = vpack.c.bf16 %v3112, %v3112
  %v3118 = vld [vmem:[%s5] sm:$0xff]
  %v3119 = vld [vmem:[%s5 + $0x8] sm:$0xf]
  %v3120 = vld [vmem:[%s5 + $0xc] sm:$0xff]
  %v3121 = vld [vmem:[%s5 + $0x14] sm:$0xf]
  %v3122 = vld [vmem:[%s5 + $0x18] sm:$0xff]
  %v3123 = vld [vmem:[%s5 + $0x20] sm:$0xf]
  %v3124 = vld [vmem:[%s5 + $0x24] sm:$0xff]
  %v3125 = vld [vmem:[%s5 + $0x2c] sm:$0xf]
  %v3126 = vld [vmem:[%s5 + $0x30] sm:$0xff]
  %v3127 = vld [vmem:[%s5 + $0x38] sm:$0xf]
  %v3128 = vld [vmem:[%s5 + $0x3c] sm:$0xff]
  %v3129 = vld [vmem:[%s5 + $0x44] sm:$0xf]
  %v3130 = vld [vmem:[%s5 + $0x48] sm:$0xff]
  %v3131 = vld [vmem:[%s5 + $0x50] sm:$0xf]
  %v3132 = vld [vmem:[%s5 + $0x54] sm:$0xff]
  %v3133 = vld [vmem:[%s5 + $0x5c] sm:$0xf]
  %v3134 = vld [vmem:[%s5 + $0x60] sm:$0xff]
  %v3135 = vld [vmem:[%s5 + $0x68] sm:$0xf]
  %v3136 = vld [vmem:[%s5 + $0x6c] sm:$0xff]
  %v3137 = vld [vmem:[%s5 + $0x74] sm:$0xf]
  %v3138 = vld [vmem:[%s5 + $0x78] sm:$0xff]
  %v3139 = vld [vmem:[%s5 + $0x80] sm:$0xf]
  %v3140 = vld [vmem:[%s5 + $0x84] sm:$0xff]
  %v3141 = vld [vmem:[%s5 + $0x8c] sm:$0xf]
  %v3142 = vld [vmem:[%s5 + $0x90] sm:$0xff]
  %v3143 = vld [vmem:[%s5 + $0x98] sm:$0xf]
  %v3144 = vld [vmem:[%s5 + $0x9c] sm:$0xff]
  %v3145 = vld [vmem:[%s5 + $0xa4] sm:$0xf]
  %v3146 = vld [vmem:[%s5 + $0xa8] sm:$0xff]
  %v3147 = vld [vmem:[%s5 + $0xb0] sm:$0xf]
  %v3148 = vld [vmem:[%s5 + $0xb4] sm:$0xff]
  %v3149 = vld [vmem:[%s5 + $0xbc] sm:$0xf]
  %v3150 = vld [vmem:[%s5 + $0xc0] sm:$0xff]
  %v3151 = vld [vmem:[%s5 + $0xc8] sm:$0xf]
  %v3152 = vld [vmem:[%s5 + $0xcc] sm:$0xff]
  %v3153 = vld [vmem:[%s5 + $0xd4] sm:$0xf]
  %v3154 = vld [vmem:[%s5 + $0xd8] sm:$0xff]
  %v3155 = vld [vmem:[%s5 + $0xe0] sm:$0xf]
  %v3156 = vld [vmem:[%s5 + $0xe4] sm:$0xff]
  %v3157 = vld [vmem:[%s5 + $0xec] sm:$0xf]
  %v3158 = vld [vmem:[%s5 + $0xf0] sm:$0xff]
  %v3159 = vld [vmem:[%s5 + $0xf8] sm:$0xf]
  %v3160 = vld [vmem:[%s5 + $0xfc] sm:$0xff]
  %v3161 = vld [vmem:[%s5 + $0x104] sm:$0xf]
  %v3162 = vld [vmem:[%s5 + $0x108] sm:$0xff]
  %v3163 = vld [vmem:[%s5 + $0x110] sm:$0xf]
  %v3164 = vld [vmem:[%s5 + $0x114] sm:$0xff]
  %v3165 = vld [vmem:[%s5 + $0x11c] sm:$0xf]
  %v3166 = vld [vmem:[%s5 + $0x120] sm:$0xff]
  %v3167 = vld [vmem:[%s5 + $0x128] sm:$0xf]
  %v3168 = vld [vmem:[%s5 + $0x12c] sm:$0xff]
  %v3169 = vld [vmem:[%s5 + $0x134] sm:$0xf]
  %v3170 = vld [vmem:[%s5 + $0x138] sm:$0xff]
  %v3171 = vld [vmem:[%s5 + $0x140] sm:$0xf]
  %v3172 = vld [vmem:[%s5 + $0x144] sm:$0xff]
  %v3173 = vld [vmem:[%s5 + $0x14c] sm:$0xf]
  %v3174 = vld [vmem:[%s5 + $0x150] sm:$0xff]
  %v3175 = vld [vmem:[%s5 + $0x158] sm:$0xf]
  %v3176 = vld [vmem:[%s5 + $0x15c] sm:$0xff]
  %v3177 = vld [vmem:[%s5 + $0x164] sm:$0xf]
  %v3178 = vld [vmem:[%s5 + $0x168] sm:$0xff]
  %v3179 = vld [vmem:[%s5 + $0x170] sm:$0xf]
  %v3180 = vld [vmem:[%s5 + $0x174] sm:$0xff]
  %v3181 = vld [vmem:[%s5 + $0x17c] sm:$0xf]
  %v3182 = vld [vmem:[%s6] sm:$0x7]
  %v3184 = vlaneseq
  %v3185 = vshrl.u32 %v3184, 7
  %v3186 = vsub.s32 0, %v3185
  %v3187 = vrot.slane %v3182, %v3186
  %v3188 = vlaneseq
  %v3189 = vshrl.u32 %v3188, 7
  %v3190 = vsub.s32 1, %v3189
  %v3191 = vrot.slane %v3182, %v3190
  %v3192 = vlaneseq
  %v3193 = vshrl.u32 %v3192, 7
  %v3194 = vsub.s32 2, %v3193
  %v3195 = vrot.slane %v3182, %v3194
  %v3263 = vunpack.c.l.b16 %v3118
  %v3264 = vunpack.c.h.b16 %v3118
  %v3265 = vunpack.c.l.b16 %v3119
  %v3266 = vunpack.c.l.b16 %v3120
  %v3267 = vunpack.c.h.b16 %v3120
  %v3268 = vunpack.c.l.b16 %v3121
  %v3269 = vunpack.c.l.b16 %v3122
  %v3270 = vunpack.c.h.b16 %v3122
  %v3271 = vunpack.c.l.b16 %v3123
  %v3272 = vunpack.c.l.b16 %v3124
  %v3273 = vunpack.c.h.b16 %v3124
  %v3274 = vunpack.c.l.b16 %v3125
  %v3275 = vunpack.c.l.b16 %v3126
  %v3276 = vunpack.c.h.b16 %v3126
  %v3277 = vunpack.c.l.b16 %v3127
  %v3278 = vunpack.c.l.b16 %v3128
  %v3279 = vunpack.c.h.b16 %v3128
  %v3280 = vunpack.c.l.b16 %v3129
  %v3281 = vunpack.c.l.b16 %v3130
  %v3282 = vunpack.c.h.b16 %v3130
  %v3283 = vunpack.c.l.b16 %v3131
  %v3284 = vunpack.c.l.b16 %v3132
  %v3285 = vunpack.c.h.b16 %v3132
  %v3286 = vunpack.c.l.b16 %v3133
  %v3287 = vunpack.c.l.b16 %v3134
  %v3288 = vunpack.c.h.b16 %v3134
  %v3289 = vunpack.c.l.b16 %v3135
  %v3290 = vunpack.c.l.b16 %v3136
  %v3291 = vunpack.c.h.b16 %v3136
  %v3292 = vunpack.c.l.b16 %v3137
  %v3293 = vunpack.c.l.b16 %v3138
  %v3294 = vunpack.c.h.b16 %v3138
  %v3295 = vunpack.c.l.b16 %v3139
  %v3296 = vunpack.c.l.b16 %v3140
  %v3297 = vunpack.c.h.b16 %v3140
  %v3298 = vunpack.c.l.b16 %v3141
  %v3299 = vunpack.c.l.b16 %v3142
  %v3300 = vunpack.c.h.b16 %v3142
  %v3301 = vunpack.c.l.b16 %v3143
  %v3302 = vunpack.c.l.b16 %v3144
  %v3303 = vunpack.c.h.b16 %v3144
  %v3304 = vunpack.c.l.b16 %v3145
  %v3305 = vunpack.c.l.b16 %v3146
  %v3306 = vunpack.c.h.b16 %v3146
  %v3307 = vunpack.c.l.b16 %v3147
  %v3308 = vunpack.c.l.b16 %v3148
  %v3309 = vunpack.c.h.b16 %v3148
  %v3310 = vunpack.c.l.b16 %v3149
  %v3311 = vunpack.c.l.b16 %v3150
  %v3312 = vunpack.c.h.b16 %v3150
  %v3313 = vunpack.c.l.b16 %v3151
  %v3314 = vunpack.c.l.b16 %v3152
  %v3315 = vunpack.c.h.b16 %v3152
  %v3316 = vunpack.c.l.b16 %v3153
  %v3317 = vunpack.c.l.b16 %v3154
  %v3318 = vunpack.c.h.b16 %v3154
  %v3319 = vunpack.c.l.b16 %v3155
  %v3320 = vunpack.c.l.b16 %v3156
  %v3321 = vunpack.c.h.b16 %v3156
  %v3322 = vunpack.c.l.b16 %v3157
  %v3323 = vunpack.c.l.b16 %v3158
  %v3324 = vunpack.c.h.b16 %v3158
  %v3325 = vunpack.c.l.b16 %v3159
  %v3326 = vunpack.c.l.b16 %v3160
  %v3327 = vunpack.c.h.b16 %v3160
  %v3328 = vunpack.c.l.b16 %v3161
  %v3329 = vunpack.c.l.b16 %v3162
  %v3330 = vunpack.c.h.b16 %v3162
  %v3331 = vunpack.c.l.b16 %v3163
  %v3332 = vunpack.c.l.b16 %v3164
  %v3333 = vunpack.c.h.b16 %v3164
  %v3334 = vunpack.c.l.b16 %v3165
  %v3335 = vunpack.c.l.b16 %v3166
  %v3336 = vunpack.c.h.b16 %v3166
  %v3337 = vunpack.c.l.b16 %v3167
  %v3338 = vunpack.c.l.b16 %v3168
  %v3339 = vunpack.c.h.b16 %v3168
  %v3340 = vunpack.c.l.b16 %v3169
  %v3341 = vunpack.c.l.b16 %v3170
  %v3342 = vunpack.c.h.b16 %v3170
  %v3343 = vunpack.c.l.b16 %v3171
  %v3344 = vunpack.c.l.b16 %v3172
  %v3345 = vunpack.c.h.b16 %v3172
  %v3346 = vunpack.c.l.b16 %v3173
  %v3347 = vunpack.c.l.b16 %v3174
  %v3348 = vunpack.c.h.b16 %v3174
  %v3349 = vunpack.c.l.b16 %v3175
  %v3350 = vunpack.c.l.b16 %v3176
  %v3351 = vunpack.c.h.b16 %v3176
  %v3352 = vunpack.c.l.b16 %v3177
  %v3353 = vunpack.c.l.b16 %v3178
  %v3354 = vunpack.c.h.b16 %v3178
  %v3355 = vunpack.c.l.b16 %v3179
  %v3356 = vunpack.c.l.b16 %v3180
  %v3357 = vunpack.c.h.b16 %v3180
  %v3358 = vunpack.c.l.b16 %v3181
  %v3359 = vpack.c.b16 %v3266, %v3263
  %v3360 = vpack.c.b16 %v3267, %v3264
  %v3361 = vpack.c.b16 %v3268, %v3265
  %v3362 = vpack.c.b16 %v3272, %v3269
  %v3363 = vpack.c.b16 %v3273, %v3270
  %v3364 = vpack.c.b16 %v3274, %v3271
  %v3365 = vpack.c.b16 %v3278, %v3275
  %v3366 = vpack.c.b16 %v3279, %v3276
  %v3367 = vpack.c.b16 %v3280, %v3277
  %v3368 = vpack.c.b16 %v3284, %v3281
  %v3369 = vpack.c.b16 %v3285, %v3282
  %v3370 = vpack.c.b16 %v3286, %v3283
  %v3371 = vpack.c.b16 %v3290, %v3287
  %v3372 = vpack.c.b16 %v3291, %v3288
  %v3373 = vpack.c.b16 %v3292, %v3289
  %v3374 = vpack.c.b16 %v3296, %v3293
  %v3375 = vpack.c.b16 %v3297, %v3294
  %v3376 = vpack.c.b16 %v3298, %v3295
  %v3377 = vpack.c.b16 %v3302, %v3299
  %v3378 = vpack.c.b16 %v3303, %v3300
  %v3379 = vpack.c.b16 %v3304, %v3301
  %v3380 = vpack.c.b16 %v3308, %v3305
  %v3381 = vpack.c.b16 %v3309, %v3306
  %v3382 = vpack.c.b16 %v3310, %v3307
  %v3383 = vpack.c.b16 %v3314, %v3311
  %v3384 = vpack.c.b16 %v3315, %v3312
  %v3385 = vpack.c.b16 %v3316, %v3313
  %v3386 = vpack.c.b16 %v3320, %v3317
  %v3387 = vpack.c.b16 %v3321, %v3318
  %v3388 = vpack.c.b16 %v3322, %v3319
  %v3389 = vpack.c.b16 %v3326, %v3323
  %v3390 = vpack.c.b16 %v3327, %v3324
  %v3391 = vpack.c.b16 %v3328, %v3325
  %v3392 = vpack.c.b16 %v3332, %v3329
  %v3393 = vpack.c.b16 %v3333, %v3330
  %v3394 = vpack.c.b16 %v3334, %v3331
  %v3395 = vpack.c.b16 %v3338, %v3335
  %v3396 = vpack.c.b16 %v3339, %v3336
  %v3397 = vpack.c.b16 %v3340, %v3337
  %v3398 = vpack.c.b16 %v3344, %v3341
  %v3399 = vpack.c.b16 %v3345, %v3342
  %v3400 = vpack.c.b16 %v3346, %v3343
  %v3401 = vpack.c.b16 %v3350, %v3347
  %v3402 = vpack.c.b16 %v3351, %v3348
  %v3403 = vpack.c.b16 %v3352, %v3349
  %v3404 = vpack.c.b16 %v3356, %v3353
  %v3405 = vpack.c.b16 %v3357, %v3354
  %v3406 = vpack.c.b16 %v3358, %v3355
  %3455 = vmatprep.subr.bf16.mxu0 %v3360
  %3456 = vmatpush1.bf16.msra.mxu0 %v3359
  %3457 = vmatprep.subr.bf16.mxu0 %v3363
  %3458 = vmatpush1.bf16.msra.mxu0 %v3362
  %3459 = vmatprep.subr.bf16.mxu0 %v3366
  %3460 = vmatpush1.bf16.msra.mxu0 %v3365
  %3461 = vmatprep.subr.bf16.mxu0 %v3369
  %3462 = vmatpush1.bf16.msra.mxu0 %v3368
  %3463 = vmatprep.subr.bf16.mxu0 %v3372
  %3464 = vmatpush1.bf16.msra.mxu0 %v3371
  %3465 = vmatprep.subr.bf16.mxu0 %v3375
  %3466 = vmatpush1.bf16.msra.mxu0 %v3374
  %3467 = vmatprep.subr.bf16.mxu0 %v3378
  %3468 = vmatpush1.bf16.msra.mxu0 %v3377
  %3469 = vmatprep.subr.bf16.mxu0 %v3381
  %3470 = vmatpush1.bf16.msra.mxu0 %v3380
  %3471 = vmatprep.subr.bf16.mxu0 %v3384
  %3472 = vmatpush1.bf16.msra.mxu0 %v3383
  %3473 = vmatprep.subr.bf16.mxu0 %v3387
  %3474 = vmatpush1.bf16.msra.mxu0 %v3386
  %3475 = vmatprep.subr.bf16.mxu0 %v3390
  %3476 = vmatpush1.bf16.msra.mxu0 %v3389
  %3477 = vmatprep.subr.bf16.mxu0 %v3393
  %3478 = vmatpush1.bf16.msra.mxu0 %v3392
  %3479 = vmatprep.subr.bf16.mxu0 %v3396
  %3480 = vmatpush1.bf16.msra.mxu0 %v3395
  %3481 = vmatprep.subr.bf16.mxu0 %v3399
  %3482 = vmatpush1.bf16.msra.mxu0 %v3398
  %3483 = vmatprep.subr.bf16.mxu0 %v3402
  %3484 = vmatpush1.bf16.msra.mxu0 %v3401
  %3485 = vmatprep.subr.bf16.mxu0 %v3405
  %3486 = vmatpush1.bf16.msra.mxu0 %v3404
  %3487 = vmatprep.mubr.bf16.mxu0 %v3117
  %3488 = vmatmul.mubr.bf16.gmra.mrb[0].mxu0 %v3116
  %v3489 = vpop.f32.mrb[0].mxu0
  %v3490 = vadd.f32 %v3187, %v3489
  %v3491 = vpop.f32.mrb[0].mxu0
  %v3492 = vadd.f32 %v3191, %v3491
  %v3493 = vpop.f32.mrb[0].mxu0
  %v3494 = vpop.f32.mrb[0].mxu0
  %3495 = vdwg.mxu0
  %3496 = vmatprep.subr.bf16.mxu0 0
  %3497 = vmatpush1.bf16.msra.mxu0 %v3361
  %3498 = vmatprep.subr.bf16.mxu0 0
  %3499 = vmatpush1.bf16.msra.mxu0 %v3364
  %3500 = vmatprep.subr.bf16.mxu0 0
  %3501 = vmatpush1.bf16.msra.mxu0 %v3367
  %3502 = vmatprep.subr.bf16.mxu0 0
  %3503 = vmatpush1.bf16.msra.mxu0 %v3370
  %3504 = vmatprep.subr.bf16.mxu0 0
  %3505 = vmatpush1.bf16.msra.mxu0 %v3373
  %3506 = vmatprep.subr.bf16.mxu0 0
  %3507 = vmatpush1.bf16.msra.mxu0 %v3376
  %3508 = vmatprep.subr.bf16.mxu0 0
  %3509 = vmatpush1.bf16.msra.mxu0 %v3379
  %3510 = vmatprep.subr.bf16.mxu0 0
  %3511 = vmatpush1.bf16.msra.mxu0 %v3382
  %3512 = vmatprep.subr.bf16.mxu0 0
  %3513 = vmatpush1.bf16.msra.mxu0 %v3385
  %3514 = vmatprep.subr.bf16.mxu0 0
  %3515 = vmatpush1.bf16.msra.mxu0 %v3388
  %3516 = vmatprep.subr.bf16.mxu0 0
  %3517 = vmatpush1.bf16.msra.mxu0 %v3391
  %3518 = vmatprep.subr.bf16.mxu0 0
  %3519 = vmatpush1.bf16.msra.mxu0 %v3394
  %3520 = vmatprep.subr.bf16.mxu0 0
  %3521 = vmatpush1.bf16.msra.mxu0 %v3397
  %3522 = vmatprep.subr.bf16.mxu0 0
  %3523 = vmatpush1.bf16.msra.mxu0 %v3400
  %3524 = vmatprep.subr.bf16.mxu0 0
  %3525 = vmatpush1.bf16.msra.mxu0 %v3403
  %3526 = vmatprep.subr.bf16.mxu0 0
  %3527 = vmatpush1.bf16.msra.mxu0 %v3406
  %3528 = vmatprep.mubr.bf16.mxu0 %v3117
  %3529 = vmatmul.mubr.bf16.gmra.mrb[0].mxu0 %v3116
  %v3530 = vpop.f32.mrb[0].mxu0
  %v3531 = vadd.f32 %v3195, %v3530
  %v3532 = vpop.f32.mrb[0].mxu0
  %v3533 = vpop.f32.mrb[0].mxu0
  %v3534 = vpop.f32.mrb[0].mxu0
  %3535 = vdwg.mxu0
  %3536 = vst [vmem:[%s7] sm:$0xff] %v3490
  %3537 = vst [vmem:[%s7 + $0x8] sm:$0xff] %v3492
  %3538 = vst [vmem:[%s7 + $0x10] sm:$0xff] %v3531
  // Predicated region
  $region30: #{accident_xai_forward.5} parent=0 // pred_check
    _
  $region31: #{accident_xai_forward.5} parent=0 // pred_check_branch
    %3540 = sbr.rel (0) target = $region33
  $region32: #{accident_xai_forward.5} parent=0 // pred_region
    _
  $region33: #{accident_xai_forward.5} parent=0 // pred_fallthru
    _
  // Predicated region
  $region34: #{accident_xai_forward.5} parent=0 // pred_check
    _
  $region35: #{accident_xai_forward.5} parent=0 // pred_check_branch
    %3542 = sbr.rel (0) target = $region37
  $region36: #{accident_xai_forward.5} parent=0 // pred_region
    _
  $region37: #{accident_xai_forward.5} parent=0 // pred_fallthru
    _

</llo_original>
